<compile_context>
chip_gen: v6e
topology: v6e:2x2x1
jax: 0.10.0
libtpu: 0.0.40
codegen_flags: <defaults>
</compile_context>

<pallas_src>
import jax
import jax.numpy as jnp
import numpy as np
from jax.experimental import pallas as pl
from jax.experimental.pallas import tpu as pltpu

LANES = 128
TILE_I = 512    # sublane-side tile (candidate "positive" samples), multiple of 8
TILE_J = 2048   # lane-side tile (candidate "negative" samples), multiple of 128


def _auc_pair_kernel(s_pos_ref, s_neg_ref, ones_ref, out_ref, acc_ref):
    j = pl.program_id(1)

    @pl.when(j == 0)
    def _():
        acc_ref[...] = jnp.zeros_like(acc_ref)

    si = s_pos_ref[...]          # (TILE_I, 1): score if valid positive, else -inf
    sj = s_neg_ref[...]          # (1, TILE_J): score if valid negative, else +inf

    # Mann-Whitney pair contribution; class masks / padding are baked into the sentinels
    # (-inf on the i side, +inf on the j side), so no mask multiplies are needed.
    contrib = jnp.where(si > sj, jnp.float32(1.0),
                        jnp.where(si == sj, jnp.float32(0.5), jnp.float32(0.0)))

    # Reduce over the lane (j) axis on the otherwise-idle MXU:
    # (TILE_I, TILE_J)bf16 @ (TILE_J, LANES)bf16 -> (TILE_I, LANES)f32.
    # Only column 0 of ones_ref is nonzero, so acc[:, 0] carries the row sums and the
    # remaining lanes stay zero (jnp.sum over acc is then exact, no 128x redundancy).
    acc_ref[...] += jnp.dot(contrib.astype(jnp.bfloat16), ones_ref[...],
                            preferred_element_type=jnp.float32)

    @pl.when(j == pl.num_programs(1) - 1)
    def _():
        # One cross-lane/sublane reduction per i-tile; lane-dense (1, 1, 128) output block.
        out_ref[...] = jnp.full(out_ref.shape, jnp.sum(acc_ref[...]),
                                dtype=out_ref.dtype)


def auc_loss(out_put, target, *, tile_i=TILE_I, tile_j=TILE_J):
    """Exact ROC-AUC of scores `out_put` vs binary `target` (pos_label=1)."""
    scores = jnp.asarray(out_put, jnp.float32).reshape(-1)
    labels = jnp.asarray(target).reshape(-1)
    n = scores.shape[0]

    is_pos = labels == 1

    # Sentinel-masked score vectors: invalid (wrong-class or padded) entries can never
    # win or tie a comparison, so no explicit mask operands are needed in the kernel.
    s_pos = jnp.where(is_pos, scores, -jnp.inf)      # i-side operand (positives)
    s_neg = jnp.where(is_pos, jnp.inf, scores)       # j-side operand (negatives)

    # Independent padding per side (no lcm blow-up with asymmetric tiles).
    n_pad_i = ((n + tile_i - 1) // tile_i) * tile_i
    n_pad_j = ((n + tile_j - 1) // tile_j) * tile_j
    s_pos_p = jnp.pad(s_pos, (0, n_pad_i - n), constant_values=-np.inf)
    s_neg_p = jnp.pad(s_neg, (0, n_pad_j - n), constant_values=np.inf)

    s_col = s_pos_p.reshape(n_pad_i, 1)
    s_row = s_neg_p.reshape(1, n_pad_j)

    # Constant selector matrix for the MXU lane-reduction (fetched once: index_map is
    # constant, so the block stays resident across grid steps).
    ones_col = jnp.zeros((tile_j, LANES), jnp.bfloat16).at[:, 0].set(1)

    gi = n_pad_i // tile_i
    gj = n_pad_j // tile_j

    partials = pl.pallas_call(
        _auc_pair_kernel,
        out_shape=jax.ShapeDtypeStruct((gi, 1, LANES), jnp.float32),
        grid=(gi, gj),
        in_specs=[
            pl.BlockSpec((tile_i, 1), lambda i, j: (i, 0)),       # positive-side scores
            pl.BlockSpec((1, tile_j), lambda i, j: (0, j)),       # negative-side scores
            pl.BlockSpec((tile_j, LANES), lambda i, j: (0, 0)),   # MXU reduction selector
        ],
        out_specs=pl.BlockSpec((1, 1, LANES), lambda i, j: (i, 0, 0)),
        scratch_shapes=[pltpu.VMEM((tile_i, LANES), jnp.float32)],
        compiler_params=pltpu.CompilerParams(
            dimension_semantics=("parallel", "arbitrary"),
            vmem_limit_bytes=32 * 1024 * 1024,
        ),
    )(s_col, s_row, ones_col)

    pair_sum = jnp.sum(partials[:, 0, 0])
    n_pos = jnp.sum(is_pos.astype(jnp.float32))
    n_neg = jnp.asarray(n, jnp.float32) - n_pos
    denom = n_pos * n_neg
    # Single-class batch -> AUC undefined (sklearn warns / errors); return NaN here.
    return jnp.where(denom > 0, pair_sum / denom, jnp.nan)


def auc_ref_numpy(scores, labels):
    """Pure-numpy f64 reference: identical to sklearn roc_curve+auc for binary labels."""
    s = np.asarray(scores, dtype=np.float64)
    y = np.asarray(labels)
    ps = s[y == 1]
    ns = s[y != 1]
    gt = (ps[:, None] > ns[None, :]).astype(np.float64)
    eq = (ps[:, None] == ns[None, :]).astype(np.float64)
    return float((gt + 0.5 * eq).sum() / (ps.size * ns.size))


if __name__ == "__main__":
    key = jax.random.PRNGKey(0)
    ks, kt = jax.random.split(key)

    # Small, non-tile-aligned batch of scores + binary labels (exercises padding/masking).
    n = 2000
    labels = (jax.random.uniform(kt, (n,)) < 0.3).astype(jnp.int32)
    scores = jax.random.normal(ks, (n,), dtype=jnp.float32) + labels.astype(jnp.float32)

    # Force one cross-class tie so the 0.5 tie-handling path is exercised exactly.
    labels = labels.at[0].set(1).at[1].set(0)
    scores = scores.at[1].set(scores[0])

    auc = jax.block_until_ready(auc_loss(scores, labels))
    ref = auc_ref_numpy(np.asarray(scores), np.asarray(labels))

    assert np.isclose(float(auc), ref, atol=1e-5, rtol=1e-5), (float(auc), ref)
    print("KERNEL_OK")
</pallas_src>

<mosaic_0001>
module attributes {stable_mosaic.version = 11 : i64} {
  func.func @_auc_pair_kernel(%arg0: i32, %arg1: i32, %arg2: memref<512x1xf32, #tpu.memory_space<vmem>>, %arg3: memref<1x2048xf32, #tpu.memory_space<vmem>>, %arg4: memref<2048x128xbf16, #tpu.memory_space<vmem>>, %arg5: memref<1x1x128xf32, #tpu.memory_space<vmem>>, %arg6: memref<512x128xf32, #tpu.memory_space<vmem>>) attributes {dimension_semantics = [#tpu.dimension_semantics<parallel>, #tpu.dimension_semantics<arbitrary>], iteration_bounds = array<i64: 4, 1>, scalar_prefetch = 0 : i64, scratch_operands = 1 : i64, tpu.core_type = #tpu.core_type<tc>, window_params = [{transform_indices = @transform_0, window_bounds = array<i64: 512, 1>}, {transform_indices = @transform_1, window_bounds = array<i64: 1, 2048>}, {pipeline_mode = #tpu.pipeline_mode<synchronous>, transform_indices = @transform_2, window_bounds = array<i64: 2048, 128>}, {transform_indices = @transform_3, window_bounds = array<i64: 1, 1, 128>}]} {
    %c0_i32 = arith.constant 0 : i32
    %0 = arith.cmpi eq, %arg1, %c0_i32 : i32
    %1 = arith.extui %0 : i1 to i32
    %c0_i32_0 = arith.constant 0 : i32
    %2 = arith.cmpi ne, %1, %c0_i32_0 : i32
    scf.if %2 {
      %cst_15 = arith.constant 0.000000e+00 : f32
      %25 = vector.broadcast %cst_15 : f32 to vector<512x128xf32>
      %c0_16 = arith.constant 0 : index
      %c0_17 = arith.constant 0 : index
      %26 = vector.load %arg6[%c0_16, %c0_17] : memref<512x128xf32, #tpu.memory_space<vmem>>, vector<512x128xf32>
      tpu.vector_store %arg6[%c0_16, %c0_17], %25 {strides = array<i32>} : memref<512x128xf32, #tpu.memory_space<vmem>>, vector<512x128xf32>,
    } else {
    }
    %c0 = arith.constant 0 : index
    %c0_1 = arith.constant 0 : index
    %3 = vector.load %arg2[%c0, %c0_1] : memref<512x1xf32, #tpu.memory_space<vmem>>, vector<512x1xf32>
    %c0_2 = arith.constant 0 : index
    %c0_3 = arith.constant 0 : index
    %4 = vector.load %arg3[%c0_2, %c0_3] : memref<1x2048xf32, #tpu.memory_space<vmem>>, vector<1x2048xf32>
    %5 = vector.broadcast %3 : vector<512x1xf32> to vector<512x2048xf32>
    %6 = vector.broadcast %4 : vector<1x2048xf32> to vector<512x2048xf32>
    %7 = arith.cmpf ogt, %5, %6 : vector<512x2048xf32>
    %8 = vector.broadcast %3 : vector<512x1xf32> to vector<512x2048xf32>
    %9 = vector.broadcast %4 : vector<1x2048xf32> to vector<512x2048xf32>
    %10 = arith.cmpf oeq, %8, %9 : vector<512x2048xf32>
    %cst = arith.constant 5.000000e-01 : f32
    %cst_4 = arith.constant 0.000000e+00 : f32
    %11 = vector.broadcast %cst : f32 to vector<512x2048xf32>
    %12 = vector.broadcast %cst_4 : f32 to vector<512x2048xf32>
    %13 = arith.select %10, %11, %12 : vector<512x2048xi1>, vector<512x2048xf32>
    %cst_5 = arith.constant 1.000000e+00 : f32
    %14 = vector.broadcast %cst_5 : f32 to vector<512x2048xf32>
    %15 = arith.select %7, %14, %13 : vector<512x2048xi1>, vector<512x2048xf32>
    %c0_6 = arith.constant 0 : index
    %c0_7 = arith.constant 0 : index
    %16 = vector.load %arg6[%c0_6, %c0_7] : memref<512x128xf32, #tpu.memory_space<vmem>>, vector<512x128xf32>
    %17 = arith.truncf %15 : vector<512x2048xf32> to vector<512x2048xbf16>
    %c0_8 = arith.constant 0 : index
    %c0_9 = arith.constant 0 : index
    %18 = vector.load %arg4[%c0_8, %c0_9] : memref<2048x128xbf16, #tpu.memory_space<vmem>>, vector<2048x128xbf16>
    %cst_10 = arith.constant dense<0.000000e+00> : vector<512x128xf32>
    %19 = tpu.matmul %17, %18, %cst_10 {dimension_numbers = #tpu.dot_dimension_numbers<[1], [0], [0], [1], [0, 0, 1, 1], [], []>} : vector<512x2048xbf16>, vector<2048x128xbf16>, vector<512x128xf32> -> vector<512x128xf32>
    %20 = arith.addf %16, %19 : vector<512x128xf32>
    %c0_11 = arith.constant 0 : index
    %c0_12 = arith.constant 0 : index
    %21 = vector.load %arg6[%c0_11, %c0_12] : memref<512x128xf32, #tpu.memory_space<vmem>>, vector<512x128xf32>
    tpu.vector_store %arg6[%c0_11, %c0_12], %20 {strides = array<i32>} : memref<512x128xf32, #tpu.memory_space<vmem>>, vector<512x128xf32>,
    %c0_i32_13 = arith.constant 0 : i32
    %22 = arith.cmpi eq, %arg1, %c0_i32_13 : i32
    %23 = arith.extui %22 : i1 to i32
    %c0_i32_14 = arith.constant 0 : i32
    %24 = arith.cmpi ne, %23, %c0_i32_14 : i32
    scf.if %24 {
      %c0_15 = arith.constant 0 : index
      %c0_16 = arith.constant 0 : index
      %25 = vector.load %arg6[%c0_15, %c0_16] : memref<512x128xf32, #tpu.memory_space<vmem>>, vector<512x128xf32>
      %26 = vector.shape_cast %25 : vector<512x128xf32> to vector<1x512x128xf32>
      %cst_17 = arith.constant dense<0.000000e+00> : vector<1xf32>
      %27 = vector.multi_reduction <add>, %26, %cst_17 [1, 2] : vector<1x512x128xf32> to vector<1xf32>
      %28 = vector.shape_cast %27 : vector<1xf32> to vector<1x1x1xf32>
      %29 = vector.extract %28[0, 0, 0] : f32 from vector<1x1x1xf32>
      %30 = vector.broadcast %29 : f32 to vector<1x1x128xf32>
      %c0_18 = arith.constant 0 : index
      %c0_19 = arith.constant 0 : index
      %c0_20 = arith.constant 0 : index
      %31 = vector.load %arg5[%c0_18, %c0_19, %c0_20] : memref<1x1x128xf32, #tpu.memory_space<vmem>>, vector<1x1x128xf32>
      tpu.vector_store %arg5[%c0_18, %c0_19, %c0_20], %30 {strides = array<i32>} : memref<1x1x128xf32, #tpu.memory_space<vmem>>, vector<1x1x128xf32>,
    } else {
    }
    return
  }
  func.func @transform_0(%arg0: i32, %arg1: i32) -> (i32, i32) {
    %c0_i32 = arith.constant 0 : i32
    %c0_i32_0 = arith.constant 0 : i32
    return %arg0, %c0_i32 : i32, i32
  }
  func.func @transform_1(%arg0: i32, %arg1: i32) -> (i32, i32) {
    %c0_i32 = arith.constant 0 : i32
    %c0_i32_0 = arith.constant 0 : i32
    return %c0_i32, %arg1 : i32, i32
  }
  func.func @transform_2(%arg0: i32, %arg1: i32) -> (i32, i32) {
    %c0_i32 = arith.constant 0 : i32
    %c0_i32_0 = arith.constant 0 : i32
    %c0_i32_1 = arith.constant 0 : i32
    return %c0_i32, %c0_i32_0 : i32, i32
  }
  func.func @transform_3(%arg0: i32, %arg1: i32) -> (i32, i32, i32) {
    %c0_i32 = arith.constant 0 : i32
    %c0_i32_0 = arith.constant 0 : i32
    %c0_i32_1 = arith.constant 0 : i32
    return %arg0, %c0_i32, %c0_i32_0 : i32, i32, i32
  }
}

</mosaic_0001>

<llo_original>
// kernel: tpu_custom_call.1
$region0: #{tpu_custom_call.1}
  #allocation0 [shape = 'u32[]', space=smem, size = 0x4, offset = 0x4, fixed_abs, tag = 'smem constant byte address 0x4 - core index']
  #allocation1 [shape = 'u32[144,128]{1,0:T(1,128)}', space=vmem, size = 0x12000, scoped, tag = 'internal scratch']
  #allocation2 [shape = 'f32[512,128]{1,0:T(8,128)}', space=vmem, size = 0x40000, scoped, tag = 'scratch operand']
  %s0 = inlined_call_operand.vmem [shape: f32[2048,1], index: 0, kind: input, shape index: {}]
  %s1 = inlined_call_operand.vmem [shape: f32[1,2048], index: 1, kind: input, shape index: {}]
  %s2 = inlined_call_operand.vmem [shape: bf16[2048,128], index: 2, kind: input, shape index: {}]
  %s3 = inlined_call_operand.hbm [shape: f32[4,1,128], index: 3, kind: output, shape index: {}]
  %s4 = sld [smem:[#allocation0]]
  $region53: #{tpu_custom_call.1} parent=0
    _
  %s6 = ssub.s32 1, %s4
  %s7 = scalar_select 0, %s6, %s4
  $region1: #{tpu_custom_call.1} parent=0
    #allocation3 [shape = 'u8[1024]{0}', space=vmem, size = 0x400, scoped, tag = 'output window, operand 0']
    #allocation4 [shape = 's32[2]{0}', space=sflag, size = 0x8, scoped, tag = 'scoped memory for tpu_custom_call.1']
    %8 = vsyncpa [#allocation4], 0
    %s9 = scalar_lea.sflag [#allocation4], 1
    %10 = vsyncpa %s9, 0
    loop: start=0, step=1, limit=6
    $region2: #{tpu_custom_call.1} parent=1 // loop_pre_header
      _
    $region3: #{tpu_custom_call.1} parent=1 // loop_header
      %s12 = sphi 0, %s16
      %p13 = scmp.ge.s32.totalorder %s12, 6
      %s19 = sphi 0, %s31
      %s20 = sphi 0, %s27
      %s21 = sphi 0, %s19
      %s22 = sphi 0, %s20
      %s23 = sphi 0, %s21
      %s24 = sphi 0, %s22
      %s34 = sphi 0, %s36
      %s37 = sphi 0, %s34
      %s38 = sphi 0, %s37
      %s54 = sphi 0, %s38
      %s60 = sphi 0, %s62
      %s63 = sphi 0, %s60
      %s64 = sphi 0, %s63
      %s80 = sphi 0, %s64
      %s84 = sphi 0, %s84
      %s86 = sphi 0, %s84
      %s87 = sphi 0, %s86
      %s101 = sphi 0, %s87
      %s107 = sphi 0, %s109
      %s110 = sphi 0, %s107
      %s111 = sphi 0, %s110
      %s127 = sphi 0, %s111
    $region4: #{tpu_custom_call.1} parent=1 // loop_header_branch
      %15 = sbr.rel (%p13) target = $region8
    $region5: #{tpu_custom_call.1} parent=1 // loop_body
      %s17 = ssub.s32 %s12, 1
      %s18 = ssub.s32 %s12, 2
      %s25 = sadd.s32 1, %s20
      %p26 = scmp.ge.s32.totalorder %s25, 1
      %s27 = scalar_select %p26, 0, %s25
      %s28 = sadd.s32 1, %s19
      %s29 = scalar_select %p26, %s28, %s19
      %p30 = scmp.ge.s32.totalorder %s29, 4
      %s31 = scalar_select %p30, 0, %s29
      %s32 = ssub.s32 %s19, %s31
      %p33 = scmp.eq.s32.totalorder %s32, 0
      %s35 = sadd.s32 %s34, 1
      %s36 = scalar_select %p33, %s34, %s35
      %p39 = pneg %p33
      %p40 = scmp.eq.s32.totalorder %s12, 3
      %p41 = por %p39, %p40
      %p42 = scmp.ne.s32.totalorder %s34, %s37
      %p43 = scmp.eq.s32.totalorder %s12, 0
      %p44 = por %p42, %p43
      %p45 = scmp.ne.s32.totalorder %s34, %s37
      %p46 = scmp.eq.s32.totalorder %s17, 3
      %p47 = por %p45, %p46
      %p48 = scmp.ne.s32.totalorder %s37, %s38
      %p49 = scmp.eq.s32.totalorder %s17, 0
      %p50 = por %p48, %p49
      %p51 = scmp.ne.s32.totalorder %s37, %s38
      %p52 = scmp.eq.s32.totalorder %s18, 3
      %p53 = por %p51, %p52
      %p55 = scmp.ne.s32.totalorder %s38, %s54
      %p56 = scmp.eq.s32.totalorder %s18, 0
      %p57 = por %p55, %p56
      %s58 = ssub.s32 %s20, %s27
      %p59 = scmp.eq.s32.totalorder %s58, 0
      %s61 = sadd.s32 %s60, 1
      %s62 = scalar_select %p59, %s60, %s61
      %p65 = pneg %p59
      %p66 = scmp.eq.s32.totalorder %s12, 3
      %p67 = por %p65, %p66
      %p68 = scmp.ne.s32.totalorder %s60, %s63
      %p69 = scmp.eq.s32.totalorder %s12, 0
      %p70 = por %p68, %p69
      %p71 = scmp.ne.s32.totalorder %s60, %s63
      %p72 = scmp.eq.s32.totalorder %s17, 3
      %p73 = por %p71, %p72
      %p74 = scmp.ne.s32.totalorder %s63, %s64
      %p75 = scmp.eq.s32.totalorder %s17, 0
      %p76 = por %p74, %p75
      %p77 = scmp.ne.s32.totalorder %s63, %s64
      %p78 = scmp.eq.s32.totalorder %s18, 3
      %p79 = por %p77, %p78
      %p81 = scmp.ne.s32.totalorder %s64, %s80
      %p82 = scmp.eq.s32.totalorder %s18, 0
      %p83 = por %p81, %p82
      %s85 = sadd.s32 %s84, 1
      %p88 = scmp.eq.s32.totalorder %s12, 3
      %p89 = scmp.ne.s32.totalorder %s84, %s86
      %p90 = scmp.eq.s32.totalorder %s12, 0
      %p91 = por %p89, %p90
      %p92 = scmp.ne.s32.totalorder %s84, %s86
      %p93 = scmp.eq.s32.totalorder %s17, 3
      %p94 = por %p92, %p93
      %p95 = scmp.ne.s32.totalorder %s86, %s87
      %p96 = scmp.eq.s32.totalorder %s17, 0
      %p97 = por %p95, %p96
      %p98 = scmp.ne.s32.totalorder %s86, %s87
      %p99 = scmp.eq.s32.totalorder %s18, 3
      %p100 = por %p98, %p99
      %p102 = scmp.ne.s32.totalorder %s87, %s101
      %p103 = scmp.eq.s32.totalorder %s18, 0
      %p104 = por %p102, %p103
      %s105 = ssub.s32 %s19, %s31
      %p106 = scmp.eq.s32.totalorder %s105, 0
      %s108 = sadd.s32 %s107, 1
      %s109 = scalar_select %p106, %s107, %s108
      %p112 = pneg %p106
      %p113 = scmp.eq.s32.totalorder %s12, 3
      %p114 = por %p112, %p113
      %p115 = scmp.ne.s32.totalorder %s107, %s110
      %p116 = scmp.eq.s32.totalorder %s12, 0
      %p117 = por %p115, %p116
      %p118 = scmp.ne.s32.totalorder %s107, %s110
      %p119 = scmp.eq.s32.totalorder %s17, 3
      %p120 = por %p118, %p119
      %p121 = scmp.ne.s32.totalorder %s110, %s111
      %p122 = scmp.eq.s32.totalorder %s17, 0
      %p123 = por %p121, %p122
      %p124 = scmp.ne.s32.totalorder %s110, %s111
      %p125 = scmp.eq.s32.totalorder %s18, 3
      %p126 = por %p124, %p125
      %p128 = scmp.ne.s32.totalorder %s111, %s127
      %p129 = scmp.eq.s32.totalorder %s18, 0
      %p130 = por %p128, %p129
      %p131 = scmp.le.s32.totalorder 1, %s12
      %p132 = scmp.lt.s32.totalorder %s12, 5
      %p133 = pnand %p131, %p132
      %p134 = pneg %p133
      // Predicated region
      $region9: #{tpu_custom_call.1} parent=5 // pred_check
        _
      $region10: #{tpu_custom_call.1} parent=5 // pred_check_branch
        %136 = sbr.rel (%p133) target = $region12
      $region11: #{tpu_custom_call.1} parent=5 // pred_region
        %s137 = ssub.s32 %s12, 1
        // Predicated region
        $region13: #{tpu_custom_call.1} parent=11 // pred_check
          %p138 = pneg %p76
        $region14: #{tpu_custom_call.1} parent=11 // pred_check_branch
          %140 = sbr.rel (%p138) target = $region16
        $region15: #{tpu_custom_call.1} parent=11 // pred_region
          %s141 = smul.u32 16, %s22
          %p142 = scmp.lt.s32.totalorder %s141, 15
          %s143 = scalar_select %p142, %s141, 15
          %s144 = scalar_lea.vmem %s1, %s143
          %s145 = smul.u32 16, %s22
        $region16: #{tpu_custom_call.1} parent=11 // pred_fallthru
          _
        // Predicated region
        $region17: #{tpu_custom_call.1} parent=11 // pred_check
          %p146 = pneg %p97
        $region18: #{tpu_custom_call.1} parent=11 // pred_check_branch
          %148 = sbr.rel (%p146) target = $region20
        $region19: #{tpu_custom_call.1} parent=11 // pred_region
          _
        $region20: #{tpu_custom_call.1} parent=11 // pred_fallthru
          _
      $region12: #{tpu_custom_call.1} parent=5 // pred_fallthru
        _
      %p149 = scmp.lt.s32.totalorder %s12, 4
      // Predicated region
      $region21: #{tpu_custom_call.1} parent=5 // pred_check
        %p150 = pneg %p149
      $region22: #{tpu_custom_call.1} parent=5 // pred_check_branch
        %152 = sbr.rel (%p150) target = $region24
      $region23: #{tpu_custom_call.1} parent=5 // pred_region
        // Predicated region
        $region25: #{tpu_custom_call.1} parent=23 // pred_check
          %p153 = pneg %p44
        $region26: #{tpu_custom_call.1} parent=23 // pred_check_branch
          %155 = sbr.rel (%p153) target = $region28
        $region27: #{tpu_custom_call.1} parent=23 // pred_region
          %s156 = smul.u32 64, %s19
          %p157 = scmp.lt.s32.totalorder %s156, 255
          %s158 = scalar_select %p157, %s156, 255
          %s159 = smul.addr %s158, 8
          %s160 = scalar_lea.vmem %s0, %s159
          %s161 = smul.u32 64, %s19
        $region28: #{tpu_custom_call.1} parent=23 // pred_fallthru
          _
      $region24: #{tpu_custom_call.1} parent=5 // pred_fallthru
        _
      %p162 = scmp.le.s32.totalorder 1, %s12
      %p163 = scmp.lt.s32.totalorder %s12, 5
      %p164 = pnand %p162, %p163
      %p165 = pneg %p164
      // Predicated region
      $region29: #{tpu_custom_call.1} parent=5 // pred_check
        _
      $region30: #{tpu_custom_call.1} parent=5 // pred_check_branch
        %167 = sbr.rel (%p164) target = $region32
      $region31: #{tpu_custom_call.1} parent=5 // pred_region
        %s168 = ssub.s32 %s12, 1
        %s169 = smul.u32 64, %s21
        %p170 = scmp.lt.s32.totalorder %s169, 255
        %s171 = scalar_select %p170, %s169, 255
        %s172 = smul.addr %s171, 8
        %s173 = scalar_lea.vmem %s0, %s172
        %p174 = pneg %p50
        %p175 = pneg %p47
        %s176 = smul.u32 16, %s22
        %p177 = scmp.lt.s32.totalorder %s176, 15
        %s178 = scalar_select %p177, %s176, 15
        %s179 = scalar_lea.vmem %s1, %s178
        %p180 = pneg %p76
        %p181 = pneg %p73
        %p182 = pneg %p97
        %p183 = pneg %p94
        %p184 = pneg %p123
        %p185 = pneg %p120
        %s186 = sand.u32 %s110, 1
        %s187 = scalar_lea.sflag [#allocation4], %s186
        %s188 = sand.u32 %s110, 1
        %s189 = scalar_lea.vmem [#allocation3], %s188
        %s190 = smul.u32 64, %s21
        %p191 = scmp.lt.s32.totalorder %s190, 255
        %s192 = scalar_select %p191, %s190, 255
        %s193 = smul.addr %s192, 8
        %s194 = scalar_lea.vmem %s0, %s193
        %s195 = smul.u32 64, %s21
        %s196 = smul.u32 16, %s22
        %p197 = scmp.lt.s32.totalorder %s196, 15
        %s198 = scalar_select %p197, %s196, 15
        %s199 = scalar_lea.vmem %s1, %s198
        %s200 = smul.u32 16, %s22
        %p202 = scmp.eq.s32.totalorder %s22, 0
        // Predicated region
        $region33: #{tpu_custom_call.1} parent=31 // pred_check
          %p203 = pneg %p202
        $region34: #{tpu_custom_call.1} parent=31 // pred_check_branch
          %205 = sbr.rel (%p203) target = $region36
        $region35: #{tpu_custom_call.1} parent=31 // pred_region
          %206 = vst [vmem:[#allocation2] sm:$0xff] 0.0
          %207 = vst [vmem:[#allocation2 + $0x8] sm:$0xff] 0.0
          %208 = vst [vmem:[#allocation2 + $0x10] sm:$0xff] 0.0
          %209 = vst [vmem:[#allocation2 + $0x18] sm:$0xff] 0.0
          %210 = vst [vmem:[#allocation2 + $0x20] sm:$0xff] 0.0
          %211 = vst [vmem:[#allocation2 + $0x28] sm:$0xff] 0.0
          %212 = vst [vmem:[#allocation2 + $0x30] sm:$0xff] 0.0
          %213 = vst [vmem:[#allocation2 + $0x38] sm:$0xff] 0.0
          %214 = vst [vmem:[#allocation2 + $0x40] sm:$0xff] 0.0
          %215 = vst [vmem:[#allocation2 + $0x48] sm:$0xff] 0.0
          %216 = vst [vmem:[#allocation2 + $0x50] sm:$0xff] 0.0
          %217 = vst [vmem:[#allocation2 + $0x58] sm:$0xff] 0.0
          %218 = vst [vmem:[#allocation2 + $0x60] sm:$0xff] 0.0
          %219 = vst [vmem:[#allocation2 + $0x68] sm:$0xff] 0.0
          %220 = vst [vmem:[#allocation2 + $0x70] sm:$0xff] 0.0
          %221 = vst [vmem:[#allocation2 + $0x78] sm:$0xff] 0.0
          %222 = vst [vmem:[#allocation2 + $0x80] sm:$0xff] 0.0
          %223 = vst [vmem:[#allocation2 + $0x88] sm:$0xff] 0.0
          %224 = vst [vmem:[#allocation2 + $0x90] sm:$0xff] 0.0
          %225 = vst [vmem:[#allocation2 + $0x98] sm:$0xff] 0.0
          %226 = vst [vmem:[#allocation2 + $0xa0] sm:$0xff] 0.0
          %227 = vst [vmem:[#allocation2 + $0xa8] sm:$0xff] 0.0
          %228 = vst [vmem:[#allocation2 + $0xb0] sm:$0xff] 0.0
          %229 = vst [vmem:[#allocation2 + $0xb8] sm:$0xff] 0.0
          %230 = vst [vmem:[#allocation2 + $0xc0] sm:$0xff] 0.0
          %231 = vst [vmem:[#allocation2 + $0xc8] sm:$0xff] 0.0
          %232 = vst [vmem:[#allocation2 + $0xd0] sm:$0xff] 0.0
          %233 = vst [vmem:[#allocation2 + $0xd8] sm:$0xff] 0.0
          %234 = vst [vmem:[#allocation2 + $0xe0] sm:$0xff] 0.0
          %235 = vst [vmem:[#allocation2 + $0xe8] sm:$0xff] 0.0
          %236 = vst [vmem:[#allocation2 + $0xf0] sm:$0xff] 0.0
          %237 = vst [vmem:[#allocation2 + $0xf8] sm:$0xff] 0.0
          %238 = vst [vmem:[#allocation2 + $0x100] sm:$0xff] 0.0
          %239 = vst [vmem:[#allocation2 + $0x108] sm:$0xff] 0.0
          %240 = vst [vmem:[#allocation2 + $0x110] sm:$0xff] 0.0
          %241 = vst [vmem:[#allocation2 + $0x118] sm:$0xff] 0.0
          %242 = vst [vmem:[#allocation2 + $0x120] sm:$0xff] 0.0
          %243 = vst [vmem:[#allocation2 + $0x128] sm:$0xff] 0.0
          %244 = vst [vmem:[#allocation2 + $0x130] sm:$0xff] 0.0
          %245 = vst [vmem:[#allocation2 + $0x138] sm:$0xff] 0.0
          %246 = vst [vmem:[#allocation2 + $0x140] sm:$0xff] 0.0
          %247 = vst [vmem:[#allocation2 + $0x148] sm:$0xff] 0.0
          %248 = vst [vmem:[#allocation2 + $0x150] sm:$0xff] 0.0
          %249 = vst [vmem:[#allocation2 + $0x158] sm:$0xff] 0.0
          %250 = vst [vmem:[#allocation2 + $0x160] sm:$0xff] 0.0
          %251 = vst [vmem:[#allocation2 + $0x168] sm:$0xff] 0.0
          %252 = vst [vmem:[#allocation2 + $0x170] sm:$0xff] 0.0
          %253 = vst [vmem:[#allocation2 + $0x178] sm:$0xff] 0.0
          %254 = vst [vmem:[#allocation2 + $0x180] sm:$0xff] 0.0
          %255 = vst [vmem:[#allocation2 + $0x188] sm:$0xff] 0.0
          %256 = vst [vmem:[#allocation2 + $0x190] sm:$0xff] 0.0
          %257 = vst [vmem:[#allocation2 + $0x198] sm:$0xff] 0.0
          %258 = vst [vmem:[#allocation2 + $0x1a0] sm:$0xff] 0.0
          %259 = vst [vmem:[#allocation2 + $0x1a8] sm:$0xff] 0.0
          %260 = vst [vmem:[#allocation2 + $0x1b0] sm:$0xff] 0.0
          %261 = vst [vmem:[#allocation2 + $0x1b8] sm:$0xff] 0.0
          %262 = vst [vmem:[#allocation2 + $0x1c0] sm:$0xff] 0.0
          %263 = vst [vmem:[#allocation2 + $0x1c8] sm:$0xff] 0.0
          %264 = vst [vmem:[#allocation2 + $0x1d0] sm:$0xff] 0.0
          %265 = vst [vmem:[#allocation2 + $0x1d8] sm:$0xff] 0.0
          %266 = vst [vmem:[#allocation2 + $0x1e0] sm:$0xff] 0.0
          %267 = vst [vmem:[#allocation2 + $0x1e8] sm:$0xff] 0.0
          %268 = vst [vmem:[#allocation2 + $0x1f0] sm:$0xff] 0.0
          %269 = vst [vmem:[#allocation2 + $0x1f8] sm:$0xff] 0.0
        $region36: #{tpu_custom_call.1} parent=31 // pred_fallthru
          _
        %v270 = vld [vmem:[%s194] sm:$0xff]
        %v271 = vld [vmem:[%s194 + $0x8] sm:$0xff]
        %v272 = vld [vmem:[%s194 + $0x10] sm:$0xff]
        %v273 = vld [vmem:[%s194 + $0x18] sm:$0xff]
        %v274 = vld [vmem:[%s194 + $0x20] sm:$0xff]
        %v275 = vld [vmem:[%s194 + $0x28] sm:$0xff]
        %v276 = vld [vmem:[%s194 + $0x30] sm:$0xff]
        %v277 = vld [vmem:[%s194 + $0x38] sm:$0xff]
        %v278 = vld [vmem:[%s194 + $0x40] sm:$0xff]
        %v279 = vld [vmem:[%s194 + $0x48] sm:$0xff]
        %v280 = vld [vmem:[%s194 + $0x50] sm:$0xff]
        %v281 = vld [vmem:[%s194 + $0x58] sm:$0xff]
        %v282 = vld [vmem:[%s194 + $0x60] sm:$0xff]
        %v283 = vld [vmem:[%s194 + $0x68] sm:$0xff]
        %v284 = vld [vmem:[%s194 + $0x70] sm:$0xff]
        %v285 = vld [vmem:[%s194 + $0x78] sm:$0xff]
        %v286 = vld [vmem:[%s194 + $0x80] sm:$0xff]
        %v287 = vld [vmem:[%s194 + $0x88] sm:$0xff]
        %v288 = vld [vmem:[%s194 + $0x90] sm:$0xff]
        %v289 = vld [vmem:[%s194 + $0x98] sm:$0xff]
        %v290 = vld [vmem:[%s194 + $0xa0] sm:$0xff]
        %v291 = vld [vmem:[%s194 + $0xa8] sm:$0xff]
        %v292 = vld [vmem:[%s194 + $0xb0] sm:$0xff]
        %v293 = vld [vmem:[%s194 + $0xb8] sm:$0xff]
        %v294 = vld [vmem:[%s194 + $0xc0] sm:$0xff]
        %v295 = vld [vmem:[%s194 + $0xc8] sm:$0xff]
        %v296 = vld [vmem:[%s194 + $0xd0] sm:$0xff]
        %v297 = vld [vmem:[%s194 + $0xd8] sm:$0xff]
        %v298 = vld [vmem:[%s194 + $0xe0] sm:$0xff]
        %v299 = vld [vmem:[%s194 + $0xe8] sm:$0xff]
        %v300 = vld [vmem:[%s194 + $0xf0] sm:$0xff]
        %v301 = vld [vmem:[%s194 + $0xf8] sm:$0xff]
        %v302 = vld [vmem:[%s194 + $0x100] sm:$0xff]
        %v303 = vld [vmem:[%s194 + $0x108] sm:$0xff]
        %v304 = vld [vmem:[%s194 + $0x110] sm:$0xff]
        %v305 = vld [vmem:[%s194 + $0x118] sm:$0xff]
        %v306 = vld [vmem:[%s194 + $0x120] sm:$0xff]
        %v307 = vld [vmem:[%s194 + $0x128] sm:$0xff]
        %v308 = vld [vmem:[%s194 + $0x130] sm:$0xff]
        %v309 = vld [vmem:[%s194 + $0x138] sm:$0xff]
        %v310 = vld [vmem:[%s194 + $0x140] sm:$0xff]
        %v311 = vld [vmem:[%s194 + $0x148] sm:$0xff]
        %v312 = vld [vmem:[%s194 + $0x150] sm:$0xff]
        %v313 = vld [vmem:[%s194 + $0x158] sm:$0xff]
        %v314 = vld [vmem:[%s194 + $0x160] sm:$0xff]
        %v315 = vld [vmem:[%s194 + $0x168] sm:$0xff]
        %v316 = vld [vmem:[%s194 + $0x170] sm:$0xff]
        %v317 = vld [vmem:[%s194 + $0x178] sm:$0xff]
        %v318 = vld [vmem:[%s194 + $0x180] sm:$0xff]
        %v319 = vld [vmem:[%s194 + $0x188] sm:$0xff]
        %v320 = vld [vmem:[%s194 + $0x190] sm:$0xff]
        %v321 = vld [vmem:[%s194 + $0x198] sm:$0xff]
        %v322 = vld [vmem:[%s194 + $0x1a0] sm:$0xff]
        %v323 = vld [vmem:[%s194 + $0x1a8] sm:$0xff]
        %v324 = vld [vmem:[%s194 + $0x1b0] sm:$0xff]
        %v325 = vld [vmem:[%s194 + $0x1b8] sm:$0xff]
        %v326 = vld [vmem:[%s194 + $0x1c0] sm:$0xff]
        %v327 = vld [vmem:[%s194 + $0x1c8] sm:$0xff]
        %v328 = vld [vmem:[%s194 + $0x1d0] sm:$0xff]
        %v329 = vld [vmem:[%s194 + $0x1d8] sm:$0xff]
        %v330 = vld [vmem:[%s194 + $0x1e0] sm:$0xff]
        %v331 = vld [vmem:[%s194 + $0x1e8] sm:$0xff]
        %v332 = vld [vmem:[%s194 + $0x1f0] sm:$0xff]
        %v333 = vld [vmem:[%s194 + $0x1f8] sm:$0xff]
        %v334 = vld [vmem:[%s199] sm:$0xff]
        %v335 = vld [vmem:[%s199 + $0x8] sm:$0xff]
        %337 = vset.pattern.permute.xlu0 0
        %338 = vperm.xlu0 %337, %v270
        %v339 = vpop.permute.xlu0 %338
        %342 = vset.pattern.permute.xlu0 0
        %343 = vperm.xlu0 %342, %v271
        %v344 = vpop.permute.xlu0 %343
        %347 = vset.pattern.permute.xlu0 0
        %348 = vperm.xlu0 %347, %v272
        %v349 = vpop.permute.xlu0 %348
        %352 = vset.pattern.permute.xlu0 0
        %353 = vperm.xlu0 %352, %v273
        %v354 = vpop.permute.xlu0 %353
        %357 = vset.pattern.permute.xlu0 0
        %358 = vperm.xlu0 %357, %v274
        %v359 = vpop.permute.xlu0 %358
        %362 = vset.pattern.permute.xlu0 0
        %363 = vperm.xlu0 %362, %v275
        %v364 = vpop.permute.xlu0 %363
        %367 = vset.pattern.permute.xlu0 0
        %368 = vperm.xlu0 %367, %v276
        %v369 = vpop.permute.xlu0 %368
        %372 = vset.pattern.permute.xlu0 0
        %373 = vperm.xlu0 %372, %v277
        %v374 = vpop.permute.xlu0 %373
        %377 = vset.pattern.permute.xlu0 0
        %378 = vperm.xlu0 %377, %v278
        %v379 = vpop.permute.xlu0 %378
        %382 = vset.pattern.permute.xlu0 0
        %383 = vperm.xlu0 %382, %v279
        %v384 = vpop.permute.xlu0 %383
        %387 = vset.pattern.permute.xlu0 0
        %388 = vperm.xlu0 %387, %v280
        %v389 = vpop.permute.xlu0 %388
        %392 = vset.pattern.permute.xlu0 0
        %393 = vperm.xlu0 %392, %v281
        %v394 = vpop.permute.xlu0 %393
        %397 = vset.pattern.permute.xlu0 0
        %398 = vperm.xlu0 %397, %v282
        %v399 = vpop.permute.xlu0 %398
        %402 = vset.pattern.permute.xlu0 0
        %403 = vperm.xlu0 %402, %v283
        %v404 = vpop.permute.xlu0 %403
        %407 = vset.pattern.permute.xlu0 0
        %408 = vperm.xlu0 %407, %v284
        %v409 = vpop.permute.xlu0 %408
        %412 = vset.pattern.permute.xlu0 0
        %413 = vperm.xlu0 %412, %v285
        %v414 = vpop.permute.xlu0 %413
        %417 = vset.pattern.permute.xlu0 0
        %418 = vperm.xlu0 %417, %v286
        %v419 = vpop.permute.xlu0 %418
        %422 = vset.pattern.permute.xlu0 0
        %423 = vperm.xlu0 %422, %v287
        %v424 = vpop.permute.xlu0 %423
        %427 = vset.pattern.permute.xlu0 0
        %428 = vperm.xlu0 %427, %v288
        %v429 = vpop.permute.xlu0 %428
        %432 = vset.pattern.permute.xlu0 0
        %433 = vperm.xlu0 %432, %v289
        %v434 = vpop.permute.xlu0 %433
        %437 = vset.pattern.permute.xlu0 0
        %438 = vperm.xlu0 %437, %v290
        %v439 = vpop.permute.xlu0 %438
        %442 = vset.pattern.permute.xlu0 0
        %443 = vperm.xlu0 %442, %v291
        %v444 = vpop.permute.xlu0 %443
        %447 = vset.pattern.permute.xlu0 0
        %448 = vperm.xlu0 %447, %v292
        %v449 = vpop.permute.xlu0 %448
        %452 = vset.pattern.permute.xlu0 0
        %453 = vperm.xlu0 %452, %v293
        %v454 = vpop.permute.xlu0 %453
        %457 = vset.pattern.permute.xlu0 0
        %458 = vperm.xlu0 %457, %v294
        %v459 = vpop.permute.xlu0 %458
        %462 = vset.pattern.permute.xlu0 0
        %463 = vperm.xlu0 %462, %v295
        %v464 = vpop.permute.xlu0 %463
        %467 = vset.pattern.permute.xlu0 0
        %468 = vperm.xlu0 %467, %v296
        %v469 = vpop.permute.xlu0 %468
        %472 = vset.pattern.permute.xlu0 0
        %473 = vperm.xlu0 %472, %v297
        %v474 = vpop.permute.xlu0 %473
        %477 = vset.pattern.permute.xlu0 0
        %478 = vperm.xlu0 %477, %v298
        %v479 = vpop.permute.xlu0 %478
        %482 = vset.pattern.permute.xlu0 0
        %483 = vperm.xlu0 %482, %v299
        %v484 = vpop.permute.xlu0 %483
        %487 = vset.pattern.permute.xlu0 0
        %488 = vperm.xlu0 %487, %v300
        %v489 = vpop.permute.xlu0 %488
        %492 = vset.pattern.permute.xlu0 0
        %493 = vperm.xlu0 %492, %v301
        %v494 = vpop.permute.xlu0 %493
        %497 = vset.pattern.permute.xlu0 0
        %498 = vperm.xlu0 %497, %v302
        %v499 = vpop.permute.xlu0 %498
        %502 = vset.pattern.permute.xlu0 0
        %503 = vperm.xlu0 %502, %v303
        %v504 = vpop.permute.xlu0 %503
        %507 = vset.pattern.permute.xlu0 0
        %508 = vperm.xlu0 %507, %v304
        %v509 = vpop.permute.xlu0 %508
        %512 = vset.pattern.permute.xlu0 0
        %513 = vperm.xlu0 %512, %v305
        %v514 = vpop.permute.xlu0 %513
        %517 = vset.pattern.permute.xlu0 0
        %518 = vperm.xlu0 %517, %v306
        %v519 = vpop.permute.xlu0 %518
        %522 = vset.pattern.permute.xlu0 0
        %523 = vperm.xlu0 %522, %v307
        %v524 = vpop.permute.xlu0 %523
        %527 = vset.pattern.permute.xlu0 0
        %528 = vperm.xlu0 %527, %v308
        %v529 = vpop.permute.xlu0 %528
        %532 = vset.pattern.permute.xlu0 0
        %533 = vperm.xlu0 %532, %v309
        %v534 = vpop.permute.xlu0 %533
        %537 = vset.pattern.permute.xlu0 0
        %538 = vperm.xlu0 %537, %v310
        %v539 = vpop.permute.xlu0 %538
        %542 = vset.pattern.permute.xlu0 0
        %543 = vperm.xlu0 %542, %v311
        %v544 = vpop.permute.xlu0 %543
        %547 = vset.pattern.permute.xlu0 0
        %548 = vperm.xlu0 %547, %v312
        %v549 = vpop.permute.xlu0 %548
        %552 = vset.pattern.permute.xlu0 0
        %553 = vperm.xlu0 %552, %v313
        %v554 = vpop.permute.xlu0 %553
        %557 = vset.pattern.permute.xlu0 0
        %558 = vperm.xlu0 %557, %v314
        %v559 = vpop.permute.xlu0 %558
        %562 = vset.pattern.permute.xlu0 0
        %563 = vperm.xlu0 %562, %v315
        %v564 = vpop.permute.xlu0 %563
        %567 = vset.pattern.permute.xlu0 0
        %568 = vperm.xlu0 %567, %v316
        %v569 = vpop.permute.xlu0 %568
        %572 = vset.pattern.permute.xlu0 0
        %573 = vperm.xlu0 %572, %v317
        %v574 = vpop.permute.xlu0 %573
        %577 = vset.pattern.permute.xlu0 0
        %578 = vperm.xlu0 %577, %v318
        %v579 = vpop.permute.xlu0 %578
        %582 = vset.pattern.permute.xlu0 0
        %583 = vperm.xlu0 %582, %v319
        %v584 = vpop.permute.xlu0 %583
        %587 = vset.pattern.permute.xlu0 0
        %588 = vperm.xlu0 %587, %v320
        %v589 = vpop.permute.xlu0 %588
        %592 = vset.pattern.permute.xlu0 0
        %593 = vperm.xlu0 %592, %v321
        %v594 = vpop.permute.xlu0 %593
        %597 = vset.pattern.permute.xlu0 0
        %598 = vperm.xlu0 %597, %v322
        %v599 = vpop.permute.xlu0 %598
        %602 = vset.pattern.permute.xlu0 0
        %603 = vperm.xlu0 %602, %v323
        %v604 = vpop.permute.xlu0 %603
        %607 = vset.pattern.permute.xlu0 0
        %608 = vperm.xlu0 %607, %v324
        %v609 = vpop.permute.xlu0 %608
        %612 = vset.pattern.permute.xlu0 0
        %613 = vperm.xlu0 %612, %v325
        %v614 = vpop.permute.xlu0 %613
        %617 = vset.pattern.permute.xlu0 0
        %618 = vperm.xlu0 %617, %v326
        %v619 = vpop.permute.xlu0 %618
        %622 = vset.pattern.permute.xlu0 0
        %623 = vperm.xlu0 %622, %v327
        %v624 = vpop.permute.xlu0 %623
        %627 = vset.pattern.permute.xlu0 0
        %628 = vperm.xlu0 %627, %v328
        %v629 = vpop.permute.xlu0 %628
        %632 = vset.pattern.permute.xlu0 0
        %633 = vperm.xlu0 %632, %v329
        %v634 = vpop.permute.xlu0 %633
        %637 = vset.pattern.permute.xlu0 0
        %638 = vperm.xlu0 %637, %v330
        %v639 = vpop.permute.xlu0 %638
        %642 = vset.pattern.permute.xlu0 0
        %643 = vperm.xlu0 %642, %v331
        %v644 = vpop.permute.xlu0 %643
        %647 = vset.pattern.permute.xlu0 0
        %648 = vperm.xlu0 %647, %v332
        %v649 = vpop.permute.xlu0 %648
        %652 = vset.pattern.permute.xlu0 0
        %653 = vperm.xlu0 %652, %v333
        %v654 = vpop.permute.xlu0 %653
        %v658 = vlaneseq
        %v659 = vshrl.u32 %v658, 7
        %v660 = vsub.s32 0, %v659
        %v661 = vrot.slane %v334, %v660
        %v662 = vlaneseq
        %v663 = vshrl.u32 %v662, 7
        %v664 = vsub.s32 1, %v663
        %v665 = vrot.slane %v334, %v664
        %v666 = vlaneseq
        %v667 = vshrl.u32 %v666, 7
        %v668 = vsub.s32 2, %v667
        %v669 = vrot.slane %v334, %v668
        %v670 = vlaneseq
        %v671 = vshrl.u32 %v670, 7
        %v672 = vsub.s32 3, %v671
        %v673 = vrot.slane %v334, %v672
        %v674 = vlaneseq
        %v675 = vshrl.u32 %v674, 7
        %v676 = vsub.s32 4, %v675
        %v677 = vrot.slane %v334, %v676
        %v678 = vlaneseq
        %v679 = vshrl.u32 %v678, 7
        %v680 = vsub.s32 5, %v679
        %v681 = vrot.slane %v334, %v680
        %v682 = vlaneseq
        %v683 = vshrl.u32 %v682, 7
        %v684 = vsub.s32 6, %v683
        %v685 = vrot.slane %v334, %v684
        %v686 = vlaneseq
        %v687 = vshrl.u32 %v686, 7
        %v688 = vsub.s32 7, %v687
        %v689 = vrot.slane %v334, %v688
        %v690 = vlaneseq
        %v691 = vshrl.u32 %v690, 7
        %v692 = vsub.s32 0, %v691
        %v693 = vrot.slane %v335, %v692
        %v694 = vlaneseq
        %v695 = vshrl.u32 %v694, 7
        %v696 = vsub.s32 1, %v695
        %v697 = vrot.slane %v335, %v696
        %v698 = vlaneseq
        %v699 = vshrl.u32 %v698, 7
        %v700 = vsub.s32 2, %v699
        %v701 = vrot.slane %v335, %v700
        %v702 = vlaneseq
        %v703 = vshrl.u32 %v702, 7
        %v704 = vsub.s32 3, %v703
        %v705 = vrot.slane %v335, %v704
        %v706 = vlaneseq
        %v707 = vshrl.u32 %v706, 7
        %v708 = vsub.s32 4, %v707
        %v709 = vrot.slane %v335, %v708
        %v710 = vlaneseq
        %v711 = vshrl.u32 %v710, 7
        %v712 = vsub.s32 5, %v711
        %v713 = vrot.slane %v335, %v712
        %v714 = vlaneseq
        %v715 = vshrl.u32 %v714, 7
        %v716 = vsub.s32 6, %v715
        %v717 = vrot.slane %v335, %v716
        %v718 = vlaneseq
        %v719 = vshrl.u32 %v718, 7
        %v720 = vsub.s32 7, %v719
        %v721 = vrot.slane %v335, %v720
        %vm738 = vcmp.gt.f32.partialorder %v339, %v661
        %vm739 = vcmp.gt.f32.partialorder %v339, %v665
        %vm740 = vcmp.gt.f32.partialorder %v339, %v669
        %vm741 = vcmp.gt.f32.partialorder %v339, %v673
        %vm742 = vcmp.gt.f32.partialorder %v339, %v677
        %vm743 = vcmp.gt.f32.partialorder %v339, %v681
        %vm744 = vcmp.gt.f32.partialorder %v339, %v685
        %vm745 = vcmp.gt.f32.partialorder %v339, %v689
        %vm746 = vcmp.gt.f32.partialorder %v339, %v693
        %vm747 = vcmp.gt.f32.partialorder %v339, %v697
        %vm748 = vcmp.gt.f32.partialorder %v339, %v701
        %vm749 = vcmp.gt.f32.partialorder %v339, %v705
        %vm750 = vcmp.gt.f32.partialorder %v339, %v709
        %vm751 = vcmp.gt.f32.partialorder %v339, %v713
        %vm752 = vcmp.gt.f32.partialorder %v339, %v717
        %vm753 = vcmp.gt.f32.partialorder %v339, %v721
        %vm754 = vcmp.gt.f32.partialorder %v344, %v661
        %vm755 = vcmp.gt.f32.partialorder %v344, %v665
        %vm756 = vcmp.gt.f32.partialorder %v344, %v669
        %vm757 = vcmp.gt.f32.partialorder %v344, %v673
        %vm758 = vcmp.gt.f32.partialorder %v344, %v677
        %vm759 = vcmp.gt.f32.partialorder %v344, %v681
        %vm760 = vcmp.gt.f32.partialorder %v344, %v685
        %vm761 = vcmp.gt.f32.partialorder %v344, %v689
        %vm762 = vcmp.gt.f32.partialorder %v344, %v693
        %vm763 = vcmp.gt.f32.partialorder %v344, %v697
        %vm764 = vcmp.gt.f32.partialorder %v344, %v701
        %vm765 = vcmp.gt.f32.partialorder %v344, %v705
        %vm766 = vcmp.gt.f32.partialorder %v344, %v709
        %vm767 = vcmp.gt.f32.partialorder %v344, %v713
        %vm768 = vcmp.gt.f32.partialorder %v344, %v717
        %vm769 = vcmp.gt.f32.partialorder %v344, %v721
        %vm770 = vcmp.gt.f32.partialorder %v349, %v661
        %vm771 = vcmp.gt.f32.partialorder %v349, %v665
        %vm772 = vcmp.gt.f32.partialorder %v349, %v669
        %vm773 = vcmp.gt.f32.partialorder %v349, %v673
        %vm774 = vcmp.gt.f32.partialorder %v349, %v677
        %vm775 = vcmp.gt.f32.partialorder %v349, %v681
        %vm776 = vcmp.gt.f32.partialorder %v349, %v685
        %vm777 = vcmp.gt.f32.partialorder %v349, %v689
        %vm778 = vcmp.gt.f32.partialorder %v349, %v693
        %vm779 = vcmp.gt.f32.partialorder %v349, %v697
        %vm780 = vcmp.gt.f32.partialorder %v349, %v701
        %vm781 = vcmp.gt.f32.partialorder %v349, %v705
        %vm782 = vcmp.gt.f32.partialorder %v349, %v709
        %vm783 = vcmp.gt.f32.partialorder %v349, %v713
        %vm784 = vcmp.gt.f32.partialorder %v349, %v717
        %vm785 = vcmp.gt.f32.partialorder %v349, %v721
        %vm786 = vcmp.gt.f32.partialorder %v354, %v661
        %vm787 = vcmp.gt.f32.partialorder %v354, %v665
        %vm788 = vcmp.gt.f32.partialorder %v354, %v669
        %vm789 = vcmp.gt.f32.partialorder %v354, %v673
        %vm790 = vcmp.gt.f32.partialorder %v354, %v677
        %vm791 = vcmp.gt.f32.partialorder %v354, %v681
        %vm792 = vcmp.gt.f32.partialorder %v354, %v685
        %vm793 = vcmp.gt.f32.partialorder %v354, %v689
        %vm794 = vcmp.gt.f32.partialorder %v354, %v693
        %vm795 = vcmp.gt.f32.partialorder %v354, %v697
        %vm796 = vcmp.gt.f32.partialorder %v354, %v701
        %vm797 = vcmp.gt.f32.partialorder %v354, %v705
        %vm798 = vcmp.gt.f32.partialorder %v354, %v709
        %vm799 = vcmp.gt.f32.partialorder %v354, %v713
        %vm800 = vcmp.gt.f32.partialorder %v354, %v717
        %vm801 = vcmp.gt.f32.partialorder %v354, %v721
        %vm802 = vcmp.gt.f32.partialorder %v359, %v661
        %vm803 = vcmp.gt.f32.partialorder %v359, %v665
        %vm804 = vcmp.gt.f32.partialorder %v359, %v669
        %vm805 = vcmp.gt.f32.partialorder %v359, %v673
        %vm806 = vcmp.gt.f32.partialorder %v359, %v677
        %vm807 = vcmp.gt.f32.partialorder %v359, %v681
        %vm808 = vcmp.gt.f32.partialorder %v359, %v685
        %vm809 = vcmp.gt.f32.partialorder %v359, %v689
        %vm810 = vcmp.gt.f32.partialorder %v359, %v693
        %vm811 = vcmp.gt.f32.partialorder %v359, %v697
        %vm812 = vcmp.gt.f32.partialorder %v359, %v701
        %vm813 = vcmp.gt.f32.partialorder %v359, %v705
        %vm814 = vcmp.gt.f32.partialorder %v359, %v709
        %vm815 = vcmp.gt.f32.partialorder %v359, %v713
        %vm816 = vcmp.gt.f32.partialorder %v359, %v717
        %vm817 = vcmp.gt.f32.partialorder %v359, %v721
        %vm818 = vcmp.gt.f32.partialorder %v364, %v661
        %vm819 = vcmp.gt.f32.partialorder %v364, %v665
        %vm820 = vcmp.gt.f32.partialorder %v364, %v669
        %vm821 = vcmp.gt.f32.partialorder %v364, %v673
        %vm822 = vcmp.gt.f32.partialorder %v364, %v677
        %vm823 = vcmp.gt.f32.partialorder %v364, %v681
        %vm824 = vcmp.gt.f32.partialorder %v364, %v685
        %vm825 = vcmp.gt.f32.partialorder %v364, %v689
        %vm826 = vcmp.gt.f32.partialorder %v364, %v693
        %vm827 = vcmp.gt.f32.partialorder %v364, %v697
        %vm828 = vcmp.gt.f32.partialorder %v364, %v701
        %vm829 = vcmp.gt.f32.partialorder %v364, %v705
        %vm830 = vcmp.gt.f32.partialorder %v364, %v709
        %vm831 = vcmp.gt.f32.partialorder %v364, %v713
        %vm832 = vcmp.gt.f32.partialorder %v364, %v717
        %vm833 = vcmp.gt.f32.partialorder %v364, %v721
        %vm834 = vcmp.gt.f32.partialorder %v369, %v661
        %vm835 = vcmp.gt.f32.partialorder %v369, %v665
        %vm836 = vcmp.gt.f32.partialorder %v369, %v669
        %vm837 = vcmp.gt.f32.partialorder %v369, %v673
        %vm838 = vcmp.gt.f32.partialorder %v369, %v677
        %vm839 = vcmp.gt.f32.partialorder %v369, %v681
        %vm840 = vcmp.gt.f32.partialorder %v369, %v685
        %vm841 = vcmp.gt.f32.partialorder %v369, %v689
        %vm842 = vcmp.gt.f32.partialorder %v369, %v693
        %vm843 = vcmp.gt.f32.partialorder %v369, %v697
        %vm844 = vcmp.gt.f32.partialorder %v369, %v701
        %vm845 = vcmp.gt.f32.partialorder %v369, %v705
        %vm846 = vcmp.gt.f32.partialorder %v369, %v709
        %vm847 = vcmp.gt.f32.partialorder %v369, %v713
        %vm848 = vcmp.gt.f32.partialorder %v369, %v717
        %vm849 = vcmp.gt.f32.partialorder %v369, %v721
        %vm850 = vcmp.gt.f32.partialorder %v374, %v661
        %vm851 = vcmp.gt.f32.partialorder %v374, %v665
        %vm852 = vcmp.gt.f32.partialorder %v374, %v669
        %vm853 = vcmp.gt.f32.partialorder %v374, %v673
        %vm854 = vcmp.gt.f32.partialorder %v374, %v677
        %vm855 = vcmp.gt.f32.partialorder %v374, %v681
        %vm856 = vcmp.gt.f32.partialorder %v374, %v685
        %vm857 = vcmp.gt.f32.partialorder %v374, %v689
        %vm858 = vcmp.gt.f32.partialorder %v374, %v693
        %vm859 = vcmp.gt.f32.partialorder %v374, %v697
        %vm860 = vcmp.gt.f32.partialorder %v374, %v701
        %vm861 = vcmp.gt.f32.partialorder %v374, %v705
        %vm862 = vcmp.gt.f32.partialorder %v374, %v709
        %vm863 = vcmp.gt.f32.partialorder %v374, %v713
        %vm864 = vcmp.gt.f32.partialorder %v374, %v717
        %vm865 = vcmp.gt.f32.partialorder %v374, %v721
        %vm866 = vcmp.gt.f32.partialorder %v379, %v661
        %vm867 = vcmp.gt.f32.partialorder %v379, %v665
        %vm868 = vcmp.gt.f32.partialorder %v379, %v669
        %vm869 = vcmp.gt.f32.partialorder %v379, %v673
        %vm870 = vcmp.gt.f32.partialorder %v379, %v677
        %vm871 = vcmp.gt.f32.partialorder %v379, %v681
        %vm872 = vcmp.gt.f32.partialorder %v379, %v685
        %vm873 = vcmp.gt.f32.partialorder %v379, %v689
        %vm874 = vcmp.gt.f32.partialorder %v379, %v693
        %vm875 = vcmp.gt.f32.partialorder %v379, %v697
        %vm876 = vcmp.gt.f32.partialorder %v379, %v701
        %vm877 = vcmp.gt.f32.partialorder %v379, %v705
        %vm878 = vcmp.gt.f32.partialorder %v379, %v709
        %vm879 = vcmp.gt.f32.partialorder %v379, %v713
        %vm880 = vcmp.gt.f32.partialorder %v379, %v717
        %vm881 = vcmp.gt.f32.partialorder %v379, %v721
        %vm882 = vcmp.gt.f32.partialorder %v384, %v661
        %vm883 = vcmp.gt.f32.partialorder %v384, %v665
        %vm884 = vcmp.gt.f32.partialorder %v384, %v669
        %vm885 = vcmp.gt.f32.partialorder %v384, %v673
        %vm886 = vcmp.gt.f32.partialorder %v384, %v677
        %vm887 = vcmp.gt.f32.partialorder %v384, %v681
        %vm888 = vcmp.gt.f32.partialorder %v384, %v685
        %vm889 = vcmp.gt.f32.partialorder %v384, %v689
        %vm890 = vcmp.gt.f32.partialorder %v384, %v693
        %vm891 = vcmp.gt.f32.partialorder %v384, %v697
        %vm892 = vcmp.gt.f32.partialorder %v384, %v701
        %vm893 = vcmp.gt.f32.partialorder %v384, %v705
        %vm894 = vcmp.gt.f32.partialorder %v384, %v709
        %vm895 = vcmp.gt.f32.partialorder %v384, %v713
        %vm896 = vcmp.gt.f32.partialorder %v384, %v717
        %vm897 = vcmp.gt.f32.partialorder %v384, %v721
        %vm898 = vcmp.gt.f32.partialorder %v389, %v661
        %vm899 = vcmp.gt.f32.partialorder %v389, %v665
        %vm900 = vcmp.gt.f32.partialorder %v389, %v669
        %vm901 = vcmp.gt.f32.partialorder %v389, %v673
        %vm902 = vcmp.gt.f32.partialorder %v389, %v677
        %vm903 = vcmp.gt.f32.partialorder %v389, %v681
        %vm904 = vcmp.gt.f32.partialorder %v389, %v685
        %vm905 = vcmp.gt.f32.partialorder %v389, %v689
        %vm906 = vcmp.gt.f32.partialorder %v389, %v693
        %vm907 = vcmp.gt.f32.partialorder %v389, %v697
        %vm908 = vcmp.gt.f32.partialorder %v389, %v701
        %vm909 = vcmp.gt.f32.partialorder %v389, %v705
        %vm910 = vcmp.gt.f32.partialorder %v389, %v709
        %vm911 = vcmp.gt.f32.partialorder %v389, %v713
        %vm912 = vcmp.gt.f32.partialorder %v389, %v717
        %vm913 = vcmp.gt.f32.partialorder %v389, %v721
        %vm914 = vcmp.gt.f32.partialorder %v394, %v661
        %vm915 = vcmp.gt.f32.partialorder %v394, %v665
        %vm916 = vcmp.gt.f32.partialorder %v394, %v669
        %vm917 = vcmp.gt.f32.partialorder %v394, %v673
        %vm918 = vcmp.gt.f32.partialorder %v394, %v677
        %vm919 = vcmp.gt.f32.partialorder %v394, %v681
        %vm920 = vcmp.gt.f32.partialorder %v394, %v685
        %vm921 = vcmp.gt.f32.partialorder %v394, %v689
        %vm922 = vcmp.gt.f32.partialorder %v394, %v693
        %vm923 = vcmp.gt.f32.partialorder %v394, %v697
        %vm924 = vcmp.gt.f32.partialorder %v394, %v701
        %vm925 = vcmp.gt.f32.partialorder %v394, %v705
        %vm926 = vcmp.gt.f32.partialorder %v394, %v709
        %vm927 = vcmp.gt.f32.partialorder %v394, %v713
        %vm928 = vcmp.gt.f32.partialorder %v394, %v717
        %vm929 = vcmp.gt.f32.partialorder %v394, %v721
        %vm930 = vcmp.gt.f32.partialorder %v399, %v661
        %vm931 = vcmp.gt.f32.partialorder %v399, %v665
        %vm932 = vcmp.gt.f32.partialorder %v399, %v669
        %vm933 = vcmp.gt.f32.partialorder %v399, %v673
        %vm934 = vcmp.gt.f32.partialorder %v399, %v677
        %vm935 = vcmp.gt.f32.partialorder %v399, %v681
        %vm936 = vcmp.gt.f32.partialorder %v399, %v685
        %vm937 = vcmp.gt.f32.partialorder %v399, %v689
        %vm938 = vcmp.gt.f32.partialorder %v399, %v693
        %vm939 = vcmp.gt.f32.partialorder %v399, %v697
        %vm940 = vcmp.gt.f32.partialorder %v399, %v701
        %vm941 = vcmp.gt.f32.partialorder %v399, %v705
        %vm942 = vcmp.gt.f32.partialorder %v399, %v709
        %vm943 = vcmp.gt.f32.partialorder %v399, %v713
        %vm944 = vcmp.gt.f32.partialorder %v399, %v717
        %vm945 = vcmp.gt.f32.partialorder %v399, %v721
        %vm946 = vcmp.gt.f32.partialorder %v404, %v661
        %vm947 = vcmp.gt.f32.partialorder %v404, %v665
        %vm948 = vcmp.gt.f32.partialorder %v404, %v669
        %vm949 = vcmp.gt.f32.partialorder %v404, %v673
        %vm950 = vcmp.gt.f32.partialorder %v404, %v677
        %vm951 = vcmp.gt.f32.partialorder %v404, %v681
        %vm952 = vcmp.gt.f32.partialorder %v404, %v685
        %vm953 = vcmp.gt.f32.partialorder %v404, %v689
        %vm954 = vcmp.gt.f32.partialorder %v404, %v693
        %vm955 = vcmp.gt.f32.partialorder %v404, %v697
        %vm956 = vcmp.gt.f32.partialorder %v404, %v701
        %vm957 = vcmp.gt.f32.partialorder %v404, %v705
        %vm958 = vcmp.gt.f32.partialorder %v404, %v709
        %vm959 = vcmp.gt.f32.partialorder %v404, %v713
        %vm960 = vcmp.gt.f32.partialorder %v404, %v717
        %vm961 = vcmp.gt.f32.partialorder %v404, %v721
        %vm962 = vcmp.gt.f32.partialorder %v409, %v661
        %vm963 = vcmp.gt.f32.partialorder %v409, %v665
        %vm964 = vcmp.gt.f32.partialorder %v409, %v669
        %vm965 = vcmp.gt.f32.partialorder %v409, %v673
        %vm966 = vcmp.gt.f32.partialorder %v409, %v677
        %vm967 = vcmp.gt.f32.partialorder %v409, %v681
        %vm968 = vcmp.gt.f32.partialorder %v409, %v685
        %vm969 = vcmp.gt.f32.partialorder %v409, %v689
        %vm970 = vcmp.gt.f32.partialorder %v409, %v693
        %vm971 = vcmp.gt.f32.partialorder %v409, %v697
        %vm972 = vcmp.gt.f32.partialorder %v409, %v701
        %vm973 = vcmp.gt.f32.partialorder %v409, %v705
        %vm974 = vcmp.gt.f32.partialorder %v409, %v709
        %vm975 = vcmp.gt.f32.partialorder %v409, %v713
        %vm976 = vcmp.gt.f32.partialorder %v409, %v717
        %vm977 = vcmp.gt.f32.partialorder %v409, %v721
        %vm978 = vcmp.gt.f32.partialorder %v414, %v661
        %vm979 = vcmp.gt.f32.partialorder %v414, %v665
        %vm980 = vcmp.gt.f32.partialorder %v414, %v669
        %vm981 = vcmp.gt.f32.partialorder %v414, %v673
        %vm982 = vcmp.gt.f32.partialorder %v414, %v677
        %vm983 = vcmp.gt.f32.partialorder %v414, %v681
        %vm984 = vcmp.gt.f32.partialorder %v414, %v685
        %vm985 = vcmp.gt.f32.partialorder %v414, %v689
        %vm986 = vcmp.gt.f32.partialorder %v414, %v693
        %vm987 = vcmp.gt.f32.partialorder %v414, %v697
        %vm988 = vcmp.gt.f32.partialorder %v414, %v701
        %vm989 = vcmp.gt.f32.partialorder %v414, %v705
        %vm990 = vcmp.gt.f32.partialorder %v414, %v709
        %vm991 = vcmp.gt.f32.partialorder %v414, %v713
        %vm992 = vcmp.gt.f32.partialorder %v414, %v717
        %vm993 = vcmp.gt.f32.partialorder %v414, %v721
        %vm994 = vcmp.gt.f32.partialorder %v419, %v661
        %vm995 = vcmp.gt.f32.partialorder %v419, %v665
        %vm996 = vcmp.gt.f32.partialorder %v419, %v669
        %vm997 = vcmp.gt.f32.partialorder %v419, %v673
        %vm998 = vcmp.gt.f32.partialorder %v419, %v677
        %vm999 = vcmp.gt.f32.partialorder %v419, %v681
        %vm1000 = vcmp.gt.f32.partialorder %v419, %v685
        %vm1001 = vcmp.gt.f32.partialorder %v419, %v689
        %vm1002 = vcmp.gt.f32.partialorder %v419, %v693
        %vm1003 = vcmp.gt.f32.partialorder %v419, %v697
        %vm1004 = vcmp.gt.f32.partialorder %v419, %v701
        %vm1005 = vcmp.gt.f32.partialorder %v419, %v705
        %vm1006 = vcmp.gt.f32.partialorder %v419, %v709
        %vm1007 = vcmp.gt.f32.partialorder %v419, %v713
        %vm1008 = vcmp.gt.f32.partialorder %v419, %v717
        %vm1009 = vcmp.gt.f32.partialorder %v419, %v721
        %vm1010 = vcmp.gt.f32.partialorder %v424, %v661
        %vm1011 = vcmp.gt.f32.partialorder %v424, %v665
        %vm1012 = vcmp.gt.f32.partialorder %v424, %v669
        %vm1013 = vcmp.gt.f32.partialorder %v424, %v673
        %vm1014 = vcmp.gt.f32.partialorder %v424, %v677
        %vm1015 = vcmp.gt.f32.partialorder %v424, %v681
        %vm1016 = vcmp.gt.f32.partialorder %v424, %v685
        %vm1017 = vcmp.gt.f32.partialorder %v424, %v689
        %vm1018 = vcmp.gt.f32.partialorder %v424, %v693
        %vm1019 = vcmp.gt.f32.partialorder %v424, %v697
        %vm1020 = vcmp.gt.f32.partialorder %v424, %v701
        %vm1021 = vcmp.gt.f32.partialorder %v424, %v705
        %vm1022 = vcmp.gt.f32.partialorder %v424, %v709
        %vm1023 = vcmp.gt.f32.partialorder %v424, %v713
        %vm1024 = vcmp.gt.f32.partialorder %v424, %v717
        %vm1025 = vcmp.gt.f32.partialorder %v424, %v721
        %vm1026 = vcmp.gt.f32.partialorder %v429, %v661
        %vm1027 = vcmp.gt.f32.partialorder %v429, %v665
        %vm1028 = vcmp.gt.f32.partialorder %v429, %v669
        %vm1029 = vcmp.gt.f32.partialorder %v429, %v673
        %vm1030 = vcmp.gt.f32.partialorder %v429, %v677
        %vm1031 = vcmp.gt.f32.partialorder %v429, %v681
        %vm1032 = vcmp.gt.f32.partialorder %v429, %v685
        %vm1033 = vcmp.gt.f32.partialorder %v429, %v689
        %vm1034 = vcmp.gt.f32.partialorder %v429, %v693
        %vm1035 = vcmp.gt.f32.partialorder %v429, %v697
        %vm1036 = vcmp.gt.f32.partialorder %v429, %v701
        %vm1037 = vcmp.gt.f32.partialorder %v429, %v705
        %vm1038 = vcmp.gt.f32.partialorder %v429, %v709
        %vm1039 = vcmp.gt.f32.partialorder %v429, %v713
        %vm1040 = vcmp.gt.f32.partialorder %v429, %v717
        %vm1041 = vcmp.gt.f32.partialorder %v429, %v721
        %vm1042 = vcmp.gt.f32.partialorder %v434, %v661
        %vm1043 = vcmp.gt.f32.partialorder %v434, %v665
        %vm1044 = vcmp.gt.f32.partialorder %v434, %v669
        %vm1045 = vcmp.gt.f32.partialorder %v434, %v673
        %vm1046 = vcmp.gt.f32.partialorder %v434, %v677
        %vm1047 = vcmp.gt.f32.partialorder %v434, %v681
        %vm1048 = vcmp.gt.f32.partialorder %v434, %v685
        %vm1049 = vcmp.gt.f32.partialorder %v434, %v689
        %vm1050 = vcmp.gt.f32.partialorder %v434, %v693
        %vm1051 = vcmp.gt.f32.partialorder %v434, %v697
        %vm1052 = vcmp.gt.f32.partialorder %v434, %v701
        %vm1053 = vcmp.gt.f32.partialorder %v434, %v705
        %vm1054 = vcmp.gt.f32.partialorder %v434, %v709
        %vm1055 = vcmp.gt.f32.partialorder %v434, %v713
        %vm1056 = vcmp.gt.f32.partialorder %v434, %v717
        %vm1057 = vcmp.gt.f32.partialorder %v434, %v721
        %vm1058 = vcmp.gt.f32.partialorder %v439, %v661
        %vm1059 = vcmp.gt.f32.partialorder %v439, %v665
        %vm1060 = vcmp.gt.f32.partialorder %v439, %v669
        %vm1061 = vcmp.gt.f32.partialorder %v439, %v673
        %vm1062 = vcmp.gt.f32.partialorder %v439, %v677
        %vm1063 = vcmp.gt.f32.partialorder %v439, %v681
        %vm1064 = vcmp.gt.f32.partialorder %v439, %v685
        %vm1065 = vcmp.gt.f32.partialorder %v439, %v689
        %vm1066 = vcmp.gt.f32.partialorder %v439, %v693
        %vm1067 = vcmp.gt.f32.partialorder %v439, %v697
        %vm1068 = vcmp.gt.f32.partialorder %v439, %v701
        %vm1069 = vcmp.gt.f32.partialorder %v439, %v705
        %vm1070 = vcmp.gt.f32.partialorder %v439, %v709
        %vm1071 = vcmp.gt.f32.partialorder %v439, %v713
        %vm1072 = vcmp.gt.f32.partialorder %v439, %v717
        %vm1073 = vcmp.gt.f32.partialorder %v439, %v721
        %vm1074 = vcmp.gt.f32.partialorder %v444, %v661
        %vm1075 = vcmp.gt.f32.partialorder %v444, %v665
        %vm1076 = vcmp.gt.f32.partialorder %v444, %v669
        %vm1077 = vcmp.gt.f32.partialorder %v444, %v673
        %vm1078 = vcmp.gt.f32.partialorder %v444, %v677
        %vm1079 = vcmp.gt.f32.partialorder %v444, %v681
        %vm1080 = vcmp.gt.f32.partialorder %v444, %v685
        %vm1081 = vcmp.gt.f32.partialorder %v444, %v689
        %vm1082 = vcmp.gt.f32.partialorder %v444, %v693
        %vm1083 = vcmp.gt.f32.partialorder %v444, %v697
        %vm1084 = vcmp.gt.f32.partialorder %v444, %v701
        %vm1085 = vcmp.gt.f32.partialorder %v444, %v705
        %vm1086 = vcmp.gt.f32.partialorder %v444, %v709
        %vm1087 = vcmp.gt.f32.partialorder %v444, %v713
        %vm1088 = vcmp.gt.f32.partialorder %v444, %v717
        %vm1089 = vcmp.gt.f32.partialorder %v444, %v721
        %vm1090 = vcmp.gt.f32.partialorder %v449, %v661
        %vm1091 = vcmp.gt.f32.partialorder %v449, %v665
        %vm1092 = vcmp.gt.f32.partialorder %v449, %v669
        %vm1093 = vcmp.gt.f32.partialorder %v449, %v673
        %vm1094 = vcmp.gt.f32.partialorder %v449, %v677
        %vm1095 = vcmp.gt.f32.partialorder %v449, %v681
        %vm1096 = vcmp.gt.f32.partialorder %v449, %v685
        %vm1097 = vcmp.gt.f32.partialorder %v449, %v689
        %vm1098 = vcmp.gt.f32.partialorder %v449, %v693
        %vm1099 = vcmp.gt.f32.partialorder %v449, %v697
        %vm1100 = vcmp.gt.f32.partialorder %v449, %v701
        %vm1101 = vcmp.gt.f32.partialorder %v449, %v705
        %vm1102 = vcmp.gt.f32.partialorder %v449, %v709
        %vm1103 = vcmp.gt.f32.partialorder %v449, %v713
        %vm1104 = vcmp.gt.f32.partialorder %v449, %v717
        %vm1105 = vcmp.gt.f32.partialorder %v449, %v721
        %vm1106 = vcmp.gt.f32.partialorder %v454, %v661
        %vm1107 = vcmp.gt.f32.partialorder %v454, %v665
        %vm1108 = vcmp.gt.f32.partialorder %v454, %v669
        %vm1109 = vcmp.gt.f32.partialorder %v454, %v673
        %vm1110 = vcmp.gt.f32.partialorder %v454, %v677
        %vm1111 = vcmp.gt.f32.partialorder %v454, %v681
        %vm1112 = vcmp.gt.f32.partialorder %v454, %v685
        %vm1113 = vcmp.gt.f32.partialorder %v454, %v689
        %vm1114 = vcmp.gt.f32.partialorder %v454, %v693
        %vm1115 = vcmp.gt.f32.partialorder %v454, %v697
        %vm1116 = vcmp.gt.f32.partialorder %v454, %v701
        %vm1117 = vcmp.gt.f32.partialorder %v454, %v705
        %vm1118 = vcmp.gt.f32.partialorder %v454, %v709
        %vm1119 = vcmp.gt.f32.partialorder %v454, %v713
        %vm1120 = vcmp.gt.f32.partialorder %v454, %v717
        %vm1121 = vcmp.gt.f32.partialorder %v454, %v721
        %vm1122 = vcmp.gt.f32.partialorder %v459, %v661
        %vm1123 = vcmp.gt.f32.partialorder %v459, %v665
        %vm1124 = vcmp.gt.f32.partialorder %v459, %v669
        %vm1125 = vcmp.gt.f32.partialorder %v459, %v673
        %vm1126 = vcmp.gt.f32.partialorder %v459, %v677
        %vm1127 = vcmp.gt.f32.partialorder %v459, %v681
        %vm1128 = vcmp.gt.f32.partialorder %v459, %v685
        %vm1129 = vcmp.gt.f32.partialorder %v459, %v689
        %vm1130 = vcmp.gt.f32.partialorder %v459, %v693
        %vm1131 = vcmp.gt.f32.partialorder %v459, %v697
        %vm1132 = vcmp.gt.f32.partialorder %v459, %v701
        %vm1133 = vcmp.gt.f32.partialorder %v459, %v705
        %vm1134 = vcmp.gt.f32.partialorder %v459, %v709
        %vm1135 = vcmp.gt.f32.partialorder %v459, %v713
        %vm1136 = vcmp.gt.f32.partialorder %v459, %v717
        %vm1137 = vcmp.gt.f32.partialorder %v459, %v721
        %vm1138 = vcmp.gt.f32.partialorder %v464, %v661
        %vm1139 = vcmp.gt.f32.partialorder %v464, %v665
        %vm1140 = vcmp.gt.f32.partialorder %v464, %v669
        %vm1141 = vcmp.gt.f32.partialorder %v464, %v673
        %vm1142 = vcmp.gt.f32.partialorder %v464, %v677
        %vm1143 = vcmp.gt.f32.partialorder %v464, %v681
        %vm1144 = vcmp.gt.f32.partialorder %v464, %v685
        %vm1145 = vcmp.gt.f32.partialorder %v464, %v689
        %vm1146 = vcmp.gt.f32.partialorder %v464, %v693
        %vm1147 = vcmp.gt.f32.partialorder %v464, %v697
        %vm1148 = vcmp.gt.f32.partialorder %v464, %v701
        %vm1149 = vcmp.gt.f32.partialorder %v464, %v705
        %vm1150 = vcmp.gt.f32.partialorder %v464, %v709
        %vm1151 = vcmp.gt.f32.partialorder %v464, %v713
        %vm1152 = vcmp.gt.f32.partialorder %v464, %v717
        %vm1153 = vcmp.gt.f32.partialorder %v464, %v721
        %vm1154 = vcmp.gt.f32.partialorder %v469, %v661
        %vm1155 = vcmp.gt.f32.partialorder %v469, %v665
        %vm1156 = vcmp.gt.f32.partialorder %v469, %v669
        %vm1157 = vcmp.gt.f32.partialorder %v469, %v673
        %vm1158 = vcmp.gt.f32.partialorder %v469, %v677
        %vm1159 = vcmp.gt.f32.partialorder %v469, %v681
        %vm1160 = vcmp.gt.f32.partialorder %v469, %v685
        %vm1161 = vcmp.gt.f32.partialorder %v469, %v689
        %vm1162 = vcmp.gt.f32.partialorder %v469, %v693
        %vm1163 = vcmp.gt.f32.partialorder %v469, %v697
        %vm1164 = vcmp.gt.f32.partialorder %v469, %v701
        %vm1165 = vcmp.gt.f32.partialorder %v469, %v705
        %vm1166 = vcmp.gt.f32.partialorder %v469, %v709
        %vm1167 = vcmp.gt.f32.partialorder %v469, %v713
        %vm1168 = vcmp.gt.f32.partialorder %v469, %v717
        %vm1169 = vcmp.gt.f32.partialorder %v469, %v721
        %vm1170 = vcmp.gt.f32.partialorder %v474, %v661
        %vm1171 = vcmp.gt.f32.partialorder %v474, %v665
        %vm1172 = vcmp.gt.f32.partialorder %v474, %v669
        %vm1173 = vcmp.gt.f32.partialorder %v474, %v673
        %vm1174 = vcmp.gt.f32.partialorder %v474, %v677
        %vm1175 = vcmp.gt.f32.partialorder %v474, %v681
        %vm1176 = vcmp.gt.f32.partialorder %v474, %v685
        %vm1177 = vcmp.gt.f32.partialorder %v474, %v689
        %vm1178 = vcmp.gt.f32.partialorder %v474, %v693
        %vm1179 = vcmp.gt.f32.partialorder %v474, %v697
        %vm1180 = vcmp.gt.f32.partialorder %v474, %v701
        %vm1181 = vcmp.gt.f32.partialorder %v474, %v705
        %vm1182 = vcmp.gt.f32.partialorder %v474, %v709
        %vm1183 = vcmp.gt.f32.partialorder %v474, %v713
        %vm1184 = vcmp.gt.f32.partialorder %v474, %v717
        %vm1185 = vcmp.gt.f32.partialorder %v474, %v721
        %vm1186 = vcmp.gt.f32.partialorder %v479, %v661
        %vm1187 = vcmp.gt.f32.partialorder %v479, %v665
        %vm1188 = vcmp.gt.f32.partialorder %v479, %v669
        %vm1189 = vcmp.gt.f32.partialorder %v479, %v673
        %vm1190 = vcmp.gt.f32.partialorder %v479, %v677
        %vm1191 = vcmp.gt.f32.partialorder %v479, %v681
        %vm1192 = vcmp.gt.f32.partialorder %v479, %v685
        %vm1193 = vcmp.gt.f32.partialorder %v479, %v689
        %vm1194 = vcmp.gt.f32.partialorder %v479, %v693
        %vm1195 = vcmp.gt.f32.partialorder %v479, %v697
        %vm1196 = vcmp.gt.f32.partialorder %v479, %v701
        %vm1197 = vcmp.gt.f32.partialorder %v479, %v705
        %vm1198 = vcmp.gt.f32.partialorder %v479, %v709
        %vm1199 = vcmp.gt.f32.partialorder %v479, %v713
        %vm1200 = vcmp.gt.f32.partialorder %v479, %v717
        %vm1201 = vcmp.gt.f32.partialorder %v479, %v721
        %vm1202 = vcmp.gt.f32.partialorder %v484, %v661
        %vm1203 = vcmp.gt.f32.partialorder %v484, %v665
        %vm1204 = vcmp.gt.f32.partialorder %v484, %v669
        %vm1205 = vcmp.gt.f32.partialorder %v484, %v673
        %vm1206 = vcmp.gt.f32.partialorder %v484, %v677
        %vm1207 = vcmp.gt.f32.partialorder %v484, %v681
        %vm1208 = vcmp.gt.f32.partialorder %v484, %v685
        %vm1209 = vcmp.gt.f32.partialorder %v484, %v689
        %vm1210 = vcmp.gt.f32.partialorder %v484, %v693
        %vm1211 = vcmp.gt.f32.partialorder %v484, %v697
        %vm1212 = vcmp.gt.f32.partialorder %v484, %v701
        %vm1213 = vcmp.gt.f32.partialorder %v484, %v705
        %vm1214 = vcmp.gt.f32.partialorder %v484, %v709
        %vm1215 = vcmp.gt.f32.partialorder %v484, %v713
        %vm1216 = vcmp.gt.f32.partialorder %v484, %v717
        %vm1217 = vcmp.gt.f32.partialorder %v484, %v721
        %vm1218 = vcmp.gt.f32.partialorder %v489, %v661
        %vm1219 = vcmp.gt.f32.partialorder %v489, %v665
        %vm1220 = vcmp.gt.f32.partialorder %v489, %v669
        %vm1221 = vcmp.gt.f32.partialorder %v489, %v673
        %vm1222 = vcmp.gt.f32.partialorder %v489, %v677
        %vm1223 = vcmp.gt.f32.partialorder %v489, %v681
        %vm1224 = vcmp.gt.f32.partialorder %v489, %v685
        %vm1225 = vcmp.gt.f32.partialorder %v489, %v689
        %vm1226 = vcmp.gt.f32.partialorder %v489, %v693
        %vm1227 = vcmp.gt.f32.partialorder %v489, %v697
        %vm1228 = vcmp.gt.f32.partialorder %v489, %v701
        %vm1229 = vcmp.gt.f32.partialorder %v489, %v705
        %vm1230 = vcmp.gt.f32.partialorder %v489, %v709
        %vm1231 = vcmp.gt.f32.partialorder %v489, %v713
        %vm1232 = vcmp.gt.f32.partialorder %v489, %v717
        %vm1233 = vcmp.gt.f32.partialorder %v489, %v721
        %vm1234 = vcmp.gt.f32.partialorder %v494, %v661
        %vm1235 = vcmp.gt.f32.partialorder %v494, %v665
        %vm1236 = vcmp.gt.f32.partialorder %v494, %v669
        %vm1237 = vcmp.gt.f32.partialorder %v494, %v673
        %vm1238 = vcmp.gt.f32.partialorder %v494, %v677
        %vm1239 = vcmp.gt.f32.partialorder %v494, %v681
        %vm1240 = vcmp.gt.f32.partialorder %v494, %v685
        %vm1241 = vcmp.gt.f32.partialorder %v494, %v689
        %vm1242 = vcmp.gt.f32.partialorder %v494, %v693
        %vm1243 = vcmp.gt.f32.partialorder %v494, %v697
        %vm1244 = vcmp.gt.f32.partialorder %v494, %v701
        %vm1245 = vcmp.gt.f32.partialorder %v494, %v705
        %vm1246 = vcmp.gt.f32.partialorder %v494, %v709
        %vm1247 = vcmp.gt.f32.partialorder %v494, %v713
        %vm1248 = vcmp.gt.f32.partialorder %v494, %v717
        %vm1249 = vcmp.gt.f32.partialorder %v494, %v721
        %vm1250 = vcmp.gt.f32.partialorder %v499, %v661
        %vm1251 = vcmp.gt.f32.partialorder %v499, %v665
        %vm1252 = vcmp.gt.f32.partialorder %v499, %v669
        %vm1253 = vcmp.gt.f32.partialorder %v499, %v673
        %vm1254 = vcmp.gt.f32.partialorder %v499, %v677
        %vm1255 = vcmp.gt.f32.partialorder %v499, %v681
        %vm1256 = vcmp.gt.f32.partialorder %v499, %v685
        %vm1257 = vcmp.gt.f32.partialorder %v499, %v689
        %vm1258 = vcmp.gt.f32.partialorder %v499, %v693
        %vm1259 = vcmp.gt.f32.partialorder %v499, %v697
        %vm1260 = vcmp.gt.f32.partialorder %v499, %v701
        %vm1261 = vcmp.gt.f32.partialorder %v499, %v705
        %vm1262 = vcmp.gt.f32.partialorder %v499, %v709
        %vm1263 = vcmp.gt.f32.partialorder %v499, %v713
        %vm1264 = vcmp.gt.f32.partialorder %v499, %v717
        %vm1265 = vcmp.gt.f32.partialorder %v499, %v721
        %vm1266 = vcmp.gt.f32.partialorder %v504, %v661
        %vm1267 = vcmp.gt.f32.partialorder %v504, %v665
        %vm1268 = vcmp.gt.f32.partialorder %v504, %v669
        %vm1269 = vcmp.gt.f32.partialorder %v504, %v673
        %vm1270 = vcmp.gt.f32.partialorder %v504, %v677
        %vm1271 = vcmp.gt.f32.partialorder %v504, %v681
        %vm1272 = vcmp.gt.f32.partialorder %v504, %v685
        %vm1273 = vcmp.gt.f32.partialorder %v504, %v689
        %vm1274 = vcmp.gt.f32.partialorder %v504, %v693
        %vm1275 = vcmp.gt.f32.partialorder %v504, %v697
        %vm1276 = vcmp.gt.f32.partialorder %v504, %v701
        %vm1277 = vcmp.gt.f32.partialorder %v504, %v705
        %vm1278 = vcmp.gt.f32.partialorder %v504, %v709
        %vm1279 = vcmp.gt.f32.partialorder %v504, %v713
        %vm1280 = vcmp.gt.f32.partialorder %v504, %v717
        %vm1281 = vcmp.gt.f32.partialorder %v504, %v721
        %vm1282 = vcmp.gt.f32.partialorder %v509, %v661
        %vm1283 = vcmp.gt.f32.partialorder %v509, %v665
        %vm1284 = vcmp.gt.f32.partialorder %v509, %v669
        %vm1285 = vcmp.gt.f32.partialorder %v509, %v673
        %vm1286 = vcmp.gt.f32.partialorder %v509, %v677
        %vm1287 = vcmp.gt.f32.partialorder %v509, %v681
        %vm1288 = vcmp.gt.f32.partialorder %v509, %v685
        %vm1289 = vcmp.gt.f32.partialorder %v509, %v689
        %vm1290 = vcmp.gt.f32.partialorder %v509, %v693
        %vm1291 = vcmp.gt.f32.partialorder %v509, %v697
        %vm1292 = vcmp.gt.f32.partialorder %v509, %v701
        %vm1293 = vcmp.gt.f32.partialorder %v509, %v705
        %vm1294 = vcmp.gt.f32.partialorder %v509, %v709
        %vm1295 = vcmp.gt.f32.partialorder %v509, %v713
        %vm1296 = vcmp.gt.f32.partialorder %v509, %v717
        %vm1297 = vcmp.gt.f32.partialorder %v509, %v721
        %vm1298 = vcmp.gt.f32.partialorder %v514, %v661
        %vm1299 = vcmp.gt.f32.partialorder %v514, %v665
        %vm1300 = vcmp.gt.f32.partialorder %v514, %v669
        %vm1301 = vcmp.gt.f32.partialorder %v514, %v673
        %vm1302 = vcmp.gt.f32.partialorder %v514, %v677
        %vm1303 = vcmp.gt.f32.partialorder %v514, %v681
        %vm1304 = vcmp.gt.f32.partialorder %v514, %v685
        %vm1305 = vcmp.gt.f32.partialorder %v514, %v689
        %vm1306 = vcmp.gt.f32.partialorder %v514, %v693
        %vm1307 = vcmp.gt.f32.partialorder %v514, %v697
        %vm1308 = vcmp.gt.f32.partialorder %v514, %v701
        %vm1309 = vcmp.gt.f32.partialorder %v514, %v705
        %vm1310 = vcmp.gt.f32.partialorder %v514, %v709
        %vm1311 = vcmp.gt.f32.partialorder %v514, %v713
        %vm1312 = vcmp.gt.f32.partialorder %v514, %v717
        %vm1313 = vcmp.gt.f32.partialorder %v514, %v721
        %vm1314 = vcmp.gt.f32.partialorder %v519, %v661
        %vm1315 = vcmp.gt.f32.partialorder %v519, %v665
        %vm1316 = vcmp.gt.f32.partialorder %v519, %v669
        %vm1317 = vcmp.gt.f32.partialorder %v519, %v673
        %vm1318 = vcmp.gt.f32.partialorder %v519, %v677
        %vm1319 = vcmp.gt.f32.partialorder %v519, %v681
        %vm1320 = vcmp.gt.f32.partialorder %v519, %v685
        %vm1321 = vcmp.gt.f32.partialorder %v519, %v689
        %vm1322 = vcmp.gt.f32.partialorder %v519, %v693
        %vm1323 = vcmp.gt.f32.partialorder %v519, %v697
        %vm1324 = vcmp.gt.f32.partialorder %v519, %v701
        %vm1325 = vcmp.gt.f32.partialorder %v519, %v705
        %vm1326 = vcmp.gt.f32.partialorder %v519, %v709
        %vm1327 = vcmp.gt.f32.partialorder %v519, %v713
        %vm1328 = vcmp.gt.f32.partialorder %v519, %v717
        %vm1329 = vcmp.gt.f32.partialorder %v519, %v721
        %vm1330 = vcmp.gt.f32.partialorder %v524, %v661
        %vm1331 = vcmp.gt.f32.partialorder %v524, %v665
        %vm1332 = vcmp.gt.f32.partialorder %v524, %v669
        %vm1333 = vcmp.gt.f32.partialorder %v524, %v673
        %vm1334 = vcmp.gt.f32.partialorder %v524, %v677
        %vm1335 = vcmp.gt.f32.partialorder %v524, %v681
        %vm1336 = vcmp.gt.f32.partialorder %v524, %v685
        %vm1337 = vcmp.gt.f32.partialorder %v524, %v689
        %vm1338 = vcmp.gt.f32.partialorder %v524, %v693
        %vm1339 = vcmp.gt.f32.partialorder %v524, %v697
        %vm1340 = vcmp.gt.f32.partialorder %v524, %v701
        %vm1341 = vcmp.gt.f32.partialorder %v524, %v705
        %vm1342 = vcmp.gt.f32.partialorder %v524, %v709
        %vm1343 = vcmp.gt.f32.partialorder %v524, %v713
        %vm1344 = vcmp.gt.f32.partialorder %v524, %v717
        %vm1345 = vcmp.gt.f32.partialorder %v524, %v721
        %vm1346 = vcmp.gt.f32.partialorder %v529, %v661
        %vm1347 = vcmp.gt.f32.partialorder %v529, %v665
        %vm1348 = vcmp.gt.f32.partialorder %v529, %v669
        %vm1349 = vcmp.gt.f32.partialorder %v529, %v673
        %vm1350 = vcmp.gt.f32.partialorder %v529, %v677
        %vm1351 = vcmp.gt.f32.partialorder %v529, %v681
        %vm1352 = vcmp.gt.f32.partialorder %v529, %v685
        %vm1353 = vcmp.gt.f32.partialorder %v529, %v689
        %vm1354 = vcmp.gt.f32.partialorder %v529, %v693
        %vm1355 = vcmp.gt.f32.partialorder %v529, %v697
        %vm1356 = vcmp.gt.f32.partialorder %v529, %v701
        %vm1357 = vcmp.gt.f32.partialorder %v529, %v705
        %vm1358 = vcmp.gt.f32.partialorder %v529, %v709
        %vm1359 = vcmp.gt.f32.partialorder %v529, %v713
        %vm1360 = vcmp.gt.f32.partialorder %v529, %v717
        %vm1361 = vcmp.gt.f32.partialorder %v529, %v721
        %vm1362 = vcmp.gt.f32.partialorder %v534, %v661
        %vm1363 = vcmp.gt.f32.partialorder %v534, %v665
        %vm1364 = vcmp.gt.f32.partialorder %v534, %v669
        %vm1365 = vcmp.gt.f32.partialorder %v534, %v673
        %vm1366 = vcmp.gt.f32.partialorder %v534, %v677
        %vm1367 = vcmp.gt.f32.partialorder %v534, %v681
        %vm1368 = vcmp.gt.f32.partialorder %v534, %v685
        %vm1369 = vcmp.gt.f32.partialorder %v534, %v689
        %vm1370 = vcmp.gt.f32.partialorder %v534, %v693
        %vm1371 = vcmp.gt.f32.partialorder %v534, %v697
        %vm1372 = vcmp.gt.f32.partialorder %v534, %v701
        %vm1373 = vcmp.gt.f32.partialorder %v534, %v705
        %vm1374 = vcmp.gt.f32.partialorder %v534, %v709
        %vm1375 = vcmp.gt.f32.partialorder %v534, %v713
        %vm1376 = vcmp.gt.f32.partialorder %v534, %v717
        %vm1377 = vcmp.gt.f32.partialorder %v534, %v721
        %vm1378 = vcmp.gt.f32.partialorder %v539, %v661
        %vm1379 = vcmp.gt.f32.partialorder %v539, %v665
        %vm1380 = vcmp.gt.f32.partialorder %v539, %v669
        %vm1381 = vcmp.gt.f32.partialorder %v539, %v673
        %vm1382 = vcmp.gt.f32.partialorder %v539, %v677
        %vm1383 = vcmp.gt.f32.partialorder %v539, %v681
        %vm1384 = vcmp.gt.f32.partialorder %v539, %v685
        %vm1385 = vcmp.gt.f32.partialorder %v539, %v689
        %vm1386 = vcmp.gt.f32.partialorder %v539, %v693
        %vm1387 = vcmp.gt.f32.partialorder %v539, %v697
        %vm1388 = vcmp.gt.f32.partialorder %v539, %v701
        %vm1389 = vcmp.gt.f32.partialorder %v539, %v705
        %vm1390 = vcmp.gt.f32.partialorder %v539, %v709
        %vm1391 = vcmp.gt.f32.partialorder %v539, %v713
        %vm1392 = vcmp.gt.f32.partialorder %v539, %v717
        %vm1393 = vcmp.gt.f32.partialorder %v539, %v721
        %vm1394 = vcmp.gt.f32.partialorder %v544, %v661
        %vm1395 = vcmp.gt.f32.partialorder %v544, %v665
        %vm1396 = vcmp.gt.f32.partialorder %v544, %v669
        %vm1397 = vcmp.gt.f32.partialorder %v544, %v673
        %vm1398 = vcmp.gt.f32.partialorder %v544, %v677
        %vm1399 = vcmp.gt.f32.partialorder %v544, %v681
        %vm1400 = vcmp.gt.f32.partialorder %v544, %v685
        %vm1401 = vcmp.gt.f32.partialorder %v544, %v689
        %vm1402 = vcmp.gt.f32.partialorder %v544, %v693
        %vm1403 = vcmp.gt.f32.partialorder %v544, %v697
        %vm1404 = vcmp.gt.f32.partialorder %v544, %v701
        %vm1405 = vcmp.gt.f32.partialorder %v544, %v705
        %vm1406 = vcmp.gt.f32.partialorder %v544, %v709
        %vm1407 = vcmp.gt.f32.partialorder %v544, %v713
        %vm1408 = vcmp.gt.f32.partialorder %v544, %v717
        %vm1409 = vcmp.gt.f32.partialorder %v544, %v721
        %vm1410 = vcmp.gt.f32.partialorder %v549, %v661
        %vm1411 = vcmp.gt.f32.partialorder %v549, %v665
        %vm1412 = vcmp.gt.f32.partialorder %v549, %v669
        %vm1413 = vcmp.gt.f32.partialorder %v549, %v673
        %vm1414 = vcmp.gt.f32.partialorder %v549, %v677
        %vm1415 = vcmp.gt.f32.partialorder %v549, %v681
        %vm1416 = vcmp.gt.f32.partialorder %v549, %v685
        %vm1417 = vcmp.gt.f32.partialorder %v549, %v689
        %vm1418 = vcmp.gt.f32.partialorder %v549, %v693
        %vm1419 = vcmp.gt.f32.partialorder %v549, %v697
        %vm1420 = vcmp.gt.f32.partialorder %v549, %v701
        %vm1421 = vcmp.gt.f32.partialorder %v549, %v705
        %vm1422 = vcmp.gt.f32.partialorder %v549, %v709
        %vm1423 = vcmp.gt.f32.partialorder %v549, %v713
        %vm1424 = vcmp.gt.f32.partialorder %v549, %v717
        %vm1425 = vcmp.gt.f32.partialorder %v549, %v721
        %vm1426 = vcmp.gt.f32.partialorder %v554, %v661
        %vm1427 = vcmp.gt.f32.partialorder %v554, %v665
        %vm1428 = vcmp.gt.f32.partialorder %v554, %v669
        %vm1429 = vcmp.gt.f32.partialorder %v554, %v673
        %vm1430 = vcmp.gt.f32.partialorder %v554, %v677
        %vm1431 = vcmp.gt.f32.partialorder %v554, %v681
        %vm1432 = vcmp.gt.f32.partialorder %v554, %v685
        %vm1433 = vcmp.gt.f32.partialorder %v554, %v689
        %vm1434 = vcmp.gt.f32.partialorder %v554, %v693
        %vm1435 = vcmp.gt.f32.partialorder %v554, %v697
        %vm1436 = vcmp.gt.f32.partialorder %v554, %v701
        %vm1437 = vcmp.gt.f32.partialorder %v554, %v705
        %vm1438 = vcmp.gt.f32.partialorder %v554, %v709
        %vm1439 = vcmp.gt.f32.partialorder %v554, %v713
        %vm1440 = vcmp.gt.f32.partialorder %v554, %v717
        %vm1441 = vcmp.gt.f32.partialorder %v554, %v721
        %vm1442 = vcmp.gt.f32.partialorder %v559, %v661
        %vm1443 = vcmp.gt.f32.partialorder %v559, %v665
        %vm1444 = vcmp.gt.f32.partialorder %v559, %v669
        %vm1445 = vcmp.gt.f32.partialorder %v559, %v673
        %vm1446 = vcmp.gt.f32.partialorder %v559, %v677
        %vm1447 = vcmp.gt.f32.partialorder %v559, %v681
        %vm1448 = vcmp.gt.f32.partialorder %v559, %v685
        %vm1449 = vcmp.gt.f32.partialorder %v559, %v689
        %vm1450 = vcmp.gt.f32.partialorder %v559, %v693
        %vm1451 = vcmp.gt.f32.partialorder %v559, %v697
        %vm1452 = vcmp.gt.f32.partialorder %v559, %v701
        %vm1453 = vcmp.gt.f32.partialorder %v559, %v705
        %vm1454 = vcmp.gt.f32.partialorder %v559, %v709
        %vm1455 = vcmp.gt.f32.partialorder %v559, %v713
        %vm1456 = vcmp.gt.f32.partialorder %v559, %v717
        %vm1457 = vcmp.gt.f32.partialorder %v559, %v721
        %vm1458 = vcmp.gt.f32.partialorder %v564, %v661
        %vm1459 = vcmp.gt.f32.partialorder %v564, %v665
        %vm1460 = vcmp.gt.f32.partialorder %v564, %v669
        %vm1461 = vcmp.gt.f32.partialorder %v564, %v673
        %vm1462 = vcmp.gt.f32.partialorder %v564, %v677
        %vm1463 = vcmp.gt.f32.partialorder %v564, %v681
        %vm1464 = vcmp.gt.f32.partialorder %v564, %v685
        %vm1465 = vcmp.gt.f32.partialorder %v564, %v689
        %vm1466 = vcmp.gt.f32.partialorder %v564, %v693
        %vm1467 = vcmp.gt.f32.partialorder %v564, %v697
        %vm1468 = vcmp.gt.f32.partialorder %v564, %v701
        %vm1469 = vcmp.gt.f32.partialorder %v564, %v705
        %vm1470 = vcmp.gt.f32.partialorder %v564, %v709
        %vm1471 = vcmp.gt.f32.partialorder %v564, %v713
        %vm1472 = vcmp.gt.f32.partialorder %v564, %v717
        %vm1473 = vcmp.gt.f32.partialorder %v564, %v721
        %vm1474 = vcmp.gt.f32.partialorder %v569, %v661
        %vm1475 = vcmp.gt.f32.partialorder %v569, %v665
        %vm1476 = vcmp.gt.f32.partialorder %v569, %v669
        %vm1477 = vcmp.gt.f32.partialorder %v569, %v673
        %vm1478 = vcmp.gt.f32.partialorder %v569, %v677
        %vm1479 = vcmp.gt.f32.partialorder %v569, %v681
        %vm1480 = vcmp.gt.f32.partialorder %v569, %v685
        %vm1481 = vcmp.gt.f32.partialorder %v569, %v689
        %vm1482 = vcmp.gt.f32.partialorder %v569, %v693
        %vm1483 = vcmp.gt.f32.partialorder %v569, %v697
        %vm1484 = vcmp.gt.f32.partialorder %v569, %v701
        %vm1485 = vcmp.gt.f32.partialorder %v569, %v705
        %vm1486 = vcmp.gt.f32.partialorder %v569, %v709
        %vm1487 = vcmp.gt.f32.partialorder %v569, %v713
        %vm1488 = vcmp.gt.f32.partialorder %v569, %v717
        %vm1489 = vcmp.gt.f32.partialorder %v569, %v721
        %vm1490 = vcmp.gt.f32.partialorder %v574, %v661
        %vm1491 = vcmp.gt.f32.partialorder %v574, %v665
        %vm1492 = vcmp.gt.f32.partialorder %v574, %v669
        %vm1493 = vcmp.gt.f32.partialorder %v574, %v673
        %vm1494 = vcmp.gt.f32.partialorder %v574, %v677
        %vm1495 = vcmp.gt.f32.partialorder %v574, %v681
        %vm1496 = vcmp.gt.f32.partialorder %v574, %v685
        %vm1497 = vcmp.gt.f32.partialorder %v574, %v689
        %vm1498 = vcmp.gt.f32.partialorder %v574, %v693
        %vm1499 = vcmp.gt.f32.partialorder %v574, %v697
        %vm1500 = vcmp.gt.f32.partialorder %v574, %v701
        %vm1501 = vcmp.gt.f32.partialorder %v574, %v705
        %vm1502 = vcmp.gt.f32.partialorder %v574, %v709
        %vm1503 = vcmp.gt.f32.partialorder %v574, %v713
        %vm1504 = vcmp.gt.f32.partialorder %v574, %v717
        %vm1505 = vcmp.gt.f32.partialorder %v574, %v721
        %vm1506 = vcmp.gt.f32.partialorder %v579, %v661
        %vm1507 = vcmp.gt.f32.partialorder %v579, %v665
        %vm1508 = vcmp.gt.f32.partialorder %v579, %v669
        %vm1509 = vcmp.gt.f32.partialorder %v579, %v673
        %vm1510 = vcmp.gt.f32.partialorder %v579, %v677
        %vm1511 = vcmp.gt.f32.partialorder %v579, %v681
        %vm1512 = vcmp.gt.f32.partialorder %v579, %v685
        %vm1513 = vcmp.gt.f32.partialorder %v579, %v689
        %vm1514 = vcmp.gt.f32.partialorder %v579, %v693
        %vm1515 = vcmp.gt.f32.partialorder %v579, %v697
        %vm1516 = vcmp.gt.f32.partialorder %v579, %v701
        %vm1517 = vcmp.gt.f32.partialorder %v579, %v705
        %vm1518 = vcmp.gt.f32.partialorder %v579, %v709
        %vm1519 = vcmp.gt.f32.partialorder %v579, %v713
        %vm1520 = vcmp.gt.f32.partialorder %v579, %v717
        %vm1521 = vcmp.gt.f32.partialorder %v579, %v721
        %vm1522 = vcmp.gt.f32.partialorder %v584, %v661
        %vm1523 = vcmp.gt.f32.partialorder %v584, %v665
        %vm1524 = vcmp.gt.f32.partialorder %v584, %v669
        %vm1525 = vcmp.gt.f32.partialorder %v584, %v673
        %vm1526 = vcmp.gt.f32.partialorder %v584, %v677
        %vm1527 = vcmp.gt.f32.partialorder %v584, %v681
        %vm1528 = vcmp.gt.f32.partialorder %v584, %v685
        %vm1529 = vcmp.gt.f32.partialorder %v584, %v689
        %vm1530 = vcmp.gt.f32.partialorder %v584, %v693
        %vm1531 = vcmp.gt.f32.partialorder %v584, %v697
        %vm1532 = vcmp.gt.f32.partialorder %v584, %v701
        %vm1533 = vcmp.gt.f32.partialorder %v584, %v705
        %vm1534 = vcmp.gt.f32.partialorder %v584, %v709
        %vm1535 = vcmp.gt.f32.partialorder %v584, %v713
        %vm1536 = vcmp.gt.f32.partialorder %v584, %v717
        %vm1537 = vcmp.gt.f32.partialorder %v584, %v721
        %vm1538 = vcmp.gt.f32.partialorder %v589, %v661
        %vm1539 = vcmp.gt.f32.partialorder %v589, %v665
        %vm1540 = vcmp.gt.f32.partialorder %v589, %v669
        %vm1541 = vcmp.gt.f32.partialorder %v589, %v673
        %vm1542 = vcmp.gt.f32.partialorder %v589, %v677
        %vm1543 = vcmp.gt.f32.partialorder %v589, %v681
        %vm1544 = vcmp.gt.f32.partialorder %v589, %v685
        %vm1545 = vcmp.gt.f32.partialorder %v589, %v689
        %vm1546 = vcmp.gt.f32.partialorder %v589, %v693
        %vm1547 = vcmp.gt.f32.partialorder %v589, %v697
        %vm1548 = vcmp.gt.f32.partialorder %v589, %v701
        %vm1549 = vcmp.gt.f32.partialorder %v589, %v705
        %vm1550 = vcmp.gt.f32.partialorder %v589, %v709
        %vm1551 = vcmp.gt.f32.partialorder %v589, %v713
        %vm1552 = vcmp.gt.f32.partialorder %v589, %v717
        %vm1553 = vcmp.gt.f32.partialorder %v589, %v721
        %vm1554 = vcmp.gt.f32.partialorder %v594, %v661
        %vm1555 = vcmp.gt.f32.partialorder %v594, %v665
        %vm1556 = vcmp.gt.f32.partialorder %v594, %v669
        %vm1557 = vcmp.gt.f32.partialorder %v594, %v673
        %vm1558 = vcmp.gt.f32.partialorder %v594, %v677
        %vm1559 = vcmp.gt.f32.partialorder %v594, %v681
        %vm1560 = vcmp.gt.f32.partialorder %v594, %v685
        %vm1561 = vcmp.gt.f32.partialorder %v594, %v689
        %vm1562 = vcmp.gt.f32.partialorder %v594, %v693
        %vm1563 = vcmp.gt.f32.partialorder %v594, %v697
        %vm1564 = vcmp.gt.f32.partialorder %v594, %v701
        %vm1565 = vcmp.gt.f32.partialorder %v594, %v705
        %vm1566 = vcmp.gt.f32.partialorder %v594, %v709
        %vm1567 = vcmp.gt.f32.partialorder %v594, %v713
        %vm1568 = vcmp.gt.f32.partialorder %v594, %v717
        %vm1569 = vcmp.gt.f32.partialorder %v594, %v721
        %vm1570 = vcmp.gt.f32.partialorder %v599, %v661
        %vm1571 = vcmp.gt.f32.partialorder %v599, %v665
        %vm1572 = vcmp.gt.f32.partialorder %v599, %v669
        %vm1573 = vcmp.gt.f32.partialorder %v599, %v673
        %vm1574 = vcmp.gt.f32.partialorder %v599, %v677
        %vm1575 = vcmp.gt.f32.partialorder %v599, %v681
        %vm1576 = vcmp.gt.f32.partialorder %v599, %v685
        %vm1577 = vcmp.gt.f32.partialorder %v599, %v689
        %vm1578 = vcmp.gt.f32.partialorder %v599, %v693
        %vm1579 = vcmp.gt.f32.partialorder %v599, %v697
        %vm1580 = vcmp.gt.f32.partialorder %v599, %v701
        %vm1581 = vcmp.gt.f32.partialorder %v599, %v705
        %vm1582 = vcmp.gt.f32.partialorder %v599, %v709
        %vm1583 = vcmp.gt.f32.partialorder %v599, %v713
        %vm1584 = vcmp.gt.f32.partialorder %v599, %v717
        %vm1585 = vcmp.gt.f32.partialorder %v599, %v721
        %vm1586 = vcmp.gt.f32.partialorder %v604, %v661
        %vm1587 = vcmp.gt.f32.partialorder %v604, %v665
        %vm1588 = vcmp.gt.f32.partialorder %v604, %v669
        %vm1589 = vcmp.gt.f32.partialorder %v604, %v673
        %vm1590 = vcmp.gt.f32.partialorder %v604, %v677
        %vm1591 = vcmp.gt.f32.partialorder %v604, %v681
        %vm1592 = vcmp.gt.f32.partialorder %v604, %v685
        %vm1593 = vcmp.gt.f32.partialorder %v604, %v689
        %vm1594 = vcmp.gt.f32.partialorder %v604, %v693
        %vm1595 = vcmp.gt.f32.partialorder %v604, %v697
        %vm1596 = vcmp.gt.f32.partialorder %v604, %v701
        %vm1597 = vcmp.gt.f32.partialorder %v604, %v705
        %vm1598 = vcmp.gt.f32.partialorder %v604, %v709
        %vm1599 = vcmp.gt.f32.partialorder %v604, %v713
        %vm1600 = vcmp.gt.f32.partialorder %v604, %v717
        %vm1601 = vcmp.gt.f32.partialorder %v604, %v721
        %vm1602 = vcmp.gt.f32.partialorder %v609, %v661
        %vm1603 = vcmp.gt.f32.partialorder %v609, %v665
        %vm1604 = vcmp.gt.f32.partialorder %v609, %v669
        %vm1605 = vcmp.gt.f32.partialorder %v609, %v673
        %vm1606 = vcmp.gt.f32.partialorder %v609, %v677
        %vm1607 = vcmp.gt.f32.partialorder %v609, %v681
        %vm1608 = vcmp.gt.f32.partialorder %v609, %v685
        %vm1609 = vcmp.gt.f32.partialorder %v609, %v689
        %vm1610 = vcmp.gt.f32.partialorder %v609, %v693
        %vm1611 = vcmp.gt.f32.partialorder %v609, %v697
        %vm1612 = vcmp.gt.f32.partialorder %v609, %v701
        %vm1613 = vcmp.gt.f32.partialorder %v609, %v705
        %vm1614 = vcmp.gt.f32.partialorder %v609, %v709
        %vm1615 = vcmp.gt.f32.partialorder %v609, %v713
        %vm1616 = vcmp.gt.f32.partialorder %v609, %v717
        %vm1617 = vcmp.gt.f32.partialorder %v609, %v721
        %vm1618 = vcmp.gt.f32.partialorder %v614, %v661
        %vm1619 = vcmp.gt.f32.partialorder %v614, %v665
        %vm1620 = vcmp.gt.f32.partialorder %v614, %v669
        %vm1621 = vcmp.gt.f32.partialorder %v614, %v673
        %vm1622 = vcmp.gt.f32.partialorder %v614, %v677
        %vm1623 = vcmp.gt.f32.partialorder %v614, %v681
        %vm1624 = vcmp.gt.f32.partialorder %v614, %v685
        %vm1625 = vcmp.gt.f32.partialorder %v614, %v689
        %vm1626 = vcmp.gt.f32.partialorder %v614, %v693
        %vm1627 = vcmp.gt.f32.partialorder %v614, %v697
        %vm1628 = vcmp.gt.f32.partialorder %v614, %v701
        %vm1629 = vcmp.gt.f32.partialorder %v614, %v705
        %vm1630 = vcmp.gt.f32.partialorder %v614, %v709
        %vm1631 = vcmp.gt.f32.partialorder %v614, %v713
        %vm1632 = vcmp.gt.f32.partialorder %v614, %v717
        %vm1633 = vcmp.gt.f32.partialorder %v614, %v721
        %vm1634 = vcmp.gt.f32.partialorder %v619, %v661
        %vm1635 = vcmp.gt.f32.partialorder %v619, %v665
        %vm1636 = vcmp.gt.f32.partialorder %v619, %v669
        %vm1637 = vcmp.gt.f32.partialorder %v619, %v673
        %vm1638 = vcmp.gt.f32.partialorder %v619, %v677
        %vm1639 = vcmp.gt.f32.partialorder %v619, %v681
        %vm1640 = vcmp.gt.f32.partialorder %v619, %v685
        %vm1641 = vcmp.gt.f32.partialorder %v619, %v689
        %vm1642 = vcmp.gt.f32.partialorder %v619, %v693
        %vm1643 = vcmp.gt.f32.partialorder %v619, %v697
        %vm1644 = vcmp.gt.f32.partialorder %v619, %v701
        %vm1645 = vcmp.gt.f32.partialorder %v619, %v705
        %vm1646 = vcmp.gt.f32.partialorder %v619, %v709
        %vm1647 = vcmp.gt.f32.partialorder %v619, %v713
        %vm1648 = vcmp.gt.f32.partialorder %v619, %v717
        %vm1649 = vcmp.gt.f32.partialorder %v619, %v721
        %vm1650 = vcmp.gt.f32.partialorder %v624, %v661
        %vm1651 = vcmp.gt.f32.partialorder %v624, %v665
        %vm1652 = vcmp.gt.f32.partialorder %v624, %v669
        %vm1653 = vcmp.gt.f32.partialorder %v624, %v673
        %vm1654 = vcmp.gt.f32.partialorder %v624, %v677
        %vm1655 = vcmp.gt.f32.partialorder %v624, %v681
        %vm1656 = vcmp.gt.f32.partialorder %v624, %v685
        %vm1657 = vcmp.gt.f32.partialorder %v624, %v689
        %vm1658 = vcmp.gt.f32.partialorder %v624, %v693
        %vm1659 = vcmp.gt.f32.partialorder %v624, %v697
        %vm1660 = vcmp.gt.f32.partialorder %v624, %v701
        %vm1661 = vcmp.gt.f32.partialorder %v624, %v705
        %vm1662 = vcmp.gt.f32.partialorder %v624, %v709
        %vm1663 = vcmp.gt.f32.partialorder %v624, %v713
        %vm1664 = vcmp.gt.f32.partialorder %v624, %v717
        %vm1665 = vcmp.gt.f32.partialorder %v624, %v721
        %vm1666 = vcmp.gt.f32.partialorder %v629, %v661
        %vm1667 = vcmp.gt.f32.partialorder %v629, %v665
        %vm1668 = vcmp.gt.f32.partialorder %v629, %v669
        %vm1669 = vcmp.gt.f32.partialorder %v629, %v673
        %vm1670 = vcmp.gt.f32.partialorder %v629, %v677
        %vm1671 = vcmp.gt.f32.partialorder %v629, %v681
        %vm1672 = vcmp.gt.f32.partialorder %v629, %v685
        %vm1673 = vcmp.gt.f32.partialorder %v629, %v689
        %vm1674 = vcmp.gt.f32.partialorder %v629, %v693
        %vm1675 = vcmp.gt.f32.partialorder %v629, %v697
        %vm1676 = vcmp.gt.f32.partialorder %v629, %v701
        %vm1677 = vcmp.gt.f32.partialorder %v629, %v705
        %vm1678 = vcmp.gt.f32.partialorder %v629, %v709
        %vm1679 = vcmp.gt.f32.partialorder %v629, %v713
        %vm1680 = vcmp.gt.f32.partialorder %v629, %v717
        %vm1681 = vcmp.gt.f32.partialorder %v629, %v721
        %vm1682 = vcmp.gt.f32.partialorder %v634, %v661
        %vm1683 = vcmp.gt.f32.partialorder %v634, %v665
        %vm1684 = vcmp.gt.f32.partialorder %v634, %v669
        %vm1685 = vcmp.gt.f32.partialorder %v634, %v673
        %vm1686 = vcmp.gt.f32.partialorder %v634, %v677
        %vm1687 = vcmp.gt.f32.partialorder %v634, %v681
        %vm1688 = vcmp.gt.f32.partialorder %v634, %v685
        %vm1689 = vcmp.gt.f32.partialorder %v634, %v689
        %vm1690 = vcmp.gt.f32.partialorder %v634, %v693
        %vm1691 = vcmp.gt.f32.partialorder %v634, %v697
        %vm1692 = vcmp.gt.f32.partialorder %v634, %v701
        %vm1693 = vcmp.gt.f32.partialorder %v634, %v705
        %vm1694 = vcmp.gt.f32.partialorder %v634, %v709
        %vm1695 = vcmp.gt.f32.partialorder %v634, %v713
        %vm1696 = vcmp.gt.f32.partialorder %v634, %v717
        %vm1697 = vcmp.gt.f32.partialorder %v634, %v721
        %vm1698 = vcmp.gt.f32.partialorder %v639, %v661
        %vm1699 = vcmp.gt.f32.partialorder %v639, %v665
        %vm1700 = vcmp.gt.f32.partialorder %v639, %v669
        %vm1701 = vcmp.gt.f32.partialorder %v639, %v673
        %vm1702 = vcmp.gt.f32.partialorder %v639, %v677
        %vm1703 = vcmp.gt.f32.partialorder %v639, %v681
        %vm1704 = vcmp.gt.f32.partialorder %v639, %v685
        %vm1705 = vcmp.gt.f32.partialorder %v639, %v689
        %vm1706 = vcmp.gt.f32.partialorder %v639, %v693
        %vm1707 = vcmp.gt.f32.partialorder %v639, %v697
        %vm1708 = vcmp.gt.f32.partialorder %v639, %v701
        %vm1709 = vcmp.gt.f32.partialorder %v639, %v705
        %vm1710 = vcmp.gt.f32.partialorder %v639, %v709
        %vm1711 = vcmp.gt.f32.partialorder %v639, %v713
        %vm1712 = vcmp.gt.f32.partialorder %v639, %v717
        %vm1713 = vcmp.gt.f32.partialorder %v639, %v721
        %vm1714 = vcmp.gt.f32.partialorder %v644, %v661
        %vm1715 = vcmp.gt.f32.partialorder %v644, %v665
        %vm1716 = vcmp.gt.f32.partialorder %v644, %v669
        %vm1717 = vcmp.gt.f32.partialorder %v644, %v673
        %vm1718 = vcmp.gt.f32.partialorder %v644, %v677
        %vm1719 = vcmp.gt.f32.partialorder %v644, %v681
        %vm1720 = vcmp.gt.f32.partialorder %v644, %v685
        %vm1721 = vcmp.gt.f32.partialorder %v644, %v689
        %vm1722 = vcmp.gt.f32.partialorder %v644, %v693
        %vm1723 = vcmp.gt.f32.partialorder %v644, %v697
        %vm1724 = vcmp.gt.f32.partialorder %v644, %v701
        %vm1725 = vcmp.gt.f32.partialorder %v644, %v705
        %vm1726 = vcmp.gt.f32.partialorder %v644, %v709
        %vm1727 = vcmp.gt.f32.partialorder %v644, %v713
        %vm1728 = vcmp.gt.f32.partialorder %v644, %v717
        %vm1729 = vcmp.gt.f32.partialorder %v644, %v721
        %vm1730 = vcmp.gt.f32.partialorder %v649, %v661
        %vm1731 = vcmp.gt.f32.partialorder %v649, %v665
        %vm1732 = vcmp.gt.f32.partialorder %v649, %v669
        %vm1733 = vcmp.gt.f32.partialorder %v649, %v673
        %vm1734 = vcmp.gt.f32.partialorder %v649, %v677
        %vm1735 = vcmp.gt.f32.partialorder %v649, %v681
        %vm1736 = vcmp.gt.f32.partialorder %v649, %v685
        %vm1737 = vcmp.gt.f32.partialorder %v649, %v689
        %vm1738 = vcmp.gt.f32.partialorder %v649, %v693
        %vm1739 = vcmp.gt.f32.partialorder %v649, %v697
        %vm1740 = vcmp.gt.f32.partialorder %v649, %v701
        %vm1741 = vcmp.gt.f32.partialorder %v649, %v705
        %vm1742 = vcmp.gt.f32.partialorder %v649, %v709
        %vm1743 = vcmp.gt.f32.partialorder %v649, %v713
        %vm1744 = vcmp.gt.f32.partialorder %v649, %v717
        %vm1745 = vcmp.gt.f32.partialorder %v649, %v721
        %vm1746 = vcmp.gt.f32.partialorder %v654, %v661
        %vm1747 = vcmp.gt.f32.partialorder %v654, %v665
        %vm1748 = vcmp.gt.f32.partialorder %v654, %v669
        %vm1749 = vcmp.gt.f32.partialorder %v654, %v673
        %vm1750 = vcmp.gt.f32.partialorder %v654, %v677
        %vm1751 = vcmp.gt.f32.partialorder %v654, %v681
        %vm1752 = vcmp.gt.f32.partialorder %v654, %v685
        %vm1753 = vcmp.gt.f32.partialorder %v654, %v689
        %vm1754 = vcmp.gt.f32.partialorder %v654, %v693
        %vm1755 = vcmp.gt.f32.partialorder %v654, %v697
        %vm1756 = vcmp.gt.f32.partialorder %v654, %v701
        %vm1757 = vcmp.gt.f32.partialorder %v654, %v705
        %vm1758 = vcmp.gt.f32.partialorder %v654, %v709
        %vm1759 = vcmp.gt.f32.partialorder %v654, %v713
        %vm1760 = vcmp.gt.f32.partialorder %v654, %v717
        %vm1761 = vcmp.gt.f32.partialorder %v654, %v721
        %vm1762 = vcmp.eq.f32.partialorder %v339, %v661
        %vm1763 = vcmp.eq.f32.partialorder %v339, %v665
        %vm1764 = vcmp.eq.f32.partialorder %v339, %v669
        %vm1765 = vcmp.eq.f32.partialorder %v339, %v673
        %vm1766 = vcmp.eq.f32.partialorder %v339, %v677
        %vm1767 = vcmp.eq.f32.partialorder %v339, %v681
        %vm1768 = vcmp.eq.f32.partialorder %v339, %v685
        %vm1769 = vcmp.eq.f32.partialorder %v339, %v689
        %vm1770 = vcmp.eq.f32.partialorder %v339, %v693
        %vm1771 = vcmp.eq.f32.partialorder %v339, %v697
        %vm1772 = vcmp.eq.f32.partialorder %v339, %v701
        %vm1773 = vcmp.eq.f32.partialorder %v339, %v705
        %vm1774 = vcmp.eq.f32.partialorder %v339, %v709
        %vm1775 = vcmp.eq.f32.partialorder %v339, %v713
        %vm1776 = vcmp.eq.f32.partialorder %v339, %v717
        %vm1777 = vcmp.eq.f32.partialorder %v339, %v721
        %vm1778 = vcmp.eq.f32.partialorder %v344, %v661
        %vm1779 = vcmp.eq.f32.partialorder %v344, %v665
        %vm1780 = vcmp.eq.f32.partialorder %v344, %v669
        %vm1781 = vcmp.eq.f32.partialorder %v344, %v673
        %vm1782 = vcmp.eq.f32.partialorder %v344, %v677
        %vm1783 = vcmp.eq.f32.partialorder %v344, %v681
        %vm1784 = vcmp.eq.f32.partialorder %v344, %v685
        %vm1785 = vcmp.eq.f32.partialorder %v344, %v689
        %vm1786 = vcmp.eq.f32.partialorder %v344, %v693
        %vm1787 = vcmp.eq.f32.partialorder %v344, %v697
        %vm1788 = vcmp.eq.f32.partialorder %v344, %v701
        %vm1789 = vcmp.eq.f32.partialorder %v344, %v705
        %vm1790 = vcmp.eq.f32.partialorder %v344, %v709
        %vm1791 = vcmp.eq.f32.partialorder %v344, %v713
        %vm1792 = vcmp.eq.f32.partialorder %v344, %v717
        %vm1793 = vcmp.eq.f32.partialorder %v344, %v721
        %vm1794 = vcmp.eq.f32.partialorder %v349, %v661
        %vm1795 = vcmp.eq.f32.partialorder %v349, %v665
        %vm1796 = vcmp.eq.f32.partialorder %v349, %v669
        %vm1797 = vcmp.eq.f32.partialorder %v349, %v673
        %vm1798 = vcmp.eq.f32.partialorder %v349, %v677
        %vm1799 = vcmp.eq.f32.partialorder %v349, %v681
        %vm1800 = vcmp.eq.f32.partialorder %v349, %v685
        %vm1801 = vcmp.eq.f32.partialorder %v349, %v689
        %vm1802 = vcmp.eq.f32.partialorder %v349, %v693
        %vm1803 = vcmp.eq.f32.partialorder %v349, %v697
        %vm1804 = vcmp.eq.f32.partialorder %v349, %v701
        %vm1805 = vcmp.eq.f32.partialorder %v349, %v705
        %vm1806 = vcmp.eq.f32.partialorder %v349, %v709
        %vm1807 = vcmp.eq.f32.partialorder %v349, %v713
        %vm1808 = vcmp.eq.f32.partialorder %v349, %v717
        %vm1809 = vcmp.eq.f32.partialorder %v349, %v721
        %vm1810 = vcmp.eq.f32.partialorder %v354, %v661
        %vm1811 = vcmp.eq.f32.partialorder %v354, %v665
        %vm1812 = vcmp.eq.f32.partialorder %v354, %v669
        %vm1813 = vcmp.eq.f32.partialorder %v354, %v673
        %vm1814 = vcmp.eq.f32.partialorder %v354, %v677
        %vm1815 = vcmp.eq.f32.partialorder %v354, %v681
        %vm1816 = vcmp.eq.f32.partialorder %v354, %v685
        %vm1817 = vcmp.eq.f32.partialorder %v354, %v689
        %vm1818 = vcmp.eq.f32.partialorder %v354, %v693
        %vm1819 = vcmp.eq.f32.partialorder %v354, %v697
        %vm1820 = vcmp.eq.f32.partialorder %v354, %v701
        %vm1821 = vcmp.eq.f32.partialorder %v354, %v705
        %vm1822 = vcmp.eq.f32.partialorder %v354, %v709
        %vm1823 = vcmp.eq.f32.partialorder %v354, %v713
        %vm1824 = vcmp.eq.f32.partialorder %v354, %v717
        %vm1825 = vcmp.eq.f32.partialorder %v354, %v721
        %vm1826 = vcmp.eq.f32.partialorder %v359, %v661
        %vm1827 = vcmp.eq.f32.partialorder %v359, %v665
        %vm1828 = vcmp.eq.f32.partialorder %v359, %v669
        %vm1829 = vcmp.eq.f32.partialorder %v359, %v673
        %vm1830 = vcmp.eq.f32.partialorder %v359, %v677
        %vm1831 = vcmp.eq.f32.partialorder %v359, %v681
        %vm1832 = vcmp.eq.f32.partialorder %v359, %v685
        %vm1833 = vcmp.eq.f32.partialorder %v359, %v689
        %vm1834 = vcmp.eq.f32.partialorder %v359, %v693
        %vm1835 = vcmp.eq.f32.partialorder %v359, %v697
        %vm1836 = vcmp.eq.f32.partialorder %v359, %v701
        %vm1837 = vcmp.eq.f32.partialorder %v359, %v705
        %vm1838 = vcmp.eq.f32.partialorder %v359, %v709
        %vm1839 = vcmp.eq.f32.partialorder %v359, %v713
        %vm1840 = vcmp.eq.f32.partialorder %v359, %v717
        %vm1841 = vcmp.eq.f32.partialorder %v359, %v721
        %vm1842 = vcmp.eq.f32.partialorder %v364, %v661
        %vm1843 = vcmp.eq.f32.partialorder %v364, %v665
        %vm1844 = vcmp.eq.f32.partialorder %v364, %v669
        %vm1845 = vcmp.eq.f32.partialorder %v364, %v673
        %vm1846 = vcmp.eq.f32.partialorder %v364, %v677
        %vm1847 = vcmp.eq.f32.partialorder %v364, %v681
        %vm1848 = vcmp.eq.f32.partialorder %v364, %v685
        %vm1849 = vcmp.eq.f32.partialorder %v364, %v689
        %vm1850 = vcmp.eq.f32.partialorder %v364, %v693
        %vm1851 = vcmp.eq.f32.partialorder %v364, %v697
        %vm1852 = vcmp.eq.f32.partialorder %v364, %v701
        %vm1853 = vcmp.eq.f32.partialorder %v364, %v705
        %vm1854 = vcmp.eq.f32.partialorder %v364, %v709
        %vm1855 = vcmp.eq.f32.partialorder %v364, %v713
        %vm1856 = vcmp.eq.f32.partialorder %v364, %v717
        %vm1857 = vcmp.eq.f32.partialorder %v364, %v721
        %vm1858 = vcmp.eq.f32.partialorder %v369, %v661
        %vm1859 = vcmp.eq.f32.partialorder %v369, %v665
        %vm1860 = vcmp.eq.f32.partialorder %v369, %v669
        %vm1861 = vcmp.eq.f32.partialorder %v369, %v673
        %vm1862 = vcmp.eq.f32.partialorder %v369, %v677
        %vm1863 = vcmp.eq.f32.partialorder %v369, %v681
        %vm1864 = vcmp.eq.f32.partialorder %v369, %v685
        %vm1865 = vcmp.eq.f32.partialorder %v369, %v689
        %vm1866 = vcmp.eq.f32.partialorder %v369, %v693
        %vm1867 = vcmp.eq.f32.partialorder %v369, %v697
        %vm1868 = vcmp.eq.f32.partialorder %v369, %v701
        %vm1869 = vcmp.eq.f32.partialorder %v369, %v705
        %vm1870 = vcmp.eq.f32.partialorder %v369, %v709
        %vm1871 = vcmp.eq.f32.partialorder %v369, %v713
        %vm1872 = vcmp.eq.f32.partialorder %v369, %v717
        %vm1873 = vcmp.eq.f32.partialorder %v369, %v721
        %vm1874 = vcmp.eq.f32.partialorder %v374, %v661
        %vm1875 = vcmp.eq.f32.partialorder %v374, %v665
        %vm1876 = vcmp.eq.f32.partialorder %v374, %v669
        %vm1877 = vcmp.eq.f32.partialorder %v374, %v673
        %vm1878 = vcmp.eq.f32.partialorder %v374, %v677
        %vm1879 = vcmp.eq.f32.partialorder %v374, %v681
        %vm1880 = vcmp.eq.f32.partialorder %v374, %v685
        %vm1881 = vcmp.eq.f32.partialorder %v374, %v689
        %vm1882 = vcmp.eq.f32.partialorder %v374, %v693
        %vm1883 = vcmp.eq.f32.partialorder %v374, %v697
        %vm1884 = vcmp.eq.f32.partialorder %v374, %v701
        %vm1885 = vcmp.eq.f32.partialorder %v374, %v705
        %vm1886 = vcmp.eq.f32.partialorder %v374, %v709
        %vm1887 = vcmp.eq.f32.partialorder %v374, %v713
        %vm1888 = vcmp.eq.f32.partialorder %v374, %v717
        %vm1889 = vcmp.eq.f32.partialorder %v374, %v721
        %vm1890 = vcmp.eq.f32.partialorder %v379, %v661
        %vm1891 = vcmp.eq.f32.partialorder %v379, %v665
        %vm1892 = vcmp.eq.f32.partialorder %v379, %v669
        %vm1893 = vcmp.eq.f32.partialorder %v379, %v673
        %vm1894 = vcmp.eq.f32.partialorder %v379, %v677
        %vm1895 = vcmp.eq.f32.partialorder %v379, %v681
        %vm1896 = vcmp.eq.f32.partialorder %v379, %v685
        %vm1897 = vcmp.eq.f32.partialorder %v379, %v689
        %vm1898 = vcmp.eq.f32.partialorder %v379, %v693
        %vm1899 = vcmp.eq.f32.partialorder %v379, %v697
        %vm1900 = vcmp.eq.f32.partialorder %v379, %v701
        %vm1901 = vcmp.eq.f32.partialorder %v379, %v705
        %vm1902 = vcmp.eq.f32.partialorder %v379, %v709
        %vm1903 = vcmp.eq.f32.partialorder %v379, %v713
        %vm1904 = vcmp.eq.f32.partialorder %v379, %v717
        %vm1905 = vcmp.eq.f32.partialorder %v379, %v721
        %vm1906 = vcmp.eq.f32.partialorder %v384, %v661
        %vm1907 = vcmp.eq.f32.partialorder %v384, %v665
        %vm1908 = vcmp.eq.f32.partialorder %v384, %v669
        %vm1909 = vcmp.eq.f32.partialorder %v384, %v673
        %vm1910 = vcmp.eq.f32.partialorder %v384, %v677
        %vm1911 = vcmp.eq.f32.partialorder %v384, %v681
        %vm1912 = vcmp.eq.f32.partialorder %v384, %v685
        %vm1913 = vcmp.eq.f32.partialorder %v384, %v689
        %vm1914 = vcmp.eq.f32.partialorder %v384, %v693
        %vm1915 = vcmp.eq.f32.partialorder %v384, %v697
        %vm1916 = vcmp.eq.f32.partialorder %v384, %v701
        %vm1917 = vcmp.eq.f32.partialorder %v384, %v705
        %vm1918 = vcmp.eq.f32.partialorder %v384, %v709
        %vm1919 = vcmp.eq.f32.partialorder %v384, %v713
        %vm1920 = vcmp.eq.f32.partialorder %v384, %v717
        %vm1921 = vcmp.eq.f32.partialorder %v384, %v721
        %vm1922 = vcmp.eq.f32.partialorder %v389, %v661
        %vm1923 = vcmp.eq.f32.partialorder %v389, %v665
        %vm1924 = vcmp.eq.f32.partialorder %v389, %v669
        %vm1925 = vcmp.eq.f32.partialorder %v389, %v673
        %vm1926 = vcmp.eq.f32.partialorder %v389, %v677
        %vm1927 = vcmp.eq.f32.partialorder %v389, %v681
        %vm1928 = vcmp.eq.f32.partialorder %v389, %v685
        %vm1929 = vcmp.eq.f32.partialorder %v389, %v689
        %vm1930 = vcmp.eq.f32.partialorder %v389, %v693
        %vm1931 = vcmp.eq.f32.partialorder %v389, %v697
        %vm1932 = vcmp.eq.f32.partialorder %v389, %v701
        %vm1933 = vcmp.eq.f32.partialorder %v389, %v705
        %vm1934 = vcmp.eq.f32.partialorder %v389, %v709
        %vm1935 = vcmp.eq.f32.partialorder %v389, %v713
        %vm1936 = vcmp.eq.f32.partialorder %v389, %v717
        %vm1937 = vcmp.eq.f32.partialorder %v389, %v721
        %vm1938 = vcmp.eq.f32.partialorder %v394, %v661
        %vm1939 = vcmp.eq.f32.partialorder %v394, %v665
        %vm1940 = vcmp.eq.f32.partialorder %v394, %v669
        %vm1941 = vcmp.eq.f32.partialorder %v394, %v673
        %vm1942 = vcmp.eq.f32.partialorder %v394, %v677
        %vm1943 = vcmp.eq.f32.partialorder %v394, %v681
        %vm1944 = vcmp.eq.f32.partialorder %v394, %v685
        %vm1945 = vcmp.eq.f32.partialorder %v394, %v689
        %vm1946 = vcmp.eq.f32.partialorder %v394, %v693
        %vm1947 = vcmp.eq.f32.partialorder %v394, %v697
        %vm1948 = vcmp.eq.f32.partialorder %v394, %v701
        %vm1949 = vcmp.eq.f32.partialorder %v394, %v705
        %vm1950 = vcmp.eq.f32.partialorder %v394, %v709
        %vm1951 = vcmp.eq.f32.partialorder %v394, %v713
        %vm1952 = vcmp.eq.f32.partialorder %v394, %v717
        %vm1953 = vcmp.eq.f32.partialorder %v394, %v721
        %vm1954 = vcmp.eq.f32.partialorder %v399, %v661
        %vm1955 = vcmp.eq.f32.partialorder %v399, %v665
        %vm1956 = vcmp.eq.f32.partialorder %v399, %v669
        %vm1957 = vcmp.eq.f32.partialorder %v399, %v673
        %vm1958 = vcmp.eq.f32.partialorder %v399, %v677
        %vm1959 = vcmp.eq.f32.partialorder %v399, %v681
        %vm1960 = vcmp.eq.f32.partialorder %v399, %v685
        %vm1961 = vcmp.eq.f32.partialorder %v399, %v689
        %vm1962 = vcmp.eq.f32.partialorder %v399, %v693
        %vm1963 = vcmp.eq.f32.partialorder %v399, %v697
        %vm1964 = vcmp.eq.f32.partialorder %v399, %v701
        %vm1965 = vcmp.eq.f32.partialorder %v399, %v705
        %vm1966 = vcmp.eq.f32.partialorder %v399, %v709
        %vm1967 = vcmp.eq.f32.partialorder %v399, %v713
        %vm1968 = vcmp.eq.f32.partialorder %v399, %v717
        %vm1969 = vcmp.eq.f32.partialorder %v399, %v721
        %vm1970 = vcmp.eq.f32.partialorder %v404, %v661
        %vm1971 = vcmp.eq.f32.partialorder %v404, %v665
        %vm1972 = vcmp.eq.f32.partialorder %v404, %v669
        %vm1973 = vcmp.eq.f32.partialorder %v404, %v673
        %vm1974 = vcmp.eq.f32.partialorder %v404, %v677
        %vm1975 = vcmp.eq.f32.partialorder %v404, %v681
        %vm1976 = vcmp.eq.f32.partialorder %v404, %v685
        %vm1977 = vcmp.eq.f32.partialorder %v404, %v689
        %vm1978 = vcmp.eq.f32.partialorder %v404, %v693
        %vm1979 = vcmp.eq.f32.partialorder %v404, %v697
        %vm1980 = vcmp.eq.f32.partialorder %v404, %v701
        %vm1981 = vcmp.eq.f32.partialorder %v404, %v705
        %vm1982 = vcmp.eq.f32.partialorder %v404, %v709
        %vm1983 = vcmp.eq.f32.partialorder %v404, %v713
        %vm1984 = vcmp.eq.f32.partialorder %v404, %v717
        %vm1985 = vcmp.eq.f32.partialorder %v404, %v721
        %vm1986 = vcmp.eq.f32.partialorder %v409, %v661
        %vm1987 = vcmp.eq.f32.partialorder %v409, %v665
        %vm1988 = vcmp.eq.f32.partialorder %v409, %v669
        %vm1989 = vcmp.eq.f32.partialorder %v409, %v673
        %vm1990 = vcmp.eq.f32.partialorder %v409, %v677
        %vm1991 = vcmp.eq.f32.partialorder %v409, %v681
        %vm1992 = vcmp.eq.f32.partialorder %v409, %v685
        %vm1993 = vcmp.eq.f32.partialorder %v409, %v689
        %vm1994 = vcmp.eq.f32.partialorder %v409, %v693
        %vm1995 = vcmp.eq.f32.partialorder %v409, %v697
        %vm1996 = vcmp.eq.f32.partialorder %v409, %v701
        %vm1997 = vcmp.eq.f32.partialorder %v409, %v705
        %vm1998 = vcmp.eq.f32.partialorder %v409, %v709
        %vm1999 = vcmp.eq.f32.partialorder %v409, %v713
        %vm2000 = vcmp.eq.f32.partialorder %v409, %v717
        %vm2001 = vcmp.eq.f32.partialorder %v409, %v721
        %vm2002 = vcmp.eq.f32.partialorder %v414, %v661
        %vm2003 = vcmp.eq.f32.partialorder %v414, %v665
        %vm2004 = vcmp.eq.f32.partialorder %v414, %v669
        %vm2005 = vcmp.eq.f32.partialorder %v414, %v673
        %vm2006 = vcmp.eq.f32.partialorder %v414, %v677
        %vm2007 = vcmp.eq.f32.partialorder %v414, %v681
        %vm2008 = vcmp.eq.f32.partialorder %v414, %v685
        %vm2009 = vcmp.eq.f32.partialorder %v414, %v689
        %vm2010 = vcmp.eq.f32.partialorder %v414, %v693
        %vm2011 = vcmp.eq.f32.partialorder %v414, %v697
        %vm2012 = vcmp.eq.f32.partialorder %v414, %v701
        %vm2013 = vcmp.eq.f32.partialorder %v414, %v705
        %vm2014 = vcmp.eq.f32.partialorder %v414, %v709
        %vm2015 = vcmp.eq.f32.partialorder %v414, %v713
        %vm2016 = vcmp.eq.f32.partialorder %v414, %v717
        %vm2017 = vcmp.eq.f32.partialorder %v414, %v721
        %vm2018 = vcmp.eq.f32.partialorder %v419, %v661
        %vm2019 = vcmp.eq.f32.partialorder %v419, %v665
        %vm2020 = vcmp.eq.f32.partialorder %v419, %v669
        %vm2021 = vcmp.eq.f32.partialorder %v419, %v673
        %vm2022 = vcmp.eq.f32.partialorder %v419, %v677
        %vm2023 = vcmp.eq.f32.partialorder %v419, %v681
        %vm2024 = vcmp.eq.f32.partialorder %v419, %v685
        %vm2025 = vcmp.eq.f32.partialorder %v419, %v689
        %vm2026 = vcmp.eq.f32.partialorder %v419, %v693
        %vm2027 = vcmp.eq.f32.partialorder %v419, %v697
        %vm2028 = vcmp.eq.f32.partialorder %v419, %v701
        %vm2029 = vcmp.eq.f32.partialorder %v419, %v705
        %vm2030 = vcmp.eq.f32.partialorder %v419, %v709
        %vm2031 = vcmp.eq.f32.partialorder %v419, %v713
        %vm2032 = vcmp.eq.f32.partialorder %v419, %v717
        %vm2033 = vcmp.eq.f32.partialorder %v419, %v721
        %vm2034 = vcmp.eq.f32.partialorder %v424, %v661
        %vm2035 = vcmp.eq.f32.partialorder %v424, %v665
        %vm2036 = vcmp.eq.f32.partialorder %v424, %v669
        %vm2037 = vcmp.eq.f32.partialorder %v424, %v673
        %vm2038 = vcmp.eq.f32.partialorder %v424, %v677
        %vm2039 = vcmp.eq.f32.partialorder %v424, %v681
        %vm2040 = vcmp.eq.f32.partialorder %v424, %v685
        %vm2041 = vcmp.eq.f32.partialorder %v424, %v689
        %vm2042 = vcmp.eq.f32.partialorder %v424, %v693
        %vm2043 = vcmp.eq.f32.partialorder %v424, %v697
        %vm2044 = vcmp.eq.f32.partialorder %v424, %v701
        %vm2045 = vcmp.eq.f32.partialorder %v424, %v705
        %vm2046 = vcmp.eq.f32.partialorder %v424, %v709
        %vm2047 = vcmp.eq.f32.partialorder %v424, %v713
        %vm2048 = vcmp.eq.f32.partialorder %v424, %v717
        %vm2049 = vcmp.eq.f32.partialorder %v424, %v721
        %vm2050 = vcmp.eq.f32.partialorder %v429, %v661
        %vm2051 = vcmp.eq.f32.partialorder %v429, %v665
        %vm2052 = vcmp.eq.f32.partialorder %v429, %v669
        %vm2053 = vcmp.eq.f32.partialorder %v429, %v673
        %vm2054 = vcmp.eq.f32.partialorder %v429, %v677
        %vm2055 = vcmp.eq.f32.partialorder %v429, %v681
        %vm2056 = vcmp.eq.f32.partialorder %v429, %v685
        %vm2057 = vcmp.eq.f32.partialorder %v429, %v689
        %vm2058 = vcmp.eq.f32.partialorder %v429, %v693
        %vm2059 = vcmp.eq.f32.partialorder %v429, %v697
        %vm2060 = vcmp.eq.f32.partialorder %v429, %v701
        %vm2061 = vcmp.eq.f32.partialorder %v429, %v705
        %vm2062 = vcmp.eq.f32.partialorder %v429, %v709
        %vm2063 = vcmp.eq.f32.partialorder %v429, %v713
        %vm2064 = vcmp.eq.f32.partialorder %v429, %v717
        %vm2065 = vcmp.eq.f32.partialorder %v429, %v721
        %vm2066 = vcmp.eq.f32.partialorder %v434, %v661
        %vm2067 = vcmp.eq.f32.partialorder %v434, %v665
        %vm2068 = vcmp.eq.f32.partialorder %v434, %v669
        %vm2069 = vcmp.eq.f32.partialorder %v434, %v673
        %vm2070 = vcmp.eq.f32.partialorder %v434, %v677
        %vm2071 = vcmp.eq.f32.partialorder %v434, %v681
        %vm2072 = vcmp.eq.f32.partialorder %v434, %v685
        %vm2073 = vcmp.eq.f32.partialorder %v434, %v689
        %vm2074 = vcmp.eq.f32.partialorder %v434, %v693
        %vm2075 = vcmp.eq.f32.partialorder %v434, %v697
        %vm2076 = vcmp.eq.f32.partialorder %v434, %v701
        %vm2077 = vcmp.eq.f32.partialorder %v434, %v705
        %vm2078 = vcmp.eq.f32.partialorder %v434, %v709
        %vm2079 = vcmp.eq.f32.partialorder %v434, %v713
        %vm2080 = vcmp.eq.f32.partialorder %v434, %v717
        %vm2081 = vcmp.eq.f32.partialorder %v434, %v721
        %vm2082 = vcmp.eq.f32.partialorder %v439, %v661
        %vm2083 = vcmp.eq.f32.partialorder %v439, %v665
        %vm2084 = vcmp.eq.f32.partialorder %v439, %v669
        %vm2085 = vcmp.eq.f32.partialorder %v439, %v673
        %vm2086 = vcmp.eq.f32.partialorder %v439, %v677
        %vm2087 = vcmp.eq.f32.partialorder %v439, %v681
        %vm2088 = vcmp.eq.f32.partialorder %v439, %v685
        %vm2089 = vcmp.eq.f32.partialorder %v439, %v689
        %vm2090 = vcmp.eq.f32.partialorder %v439, %v693
        %vm2091 = vcmp.eq.f32.partialorder %v439, %v697
        %vm2092 = vcmp.eq.f32.partialorder %v439, %v701
        %vm2093 = vcmp.eq.f32.partialorder %v439, %v705
        %vm2094 = vcmp.eq.f32.partialorder %v439, %v709
        %vm2095 = vcmp.eq.f32.partialorder %v439, %v713
        %vm2096 = vcmp.eq.f32.partialorder %v439, %v717
        %vm2097 = vcmp.eq.f32.partialorder %v439, %v721
        %vm2098 = vcmp.eq.f32.partialorder %v444, %v661
        %vm2099 = vcmp.eq.f32.partialorder %v444, %v665
        %vm2100 = vcmp.eq.f32.partialorder %v444, %v669
        %vm2101 = vcmp.eq.f32.partialorder %v444, %v673
        %vm2102 = vcmp.eq.f32.partialorder %v444, %v677
        %vm2103 = vcmp.eq.f32.partialorder %v444, %v681
        %vm2104 = vcmp.eq.f32.partialorder %v444, %v685
        %vm2105 = vcmp.eq.f32.partialorder %v444, %v689
        %vm2106 = vcmp.eq.f32.partialorder %v444, %v693
        %vm2107 = vcmp.eq.f32.partialorder %v444, %v697
        %vm2108 = vcmp.eq.f32.partialorder %v444, %v701
        %vm2109 = vcmp.eq.f32.partialorder %v444, %v705
        %vm2110 = vcmp.eq.f32.partialorder %v444, %v709
        %vm2111 = vcmp.eq.f32.partialorder %v444, %v713
        %vm2112 = vcmp.eq.f32.partialorder %v444, %v717
        %vm2113 = vcmp.eq.f32.partialorder %v444, %v721
        %vm2114 = vcmp.eq.f32.partialorder %v449, %v661
        %vm2115 = vcmp.eq.f32.partialorder %v449, %v665
        %vm2116 = vcmp.eq.f32.partialorder %v449, %v669
        %vm2117 = vcmp.eq.f32.partialorder %v449, %v673
        %vm2118 = vcmp.eq.f32.partialorder %v449, %v677
        %vm2119 = vcmp.eq.f32.partialorder %v449, %v681
        %vm2120 = vcmp.eq.f32.partialorder %v449, %v685
        %vm2121 = vcmp.eq.f32.partialorder %v449, %v689
        %vm2122 = vcmp.eq.f32.partialorder %v449, %v693
        %vm2123 = vcmp.eq.f32.partialorder %v449, %v697
        %vm2124 = vcmp.eq.f32.partialorder %v449, %v701
        %vm2125 = vcmp.eq.f32.partialorder %v449, %v705
        %vm2126 = vcmp.eq.f32.partialorder %v449, %v709
        %vm2127 = vcmp.eq.f32.partialorder %v449, %v713
        %vm2128 = vcmp.eq.f32.partialorder %v449, %v717
        %vm2129 = vcmp.eq.f32.partialorder %v449, %v721
        %vm2130 = vcmp.eq.f32.partialorder %v454, %v661
        %vm2131 = vcmp.eq.f32.partialorder %v454, %v665
        %vm2132 = vcmp.eq.f32.partialorder %v454, %v669
        %vm2133 = vcmp.eq.f32.partialorder %v454, %v673
        %vm2134 = vcmp.eq.f32.partialorder %v454, %v677
        %vm2135 = vcmp.eq.f32.partialorder %v454, %v681
        %vm2136 = vcmp.eq.f32.partialorder %v454, %v685
        %vm2137 = vcmp.eq.f32.partialorder %v454, %v689
        %vm2138 = vcmp.eq.f32.partialorder %v454, %v693
        %vm2139 = vcmp.eq.f32.partialorder %v454, %v697
        %vm2140 = vcmp.eq.f32.partialorder %v454, %v701
        %vm2141 = vcmp.eq.f32.partialorder %v454, %v705
        %vm2142 = vcmp.eq.f32.partialorder %v454, %v709
        %vm2143 = vcmp.eq.f32.partialorder %v454, %v713
        %vm2144 = vcmp.eq.f32.partialorder %v454, %v717
        %vm2145 = vcmp.eq.f32.partialorder %v454, %v721
        %vm2146 = vcmp.eq.f32.partialorder %v459, %v661
        %vm2147 = vcmp.eq.f32.partialorder %v459, %v665
        %vm2148 = vcmp.eq.f32.partialorder %v459, %v669
        %vm2149 = vcmp.eq.f32.partialorder %v459, %v673
        %vm2150 = vcmp.eq.f32.partialorder %v459, %v677
        %vm2151 = vcmp.eq.f32.partialorder %v459, %v681
        %vm2152 = vcmp.eq.f32.partialorder %v459, %v685
        %vm2153 = vcmp.eq.f32.partialorder %v459, %v689
        %vm2154 = vcmp.eq.f32.partialorder %v459, %v693
        %vm2155 = vcmp.eq.f32.partialorder %v459, %v697
        %vm2156 = vcmp.eq.f32.partialorder %v459, %v701
        %vm2157 = vcmp.eq.f32.partialorder %v459, %v705
        %vm2158 = vcmp.eq.f32.partialorder %v459, %v709
        %vm2159 = vcmp.eq.f32.partialorder %v459, %v713
        %vm2160 = vcmp.eq.f32.partialorder %v459, %v717
        %vm2161 = vcmp.eq.f32.partialorder %v459, %v721
        %vm2162 = vcmp.eq.f32.partialorder %v464, %v661
        %vm2163 = vcmp.eq.f32.partialorder %v464, %v665
        %vm2164 = vcmp.eq.f32.partialorder %v464, %v669
        %vm2165 = vcmp.eq.f32.partialorder %v464, %v673
        %vm2166 = vcmp.eq.f32.partialorder %v464, %v677
        %vm2167 = vcmp.eq.f32.partialorder %v464, %v681
        %vm2168 = vcmp.eq.f32.partialorder %v464, %v685
        %vm2169 = vcmp.eq.f32.partialorder %v464, %v689
        %vm2170 = vcmp.eq.f32.partialorder %v464, %v693
        %vm2171 = vcmp.eq.f32.partialorder %v464, %v697
        %vm2172 = vcmp.eq.f32.partialorder %v464, %v701
        %vm2173 = vcmp.eq.f32.partialorder %v464, %v705
        %vm2174 = vcmp.eq.f32.partialorder %v464, %v709
        %vm2175 = vcmp.eq.f32.partialorder %v464, %v713
        %vm2176 = vcmp.eq.f32.partialorder %v464, %v717
        %vm2177 = vcmp.eq.f32.partialorder %v464, %v721
        %vm2178 = vcmp.eq.f32.partialorder %v469, %v661
        %vm2179 = vcmp.eq.f32.partialorder %v469, %v665
        %vm2180 = vcmp.eq.f32.partialorder %v469, %v669
        %vm2181 = vcmp.eq.f32.partialorder %v469, %v673
        %vm2182 = vcmp.eq.f32.partialorder %v469, %v677
        %vm2183 = vcmp.eq.f32.partialorder %v469, %v681
        %vm2184 = vcmp.eq.f32.partialorder %v469, %v685
        %vm2185 = vcmp.eq.f32.partialorder %v469, %v689
        %vm2186 = vcmp.eq.f32.partialorder %v469, %v693
        %vm2187 = vcmp.eq.f32.partialorder %v469, %v697
        %vm2188 = vcmp.eq.f32.partialorder %v469, %v701
        %vm2189 = vcmp.eq.f32.partialorder %v469, %v705
        %vm2190 = vcmp.eq.f32.partialorder %v469, %v709
        %vm2191 = vcmp.eq.f32.partialorder %v469, %v713
        %vm2192 = vcmp.eq.f32.partialorder %v469, %v717
        %vm2193 = vcmp.eq.f32.partialorder %v469, %v721
        %vm2194 = vcmp.eq.f32.partialorder %v474, %v661
        %vm2195 = vcmp.eq.f32.partialorder %v474, %v665
        %vm2196 = vcmp.eq.f32.partialorder %v474, %v669
        %vm2197 = vcmp.eq.f32.partialorder %v474, %v673
        %vm2198 = vcmp.eq.f32.partialorder %v474, %v677
        %vm2199 = vcmp.eq.f32.partialorder %v474, %v681
        %vm2200 = vcmp.eq.f32.partialorder %v474, %v685
        %vm2201 = vcmp.eq.f32.partialorder %v474, %v689
        %vm2202 = vcmp.eq.f32.partialorder %v474, %v693
        %vm2203 = vcmp.eq.f32.partialorder %v474, %v697
        %vm2204 = vcmp.eq.f32.partialorder %v474, %v701
        %vm2205 = vcmp.eq.f32.partialorder %v474, %v705
        %vm2206 = vcmp.eq.f32.partialorder %v474, %v709
        %vm2207 = vcmp.eq.f32.partialorder %v474, %v713
        %vm2208 = vcmp.eq.f32.partialorder %v474, %v717
        %vm2209 = vcmp.eq.f32.partialorder %v474, %v721
        %vm2210 = vcmp.eq.f32.partialorder %v479, %v661
        %vm2211 = vcmp.eq.f32.partialorder %v479, %v665
        %vm2212 = vcmp.eq.f32.partialorder %v479, %v669
        %vm2213 = vcmp.eq.f32.partialorder %v479, %v673
        %vm2214 = vcmp.eq.f32.partialorder %v479, %v677
        %vm2215 = vcmp.eq.f32.partialorder %v479, %v681
        %vm2216 = vcmp.eq.f32.partialorder %v479, %v685
        %vm2217 = vcmp.eq.f32.partialorder %v479, %v689
        %vm2218 = vcmp.eq.f32.partialorder %v479, %v693
        %vm2219 = vcmp.eq.f32.partialorder %v479, %v697
        %vm2220 = vcmp.eq.f32.partialorder %v479, %v701
        %vm2221 = vcmp.eq.f32.partialorder %v479, %v705
        %vm2222 = vcmp.eq.f32.partialorder %v479, %v709
        %vm2223 = vcmp.eq.f32.partialorder %v479, %v713
        %vm2224 = vcmp.eq.f32.partialorder %v479, %v717
        %vm2225 = vcmp.eq.f32.partialorder %v479, %v721
        %vm2226 = vcmp.eq.f32.partialorder %v484, %v661
        %vm2227 = vcmp.eq.f32.partialorder %v484, %v665
        %vm2228 = vcmp.eq.f32.partialorder %v484, %v669
        %vm2229 = vcmp.eq.f32.partialorder %v484, %v673
        %vm2230 = vcmp.eq.f32.partialorder %v484, %v677
        %vm2231 = vcmp.eq.f32.partialorder %v484, %v681
        %vm2232 = vcmp.eq.f32.partialorder %v484, %v685
        %vm2233 = vcmp.eq.f32.partialorder %v484, %v689
        %vm2234 = vcmp.eq.f32.partialorder %v484, %v693
        %vm2235 = vcmp.eq.f32.partialorder %v484, %v697
        %vm2236 = vcmp.eq.f32.partialorder %v484, %v701
        %vm2237 = vcmp.eq.f32.partialorder %v484, %v705
        %vm2238 = vcmp.eq.f32.partialorder %v484, %v709
        %vm2239 = vcmp.eq.f32.partialorder %v484, %v713
        %vm2240 = vcmp.eq.f32.partialorder %v484, %v717
        %vm2241 = vcmp.eq.f32.partialorder %v484, %v721
        %vm2242 = vcmp.eq.f32.partialorder %v489, %v661
        %vm2243 = vcmp.eq.f32.partialorder %v489, %v665
        %vm2244 = vcmp.eq.f32.partialorder %v489, %v669
        %vm2245 = vcmp.eq.f32.partialorder %v489, %v673
        %vm2246 = vcmp.eq.f32.partialorder %v489, %v677
        %vm2247 = vcmp.eq.f32.partialorder %v489, %v681
        %vm2248 = vcmp.eq.f32.partialorder %v489, %v685
        %vm2249 = vcmp.eq.f32.partialorder %v489, %v689
        %vm2250 = vcmp.eq.f32.partialorder %v489, %v693
        %vm2251 = vcmp.eq.f32.partialorder %v489, %v697
        %vm2252 = vcmp.eq.f32.partialorder %v489, %v701
        %vm2253 = vcmp.eq.f32.partialorder %v489, %v705
        %vm2254 = vcmp.eq.f32.partialorder %v489, %v709
        %vm2255 = vcmp.eq.f32.partialorder %v489, %v713
        %vm2256 = vcmp.eq.f32.partialorder %v489, %v717
        %vm2257 = vcmp.eq.f32.partialorder %v489, %v721
        %vm2258 = vcmp.eq.f32.partialorder %v494, %v661
        %vm2259 = vcmp.eq.f32.partialorder %v494, %v665
        %vm2260 = vcmp.eq.f32.partialorder %v494, %v669
        %vm2261 = vcmp.eq.f32.partialorder %v494, %v673
        %vm2262 = vcmp.eq.f32.partialorder %v494, %v677
        %vm2263 = vcmp.eq.f32.partialorder %v494, %v681
        %vm2264 = vcmp.eq.f32.partialorder %v494, %v685
        %vm2265 = vcmp.eq.f32.partialorder %v494, %v689
        %vm2266 = vcmp.eq.f32.partialorder %v494, %v693
        %vm2267 = vcmp.eq.f32.partialorder %v494, %v697
        %vm2268 = vcmp.eq.f32.partialorder %v494, %v701
        %vm2269 = vcmp.eq.f32.partialorder %v494, %v705
        %vm2270 = vcmp.eq.f32.partialorder %v494, %v709
        %vm2271 = vcmp.eq.f32.partialorder %v494, %v713
        %vm2272 = vcmp.eq.f32.partialorder %v494, %v717
        %vm2273 = vcmp.eq.f32.partialorder %v494, %v721
        %vm2274 = vcmp.eq.f32.partialorder %v499, %v661
        %vm2275 = vcmp.eq.f32.partialorder %v499, %v665
        %vm2276 = vcmp.eq.f32.partialorder %v499, %v669
        %vm2277 = vcmp.eq.f32.partialorder %v499, %v673
        %vm2278 = vcmp.eq.f32.partialorder %v499, %v677
        %vm2279 = vcmp.eq.f32.partialorder %v499, %v681
        %vm2280 = vcmp.eq.f32.partialorder %v499, %v685
        %vm2281 = vcmp.eq.f32.partialorder %v499, %v689
        %vm2282 = vcmp.eq.f32.partialorder %v499, %v693
        %vm2283 = vcmp.eq.f32.partialorder %v499, %v697
        %vm2284 = vcmp.eq.f32.partialorder %v499, %v701
        %vm2285 = vcmp.eq.f32.partialorder %v499, %v705
        %vm2286 = vcmp.eq.f32.partialorder %v499, %v709
        %vm2287 = vcmp.eq.f32.partialorder %v499, %v713
        %vm2288 = vcmp.eq.f32.partialorder %v499, %v717
        %vm2289 = vcmp.eq.f32.partialorder %v499, %v721
        %vm2290 = vcmp.eq.f32.partialorder %v504, %v661
        %vm2291 = vcmp.eq.f32.partialorder %v504, %v665
        %vm2292 = vcmp.eq.f32.partialorder %v504, %v669
        %vm2293 = vcmp.eq.f32.partialorder %v504, %v673
        %vm2294 = vcmp.eq.f32.partialorder %v504, %v677
        %vm2295 = vcmp.eq.f32.partialorder %v504, %v681
        %vm2296 = vcmp.eq.f32.partialorder %v504, %v685
        %vm2297 = vcmp.eq.f32.partialorder %v504, %v689
        %vm2298 = vcmp.eq.f32.partialorder %v504, %v693
        %vm2299 = vcmp.eq.f32.partialorder %v504, %v697
        %vm2300 = vcmp.eq.f32.partialorder %v504, %v701
        %vm2301 = vcmp.eq.f32.partialorder %v504, %v705
        %vm2302 = vcmp.eq.f32.partialorder %v504, %v709
        %vm2303 = vcmp.eq.f32.partialorder %v504, %v713
        %vm2304 = vcmp.eq.f32.partialorder %v504, %v717
        %vm2305 = vcmp.eq.f32.partialorder %v504, %v721
        %vm2306 = vcmp.eq.f32.partialorder %v509, %v661
        %vm2307 = vcmp.eq.f32.partialorder %v509, %v665
        %vm2308 = vcmp.eq.f32.partialorder %v509, %v669
        %vm2309 = vcmp.eq.f32.partialorder %v509, %v673
        %vm2310 = vcmp.eq.f32.partialorder %v509, %v677
        %vm2311 = vcmp.eq.f32.partialorder %v509, %v681
        %vm2312 = vcmp.eq.f32.partialorder %v509, %v685
        %vm2313 = vcmp.eq.f32.partialorder %v509, %v689
        %vm2314 = vcmp.eq.f32.partialorder %v509, %v693
        %vm2315 = vcmp.eq.f32.partialorder %v509, %v697
        %vm2316 = vcmp.eq.f32.partialorder %v509, %v701
        %vm2317 = vcmp.eq.f32.partialorder %v509, %v705
        %vm2318 = vcmp.eq.f32.partialorder %v509, %v709
        %vm2319 = vcmp.eq.f32.partialorder %v509, %v713
        %vm2320 = vcmp.eq.f32.partialorder %v509, %v717
        %vm2321 = vcmp.eq.f32.partialorder %v509, %v721
        %vm2322 = vcmp.eq.f32.partialorder %v514, %v661
        %vm2323 = vcmp.eq.f32.partialorder %v514, %v665
        %vm2324 = vcmp.eq.f32.partialorder %v514, %v669
        %vm2325 = vcmp.eq.f32.partialorder %v514, %v673
        %vm2326 = vcmp.eq.f32.partialorder %v514, %v677
        %vm2327 = vcmp.eq.f32.partialorder %v514, %v681
        %vm2328 = vcmp.eq.f32.partialorder %v514, %v685
        %vm2329 = vcmp.eq.f32.partialorder %v514, %v689
        %vm2330 = vcmp.eq.f32.partialorder %v514, %v693
        %vm2331 = vcmp.eq.f32.partialorder %v514, %v697
        %vm2332 = vcmp.eq.f32.partialorder %v514, %v701
        %vm2333 = vcmp.eq.f32.partialorder %v514, %v705
        %vm2334 = vcmp.eq.f32.partialorder %v514, %v709
        %vm2335 = vcmp.eq.f32.partialorder %v514, %v713
        %vm2336 = vcmp.eq.f32.partialorder %v514, %v717
        %vm2337 = vcmp.eq.f32.partialorder %v514, %v721
        %vm2338 = vcmp.eq.f32.partialorder %v519, %v661
        %vm2339 = vcmp.eq.f32.partialorder %v519, %v665
        %vm2340 = vcmp.eq.f32.partialorder %v519, %v669
        %vm2341 = vcmp.eq.f32.partialorder %v519, %v673
        %vm2342 = vcmp.eq.f32.partialorder %v519, %v677
        %vm2343 = vcmp.eq.f32.partialorder %v519, %v681
        %vm2344 = vcmp.eq.f32.partialorder %v519, %v685
        %vm2345 = vcmp.eq.f32.partialorder %v519, %v689
        %vm2346 = vcmp.eq.f32.partialorder %v519, %v693
        %vm2347 = vcmp.eq.f32.partialorder %v519, %v697
        %vm2348 = vcmp.eq.f32.partialorder %v519, %v701
        %vm2349 = vcmp.eq.f32.partialorder %v519, %v705
        %vm2350 = vcmp.eq.f32.partialorder %v519, %v709
        %vm2351 = vcmp.eq.f32.partialorder %v519, %v713
        %vm2352 = vcmp.eq.f32.partialorder %v519, %v717
        %vm2353 = vcmp.eq.f32.partialorder %v519, %v721
        %vm2354 = vcmp.eq.f32.partialorder %v524, %v661
        %vm2355 = vcmp.eq.f32.partialorder %v524, %v665
        %vm2356 = vcmp.eq.f32.partialorder %v524, %v669
        %vm2357 = vcmp.eq.f32.partialorder %v524, %v673
        %vm2358 = vcmp.eq.f32.partialorder %v524, %v677
        %vm2359 = vcmp.eq.f32.partialorder %v524, %v681
        %vm2360 = vcmp.eq.f32.partialorder %v524, %v685
        %vm2361 = vcmp.eq.f32.partialorder %v524, %v689
        %vm2362 = vcmp.eq.f32.partialorder %v524, %v693
        %vm2363 = vcmp.eq.f32.partialorder %v524, %v697
        %vm2364 = vcmp.eq.f32.partialorder %v524, %v701
        %vm2365 = vcmp.eq.f32.partialorder %v524, %v705
        %vm2366 = vcmp.eq.f32.partialorder %v524, %v709
        %vm2367 = vcmp.eq.f32.partialorder %v524, %v713
        %vm2368 = vcmp.eq.f32.partialorder %v524, %v717
        %vm2369 = vcmp.eq.f32.partialorder %v524, %v721
        %vm2370 = vcmp.eq.f32.partialorder %v529, %v661
        %vm2371 = vcmp.eq.f32.partialorder %v529, %v665
        %vm2372 = vcmp.eq.f32.partialorder %v529, %v669
        %vm2373 = vcmp.eq.f32.partialorder %v529, %v673
        %vm2374 = vcmp.eq.f32.partialorder %v529, %v677
        %vm2375 = vcmp.eq.f32.partialorder %v529, %v681
        %vm2376 = vcmp.eq.f32.partialorder %v529, %v685
        %vm2377 = vcmp.eq.f32.partialorder %v529, %v689
        %vm2378 = vcmp.eq.f32.partialorder %v529, %v693
        %vm2379 = vcmp.eq.f32.partialorder %v529, %v697
        %vm2380 = vcmp.eq.f32.partialorder %v529, %v701
        %vm2381 = vcmp.eq.f32.partialorder %v529, %v705
        %vm2382 = vcmp.eq.f32.partialorder %v529, %v709
        %vm2383 = vcmp.eq.f32.partialorder %v529, %v713
        %vm2384 = vcmp.eq.f32.partialorder %v529, %v717
        %vm2385 = vcmp.eq.f32.partialorder %v529, %v721
        %vm2386 = vcmp.eq.f32.partialorder %v534, %v661
        %vm2387 = vcmp.eq.f32.partialorder %v534, %v665
        %vm2388 = vcmp.eq.f32.partialorder %v534, %v669
        %vm2389 = vcmp.eq.f32.partialorder %v534, %v673
        %vm2390 = vcmp.eq.f32.partialorder %v534, %v677
        %vm2391 = vcmp.eq.f32.partialorder %v534, %v681
        %vm2392 = vcmp.eq.f32.partialorder %v534, %v685
        %vm2393 = vcmp.eq.f32.partialorder %v534, %v689
        %vm2394 = vcmp.eq.f32.partialorder %v534, %v693
        %vm2395 = vcmp.eq.f32.partialorder %v534, %v697
        %vm2396 = vcmp.eq.f32.partialorder %v534, %v701
        %vm2397 = vcmp.eq.f32.partialorder %v534, %v705
        %vm2398 = vcmp.eq.f32.partialorder %v534, %v709
        %vm2399 = vcmp.eq.f32.partialorder %v534, %v713
        %vm2400 = vcmp.eq.f32.partialorder %v534, %v717
        %vm2401 = vcmp.eq.f32.partialorder %v534, %v721
        %vm2402 = vcmp.eq.f32.partialorder %v539, %v661
        %vm2403 = vcmp.eq.f32.partialorder %v539, %v665
        %vm2404 = vcmp.eq.f32.partialorder %v539, %v669
        %vm2405 = vcmp.eq.f32.partialorder %v539, %v673
        %vm2406 = vcmp.eq.f32.partialorder %v539, %v677
        %vm2407 = vcmp.eq.f32.partialorder %v539, %v681
        %vm2408 = vcmp.eq.f32.partialorder %v539, %v685
        %vm2409 = vcmp.eq.f32.partialorder %v539, %v689
        %vm2410 = vcmp.eq.f32.partialorder %v539, %v693
        %vm2411 = vcmp.eq.f32.partialorder %v539, %v697
        %vm2412 = vcmp.eq.f32.partialorder %v539, %v701
        %vm2413 = vcmp.eq.f32.partialorder %v539, %v705
        %vm2414 = vcmp.eq.f32.partialorder %v539, %v709
        %vm2415 = vcmp.eq.f32.partialorder %v539, %v713
        %vm2416 = vcmp.eq.f32.partialorder %v539, %v717
        %vm2417 = vcmp.eq.f32.partialorder %v539, %v721
        %vm2418 = vcmp.eq.f32.partialorder %v544, %v661
        %vm2419 = vcmp.eq.f32.partialorder %v544, %v665
        %vm2420 = vcmp.eq.f32.partialorder %v544, %v669
        %vm2421 = vcmp.eq.f32.partialorder %v544, %v673
        %vm2422 = vcmp.eq.f32.partialorder %v544, %v677
        %vm2423 = vcmp.eq.f32.partialorder %v544, %v681
        %vm2424 = vcmp.eq.f32.partialorder %v544, %v685
        %vm2425 = vcmp.eq.f32.partialorder %v544, %v689
        %vm2426 = vcmp.eq.f32.partialorder %v544, %v693
        %vm2427 = vcmp.eq.f32.partialorder %v544, %v697
        %vm2428 = vcmp.eq.f32.partialorder %v544, %v701
        %vm2429 = vcmp.eq.f32.partialorder %v544, %v705
        %vm2430 = vcmp.eq.f32.partialorder %v544, %v709
        %vm2431 = vcmp.eq.f32.partialorder %v544, %v713
        %vm2432 = vcmp.eq.f32.partialorder %v544, %v717
        %vm2433 = vcmp.eq.f32.partialorder %v544, %v721
        %vm2434 = vcmp.eq.f32.partialorder %v549, %v661
        %vm2435 = vcmp.eq.f32.partialorder %v549, %v665
        %vm2436 = vcmp.eq.f32.partialorder %v549, %v669
        %vm2437 = vcmp.eq.f32.partialorder %v549, %v673
        %vm2438 = vcmp.eq.f32.partialorder %v549, %v677
        %vm2439 = vcmp.eq.f32.partialorder %v549, %v681
        %vm2440 = vcmp.eq.f32.partialorder %v549, %v685
        %vm2441 = vcmp.eq.f32.partialorder %v549, %v689
        %vm2442 = vcmp.eq.f32.partialorder %v549, %v693
        %vm2443 = vcmp.eq.f32.partialorder %v549, %v697
        %vm2444 = vcmp.eq.f32.partialorder %v549, %v701
        %vm2445 = vcmp.eq.f32.partialorder %v549, %v705
        %vm2446 = vcmp.eq.f32.partialorder %v549, %v709
        %vm2447 = vcmp.eq.f32.partialorder %v549, %v713
        %vm2448 = vcmp.eq.f32.partialorder %v549, %v717
        %vm2449 = vcmp.eq.f32.partialorder %v549, %v721
        %vm2450 = vcmp.eq.f32.partialorder %v554, %v661
        %vm2451 = vcmp.eq.f32.partialorder %v554, %v665
        %vm2452 = vcmp.eq.f32.partialorder %v554, %v669
        %vm2453 = vcmp.eq.f32.partialorder %v554, %v673
        %vm2454 = vcmp.eq.f32.partialorder %v554, %v677
        %vm2455 = vcmp.eq.f32.partialorder %v554, %v681
        %vm2456 = vcmp.eq.f32.partialorder %v554, %v685
        %vm2457 = vcmp.eq.f32.partialorder %v554, %v689
        %vm2458 = vcmp.eq.f32.partialorder %v554, %v693
        %vm2459 = vcmp.eq.f32.partialorder %v554, %v697
        %vm2460 = vcmp.eq.f32.partialorder %v554, %v701
        %vm2461 = vcmp.eq.f32.partialorder %v554, %v705
        %vm2462 = vcmp.eq.f32.partialorder %v554, %v709
        %vm2463 = vcmp.eq.f32.partialorder %v554, %v713
        %vm2464 = vcmp.eq.f32.partialorder %v554, %v717
        %vm2465 = vcmp.eq.f32.partialorder %v554, %v721
        %vm2466 = vcmp.eq.f32.partialorder %v559, %v661
        %vm2467 = vcmp.eq.f32.partialorder %v559, %v665
        %vm2468 = vcmp.eq.f32.partialorder %v559, %v669
        %vm2469 = vcmp.eq.f32.partialorder %v559, %v673
        %vm2470 = vcmp.eq.f32.partialorder %v559, %v677
        %vm2471 = vcmp.eq.f32.partialorder %v559, %v681
        %vm2472 = vcmp.eq.f32.partialorder %v559, %v685
        %vm2473 = vcmp.eq.f32.partialorder %v559, %v689
        %vm2474 = vcmp.eq.f32.partialorder %v559, %v693
        %vm2475 = vcmp.eq.f32.partialorder %v559, %v697
        %vm2476 = vcmp.eq.f32.partialorder %v559, %v701
        %vm2477 = vcmp.eq.f32.partialorder %v559, %v705
        %vm2478 = vcmp.eq.f32.partialorder %v559, %v709
        %vm2479 = vcmp.eq.f32.partialorder %v559, %v713
        %vm2480 = vcmp.eq.f32.partialorder %v559, %v717
        %vm2481 = vcmp.eq.f32.partialorder %v559, %v721
        %vm2482 = vcmp.eq.f32.partialorder %v564, %v661
        %vm2483 = vcmp.eq.f32.partialorder %v564, %v665
        %vm2484 = vcmp.eq.f32.partialorder %v564, %v669
        %vm2485 = vcmp.eq.f32.partialorder %v564, %v673
        %vm2486 = vcmp.eq.f32.partialorder %v564, %v677
        %vm2487 = vcmp.eq.f32.partialorder %v564, %v681
        %vm2488 = vcmp.eq.f32.partialorder %v564, %v685
        %vm2489 = vcmp.eq.f32.partialorder %v564, %v689
        %vm2490 = vcmp.eq.f32.partialorder %v564, %v693
        %vm2491 = vcmp.eq.f32.partialorder %v564, %v697
        %vm2492 = vcmp.eq.f32.partialorder %v564, %v701
        %vm2493 = vcmp.eq.f32.partialorder %v564, %v705
        %vm2494 = vcmp.eq.f32.partialorder %v564, %v709
        %vm2495 = vcmp.eq.f32.partialorder %v564, %v713
        %vm2496 = vcmp.eq.f32.partialorder %v564, %v717
        %vm2497 = vcmp.eq.f32.partialorder %v564, %v721
        %vm2498 = vcmp.eq.f32.partialorder %v569, %v661
        %vm2499 = vcmp.eq.f32.partialorder %v569, %v665
        %vm2500 = vcmp.eq.f32.partialorder %v569, %v669
        %vm2501 = vcmp.eq.f32.partialorder %v569, %v673
        %vm2502 = vcmp.eq.f32.partialorder %v569, %v677
        %vm2503 = vcmp.eq.f32.partialorder %v569, %v681
        %vm2504 = vcmp.eq.f32.partialorder %v569, %v685
        %vm2505 = vcmp.eq.f32.partialorder %v569, %v689
        %vm2506 = vcmp.eq.f32.partialorder %v569, %v693
        %vm2507 = vcmp.eq.f32.partialorder %v569, %v697
        %vm2508 = vcmp.eq.f32.partialorder %v569, %v701
        %vm2509 = vcmp.eq.f32.partialorder %v569, %v705
        %vm2510 = vcmp.eq.f32.partialorder %v569, %v709
        %vm2511 = vcmp.eq.f32.partialorder %v569, %v713
        %vm2512 = vcmp.eq.f32.partialorder %v569, %v717
        %vm2513 = vcmp.eq.f32.partialorder %v569, %v721
        %vm2514 = vcmp.eq.f32.partialorder %v574, %v661
        %vm2515 = vcmp.eq.f32.partialorder %v574, %v665
        %vm2516 = vcmp.eq.f32.partialorder %v574, %v669
        %vm2517 = vcmp.eq.f32.partialorder %v574, %v673
        %vm2518 = vcmp.eq.f32.partialorder %v574, %v677
        %vm2519 = vcmp.eq.f32.partialorder %v574, %v681
        %vm2520 = vcmp.eq.f32.partialorder %v574, %v685
        %vm2521 = vcmp.eq.f32.partialorder %v574, %v689
        %vm2522 = vcmp.eq.f32.partialorder %v574, %v693
        %vm2523 = vcmp.eq.f32.partialorder %v574, %v697
        %vm2524 = vcmp.eq.f32.partialorder %v574, %v701
        %vm2525 = vcmp.eq.f32.partialorder %v574, %v705
        %vm2526 = vcmp.eq.f32.partialorder %v574, %v709
        %vm2527 = vcmp.eq.f32.partialorder %v574, %v713
        %vm2528 = vcmp.eq.f32.partialorder %v574, %v717
        %vm2529 = vcmp.eq.f32.partialorder %v574, %v721
        %vm2530 = vcmp.eq.f32.partialorder %v579, %v661
        %vm2531 = vcmp.eq.f32.partialorder %v579, %v665
        %vm2532 = vcmp.eq.f32.partialorder %v579, %v669
        %vm2533 = vcmp.eq.f32.partialorder %v579, %v673
        %vm2534 = vcmp.eq.f32.partialorder %v579, %v677
        %vm2535 = vcmp.eq.f32.partialorder %v579, %v681
        %vm2536 = vcmp.eq.f32.partialorder %v579, %v685
        %vm2537 = vcmp.eq.f32.partialorder %v579, %v689
        %vm2538 = vcmp.eq.f32.partialorder %v579, %v693
        %vm2539 = vcmp.eq.f32.partialorder %v579, %v697
        %vm2540 = vcmp.eq.f32.partialorder %v579, %v701
        %vm2541 = vcmp.eq.f32.partialorder %v579, %v705
        %vm2542 = vcmp.eq.f32.partialorder %v579, %v709
        %vm2543 = vcmp.eq.f32.partialorder %v579, %v713
        %vm2544 = vcmp.eq.f32.partialorder %v579, %v717
        %vm2545 = vcmp.eq.f32.partialorder %v579, %v721
        %vm2546 = vcmp.eq.f32.partialorder %v584, %v661
        %vm2547 = vcmp.eq.f32.partialorder %v584, %v665
        %vm2548 = vcmp.eq.f32.partialorder %v584, %v669
        %vm2549 = vcmp.eq.f32.partialorder %v584, %v673
        %vm2550 = vcmp.eq.f32.partialorder %v584, %v677
        %vm2551 = vcmp.eq.f32.partialorder %v584, %v681
        %vm2552 = vcmp.eq.f32.partialorder %v584, %v685
        %vm2553 = vcmp.eq.f32.partialorder %v584, %v689
        %vm2554 = vcmp.eq.f32.partialorder %v584, %v693
        %vm2555 = vcmp.eq.f32.partialorder %v584, %v697
        %vm2556 = vcmp.eq.f32.partialorder %v584, %v701
        %vm2557 = vcmp.eq.f32.partialorder %v584, %v705
        %vm2558 = vcmp.eq.f32.partialorder %v584, %v709
        %vm2559 = vcmp.eq.f32.partialorder %v584, %v713
        %vm2560 = vcmp.eq.f32.partialorder %v584, %v717
        %vm2561 = vcmp.eq.f32.partialorder %v584, %v721
        %vm2562 = vcmp.eq.f32.partialorder %v589, %v661
        %vm2563 = vcmp.eq.f32.partialorder %v589, %v665
        %vm2564 = vcmp.eq.f32.partialorder %v589, %v669
        %vm2565 = vcmp.eq.f32.partialorder %v589, %v673
        %vm2566 = vcmp.eq.f32.partialorder %v589, %v677
        %vm2567 = vcmp.eq.f32.partialorder %v589, %v681
        %vm2568 = vcmp.eq.f32.partialorder %v589, %v685
        %vm2569 = vcmp.eq.f32.partialorder %v589, %v689
        %vm2570 = vcmp.eq.f32.partialorder %v589, %v693
        %vm2571 = vcmp.eq.f32.partialorder %v589, %v697
        %vm2572 = vcmp.eq.f32.partialorder %v589, %v701
        %vm2573 = vcmp.eq.f32.partialorder %v589, %v705
        %vm2574 = vcmp.eq.f32.partialorder %v589, %v709
        %vm2575 = vcmp.eq.f32.partialorder %v589, %v713
        %vm2576 = vcmp.eq.f32.partialorder %v589, %v717
        %vm2577 = vcmp.eq.f32.partialorder %v589, %v721
        %vm2578 = vcmp.eq.f32.partialorder %v594, %v661
        %vm2579 = vcmp.eq.f32.partialorder %v594, %v665
        %vm2580 = vcmp.eq.f32.partialorder %v594, %v669
        %vm2581 = vcmp.eq.f32.partialorder %v594, %v673
        %vm2582 = vcmp.eq.f32.partialorder %v594, %v677
        %vm2583 = vcmp.eq.f32.partialorder %v594, %v681
        %vm2584 = vcmp.eq.f32.partialorder %v594, %v685
        %vm2585 = vcmp.eq.f32.partialorder %v594, %v689
        %vm2586 = vcmp.eq.f32.partialorder %v594, %v693
        %vm2587 = vcmp.eq.f32.partialorder %v594, %v697
        %vm2588 = vcmp.eq.f32.partialorder %v594, %v701
        %vm2589 = vcmp.eq.f32.partialorder %v594, %v705
        %vm2590 = vcmp.eq.f32.partialorder %v594, %v709
        %vm2591 = vcmp.eq.f32.partialorder %v594, %v713
        %vm2592 = vcmp.eq.f32.partialorder %v594, %v717
        %vm2593 = vcmp.eq.f32.partialorder %v594, %v721
        %vm2594 = vcmp.eq.f32.partialorder %v599, %v661
        %vm2595 = vcmp.eq.f32.partialorder %v599, %v665
        %vm2596 = vcmp.eq.f32.partialorder %v599, %v669
        %vm2597 = vcmp.eq.f32.partialorder %v599, %v673
        %vm2598 = vcmp.eq.f32.partialorder %v599, %v677
        %vm2599 = vcmp.eq.f32.partialorder %v599, %v681
        %vm2600 = vcmp.eq.f32.partialorder %v599, %v685
        %vm2601 = vcmp.eq.f32.partialorder %v599, %v689
        %vm2602 = vcmp.eq.f32.partialorder %v599, %v693
        %vm2603 = vcmp.eq.f32.partialorder %v599, %v697
        %vm2604 = vcmp.eq.f32.partialorder %v599, %v701
        %vm2605 = vcmp.eq.f32.partialorder %v599, %v705
        %vm2606 = vcmp.eq.f32.partialorder %v599, %v709
        %vm2607 = vcmp.eq.f32.partialorder %v599, %v713
        %vm2608 = vcmp.eq.f32.partialorder %v599, %v717
        %vm2609 = vcmp.eq.f32.partialorder %v599, %v721
        %vm2610 = vcmp.eq.f32.partialorder %v604, %v661
        %vm2611 = vcmp.eq.f32.partialorder %v604, %v665
        %vm2612 = vcmp.eq.f32.partialorder %v604, %v669
        %vm2613 = vcmp.eq.f32.partialorder %v604, %v673
        %vm2614 = vcmp.eq.f32.partialorder %v604, %v677
        %vm2615 = vcmp.eq.f32.partialorder %v604, %v681
        %vm2616 = vcmp.eq.f32.partialorder %v604, %v685
        %vm2617 = vcmp.eq.f32.partialorder %v604, %v689
        %vm2618 = vcmp.eq.f32.partialorder %v604, %v693
        %vm2619 = vcmp.eq.f32.partialorder %v604, %v697
        %vm2620 = vcmp.eq.f32.partialorder %v604, %v701
        %vm2621 = vcmp.eq.f32.partialorder %v604, %v705
        %vm2622 = vcmp.eq.f32.partialorder %v604, %v709
        %vm2623 = vcmp.eq.f32.partialorder %v604, %v713
        %vm2624 = vcmp.eq.f32.partialorder %v604, %v717
        %vm2625 = vcmp.eq.f32.partialorder %v604, %v721
        %vm2626 = vcmp.eq.f32.partialorder %v609, %v661
        %vm2627 = vcmp.eq.f32.partialorder %v609, %v665
        %vm2628 = vcmp.eq.f32.partialorder %v609, %v669
        %vm2629 = vcmp.eq.f32.partialorder %v609, %v673
        %vm2630 = vcmp.eq.f32.partialorder %v609, %v677
        %vm2631 = vcmp.eq.f32.partialorder %v609, %v681
        %vm2632 = vcmp.eq.f32.partialorder %v609, %v685
        %vm2633 = vcmp.eq.f32.partialorder %v609, %v689
        %vm2634 = vcmp.eq.f32.partialorder %v609, %v693
        %vm2635 = vcmp.eq.f32.partialorder %v609, %v697
        %vm2636 = vcmp.eq.f32.partialorder %v609, %v701
        %vm2637 = vcmp.eq.f32.partialorder %v609, %v705
        %vm2638 = vcmp.eq.f32.partialorder %v609, %v709
        %vm2639 = vcmp.eq.f32.partialorder %v609, %v713
        %vm2640 = vcmp.eq.f32.partialorder %v609, %v717
        %vm2641 = vcmp.eq.f32.partialorder %v609, %v721
        %vm2642 = vcmp.eq.f32.partialorder %v614, %v661
        %vm2643 = vcmp.eq.f32.partialorder %v614, %v665
        %vm2644 = vcmp.eq.f32.partialorder %v614, %v669
        %vm2645 = vcmp.eq.f32.partialorder %v614, %v673
        %vm2646 = vcmp.eq.f32.partialorder %v614, %v677
        %vm2647 = vcmp.eq.f32.partialorder %v614, %v681
        %vm2648 = vcmp.eq.f32.partialorder %v614, %v685
        %vm2649 = vcmp.eq.f32.partialorder %v614, %v689
        %vm2650 = vcmp.eq.f32.partialorder %v614, %v693
        %vm2651 = vcmp.eq.f32.partialorder %v614, %v697
        %vm2652 = vcmp.eq.f32.partialorder %v614, %v701
        %vm2653 = vcmp.eq.f32.partialorder %v614, %v705
        %vm2654 = vcmp.eq.f32.partialorder %v614, %v709
        %vm2655 = vcmp.eq.f32.partialorder %v614, %v713
        %vm2656 = vcmp.eq.f32.partialorder %v614, %v717
        %vm2657 = vcmp.eq.f32.partialorder %v614, %v721
        %vm2658 = vcmp.eq.f32.partialorder %v619, %v661
        %vm2659 = vcmp.eq.f32.partialorder %v619, %v665
        %vm2660 = vcmp.eq.f32.partialorder %v619, %v669
        %vm2661 = vcmp.eq.f32.partialorder %v619, %v673
        %vm2662 = vcmp.eq.f32.partialorder %v619, %v677
        %vm2663 = vcmp.eq.f32.partialorder %v619, %v681
        %vm2664 = vcmp.eq.f32.partialorder %v619, %v685
        %vm2665 = vcmp.eq.f32.partialorder %v619, %v689
        %vm2666 = vcmp.eq.f32.partialorder %v619, %v693
        %vm2667 = vcmp.eq.f32.partialorder %v619, %v697
        %vm2668 = vcmp.eq.f32.partialorder %v619, %v701
        %vm2669 = vcmp.eq.f32.partialorder %v619, %v705
        %vm2670 = vcmp.eq.f32.partialorder %v619, %v709
        %vm2671 = vcmp.eq.f32.partialorder %v619, %v713
        %vm2672 = vcmp.eq.f32.partialorder %v619, %v717
        %vm2673 = vcmp.eq.f32.partialorder %v619, %v721
        %vm2674 = vcmp.eq.f32.partialorder %v624, %v661
        %vm2675 = vcmp.eq.f32.partialorder %v624, %v665
        %vm2676 = vcmp.eq.f32.partialorder %v624, %v669
        %vm2677 = vcmp.eq.f32.partialorder %v624, %v673
        %vm2678 = vcmp.eq.f32.partialorder %v624, %v677
        %vm2679 = vcmp.eq.f32.partialorder %v624, %v681
        %vm2680 = vcmp.eq.f32.partialorder %v624, %v685
        %vm2681 = vcmp.eq.f32.partialorder %v624, %v689
        %vm2682 = vcmp.eq.f32.partialorder %v624, %v693
        %vm2683 = vcmp.eq.f32.partialorder %v624, %v697
        %vm2684 = vcmp.eq.f32.partialorder %v624, %v701
        %vm2685 = vcmp.eq.f32.partialorder %v624, %v705
        %vm2686 = vcmp.eq.f32.partialorder %v624, %v709
        %vm2687 = vcmp.eq.f32.partialorder %v624, %v713
        %vm2688 = vcmp.eq.f32.partialorder %v624, %v717
        %vm2689 = vcmp.eq.f32.partialorder %v624, %v721
        %vm2690 = vcmp.eq.f32.partialorder %v629, %v661
        %vm2691 = vcmp.eq.f32.partialorder %v629, %v665
        %vm2692 = vcmp.eq.f32.partialorder %v629, %v669
        %vm2693 = vcmp.eq.f32.partialorder %v629, %v673
        %vm2694 = vcmp.eq.f32.partialorder %v629, %v677
        %vm2695 = vcmp.eq.f32.partialorder %v629, %v681
        %vm2696 = vcmp.eq.f32.partialorder %v629, %v685
        %vm2697 = vcmp.eq.f32.partialorder %v629, %v689
        %vm2698 = vcmp.eq.f32.partialorder %v629, %v693
        %vm2699 = vcmp.eq.f32.partialorder %v629, %v697
        %vm2700 = vcmp.eq.f32.partialorder %v629, %v701
        %vm2701 = vcmp.eq.f32.partialorder %v629, %v705
        %vm2702 = vcmp.eq.f32.partialorder %v629, %v709
        %vm2703 = vcmp.eq.f32.partialorder %v629, %v713
        %vm2704 = vcmp.eq.f32.partialorder %v629, %v717
        %vm2705 = vcmp.eq.f32.partialorder %v629, %v721
        %vm2706 = vcmp.eq.f32.partialorder %v634, %v661
        %vm2707 = vcmp.eq.f32.partialorder %v634, %v665
        %vm2708 = vcmp.eq.f32.partialorder %v634, %v669
        %vm2709 = vcmp.eq.f32.partialorder %v634, %v673
        %vm2710 = vcmp.eq.f32.partialorder %v634, %v677
        %vm2711 = vcmp.eq.f32.partialorder %v634, %v681
        %vm2712 = vcmp.eq.f32.partialorder %v634, %v685
        %vm2713 = vcmp.eq.f32.partialorder %v634, %v689
        %vm2714 = vcmp.eq.f32.partialorder %v634, %v693
        %vm2715 = vcmp.eq.f32.partialorder %v634, %v697
        %vm2716 = vcmp.eq.f32.partialorder %v634, %v701
        %vm2717 = vcmp.eq.f32.partialorder %v634, %v705
        %vm2718 = vcmp.eq.f32.partialorder %v634, %v709
        %vm2719 = vcmp.eq.f32.partialorder %v634, %v713
        %vm2720 = vcmp.eq.f32.partialorder %v634, %v717
        %vm2721 = vcmp.eq.f32.partialorder %v634, %v721
        %vm2722 = vcmp.eq.f32.partialorder %v639, %v661
        %vm2723 = vcmp.eq.f32.partialorder %v639, %v665
        %vm2724 = vcmp.eq.f32.partialorder %v639, %v669
        %vm2725 = vcmp.eq.f32.partialorder %v639, %v673
        %vm2726 = vcmp.eq.f32.partialorder %v639, %v677
        %vm2727 = vcmp.eq.f32.partialorder %v639, %v681
        %vm2728 = vcmp.eq.f32.partialorder %v639, %v685
        %vm2729 = vcmp.eq.f32.partialorder %v639, %v689
        %vm2730 = vcmp.eq.f32.partialorder %v639, %v693
        %vm2731 = vcmp.eq.f32.partialorder %v639, %v697
        %vm2732 = vcmp.eq.f32.partialorder %v639, %v701
        %vm2733 = vcmp.eq.f32.partialorder %v639, %v705
        %vm2734 = vcmp.eq.f32.partialorder %v639, %v709
        %vm2735 = vcmp.eq.f32.partialorder %v639, %v713
        %vm2736 = vcmp.eq.f32.partialorder %v639, %v717
        %vm2737 = vcmp.eq.f32.partialorder %v639, %v721
        %vm2738 = vcmp.eq.f32.partialorder %v644, %v661
        %vm2739 = vcmp.eq.f32.partialorder %v644, %v665
        %vm2740 = vcmp.eq.f32.partialorder %v644, %v669
        %vm2741 = vcmp.eq.f32.partialorder %v644, %v673
        %vm2742 = vcmp.eq.f32.partialorder %v644, %v677
        %vm2743 = vcmp.eq.f32.partialorder %v644, %v681
        %vm2744 = vcmp.eq.f32.partialorder %v644, %v685
        %vm2745 = vcmp.eq.f32.partialorder %v644, %v689
        %vm2746 = vcmp.eq.f32.partialorder %v644, %v693
        %vm2747 = vcmp.eq.f32.partialorder %v644, %v697
        %vm2748 = vcmp.eq.f32.partialorder %v644, %v701
        %vm2749 = vcmp.eq.f32.partialorder %v644, %v705
        %vm2750 = vcmp.eq.f32.partialorder %v644, %v709
        %vm2751 = vcmp.eq.f32.partialorder %v644, %v713
        %vm2752 = vcmp.eq.f32.partialorder %v644, %v717
        %vm2753 = vcmp.eq.f32.partialorder %v644, %v721
        %vm2754 = vcmp.eq.f32.partialorder %v649, %v661
        %vm2755 = vcmp.eq.f32.partialorder %v649, %v665
        %vm2756 = vcmp.eq.f32.partialorder %v649, %v669
        %vm2757 = vcmp.eq.f32.partialorder %v649, %v673
        %vm2758 = vcmp.eq.f32.partialorder %v649, %v677
        %vm2759 = vcmp.eq.f32.partialorder %v649, %v681
        %vm2760 = vcmp.eq.f32.partialorder %v649, %v685
        %vm2761 = vcmp.eq.f32.partialorder %v649, %v689
        %vm2762 = vcmp.eq.f32.partialorder %v649, %v693
        %vm2763 = vcmp.eq.f32.partialorder %v649, %v697
        %vm2764 = vcmp.eq.f32.partialorder %v649, %v701
        %vm2765 = vcmp.eq.f32.partialorder %v649, %v705
        %vm2766 = vcmp.eq.f32.partialorder %v649, %v709
        %vm2767 = vcmp.eq.f32.partialorder %v649, %v713
        %vm2768 = vcmp.eq.f32.partialorder %v649, %v717
        %vm2769 = vcmp.eq.f32.partialorder %v649, %v721
        %vm2770 = vcmp.eq.f32.partialorder %v654, %v661
        %vm2771 = vcmp.eq.f32.partialorder %v654, %v665
        %vm2772 = vcmp.eq.f32.partialorder %v654, %v669
        %vm2773 = vcmp.eq.f32.partialorder %v654, %v673
        %vm2774 = vcmp.eq.f32.partialorder %v654, %v677
        %vm2775 = vcmp.eq.f32.partialorder %v654, %v681
        %vm2776 = vcmp.eq.f32.partialorder %v654, %v685
        %vm2777 = vcmp.eq.f32.partialorder %v654, %v689
        %vm2778 = vcmp.eq.f32.partialorder %v654, %v693
        %vm2779 = vcmp.eq.f32.partialorder %v654, %v697
        %vm2780 = vcmp.eq.f32.partialorder %v654, %v701
        %vm2781 = vcmp.eq.f32.partialorder %v654, %v705
        %vm2782 = vcmp.eq.f32.partialorder %v654, %v709
        %vm2783 = vcmp.eq.f32.partialorder %v654, %v713
        %vm2784 = vcmp.eq.f32.partialorder %v654, %v717
        %vm2785 = vcmp.eq.f32.partialorder %v654, %v721
        %v2786 = vsel %vm1762, 0.5, 0.0
        %v2787 = vsel %vm1763, 0.5, 0.0
        %v2788 = vsel %vm1764, 0.5, 0.0
        %v2789 = vsel %vm1765, 0.5, 0.0
        %v2790 = vsel %vm1766, 0.5, 0.0
        %v2791 = vsel %vm1767, 0.5, 0.0
        %v2792 = vsel %vm1768, 0.5, 0.0
        %v2793 = vsel %vm1769, 0.5, 0.0
        %v2794 = vsel %vm1770, 0.5, 0.0
        %v2795 = vsel %vm1771, 0.5, 0.0
        %v2796 = vsel %vm1772, 0.5, 0.0
        %v2797 = vsel %vm1773, 0.5, 0.0
        %v2798 = vsel %vm1774, 0.5, 0.0
        %v2799 = vsel %vm1775, 0.5, 0.0
        %v2800 = vsel %vm1776, 0.5, 0.0
        %v2801 = vsel %vm1777, 0.5, 0.0
        %v2802 = vsel %vm1778, 0.5, 0.0
        %v2803 = vsel %vm1779, 0.5, 0.0
        %v2804 = vsel %vm1780, 0.5, 0.0
        %v2805 = vsel %vm1781, 0.5, 0.0
        %v2806 = vsel %vm1782, 0.5, 0.0
        %v2807 = vsel %vm1783, 0.5, 0.0
        %v2808 = vsel %vm1784, 0.5, 0.0
        %v2809 = vsel %vm1785, 0.5, 0.0
        %v2810 = vsel %vm1786, 0.5, 0.0
        %v2811 = vsel %vm1787, 0.5, 0.0
        %v2812 = vsel %vm1788, 0.5, 0.0
        %v2813 = vsel %vm1789, 0.5, 0.0
        %v2814 = vsel %vm1790, 0.5, 0.0
        %v2815 = vsel %vm1791, 0.5, 0.0
        %v2816 = vsel %vm1792, 0.5, 0.0
        %v2817 = vsel %vm1793, 0.5, 0.0
        %v2818 = vsel %vm1794, 0.5, 0.0
        %v2819 = vsel %vm1795, 0.5, 0.0
        %v2820 = vsel %vm1796, 0.5, 0.0
        %v2821 = vsel %vm1797, 0.5, 0.0
        %v2822 = vsel %vm1798, 0.5, 0.0
        %v2823 = vsel %vm1799, 0.5, 0.0
        %v2824 = vsel %vm1800, 0.5, 0.0
        %v2825 = vsel %vm1801, 0.5, 0.0
        %v2826 = vsel %vm1802, 0.5, 0.0
        %v2827 = vsel %vm1803, 0.5, 0.0
        %v2828 = vsel %vm1804, 0.5, 0.0
        %v2829 = vsel %vm1805, 0.5, 0.0
        %v2830 = vsel %vm1806, 0.5, 0.0
        %v2831 = vsel %vm1807, 0.5, 0.0
        %v2832 = vsel %vm1808, 0.5, 0.0
        %v2833 = vsel %vm1809, 0.5, 0.0
        %v2834 = vsel %vm1810, 0.5, 0.0
        %v2835 = vsel %vm1811, 0.5, 0.0
        %v2836 = vsel %vm1812, 0.5, 0.0
        %v2837 = vsel %vm1813, 0.5, 0.0
        %v2838 = vsel %vm1814, 0.5, 0.0
        %v2839 = vsel %vm1815, 0.5, 0.0
        %v2840 = vsel %vm1816, 0.5, 0.0
        %v2841 = vsel %vm1817, 0.5, 0.0
        %v2842 = vsel %vm1818, 0.5, 0.0
        %v2843 = vsel %vm1819, 0.5, 0.0
        %v2844 = vsel %vm1820, 0.5, 0.0
        %v2845 = vsel %vm1821, 0.5, 0.0
        %v2846 = vsel %vm1822, 0.5, 0.0
        %v2847 = vsel %vm1823, 0.5, 0.0
        %v2848 = vsel %vm1824, 0.5, 0.0
        %v2849 = vsel %vm1825, 0.5, 0.0
        %v2850 = vsel %vm1826, 0.5, 0.0
        %v2851 = vsel %vm1827, 0.5, 0.0
        %v2852 = vsel %vm1828, 0.5, 0.0
        %v2853 = vsel %vm1829, 0.5, 0.0
        %v2854 = vsel %vm1830, 0.5, 0.0
        %v2855 = vsel %vm1831, 0.5, 0.0
        %v2856 = vsel %vm1832, 0.5, 0.0
        %v2857 = vsel %vm1833, 0.5, 0.0
        %v2858 = vsel %vm1834, 0.5, 0.0
        %v2859 = vsel %vm1835, 0.5, 0.0
        %v2860 = vsel %vm1836, 0.5, 0.0
        %v2861 = vsel %vm1837, 0.5, 0.0
        %v2862 = vsel %vm1838, 0.5, 0.0
        %v2863 = vsel %vm1839, 0.5, 0.0
        %v2864 = vsel %vm1840, 0.5, 0.0
        %v2865 = vsel %vm1841, 0.5, 0.0
        %v2866 = vsel %vm1842, 0.5, 0.0
        %v2867 = vsel %vm1843, 0.5, 0.0
        %v2868 = vsel %vm1844, 0.5, 0.0
        %v2869 = vsel %vm1845, 0.5, 0.0
        %v2870 = vsel %vm1846, 0.5, 0.0
        %v2871 = vsel %vm1847, 0.5, 0.0
        %v2872 = vsel %vm1848, 0.5, 0.0
        %v2873 = vsel %vm1849, 0.5, 0.0
        %v2874 = vsel %vm1850, 0.5, 0.0
        %v2875 = vsel %vm1851, 0.5, 0.0
        %v2876 = vsel %vm1852, 0.5, 0.0
        %v2877 = vsel %vm1853, 0.5, 0.0
        %v2878 = vsel %vm1854, 0.5, 0.0
        %v2879 = vsel %vm1855, 0.5, 0.0
        %v2880 = vsel %vm1856, 0.5, 0.0
        %v2881 = vsel %vm1857, 0.5, 0.0
        %v2882 = vsel %vm1858, 0.5, 0.0
        %v2883 = vsel %vm1859, 0.5, 0.0
        %v2884 = vsel %vm1860, 0.5, 0.0
        %v2885 = vsel %vm1861, 0.5, 0.0
        %v2886 = vsel %vm1862, 0.5, 0.0
        %v2887 = vsel %vm1863, 0.5, 0.0
        %v2888 = vsel %vm1864, 0.5, 0.0
        %v2889 = vsel %vm1865, 0.5, 0.0
        %v2890 = vsel %vm1866, 0.5, 0.0
        %v2891 = vsel %vm1867, 0.5, 0.0
        %v2892 = vsel %vm1868, 0.5, 0.0
        %v2893 = vsel %vm1869, 0.5, 0.0
        %v2894 = vsel %vm1870, 0.5, 0.0
        %v2895 = vsel %vm1871, 0.5, 0.0
        %v2896 = vsel %vm1872, 0.5, 0.0
        %v2897 = vsel %vm1873, 0.5, 0.0
        %v2898 = vsel %vm1874, 0.5, 0.0
        %v2899 = vsel %vm1875, 0.5, 0.0
        %v2900 = vsel %vm1876, 0.5, 0.0
        %v2901 = vsel %vm1877, 0.5, 0.0
        %v2902 = vsel %vm1878, 0.5, 0.0
        %v2903 = vsel %vm1879, 0.5, 0.0
        %v2904 = vsel %vm1880, 0.5, 0.0
        %v2905 = vsel %vm1881, 0.5, 0.0
        %v2906 = vsel %vm1882, 0.5, 0.0
        %v2907 = vsel %vm1883, 0.5, 0.0
        %v2908 = vsel %vm1884, 0.5, 0.0
        %v2909 = vsel %vm1885, 0.5, 0.0
        %v2910 = vsel %vm1886, 0.5, 0.0
        %v2911 = vsel %vm1887, 0.5, 0.0
        %v2912 = vsel %vm1888, 0.5, 0.0
        %v2913 = vsel %vm1889, 0.5, 0.0
        %v2914 = vsel %vm1890, 0.5, 0.0
        %v2915 = vsel %vm1891, 0.5, 0.0
        %v2916 = vsel %vm1892, 0.5, 0.0
        %v2917 = vsel %vm1893, 0.5, 0.0
        %v2918 = vsel %vm1894, 0.5, 0.0
        %v2919 = vsel %vm1895, 0.5, 0.0
        %v2920 = vsel %vm1896, 0.5, 0.0
        %v2921 = vsel %vm1897, 0.5, 0.0
        %v2922 = vsel %vm1898, 0.5, 0.0
        %v2923 = vsel %vm1899, 0.5, 0.0
        %v2924 = vsel %vm1900, 0.5, 0.0
        %v2925 = vsel %vm1901, 0.5, 0.0
        %v2926 = vsel %vm1902, 0.5, 0.0
        %v2927 = vsel %vm1903, 0.5, 0.0
        %v2928 = vsel %vm1904, 0.5, 0.0
        %v2929 = vsel %vm1905, 0.5, 0.0
        %v2930 = vsel %vm1906, 0.5, 0.0
        %v2931 = vsel %vm1907, 0.5, 0.0
        %v2932 = vsel %vm1908, 0.5, 0.0
        %v2933 = vsel %vm1909, 0.5, 0.0
        %v2934 = vsel %vm1910, 0.5, 0.0
        %v2935 = vsel %vm1911, 0.5, 0.0
        %v2936 = vsel %vm1912, 0.5, 0.0
        %v2937 = vsel %vm1913, 0.5, 0.0
        %v2938 = vsel %vm1914, 0.5, 0.0
        %v2939 = vsel %vm1915, 0.5, 0.0
        %v2940 = vsel %vm1916, 0.5, 0.0
        %v2941 = vsel %vm1917, 0.5, 0.0
        %v2942 = vsel %vm1918, 0.5, 0.0
        %v2943 = vsel %vm1919, 0.5, 0.0
        %v2944 = vsel %vm1920, 0.5, 0.0
        %v2945 = vsel %vm1921, 0.5, 0.0
        %v2946 = vsel %vm1922, 0.5, 0.0
        %v2947 = vsel %vm1923, 0.5, 0.0
        %v2948 = vsel %vm1924, 0.5, 0.0
        %v2949 = vsel %vm1925, 0.5, 0.0
        %v2950 = vsel %vm1926, 0.5, 0.0
        %v2951 = vsel %vm1927, 0.5, 0.0
        %v2952 = vsel %vm1928, 0.5, 0.0
        %v2953 = vsel %vm1929, 0.5, 0.0
        %v2954 = vsel %vm1930, 0.5, 0.0
        %v2955 = vsel %vm1931, 0.5, 0.0
        %v2956 = vsel %vm1932, 0.5, 0.0
        %v2957 = vsel %vm1933, 0.5, 0.0
        %v2958 = vsel %vm1934, 0.5, 0.0
        %v2959 = vsel %vm1935, 0.5, 0.0
        %v2960 = vsel %vm1936, 0.5, 0.0
        %v2961 = vsel %vm1937, 0.5, 0.0
        %v2962 = vsel %vm1938, 0.5, 0.0
        %v2963 = vsel %vm1939, 0.5, 0.0
        %v2964 = vsel %vm1940, 0.5, 0.0
        %v2965 = vsel %vm1941, 0.5, 0.0
        %v2966 = vsel %vm1942, 0.5, 0.0
        %v2967 = vsel %vm1943, 0.5, 0.0
        %v2968 = vsel %vm1944, 0.5, 0.0
        %v2969 = vsel %vm1945, 0.5, 0.0
        %v2970 = vsel %vm1946, 0.5, 0.0
        %v2971 = vsel %vm1947, 0.5, 0.0
        %v2972 = vsel %vm1948, 0.5, 0.0
        %v2973 = vsel %vm1949, 0.5, 0.0
        %v2974 = vsel %vm1950, 0.5, 0.0
        %v2975 = vsel %vm1951, 0.5, 0.0
        %v2976 = vsel %vm1952, 0.5, 0.0
        %v2977 = vsel %vm1953, 0.5, 0.0
        %v2978 = vsel %vm1954, 0.5, 0.0
        %v2979 = vsel %vm1955, 0.5, 0.0
        %v2980 = vsel %vm1956, 0.5, 0.0
        %v2981 = vsel %vm1957, 0.5, 0.0
        %v2982 = vsel %vm1958, 0.5, 0.0
        %v2983 = vsel %vm1959, 0.5, 0.0
        %v2984 = vsel %vm1960, 0.5, 0.0
        %v2985 = vsel %vm1961, 0.5, 0.0
        %v2986 = vsel %vm1962, 0.5, 0.0
        %v2987 = vsel %vm1963, 0.5, 0.0
        %v2988 = vsel %vm1964, 0.5, 0.0
        %v2989 = vsel %vm1965, 0.5, 0.0
        %v2990 = vsel %vm1966, 0.5, 0.0
        %v2991 = vsel %vm1967, 0.5, 0.0
        %v2992 = vsel %vm1968, 0.5, 0.0
        %v2993 = vsel %vm1969, 0.5, 0.0
        %v2994 = vsel %vm1970, 0.5, 0.0
        %v2995 = vsel %vm1971, 0.5, 0.0
        %v2996 = vsel %vm1972, 0.5, 0.0
        %v2997 = vsel %vm1973, 0.5, 0.0
        %v2998 = vsel %vm1974, 0.5, 0.0
        %v2999 = vsel %vm1975, 0.5, 0.0
        %v3000 = vsel %vm1976, 0.5, 0.0
        %v3001 = vsel %vm1977, 0.5, 0.0
        %v3002 = vsel %vm1978, 0.5, 0.0
        %v3003 = vsel %vm1979, 0.5, 0.0
        %v3004 = vsel %vm1980, 0.5, 0.0
        %v3005 = vsel %vm1981, 0.5, 0.0
        %v3006 = vsel %vm1982, 0.5, 0.0
        %v3007 = vsel %vm1983, 0.5, 0.0
        %v3008 = vsel %vm1984, 0.5, 0.0
        %v3009 = vsel %vm1985, 0.5, 0.0
        %v3010 = vsel %vm1986, 0.5, 0.0
        %v3011 = vsel %vm1987, 0.5, 0.0
        %v3012 = vsel %vm1988, 0.5, 0.0
        %v3013 = vsel %vm1989, 0.5, 0.0
        %v3014 = vsel %vm1990, 0.5, 0.0
        %v3015 = vsel %vm1991, 0.5, 0.0
        %v3016 = vsel %vm1992, 0.5, 0.0
        %v3017 = vsel %vm1993, 0.5, 0.0
        %v3018 = vsel %vm1994, 0.5, 0.0
        %v3019 = vsel %vm1995, 0.5, 0.0
        %v3020 = vsel %vm1996, 0.5, 0.0
        %v3021 = vsel %vm1997, 0.5, 0.0
        %v3022 = vsel %vm1998, 0.5, 0.0
        %v3023 = vsel %vm1999, 0.5, 0.0
        %v3024 = vsel %vm2000, 0.5, 0.0
        %v3025 = vsel %vm2001, 0.5, 0.0
        %v3026 = vsel %vm2002, 0.5, 0.0
        %v3027 = vsel %vm2003, 0.5, 0.0
        %v3028 = vsel %vm2004, 0.5, 0.0
        %v3029 = vsel %vm2005, 0.5, 0.0
        %v3030 = vsel %vm2006, 0.5, 0.0
        %v3031 = vsel %vm2007, 0.5, 0.0
        %v3032 = vsel %vm2008, 0.5, 0.0
        %v3033 = vsel %vm2009, 0.5, 0.0
        %v3034 = vsel %vm2010, 0.5, 0.0
        %v3035 = vsel %vm2011, 0.5, 0.0
        %v3036 = vsel %vm2012, 0.5, 0.0
        %v3037 = vsel %vm2013, 0.5, 0.0
        %v3038 = vsel %vm2014, 0.5, 0.0
        %v3039 = vsel %vm2015, 0.5, 0.0
        %v3040 = vsel %vm2016, 0.5, 0.0
        %v3041 = vsel %vm2017, 0.5, 0.0
        %v3042 = vsel %vm2018, 0.5, 0.0
        %v3043 = vsel %vm2019, 0.5, 0.0
        %v3044 = vsel %vm2020, 0.5, 0.0
        %v3045 = vsel %vm2021, 0.5, 0.0
        %v3046 = vsel %vm2022, 0.5, 0.0
        %v3047 = vsel %vm2023, 0.5, 0.0
        %v3048 = vsel %vm2024, 0.5, 0.0
        %v3049 = vsel %vm2025, 0.5, 0.0
        %v3050 = vsel %vm2026, 0.5, 0.0
        %v3051 = vsel %vm2027, 0.5, 0.0
        %v3052 = vsel %vm2028, 0.5, 0.0
        %v3053 = vsel %vm2029, 0.5, 0.0
        %v3054 = vsel %vm2030, 0.5, 0.0
        %v3055 = vsel %vm2031, 0.5, 0.0
        %v3056 = vsel %vm2032, 0.5, 0.0
        %v3057 = vsel %vm2033, 0.5, 0.0
        %v3058 = vsel %vm2034, 0.5, 0.0
        %v3059 = vsel %vm2035, 0.5, 0.0
        %v3060 = vsel %vm2036, 0.5, 0.0
        %v3061 = vsel %vm2037, 0.5, 0.0
        %v3062 = vsel %vm2038, 0.5, 0.0
        %v3063 = vsel %vm2039, 0.5, 0.0
        %v3064 = vsel %vm2040, 0.5, 0.0
        %v3065 = vsel %vm2041, 0.5, 0.0
        %v3066 = vsel %vm2042, 0.5, 0.0
        %v3067 = vsel %vm2043, 0.5, 0.0
        %v3068 = vsel %vm2044, 0.5, 0.0
        %v3069 = vsel %vm2045, 0.5, 0.0
        %v3070 = vsel %vm2046, 0.5, 0.0
        %v3071 = vsel %vm2047, 0.5, 0.0
        %v3072 = vsel %vm2048, 0.5, 0.0
        %v3073 = vsel %vm2049, 0.5, 0.0
        %v3074 = vsel %vm2050, 0.5, 0.0
        %v3075 = vsel %vm2051, 0.5, 0.0
        %v3076 = vsel %vm2052, 0.5, 0.0
        %v3077 = vsel %vm2053, 0.5, 0.0
        %v3078 = vsel %vm2054, 0.5, 0.0
        %v3079 = vsel %vm2055, 0.5, 0.0
        %v3080 = vsel %vm2056, 0.5, 0.0
        %v3081 = vsel %vm2057, 0.5, 0.0
        %v3082 = vsel %vm2058, 0.5, 0.0
        %v3083 = vsel %vm2059, 0.5, 0.0
        %v3084 = vsel %vm2060, 0.5, 0.0
        %v3085 = vsel %vm2061, 0.5, 0.0
        %v3086 = vsel %vm2062, 0.5, 0.0
        %v3087 = vsel %vm2063, 0.5, 0.0
        %v3088 = vsel %vm2064, 0.5, 0.0
        %v3089 = vsel %vm2065, 0.5, 0.0
        %v3090 = vsel %vm2066, 0.5, 0.0
        %v3091 = vsel %vm2067, 0.5, 0.0
        %v3092 = vsel %vm2068, 0.5, 0.0
        %v3093 = vsel %vm2069, 0.5, 0.0
        %v3094 = vsel %vm2070, 0.5, 0.0
        %v3095 = vsel %vm2071, 0.5, 0.0
        %v3096 = vsel %vm2072, 0.5, 0.0
        %v3097 = vsel %vm2073, 0.5, 0.0
        %v3098 = vsel %vm2074, 0.5, 0.0
        %v3099 = vsel %vm2075, 0.5, 0.0
        %v3100 = vsel %vm2076, 0.5, 0.0
        %v3101 = vsel %vm2077, 0.5, 0.0
        %v3102 = vsel %vm2078, 0.5, 0.0
        %v3103 = vsel %vm2079, 0.5, 0.0
        %v3104 = vsel %vm2080, 0.5, 0.0
        %v3105 = vsel %vm2081, 0.5, 0.0
        %v3106 = vsel %vm2082, 0.5, 0.0
        %v3107 = vsel %vm2083, 0.5, 0.0
        %v3108 = vsel %vm2084, 0.5, 0.0
        %v3109 = vsel %vm2085, 0.5, 0.0
        %v3110 = vsel %vm2086, 0.5, 0.0
        %v3111 = vsel %vm2087, 0.5, 0.0
        %v3112 = vsel %vm2088, 0.5, 0.0
        %v3113 = vsel %vm2089, 0.5, 0.0
        %v3114 = vsel %vm2090, 0.5, 0.0
        %v3115 = vsel %vm2091, 0.5, 0.0
        %v3116 = vsel %vm2092, 0.5, 0.0
        %v3117 = vsel %vm2093, 0.5, 0.0
        %v3118 = vsel %vm2094, 0.5, 0.0
        %v3119 = vsel %vm2095, 0.5, 0.0
        %v3120 = vsel %vm2096, 0.5, 0.0
        %v3121 = vsel %vm2097, 0.5, 0.0
        %v3122 = vsel %vm2098, 0.5, 0.0
        %v3123 = vsel %vm2099, 0.5, 0.0
        %v3124 = vsel %vm2100, 0.5, 0.0
        %v3125 = vsel %vm2101, 0.5, 0.0
        %v3126 = vsel %vm2102, 0.5, 0.0
        %v3127 = vsel %vm2103, 0.5, 0.0
        %v3128 = vsel %vm2104, 0.5, 0.0
        %v3129 = vsel %vm2105, 0.5, 0.0
        %v3130 = vsel %vm2106, 0.5, 0.0
        %v3131 = vsel %vm2107, 0.5, 0.0
        %v3132 = vsel %vm2108, 0.5, 0.0
        %v3133 = vsel %vm2109, 0.5, 0.0
        %v3134 = vsel %vm2110, 0.5, 0.0
        %v3135 = vsel %vm2111, 0.5, 0.0
        %v3136 = vsel %vm2112, 0.5, 0.0
        %v3137 = vsel %vm2113, 0.5, 0.0
        %v3138 = vsel %vm2114, 0.5, 0.0
        %v3139 = vsel %vm2115, 0.5, 0.0
        %v3140 = vsel %vm2116, 0.5, 0.0
        %v3141 = vsel %vm2117, 0.5, 0.0
        %v3142 = vsel %vm2118, 0.5, 0.0
        %v3143 = vsel %vm2119, 0.5, 0.0
        %v3144 = vsel %vm2120, 0.5, 0.0
        %v3145 = vsel %vm2121, 0.5, 0.0
        %v3146 = vsel %vm2122, 0.5, 0.0
        %v3147 = vsel %vm2123, 0.5, 0.0
        %v3148 = vsel %vm2124, 0.5, 0.0
        %v3149 = vsel %vm2125, 0.5, 0.0
        %v3150 = vsel %vm2126, 0.5, 0.0
        %v3151 = vsel %vm2127, 0.5, 0.0
        %v3152 = vsel %vm2128, 0.5, 0.0
        %v3153 = vsel %vm2129, 0.5, 0.0
        %v3154 = vsel %vm2130, 0.5, 0.0
        %v3155 = vsel %vm2131, 0.5, 0.0
        %v3156 = vsel %vm2132, 0.5, 0.0
        %v3157 = vsel %vm2133, 0.5, 0.0
        %v3158 = vsel %vm2134, 0.5, 0.0
        %v3159 = vsel %vm2135, 0.5, 0.0
        %v3160 = vsel %vm2136, 0.5, 0.0
        %v3161 = vsel %vm2137, 0.5, 0.0
        %v3162 = vsel %vm2138, 0.5, 0.0
        %v3163 = vsel %vm2139, 0.5, 0.0
        %v3164 = vsel %vm2140, 0.5, 0.0
        %v3165 = vsel %vm2141, 0.5, 0.0
        %v3166 = vsel %vm2142, 0.5, 0.0
        %v3167 = vsel %vm2143, 0.5, 0.0
        %v3168 = vsel %vm2144, 0.5, 0.0
        %v3169 = vsel %vm2145, 0.5, 0.0
        %v3170 = vsel %vm2146, 0.5, 0.0
        %v3171 = vsel %vm2147, 0.5, 0.0
        %v3172 = vsel %vm2148, 0.5, 0.0
        %v3173 = vsel %vm2149, 0.5, 0.0
        %v3174 = vsel %vm2150, 0.5, 0.0
        %v3175 = vsel %vm2151, 0.5, 0.0
        %v3176 = vsel %vm2152, 0.5, 0.0
        %v3177 = vsel %vm2153, 0.5, 0.0
        %v3178 = vsel %vm2154, 0.5, 0.0
        %v3179 = vsel %vm2155, 0.5, 0.0
        %v3180 = vsel %vm2156, 0.5, 0.0
        %v3181 = vsel %vm2157, 0.5, 0.0
        %v3182 = vsel %vm2158, 0.5, 0.0
        %v3183 = vsel %vm2159, 0.5, 0.0
        %v3184 = vsel %vm2160, 0.5, 0.0
        %v3185 = vsel %vm2161, 0.5, 0.0
        %v3186 = vsel %vm2162, 0.5, 0.0
        %v3187 = vsel %vm2163, 0.5, 0.0
        %v3188 = vsel %vm2164, 0.5, 0.0
        %v3189 = vsel %vm2165, 0.5, 0.0
        %v3190 = vsel %vm2166, 0.5, 0.0
        %v3191 = vsel %vm2167, 0.5, 0.0
        %v3192 = vsel %vm2168, 0.5, 0.0
        %v3193 = vsel %vm2169, 0.5, 0.0
        %v3194 = vsel %vm2170, 0.5, 0.0
        %v3195 = vsel %vm2171, 0.5, 0.0
        %v3196 = vsel %vm2172, 0.5, 0.0
        %v3197 = vsel %vm2173, 0.5, 0.0
        %v3198 = vsel %vm2174, 0.5, 0.0
        %v3199 = vsel %vm2175, 0.5, 0.0
        %v3200 = vsel %vm2176, 0.5, 0.0
        %v3201 = vsel %vm2177, 0.5, 0.0
        %v3202 = vsel %vm2178, 0.5, 0.0
        %v3203 = vsel %vm2179, 0.5, 0.0
        %v3204 = vsel %vm2180, 0.5, 0.0
        %v3205 = vsel %vm2181, 0.5, 0.0
        %v3206 = vsel %vm2182, 0.5, 0.0
        %v3207 = vsel %vm2183, 0.5, 0.0
        %v3208 = vsel %vm2184, 0.5, 0.0
        %v3209 = vsel %vm2185, 0.5, 0.0
        %v3210 = vsel %vm2186, 0.5, 0.0
        %v3211 = vsel %vm2187, 0.5, 0.0
        %v3212 = vsel %vm2188, 0.5, 0.0
        %v3213 = vsel %vm2189, 0.5, 0.0
        %v3214 = vsel %vm2190, 0.5, 0.0
        %v3215 = vsel %vm2191, 0.5, 0.0
        %v3216 = vsel %vm2192, 0.5, 0.0
        %v3217 = vsel %vm2193, 0.5, 0.0
        %v3218 = vsel %vm2194, 0.5, 0.0
        %v3219 = vsel %vm2195, 0.5, 0.0
        %v3220 = vsel %vm2196, 0.5, 0.0
        %v3221 = vsel %vm2197, 0.5, 0.0
        %v3222 = vsel %vm2198, 0.5, 0.0
        %v3223 = vsel %vm2199, 0.5, 0.0
        %v3224 = vsel %vm2200, 0.5, 0.0
        %v3225 = vsel %vm2201, 0.5, 0.0
        %v3226 = vsel %vm2202, 0.5, 0.0
        %v3227 = vsel %vm2203, 0.5, 0.0
        %v3228 = vsel %vm2204, 0.5, 0.0
        %v3229 = vsel %vm2205, 0.5, 0.0
        %v3230 = vsel %vm2206, 0.5, 0.0
        %v3231 = vsel %vm2207, 0.5, 0.0
        %v3232 = vsel %vm2208, 0.5, 0.0
        %v3233 = vsel %vm2209, 0.5, 0.0
        %v3234 = vsel %vm2210, 0.5, 0.0
        %v3235 = vsel %vm2211, 0.5, 0.0
        %v3236 = vsel %vm2212, 0.5, 0.0
        %v3237 = vsel %vm2213, 0.5, 0.0
        %v3238 = vsel %vm2214, 0.5, 0.0
        %v3239 = vsel %vm2215, 0.5, 0.0
        %v3240 = vsel %vm2216, 0.5, 0.0
        %v3241 = vsel %vm2217, 0.5, 0.0
        %v3242 = vsel %vm2218, 0.5, 0.0
        %v3243 = vsel %vm2219, 0.5, 0.0
        %v3244 = vsel %vm2220, 0.5, 0.0
        %v3245 = vsel %vm2221, 0.5, 0.0
        %v3246 = vsel %vm2222, 0.5, 0.0
        %v3247 = vsel %vm2223, 0.5, 0.0
        %v3248 = vsel %vm2224, 0.5, 0.0
        %v3249 = vsel %vm2225, 0.5, 0.0
        %v3250 = vsel %vm2226, 0.5, 0.0
        %v3251 = vsel %vm2227, 0.5, 0.0
        %v3252 = vsel %vm2228, 0.5, 0.0
        %v3253 = vsel %vm2229, 0.5, 0.0
        %v3254 = vsel %vm2230, 0.5, 0.0
        %v3255 = vsel %vm2231, 0.5, 0.0
        %v3256 = vsel %vm2232, 0.5, 0.0
        %v3257 = vsel %vm2233, 0.5, 0.0
        %v3258 = vsel %vm2234, 0.5, 0.0
        %v3259 = vsel %vm2235, 0.5, 0.0
        %v3260 = vsel %vm2236, 0.5, 0.0
        %v3261 = vsel %vm2237, 0.5, 0.0
        %v3262 = vsel %vm2238, 0.5, 0.0
        %v3263 = vsel %vm2239, 0.5, 0.0
        %v3264 = vsel %vm2240, 0.5, 0.0
        %v3265 = vsel %vm2241, 0.5, 0.0
        %v3266 = vsel %vm2242, 0.5, 0.0
        %v3267 = vsel %vm2243, 0.5, 0.0
        %v3268 = vsel %vm2244, 0.5, 0.0
        %v3269 = vsel %vm2245, 0.5, 0.0
        %v3270 = vsel %vm2246, 0.5, 0.0
        %v3271 = vsel %vm2247, 0.5, 0.0
        %v3272 = vsel %vm2248, 0.5, 0.0
        %v3273 = vsel %vm2249, 0.5, 0.0
        %v3274 = vsel %vm2250, 0.5, 0.0
        %v3275 = vsel %vm2251, 0.5, 0.0
        %v3276 = vsel %vm2252, 0.5, 0.0
        %v3277 = vsel %vm2253, 0.5, 0.0
        %v3278 = vsel %vm2254, 0.5, 0.0
        %v3279 = vsel %vm2255, 0.5, 0.0
        %v3280 = vsel %vm2256, 0.5, 0.0
        %v3281 = vsel %vm2257, 0.5, 0.0
        %v3282 = vsel %vm2258, 0.5, 0.0
        %v3283 = vsel %vm2259, 0.5, 0.0
        %v3284 = vsel %vm2260, 0.5, 0.0
        %v3285 = vsel %vm2261, 0.5, 0.0
        %v3286 = vsel %vm2262, 0.5, 0.0
        %v3287 = vsel %vm2263, 0.5, 0.0
        %v3288 = vsel %vm2264, 0.5, 0.0
        %v3289 = vsel %vm2265, 0.5, 0.0
        %v3290 = vsel %vm2266, 0.5, 0.0
        %v3291 = vsel %vm2267, 0.5, 0.0
        %v3292 = vsel %vm2268, 0.5, 0.0
        %v3293 = vsel %vm2269, 0.5, 0.0
        %v3294 = vsel %vm2270, 0.5, 0.0
        %v3295 = vsel %vm2271, 0.5, 0.0
        %v3296 = vsel %vm2272, 0.5, 0.0
        %v3297 = vsel %vm2273, 0.5, 0.0
        %v3298 = vsel %vm2274, 0.5, 0.0
        %v3299 = vsel %vm2275, 0.5, 0.0
        %v3300 = vsel %vm2276, 0.5, 0.0
        %v3301 = vsel %vm2277, 0.5, 0.0
        %v3302 = vsel %vm2278, 0.5, 0.0
        %v3303 = vsel %vm2279, 0.5, 0.0
        %v3304 = vsel %vm2280, 0.5, 0.0
        %v3305 = vsel %vm2281, 0.5, 0.0
        %v3306 = vsel %vm2282, 0.5, 0.0
        %v3307 = vsel %vm2283, 0.5, 0.0
        %v3308 = vsel %vm2284, 0.5, 0.0
        %v3309 = vsel %vm2285, 0.5, 0.0
        %v3310 = vsel %vm2286, 0.5, 0.0
        %v3311 = vsel %vm2287, 0.5, 0.0
        %v3312 = vsel %vm2288, 0.5, 0.0
        %v3313 = vsel %vm2289, 0.5, 0.0
        %v3314 = vsel %vm2290, 0.5, 0.0
        %v3315 = vsel %vm2291, 0.5, 0.0
        %v3316 = vsel %vm2292, 0.5, 0.0
        %v3317 = vsel %vm2293, 0.5, 0.0
        %v3318 = vsel %vm2294, 0.5, 0.0
        %v3319 = vsel %vm2295, 0.5, 0.0
        %v3320 = vsel %vm2296, 0.5, 0.0
        %v3321 = vsel %vm2297, 0.5, 0.0
        %v3322 = vsel %vm2298, 0.5, 0.0
        %v3323 = vsel %vm2299, 0.5, 0.0
        %v3324 = vsel %vm2300, 0.5, 0.0
        %v3325 = vsel %vm2301, 0.5, 0.0
        %v3326 = vsel %vm2302, 0.5, 0.0
        %v3327 = vsel %vm2303, 0.5, 0.0
        %v3328 = vsel %vm2304, 0.5, 0.0
        %v3329 = vsel %vm2305, 0.5, 0.0
        %v3330 = vsel %vm2306, 0.5, 0.0
        %v3331 = vsel %vm2307, 0.5, 0.0
        %v3332 = vsel %vm2308, 0.5, 0.0
        %v3333 = vsel %vm2309, 0.5, 0.0
        %v3334 = vsel %vm2310, 0.5, 0.0
        %v3335 = vsel %vm2311, 0.5, 0.0
        %v3336 = vsel %vm2312, 0.5, 0.0
        %v3337 = vsel %vm2313, 0.5, 0.0
        %v3338 = vsel %vm2314, 0.5, 0.0
        %v3339 = vsel %vm2315, 0.5, 0.0
        %v3340 = vsel %vm2316, 0.5, 0.0
        %v3341 = vsel %vm2317, 0.5, 0.0
        %v3342 = vsel %vm2318, 0.5, 0.0
        %v3343 = vsel %vm2319, 0.5, 0.0
        %v3344 = vsel %vm2320, 0.5, 0.0
        %v3345 = vsel %vm2321, 0.5, 0.0
        %v3346 = vsel %vm2322, 0.5, 0.0
        %v3347 = vsel %vm2323, 0.5, 0.0
        %v3348 = vsel %vm2324, 0.5, 0.0
        %v3349 = vsel %vm2325, 0.5, 0.0
        %v3350 = vsel %vm2326, 0.5, 0.0
        %v3351 = vsel %vm2327, 0.5, 0.0
        %v3352 = vsel %vm2328, 0.5, 0.0
        %v3353 = vsel %vm2329, 0.5, 0.0
        %v3354 = vsel %vm2330, 0.5, 0.0
        %v3355 = vsel %vm2331, 0.5, 0.0
        %v3356 = vsel %vm2332, 0.5, 0.0
        %v3357 = vsel %vm2333, 0.5, 0.0
        %v3358 = vsel %vm2334, 0.5, 0.0
        %v3359 = vsel %vm2335, 0.5, 0.0
        %v3360 = vsel %vm2336, 0.5, 0.0
        %v3361 = vsel %vm2337, 0.5, 0.0
        %v3362 = vsel %vm2338, 0.5, 0.0
        %v3363 = vsel %vm2339, 0.5, 0.0
        %v3364 = vsel %vm2340, 0.5, 0.0
        %v3365 = vsel %vm2341, 0.5, 0.0
        %v3366 = vsel %vm2342, 0.5, 0.0
        %v3367 = vsel %vm2343, 0.5, 0.0
        %v3368 = vsel %vm2344, 0.5, 0.0
        %v3369 = vsel %vm2345, 0.5, 0.0
        %v3370 = vsel %vm2346, 0.5, 0.0
        %v3371 = vsel %vm2347, 0.5, 0.0
        %v3372 = vsel %vm2348, 0.5, 0.0
        %v3373 = vsel %vm2349, 0.5, 0.0
        %v3374 = vsel %vm2350, 0.5, 0.0
        %v3375 = vsel %vm2351, 0.5, 0.0
        %v3376 = vsel %vm2352, 0.5, 0.0
        %v3377 = vsel %vm2353, 0.5, 0.0
        %v3378 = vsel %vm2354, 0.5, 0.0
        %v3379 = vsel %vm2355, 0.5, 0.0
        %v3380 = vsel %vm2356, 0.5, 0.0
        %v3381 = vsel %vm2357, 0.5, 0.0
        %v3382 = vsel %vm2358, 0.5, 0.0
        %v3383 = vsel %vm2359, 0.5, 0.0
        %v3384 = vsel %vm2360, 0.5, 0.0
        %v3385 = vsel %vm2361, 0.5, 0.0
        %v3386 = vsel %vm2362, 0.5, 0.0
        %v3387 = vsel %vm2363, 0.5, 0.0
        %v3388 = vsel %vm2364, 0.5, 0.0
        %v3389 = vsel %vm2365, 0.5, 0.0
        %v3390 = vsel %vm2366, 0.5, 0.0
        %v3391 = vsel %vm2367, 0.5, 0.0
        %v3392 = vsel %vm2368, 0.5, 0.0
        %v3393 = vsel %vm2369, 0.5, 0.0
        %v3394 = vsel %vm2370, 0.5, 0.0
        %v3395 = vsel %vm2371, 0.5, 0.0
        %v3396 = vsel %vm2372, 0.5, 0.0
        %v3397 = vsel %vm2373, 0.5, 0.0
        %v3398 = vsel %vm2374, 0.5, 0.0
        %v3399 = vsel %vm2375, 0.5, 0.0
        %v3400 = vsel %vm2376, 0.5, 0.0
        %v3401 = vsel %vm2377, 0.5, 0.0
        %v3402 = vsel %vm2378, 0.5, 0.0
        %v3403 = vsel %vm2379, 0.5, 0.0
        %v3404 = vsel %vm2380, 0.5, 0.0
        %v3405 = vsel %vm2381, 0.5, 0.0
        %v3406 = vsel %vm2382, 0.5, 0.0
        %v3407 = vsel %vm2383, 0.5, 0.0
        %v3408 = vsel %vm2384, 0.5, 0.0
        %v3409 = vsel %vm2385, 0.5, 0.0
        %v3410 = vsel %vm2386, 0.5, 0.0
        %v3411 = vsel %vm2387, 0.5, 0.0
        %v3412 = vsel %vm2388, 0.5, 0.0
        %v3413 = vsel %vm2389, 0.5, 0.0
        %v3414 = vsel %vm2390, 0.5, 0.0
        %v3415 = vsel %vm2391, 0.5, 0.0
        %v3416 = vsel %vm2392, 0.5, 0.0
        %v3417 = vsel %vm2393, 0.5, 0.0
        %v3418 = vsel %vm2394, 0.5, 0.0
        %v3419 = vsel %vm2395, 0.5, 0.0
        %v3420 = vsel %vm2396, 0.5, 0.0
        %v3421 = vsel %vm2397, 0.5, 0.0
        %v3422 = vsel %vm2398, 0.5, 0.0
        %v3423 = vsel %vm2399, 0.5, 0.0
        %v3424 = vsel %vm2400, 0.5, 0.0
        %v3425 = vsel %vm2401, 0.5, 0.0
        %v3426 = vsel %vm2402, 0.5, 0.0
        %v3427 = vsel %vm2403, 0.5, 0.0
        %v3428 = vsel %vm2404, 0.5, 0.0
        %v3429 = vsel %vm2405, 0.5, 0.0
        %v3430 = vsel %vm2406, 0.5, 0.0
        %v3431 = vsel %vm2407, 0.5, 0.0
        %v3432 = vsel %vm2408, 0.5, 0.0
        %v3433 = vsel %vm2409, 0.5, 0.0
        %v3434 = vsel %vm2410, 0.5, 0.0
        %v3435 = vsel %vm2411, 0.5, 0.0
        %v3436 = vsel %vm2412, 0.5, 0.0
        %v3437 = vsel %vm2413, 0.5, 0.0
        %v3438 = vsel %vm2414, 0.5, 0.0
        %v3439 = vsel %vm2415, 0.5, 0.0
        %v3440 = vsel %vm2416, 0.5, 0.0
        %v3441 = vsel %vm2417, 0.5, 0.0
        %v3442 = vsel %vm2418, 0.5, 0.0
        %v3443 = vsel %vm2419, 0.5, 0.0
        %v3444 = vsel %vm2420, 0.5, 0.0
        %v3445 = vsel %vm2421, 0.5, 0.0
        %v3446 = vsel %vm2422, 0.5, 0.0
        %v3447 = vsel %vm2423, 0.5, 0.0
        %v3448 = vsel %vm2424, 0.5, 0.0
        %v3449 = vsel %vm2425, 0.5, 0.0
        %v3450 = vsel %vm2426, 0.5, 0.0
        %v3451 = vsel %vm2427, 0.5, 0.0
        %v3452 = vsel %vm2428, 0.5, 0.0
        %v3453 = vsel %vm2429, 0.5, 0.0
        %v3454 = vsel %vm2430, 0.5, 0.0
        %v3455 = vsel %vm2431, 0.5, 0.0
        %v3456 = vsel %vm2432, 0.5, 0.0
        %v3457 = vsel %vm2433, 0.5, 0.0
        %v3458 = vsel %vm2434, 0.5, 0.0
        %v3459 = vsel %vm2435, 0.5, 0.0
        %v3460 = vsel %vm2436, 0.5, 0.0
        %v3461 = vsel %vm2437, 0.5, 0.0
        %v3462 = vsel %vm2438, 0.5, 0.0
        %v3463 = vsel %vm2439, 0.5, 0.0
        %v3464 = vsel %vm2440, 0.5, 0.0
        %v3465 = vsel %vm2441, 0.5, 0.0
        %v3466 = vsel %vm2442, 0.5, 0.0
        %v3467 = vsel %vm2443, 0.5, 0.0
        %v3468 = vsel %vm2444, 0.5, 0.0
        %v3469 = vsel %vm2445, 0.5, 0.0
        %v3470 = vsel %vm2446, 0.5, 0.0
        %v3471 = vsel %vm2447, 0.5, 0.0
        %v3472 = vsel %vm2448, 0.5, 0.0
        %v3473 = vsel %vm2449, 0.5, 0.0
        %v3474 = vsel %vm2450, 0.5, 0.0
        %v3475 = vsel %vm2451, 0.5, 0.0
        %v3476 = vsel %vm2452, 0.5, 0.0
        %v3477 = vsel %vm2453, 0.5, 0.0
        %v3478 = vsel %vm2454, 0.5, 0.0
        %v3479 = vsel %vm2455, 0.5, 0.0
        %v3480 = vsel %vm2456, 0.5, 0.0
        %v3481 = vsel %vm2457, 0.5, 0.0
        %v3482 = vsel %vm2458, 0.5, 0.0
        %v3483 = vsel %vm2459, 0.5, 0.0
        %v3484 = vsel %vm2460, 0.5, 0.0
        %v3485 = vsel %vm2461, 0.5, 0.0
        %v3486 = vsel %vm2462, 0.5, 0.0
        %v3487 = vsel %vm2463, 0.5, 0.0
        %v3488 = vsel %vm2464, 0.5, 0.0
        %v3489 = vsel %vm2465, 0.5, 0.0
        %v3490 = vsel %vm2466, 0.5, 0.0
        %v3491 = vsel %vm2467, 0.5, 0.0
        %v3492 = vsel %vm2468, 0.5, 0.0
        %v3493 = vsel %vm2469, 0.5, 0.0
        %v3494 = vsel %vm2470, 0.5, 0.0
        %v3495 = vsel %vm2471, 0.5, 0.0
        %v3496 = vsel %vm2472, 0.5, 0.0
        %v3497 = vsel %vm2473, 0.5, 0.0
        %v3498 = vsel %vm2474, 0.5, 0.0
        %v3499 = vsel %vm2475, 0.5, 0.0
        %v3500 = vsel %vm2476, 0.5, 0.0
        %v3501 = vsel %vm2477, 0.5, 0.0
        %v3502 = vsel %vm2478, 0.5, 0.0
        %v3503 = vsel %vm2479, 0.5, 0.0
        %v3504 = vsel %vm2480, 0.5, 0.0
        %v3505 = vsel %vm2481, 0.5, 0.0
        %v3506 = vsel %vm2482, 0.5, 0.0
        %v3507 = vsel %vm2483, 0.5, 0.0
        %v3508 = vsel %vm2484, 0.5, 0.0
        %v3509 = vsel %vm2485, 0.5, 0.0
        %v3510 = vsel %vm2486, 0.5, 0.0
        %v3511 = vsel %vm2487, 0.5, 0.0
        %v3512 = vsel %vm2488, 0.5, 0.0
        %v3513 = vsel %vm2489, 0.5, 0.0
        %v3514 = vsel %vm2490, 0.5, 0.0
        %v3515 = vsel %vm2491, 0.5, 0.0
        %v3516 = vsel %vm2492, 0.5, 0.0
        %v3517 = vsel %vm2493, 0.5, 0.0
        %v3518 = vsel %vm2494, 0.5, 0.0
        %v3519 = vsel %vm2495, 0.5, 0.0
        %v3520 = vsel %vm2496, 0.5, 0.0
        %v3521 = vsel %vm2497, 0.5, 0.0
        %v3522 = vsel %vm2498, 0.5, 0.0
        %v3523 = vsel %vm2499, 0.5, 0.0
        %v3524 = vsel %vm2500, 0.5, 0.0
        %v3525 = vsel %vm2501, 0.5, 0.0
        %v3526 = vsel %vm2502, 0.5, 0.0
        %v3527 = vsel %vm2503, 0.5, 0.0
        %v3528 = vsel %vm2504, 0.5, 0.0
        %v3529 = vsel %vm2505, 0.5, 0.0
        %v3530 = vsel %vm2506, 0.5, 0.0
        %v3531 = vsel %vm2507, 0.5, 0.0
        %v3532 = vsel %vm2508, 0.5, 0.0
        %v3533 = vsel %vm2509, 0.5, 0.0
        %v3534 = vsel %vm2510, 0.5, 0.0
        %v3535 = vsel %vm2511, 0.5, 0.0
        %v3536 = vsel %vm2512, 0.5, 0.0
        %v3537 = vsel %vm2513, 0.5, 0.0
        %v3538 = vsel %vm2514, 0.5, 0.0
        %v3539 = vsel %vm2515, 0.5, 0.0
        %v3540 = vsel %vm2516, 0.5, 0.0
        %v3541 = vsel %vm2517, 0.5, 0.0
        %v3542 = vsel %vm2518, 0.5, 0.0
        %v3543 = vsel %vm2519, 0.5, 0.0
        %v3544 = vsel %vm2520, 0.5, 0.0
        %v3545 = vsel %vm2521, 0.5, 0.0
        %v3546 = vsel %vm2522, 0.5, 0.0
        %v3547 = vsel %vm2523, 0.5, 0.0
        %v3548 = vsel %vm2524, 0.5, 0.0
        %v3549 = vsel %vm2525, 0.5, 0.0
        %v3550 = vsel %vm2526, 0.5, 0.0
        %v3551 = vsel %vm2527, 0.5, 0.0
        %v3552 = vsel %vm2528, 0.5, 0.0
        %v3553 = vsel %vm2529, 0.5, 0.0
        %v3554 = vsel %vm2530, 0.5, 0.0
        %v3555 = vsel %vm2531, 0.5, 0.0
        %v3556 = vsel %vm2532, 0.5, 0.0
        %v3557 = vsel %vm2533, 0.5, 0.0
        %v3558 = vsel %vm2534, 0.5, 0.0
        %v3559 = vsel %vm2535, 0.5, 0.0
        %v3560 = vsel %vm2536, 0.5, 0.0
        %v3561 = vsel %vm2537, 0.5, 0.0
        %v3562 = vsel %vm2538, 0.5, 0.0
        %v3563 = vsel %vm2539, 0.5, 0.0
        %v3564 = vsel %vm2540, 0.5, 0.0
        %v3565 = vsel %vm2541, 0.5, 0.0
        %v3566 = vsel %vm2542, 0.5, 0.0
        %v3567 = vsel %vm2543, 0.5, 0.0
        %v3568 = vsel %vm2544, 0.5, 0.0
        %v3569 = vsel %vm2545, 0.5, 0.0
        %v3570 = vsel %vm2546, 0.5, 0.0
        %v3571 = vsel %vm2547, 0.5, 0.0
        %v3572 = vsel %vm2548, 0.5, 0.0
        %v3573 = vsel %vm2549, 0.5, 0.0
        %v3574 = vsel %vm2550, 0.5, 0.0
        %v3575 = vsel %vm2551, 0.5, 0.0
        %v3576 = vsel %vm2552, 0.5, 0.0
        %v3577 = vsel %vm2553, 0.5, 0.0
        %v3578 = vsel %vm2554, 0.5, 0.0
        %v3579 = vsel %vm2555, 0.5, 0.0
        %v3580 = vsel %vm2556, 0.5, 0.0
        %v3581 = vsel %vm2557, 0.5, 0.0
        %v3582 = vsel %vm2558, 0.5, 0.0
        %v3583 = vsel %vm2559, 0.5, 0.0
        %v3584 = vsel %vm2560, 0.5, 0.0
        %v3585 = vsel %vm2561, 0.5, 0.0
        %v3586 = vsel %vm2562, 0.5, 0.0
        %v3587 = vsel %vm2563, 0.5, 0.0
        %v3588 = vsel %vm2564, 0.5, 0.0
        %v3589 = vsel %vm2565, 0.5, 0.0
        %v3590 = vsel %vm2566, 0.5, 0.0
        %v3591 = vsel %vm2567, 0.5, 0.0
        %v3592 = vsel %vm2568, 0.5, 0.0
        %v3593 = vsel %vm2569, 0.5, 0.0
        %v3594 = vsel %vm2570, 0.5, 0.0
        %v3595 = vsel %vm2571, 0.5, 0.0
        %v3596 = vsel %vm2572, 0.5, 0.0
        %v3597 = vsel %vm2573, 0.5, 0.0
        %v3598 = vsel %vm2574, 0.5, 0.0
        %v3599 = vsel %vm2575, 0.5, 0.0
        %v3600 = vsel %vm2576, 0.5, 0.0
        %v3601 = vsel %vm2577, 0.5, 0.0
        %v3602 = vsel %vm2578, 0.5, 0.0
        %v3603 = vsel %vm2579, 0.5, 0.0
        %v3604 = vsel %vm2580, 0.5, 0.0
        %v3605 = vsel %vm2581, 0.5, 0.0
        %v3606 = vsel %vm2582, 0.5, 0.0
        %v3607 = vsel %vm2583, 0.5, 0.0
        %v3608 = vsel %vm2584, 0.5, 0.0
        %v3609 = vsel %vm2585, 0.5, 0.0
        %v3610 = vsel %vm2586, 0.5, 0.0
        %v3611 = vsel %vm2587, 0.5, 0.0
        %v3612 = vsel %vm2588, 0.5, 0.0
        %v3613 = vsel %vm2589, 0.5, 0.0
        %v3614 = vsel %vm2590, 0.5, 0.0
        %v3615 = vsel %vm2591, 0.5, 0.0
        %v3616 = vsel %vm2592, 0.5, 0.0
        %v3617 = vsel %vm2593, 0.5, 0.0
        %v3618 = vsel %vm2594, 0.5, 0.0
        %v3619 = vsel %vm2595, 0.5, 0.0
        %v3620 = vsel %vm2596, 0.5, 0.0
        %v3621 = vsel %vm2597, 0.5, 0.0
        %v3622 = vsel %vm2598, 0.5, 0.0
        %v3623 = vsel %vm2599, 0.5, 0.0
        %v3624 = vsel %vm2600, 0.5, 0.0
        %v3625 = vsel %vm2601, 0.5, 0.0
        %v3626 = vsel %vm2602, 0.5, 0.0
        %v3627 = vsel %vm2603, 0.5, 0.0
        %v3628 = vsel %vm2604, 0.5, 0.0
        %v3629 = vsel %vm2605, 0.5, 0.0
        %v3630 = vsel %vm2606, 0.5, 0.0
        %v3631 = vsel %vm2607, 0.5, 0.0
        %v3632 = vsel %vm2608, 0.5, 0.0
        %v3633 = vsel %vm2609, 0.5, 0.0
        %v3634 = vsel %vm2610, 0.5, 0.0
        %v3635 = vsel %vm2611, 0.5, 0.0
        %v3636 = vsel %vm2612, 0.5, 0.0
        %v3637 = vsel %vm2613, 0.5, 0.0
        %v3638 = vsel %vm2614, 0.5, 0.0
        %v3639 = vsel %vm2615, 0.5, 0.0
        %v3640 = vsel %vm2616, 0.5, 0.0
        %v3641 = vsel %vm2617, 0.5, 0.0
        %v3642 = vsel %vm2618, 0.5, 0.0
        %v3643 = vsel %vm2619, 0.5, 0.0
        %v3644 = vsel %vm2620, 0.5, 0.0
        %v3645 = vsel %vm2621, 0.5, 0.0
        %v3646 = vsel %vm2622, 0.5, 0.0
        %v3647 = vsel %vm2623, 0.5, 0.0
        %v3648 = vsel %vm2624, 0.5, 0.0
        %v3649 = vsel %vm2625, 0.5, 0.0
        %v3650 = vsel %vm2626, 0.5, 0.0
        %v3651 = vsel %vm2627, 0.5, 0.0
        %v3652 = vsel %vm2628, 0.5, 0.0
        %v3653 = vsel %vm2629, 0.5, 0.0
        %v3654 = vsel %vm2630, 0.5, 0.0
        %v3655 = vsel %vm2631, 0.5, 0.0
        %v3656 = vsel %vm2632, 0.5, 0.0
        %v3657 = vsel %vm2633, 0.5, 0.0
        %v3658 = vsel %vm2634, 0.5, 0.0
        %v3659 = vsel %vm2635, 0.5, 0.0
        %v3660 = vsel %vm2636, 0.5, 0.0
        %v3661 = vsel %vm2637, 0.5, 0.0
        %v3662 = vsel %vm2638, 0.5, 0.0
        %v3663 = vsel %vm2639, 0.5, 0.0
        %v3664 = vsel %vm2640, 0.5, 0.0
        %v3665 = vsel %vm2641, 0.5, 0.0
        %v3666 = vsel %vm2642, 0.5, 0.0
        %v3667 = vsel %vm2643, 0.5, 0.0
        %v3668 = vsel %vm2644, 0.5, 0.0
        %v3669 = vsel %vm2645, 0.5, 0.0
        %v3670 = vsel %vm2646, 0.5, 0.0
        %v3671 = vsel %vm2647, 0.5, 0.0
        %v3672 = vsel %vm2648, 0.5, 0.0
        %v3673 = vsel %vm2649, 0.5, 0.0
        %v3674 = vsel %vm2650, 0.5, 0.0
        %v3675 = vsel %vm2651, 0.5, 0.0
        %v3676 = vsel %vm2652, 0.5, 0.0
        %v3677 = vsel %vm2653, 0.5, 0.0
        %v3678 = vsel %vm2654, 0.5, 0.0
        %v3679 = vsel %vm2655, 0.5, 0.0
        %v3680 = vsel %vm2656, 0.5, 0.0
        %v3681 = vsel %vm2657, 0.5, 0.0
        %v3682 = vsel %vm2658, 0.5, 0.0
        %v3683 = vsel %vm2659, 0.5, 0.0
        %v3684 = vsel %vm2660, 0.5, 0.0
        %v3685 = vsel %vm2661, 0.5, 0.0
        %v3686 = vsel %vm2662, 0.5, 0.0
        %v3687 = vsel %vm2663, 0.5, 0.0
        %v3688 = vsel %vm2664, 0.5, 0.0
        %v3689 = vsel %vm2665, 0.5, 0.0
        %v3690 = vsel %vm2666, 0.5, 0.0
        %v3691 = vsel %vm2667, 0.5, 0.0
        %v3692 = vsel %vm2668, 0.5, 0.0
        %v3693 = vsel %vm2669, 0.5, 0.0
        %v3694 = vsel %vm2670, 0.5, 0.0
        %v3695 = vsel %vm2671, 0.5, 0.0
        %v3696 = vsel %vm2672, 0.5, 0.0
        %v3697 = vsel %vm2673, 0.5, 0.0
        %v3698 = vsel %vm2674, 0.5, 0.0
        %v3699 = vsel %vm2675, 0.5, 0.0
        %v3700 = vsel %vm2676, 0.5, 0.0
        %v3701 = vsel %vm2677, 0.5, 0.0
        %v3702 = vsel %vm2678, 0.5, 0.0
        %v3703 = vsel %vm2679, 0.5, 0.0
        %v3704 = vsel %vm2680, 0.5, 0.0
        %v3705 = vsel %vm2681, 0.5, 0.0
        %v3706 = vsel %vm2682, 0.5, 0.0
        %v3707 = vsel %vm2683, 0.5, 0.0
        %v3708 = vsel %vm2684, 0.5, 0.0
        %v3709 = vsel %vm2685, 0.5, 0.0
        %v3710 = vsel %vm2686, 0.5, 0.0
        %v3711 = vsel %vm2687, 0.5, 0.0
        %v3712 = vsel %vm2688, 0.5, 0.0
        %v3713 = vsel %vm2689, 0.5, 0.0
        %v3714 = vsel %vm2690, 0.5, 0.0
        %v3715 = vsel %vm2691, 0.5, 0.0
        %v3716 = vsel %vm2692, 0.5, 0.0
        %v3717 = vsel %vm2693, 0.5, 0.0
        %v3718 = vsel %vm2694, 0.5, 0.0
        %v3719 = vsel %vm2695, 0.5, 0.0
        %v3720 = vsel %vm2696, 0.5, 0.0
        %v3721 = vsel %vm2697, 0.5, 0.0
        %v3722 = vsel %vm2698, 0.5, 0.0
        %v3723 = vsel %vm2699, 0.5, 0.0
        %v3724 = vsel %vm2700, 0.5, 0.0
        %v3725 = vsel %vm2701, 0.5, 0.0
        %v3726 = vsel %vm2702, 0.5, 0.0
        %v3727 = vsel %vm2703, 0.5, 0.0
        %v3728 = vsel %vm2704, 0.5, 0.0
        %v3729 = vsel %vm2705, 0.5, 0.0
        %v3730 = vsel %vm2706, 0.5, 0.0
        %v3731 = vsel %vm2707, 0.5, 0.0
        %v3732 = vsel %vm2708, 0.5, 0.0
        %v3733 = vsel %vm2709, 0.5, 0.0
        %v3734 = vsel %vm2710, 0.5, 0.0
        %v3735 = vsel %vm2711, 0.5, 0.0
        %v3736 = vsel %vm2712, 0.5, 0.0
        %v3737 = vsel %vm2713, 0.5, 0.0
        %v3738 = vsel %vm2714, 0.5, 0.0
        %v3739 = vsel %vm2715, 0.5, 0.0
        %v3740 = vsel %vm2716, 0.5, 0.0
        %v3741 = vsel %vm2717, 0.5, 0.0
        %v3742 = vsel %vm2718, 0.5, 0.0
        %v3743 = vsel %vm2719, 0.5, 0.0
        %v3744 = vsel %vm2720, 0.5, 0.0
        %v3745 = vsel %vm2721, 0.5, 0.0
        %v3746 = vsel %vm2722, 0.5, 0.0
        %v3747 = vsel %vm2723, 0.5, 0.0
        %v3748 = vsel %vm2724, 0.5, 0.0
        %v3749 = vsel %vm2725, 0.5, 0.0
        %v3750 = vsel %vm2726, 0.5, 0.0
        %v3751 = vsel %vm2727, 0.5, 0.0
        %v3752 = vsel %vm2728, 0.5, 0.0
        %v3753 = vsel %vm2729, 0.5, 0.0
        %v3754 = vsel %vm2730, 0.5, 0.0
        %v3755 = vsel %vm2731, 0.5, 0.0
        %v3756 = vsel %vm2732, 0.5, 0.0
        %v3757 = vsel %vm2733, 0.5, 0.0
        %v3758 = vsel %vm2734, 0.5, 0.0
        %v3759 = vsel %vm2735, 0.5, 0.0
        %v3760 = vsel %vm2736, 0.5, 0.0
        %v3761 = vsel %vm2737, 0.5, 0.0
        %v3762 = vsel %vm2738, 0.5, 0.0
        %v3763 = vsel %vm2739, 0.5, 0.0
        %v3764 = vsel %vm2740, 0.5, 0.0
        %v3765 = vsel %vm2741, 0.5, 0.0
        %v3766 = vsel %vm2742, 0.5, 0.0
        %v3767 = vsel %vm2743, 0.5, 0.0
        %v3768 = vsel %vm2744, 0.5, 0.0
        %v3769 = vsel %vm2745, 0.5, 0.0
        %v3770 = vsel %vm2746, 0.5, 0.0
        %v3771 = vsel %vm2747, 0.5, 0.0
        %v3772 = vsel %vm2748, 0.5, 0.0
        %v3773 = vsel %vm2749, 0.5, 0.0
        %v3774 = vsel %vm2750, 0.5, 0.0
        %v3775 = vsel %vm2751, 0.5, 0.0
        %v3776 = vsel %vm2752, 0.5, 0.0
        %v3777 = vsel %vm2753, 0.5, 0.0
        %v3778 = vsel %vm2754, 0.5, 0.0
        %v3779 = vsel %vm2755, 0.5, 0.0
        %v3780 = vsel %vm2756, 0.5, 0.0
        %v3781 = vsel %vm2757, 0.5, 0.0
        %v3782 = vsel %vm2758, 0.5, 0.0
        %v3783 = vsel %vm2759, 0.5, 0.0
        %v3784 = vsel %vm2760, 0.5, 0.0
        %v3785 = vsel %vm2761, 0.5, 0.0
        %v3786 = vsel %vm2762, 0.5, 0.0
        %v3787 = vsel %vm2763, 0.5, 0.0
        %v3788 = vsel %vm2764, 0.5, 0.0
        %v3789 = vsel %vm2765, 0.5, 0.0
        %v3790 = vsel %vm2766, 0.5, 0.0
        %v3791 = vsel %vm2767, 0.5, 0.0
        %v3792 = vsel %vm2768, 0.5, 0.0
        %v3793 = vsel %vm2769, 0.5, 0.0
        %v3794 = vsel %vm2770, 0.5, 0.0
        %v3795 = vsel %vm2771, 0.5, 0.0
        %v3796 = vsel %vm2772, 0.5, 0.0
        %v3797 = vsel %vm2773, 0.5, 0.0
        %v3798 = vsel %vm2774, 0.5, 0.0
        %v3799 = vsel %vm2775, 0.5, 0.0
        %v3800 = vsel %vm2776, 0.5, 0.0
        %v3801 = vsel %vm2777, 0.5, 0.0
        %v3802 = vsel %vm2778, 0.5, 0.0
        %v3803 = vsel %vm2779, 0.5, 0.0
        %v3804 = vsel %vm2780, 0.5, 0.0
        %v3805 = vsel %vm2781, 0.5, 0.0
        %v3806 = vsel %vm2782, 0.5, 0.0
        %v3807 = vsel %vm2783, 0.5, 0.0
        %v3808 = vsel %vm2784, 0.5, 0.0
        %v3809 = vsel %vm2785, 0.5, 0.0
        %v3810 = vsel %vm738, 1.0, %v2786
        %v3811 = vsel %vm739, 1.0, %v2787
        %v3812 = vsel %vm740, 1.0, %v2788
        %v3813 = vsel %vm741, 1.0, %v2789
        %v3814 = vsel %vm742, 1.0, %v2790
        %v3815 = vsel %vm743, 1.0, %v2791
        %v3816 = vsel %vm744, 1.0, %v2792
        %v3817 = vsel %vm745, 1.0, %v2793
        %v3818 = vsel %vm746, 1.0, %v2794
        %v3819 = vsel %vm747, 1.0, %v2795
        %v3820 = vsel %vm748, 1.0, %v2796
        %v3821 = vsel %vm749, 1.0, %v2797
        %v3822 = vsel %vm750, 1.0, %v2798
        %v3823 = vsel %vm751, 1.0, %v2799
        %v3824 = vsel %vm752, 1.0, %v2800
        %v3825 = vsel %vm753, 1.0, %v2801
        %v3826 = vsel %vm754, 1.0, %v2802
        %v3827 = vsel %vm755, 1.0, %v2803
        %v3828 = vsel %vm756, 1.0, %v2804
        %v3829 = vsel %vm757, 1.0, %v2805
        %v3830 = vsel %vm758, 1.0, %v2806
        %v3831 = vsel %vm759, 1.0, %v2807
        %v3832 = vsel %vm760, 1.0, %v2808
        %v3833 = vsel %vm761, 1.0, %v2809
        %v3834 = vsel %vm762, 1.0, %v2810
        %v3835 = vsel %vm763, 1.0, %v2811
        %v3836 = vsel %vm764, 1.0, %v2812
        %v3837 = vsel %vm765, 1.0, %v2813
        %v3838 = vsel %vm766, 1.0, %v2814
        %v3839 = vsel %vm767, 1.0, %v2815
        %v3840 = vsel %vm768, 1.0, %v2816
        %v3841 = vsel %vm769, 1.0, %v2817
        %v3842 = vsel %vm770, 1.0, %v2818
        %v3843 = vsel %vm771, 1.0, %v2819
        %v3844 = vsel %vm772, 1.0, %v2820
        %v3845 = vsel %vm773, 1.0, %v2821
        %v3846 = vsel %vm774, 1.0, %v2822
        %v3847 = vsel %vm775, 1.0, %v2823
        %v3848 = vsel %vm776, 1.0, %v2824
        %v3849 = vsel %vm777, 1.0, %v2825
        %v3850 = vsel %vm778, 1.0, %v2826
        %v3851 = vsel %vm779, 1.0, %v2827
        %v3852 = vsel %vm780, 1.0, %v2828
        %v3853 = vsel %vm781, 1.0, %v2829
        %v3854 = vsel %vm782, 1.0, %v2830
        %v3855 = vsel %vm783, 1.0, %v2831
        %v3856 = vsel %vm784, 1.0, %v2832
        %v3857 = vsel %vm785, 1.0, %v2833
        %v3858 = vsel %vm786, 1.0, %v2834
        %v3859 = vsel %vm787, 1.0, %v2835
        %v3860 = vsel %vm788, 1.0, %v2836
        %v3861 = vsel %vm789, 1.0, %v2837
        %v3862 = vsel %vm790, 1.0, %v2838
        %v3863 = vsel %vm791, 1.0, %v2839
        %v3864 = vsel %vm792, 1.0, %v2840
        %v3865 = vsel %vm793, 1.0, %v2841
        %v3866 = vsel %vm794, 1.0, %v2842
        %v3867 = vsel %vm795, 1.0, %v2843
        %v3868 = vsel %vm796, 1.0, %v2844
        %v3869 = vsel %vm797, 1.0, %v2845
        %v3870 = vsel %vm798, 1.0, %v2846
        %v3871 = vsel %vm799, 1.0, %v2847
        %v3872 = vsel %vm800, 1.0, %v2848
        %v3873 = vsel %vm801, 1.0, %v2849
        %v3874 = vsel %vm802, 1.0, %v2850
        %v3875 = vsel %vm803, 1.0, %v2851
        %v3876 = vsel %vm804, 1.0, %v2852
        %v3877 = vsel %vm805, 1.0, %v2853
        %v3878 = vsel %vm806, 1.0, %v2854
        %v3879 = vsel %vm807, 1.0, %v2855
        %v3880 = vsel %vm808, 1.0, %v2856
        %v3881 = vsel %vm809, 1.0, %v2857
        %v3882 = vsel %vm810, 1.0, %v2858
        %v3883 = vsel %vm811, 1.0, %v2859
        %v3884 = vsel %vm812, 1.0, %v2860
        %v3885 = vsel %vm813, 1.0, %v2861
        %v3886 = vsel %vm814, 1.0, %v2862
        %v3887 = vsel %vm815, 1.0, %v2863
        %v3888 = vsel %vm816, 1.0, %v2864
        %v3889 = vsel %vm817, 1.0, %v2865
        %v3890 = vsel %vm818, 1.0, %v2866
        %v3891 = vsel %vm819, 1.0, %v2867
        %v3892 = vsel %vm820, 1.0, %v2868
        %v3893 = vsel %vm821, 1.0, %v2869
        %v3894 = vsel %vm822, 1.0, %v2870
        %v3895 = vsel %vm823, 1.0, %v2871
        %v3896 = vsel %vm824, 1.0, %v2872
        %v3897 = vsel %vm825, 1.0, %v2873
        %v3898 = vsel %vm826, 1.0, %v2874
        %v3899 = vsel %vm827, 1.0, %v2875
        %v3900 = vsel %vm828, 1.0, %v2876
        %v3901 = vsel %vm829, 1.0, %v2877
        %v3902 = vsel %vm830, 1.0, %v2878
        %v3903 = vsel %vm831, 1.0, %v2879
        %v3904 = vsel %vm832, 1.0, %v2880
        %v3905 = vsel %vm833, 1.0, %v2881
        %v3906 = vsel %vm834, 1.0, %v2882
        %v3907 = vsel %vm835, 1.0, %v2883
        %v3908 = vsel %vm836, 1.0, %v2884
        %v3909 = vsel %vm837, 1.0, %v2885
        %v3910 = vsel %vm838, 1.0, %v2886
        %v3911 = vsel %vm839, 1.0, %v2887
        %v3912 = vsel %vm840, 1.0, %v2888
        %v3913 = vsel %vm841, 1.0, %v2889
        %v3914 = vsel %vm842, 1.0, %v2890
        %v3915 = vsel %vm843, 1.0, %v2891
        %v3916 = vsel %vm844, 1.0, %v2892
        %v3917 = vsel %vm845, 1.0, %v2893
        %v3918 = vsel %vm846, 1.0, %v2894
        %v3919 = vsel %vm847, 1.0, %v2895
        %v3920 = vsel %vm848, 1.0, %v2896
        %v3921 = vsel %vm849, 1.0, %v2897
        %v3922 = vsel %vm850, 1.0, %v2898
        %v3923 = vsel %vm851, 1.0, %v2899
        %v3924 = vsel %vm852, 1.0, %v2900
        %v3925 = vsel %vm853, 1.0, %v2901
        %v3926 = vsel %vm854, 1.0, %v2902
        %v3927 = vsel %vm855, 1.0, %v2903
        %v3928 = vsel %vm856, 1.0, %v2904
        %v3929 = vsel %vm857, 1.0, %v2905
        %v3930 = vsel %vm858, 1.0, %v2906
        %v3931 = vsel %vm859, 1.0, %v2907
        %v3932 = vsel %vm860, 1.0, %v2908
        %v3933 = vsel %vm861, 1.0, %v2909
        %v3934 = vsel %vm862, 1.0, %v2910
        %v3935 = vsel %vm863, 1.0, %v2911
        %v3936 = vsel %vm864, 1.0, %v2912
        %v3937 = vsel %vm865, 1.0, %v2913
        %v3938 = vsel %vm866, 1.0, %v2914
        %v3939 = vsel %vm867, 1.0, %v2915
        %v3940 = vsel %vm868, 1.0, %v2916
        %v3941 = vsel %vm869, 1.0, %v2917
        %v3942 = vsel %vm870, 1.0, %v2918
        %v3943 = vsel %vm871, 1.0, %v2919
        %v3944 = vsel %vm872, 1.0, %v2920
        %v3945 = vsel %vm873, 1.0, %v2921
        %v3946 = vsel %vm874, 1.0, %v2922
        %v3947 = vsel %vm875, 1.0, %v2923
        %v3948 = vsel %vm876, 1.0, %v2924
        %v3949 = vsel %vm877, 1.0, %v2925
        %v3950 = vsel %vm878, 1.0, %v2926
        %v3951 = vsel %vm879, 1.0, %v2927
        %v3952 = vsel %vm880, 1.0, %v2928
        %v3953 = vsel %vm881, 1.0, %v2929
        %v3954 = vsel %vm882, 1.0, %v2930
        %v3955 = vsel %vm883, 1.0, %v2931
        %v3956 = vsel %vm884, 1.0, %v2932
        %v3957 = vsel %vm885, 1.0, %v2933
        %v3958 = vsel %vm886, 1.0, %v2934
        %v3959 = vsel %vm887, 1.0, %v2935
        %v3960 = vsel %vm888, 1.0, %v2936
        %v3961 = vsel %vm889, 1.0, %v2937
        %v3962 = vsel %vm890, 1.0, %v2938
        %v3963 = vsel %vm891, 1.0, %v2939
        %v3964 = vsel %vm892, 1.0, %v2940
        %v3965 = vsel %vm893, 1.0, %v2941
        %v3966 = vsel %vm894, 1.0, %v2942
        %v3967 = vsel %vm895, 1.0, %v2943
        %v3968 = vsel %vm896, 1.0, %v2944
        %v3969 = vsel %vm897, 1.0, %v2945
        %v3970 = vsel %vm898, 1.0, %v2946
        %v3971 = vsel %vm899, 1.0, %v2947
        %v3972 = vsel %vm900, 1.0, %v2948
        %v3973 = vsel %vm901, 1.0, %v2949
        %v3974 = vsel %vm902, 1.0, %v2950
        %v3975 = vsel %vm903, 1.0, %v2951
        %v3976 = vsel %vm904, 1.0, %v2952
        %v3977 = vsel %vm905, 1.0, %v2953
        %v3978 = vsel %vm906, 1.0, %v2954
        %v3979 = vsel %vm907, 1.0, %v2955
        %v3980 = vsel %vm908, 1.0, %v2956
        %v3981 = vsel %vm909, 1.0, %v2957
        %v3982 = vsel %vm910, 1.0, %v2958
        %v3983 = vsel %vm911, 1.0, %v2959
        %v3984 = vsel %vm912, 1.0, %v2960
        %v3985 = vsel %vm913, 1.0, %v2961
        %v3986 = vsel %vm914, 1.0, %v2962
        %v3987 = vsel %vm915, 1.0, %v2963
        %v3988 = vsel %vm916, 1.0, %v2964
        %v3989 = vsel %vm917, 1.0, %v2965
        %v3990 = vsel %vm918, 1.0, %v2966
        %v3991 = vsel %vm919, 1.0, %v2967
        %v3992 = vsel %vm920, 1.0, %v2968
        %v3993 = vsel %vm921, 1.0, %v2969
        %v3994 = vsel %vm922, 1.0, %v2970
        %v3995 = vsel %vm923, 1.0, %v2971
        %v3996 = vsel %vm924, 1.0, %v2972
        %v3997 = vsel %vm925, 1.0, %v2973
        %v3998 = vsel %vm926, 1.0, %v2974
        %v3999 = vsel %vm927, 1.0, %v2975
        %v4000 = vsel %vm928, 1.0, %v2976
        %v4001 = vsel %vm929, 1.0, %v2977
        %v4002 = vsel %vm930, 1.0, %v2978
        %v4003 = vsel %vm931, 1.0, %v2979
        %v4004 = vsel %vm932, 1.0, %v2980
        %v4005 = vsel %vm933, 1.0, %v2981
        %v4006 = vsel %vm934, 1.0, %v2982
        %v4007 = vsel %vm935, 1.0, %v2983
        %v4008 = vsel %vm936, 1.0, %v2984
        %v4009 = vsel %vm937, 1.0, %v2985
        %v4010 = vsel %vm938, 1.0, %v2986
        %v4011 = vsel %vm939, 1.0, %v2987
        %v4012 = vsel %vm940, 1.0, %v2988
        %v4013 = vsel %vm941, 1.0, %v2989
        %v4014 = vsel %vm942, 1.0, %v2990
        %v4015 = vsel %vm943, 1.0, %v2991
        %v4016 = vsel %vm944, 1.0, %v2992
        %v4017 = vsel %vm945, 1.0, %v2993
        %v4018 = vsel %vm946, 1.0, %v2994
        %v4019 = vsel %vm947, 1.0, %v2995
        %v4020 = vsel %vm948, 1.0, %v2996
        %v4021 = vsel %vm949, 1.0, %v2997
        %v4022 = vsel %vm950, 1.0, %v2998
        %v4023 = vsel %vm951, 1.0, %v2999
        %v4024 = vsel %vm952, 1.0, %v3000
        %v4025 = vsel %vm953, 1.0, %v3001
        %v4026 = vsel %vm954, 1.0, %v3002
        %v4027 = vsel %vm955, 1.0, %v3003
        %v4028 = vsel %vm956, 1.0, %v3004
        %v4029 = vsel %vm957, 1.0, %v3005
        %v4030 = vsel %vm958, 1.0, %v3006
        %v4031 = vsel %vm959, 1.0, %v3007
        %v4032 = vsel %vm960, 1.0, %v3008
        %v4033 = vsel %vm961, 1.0, %v3009
        %v4034 = vsel %vm962, 1.0, %v3010
        %v4035 = vsel %vm963, 1.0, %v3011
        %v4036 = vsel %vm964, 1.0, %v3012
        %v4037 = vsel %vm965, 1.0, %v3013
        %v4038 = vsel %vm966, 1.0, %v3014
        %v4039 = vsel %vm967, 1.0, %v3015
        %v4040 = vsel %vm968, 1.0, %v3016
        %v4041 = vsel %vm969, 1.0, %v3017
        %v4042 = vsel %vm970, 1.0, %v3018
        %v4043 = vsel %vm971, 1.0, %v3019
        %v4044 = vsel %vm972, 1.0, %v3020
        %v4045 = vsel %vm973, 1.0, %v3021
        %v4046 = vsel %vm974, 1.0, %v3022
        %v4047 = vsel %vm975, 1.0, %v3023
        %v4048 = vsel %vm976, 1.0, %v3024
        %v4049 = vsel %vm977, 1.0, %v3025
        %v4050 = vsel %vm978, 1.0, %v3026
        %v4051 = vsel %vm979, 1.0, %v3027
        %v4052 = vsel %vm980, 1.0, %v3028
        %v4053 = vsel %vm981, 1.0, %v3029
        %v4054 = vsel %vm982, 1.0, %v3030
        %v4055 = vsel %vm983, 1.0, %v3031
        %v4056 = vsel %vm984, 1.0, %v3032
        %v4057 = vsel %vm985, 1.0, %v3033
        %v4058 = vsel %vm986, 1.0, %v3034
        %v4059 = vsel %vm987, 1.0, %v3035
        %v4060 = vsel %vm988, 1.0, %v3036
        %v4061 = vsel %vm989, 1.0, %v3037
        %v4062 = vsel %vm990, 1.0, %v3038
        %v4063 = vsel %vm991, 1.0, %v3039
        %v4064 = vsel %vm992, 1.0, %v3040
        %v4065 = vsel %vm993, 1.0, %v3041
        %v4066 = vsel %vm994, 1.0, %v3042
        %v4067 = vsel %vm995, 1.0, %v3043
        %v4068 = vsel %vm996, 1.0, %v3044
        %v4069 = vsel %vm997, 1.0, %v3045
        %v4070 = vsel %vm998, 1.0, %v3046
        %v4071 = vsel %vm999, 1.0, %v3047
        %v4072 = vsel %vm1000, 1.0, %v3048
        %v4073 = vsel %vm1001, 1.0, %v3049
        %v4074 = vsel %vm1002, 1.0, %v3050
        %v4075 = vsel %vm1003, 1.0, %v3051
        %v4076 = vsel %vm1004, 1.0, %v3052
        %v4077 = vsel %vm1005, 1.0, %v3053
        %v4078 = vsel %vm1006, 1.0, %v3054
        %v4079 = vsel %vm1007, 1.0, %v3055
        %v4080 = vsel %vm1008, 1.0, %v3056
        %v4081 = vsel %vm1009, 1.0, %v3057
        %v4082 = vsel %vm1010, 1.0, %v3058
        %v4083 = vsel %vm1011, 1.0, %v3059
        %v4084 = vsel %vm1012, 1.0, %v3060
        %v4085 = vsel %vm1013, 1.0, %v3061
        %v4086 = vsel %vm1014, 1.0, %v3062
        %v4087 = vsel %vm1015, 1.0, %v3063
        %v4088 = vsel %vm1016, 1.0, %v3064
        %v4089 = vsel %vm1017, 1.0, %v3065
        %v4090 = vsel %vm1018, 1.0, %v3066
        %v4091 = vsel %vm1019, 1.0, %v3067
        %v4092 = vsel %vm1020, 1.0, %v3068
        %v4093 = vsel %vm1021, 1.0, %v3069
        %v4094 = vsel %vm1022, 1.0, %v3070
        %v4095 = vsel %vm1023, 1.0, %v3071
        %v4096 = vsel %vm1024, 1.0, %v3072
        %v4097 = vsel %vm1025, 1.0, %v3073
        %v4098 = vsel %vm1026, 1.0, %v3074
        %v4099 = vsel %vm1027, 1.0, %v3075
        %v4100 = vsel %vm1028, 1.0, %v3076
        %v4101 = vsel %vm1029, 1.0, %v3077
        %v4102 = vsel %vm1030, 1.0, %v3078
        %v4103 = vsel %vm1031, 1.0, %v3079
        %v4104 = vsel %vm1032, 1.0, %v3080
        %v4105 = vsel %vm1033, 1.0, %v3081
        %v4106 = vsel %vm1034, 1.0, %v3082
        %v4107 = vsel %vm1035, 1.0, %v3083
        %v4108 = vsel %vm1036, 1.0, %v3084
        %v4109 = vsel %vm1037, 1.0, %v3085
        %v4110 = vsel %vm1038, 1.0, %v3086
        %v4111 = vsel %vm1039, 1.0, %v3087
        %v4112 = vsel %vm1040, 1.0, %v3088
        %v4113 = vsel %vm1041, 1.0, %v3089
        %v4114 = vsel %vm1042, 1.0, %v3090
        %v4115 = vsel %vm1043, 1.0, %v3091
        %v4116 = vsel %vm1044, 1.0, %v3092
        %v4117 = vsel %vm1045, 1.0, %v3093
        %v4118 = vsel %vm1046, 1.0, %v3094
        %v4119 = vsel %vm1047, 1.0, %v3095
        %v4120 = vsel %vm1048, 1.0, %v3096
        %v4121 = vsel %vm1049, 1.0, %v3097
        %v4122 = vsel %vm1050, 1.0, %v3098
        %v4123 = vsel %vm1051, 1.0, %v3099
        %v4124 = vsel %vm1052, 1.0, %v3100
        %v4125 = vsel %vm1053, 1.0, %v3101
        %v4126 = vsel %vm1054, 1.0, %v3102
        %v4127 = vsel %vm1055, 1.0, %v3103
        %v4128 = vsel %vm1056, 1.0, %v3104
        %v4129 = vsel %vm1057, 1.0, %v3105
        %v4130 = vsel %vm1058, 1.0, %v3106
        %v4131 = vsel %vm1059, 1.0, %v3107
        %v4132 = vsel %vm1060, 1.0, %v3108
        %v4133 = vsel %vm1061, 1.0, %v3109
        %v4134 = vsel %vm1062, 1.0, %v3110
        %v4135 = vsel %vm1063, 1.0, %v3111
        %v4136 = vsel %vm1064, 1.0, %v3112
        %v4137 = vsel %vm1065, 1.0, %v3113
        %v4138 = vsel %vm1066, 1.0, %v3114
        %v4139 = vsel %vm1067, 1.0, %v3115
        %v4140 = vsel %vm1068, 1.0, %v3116
        %v4141 = vsel %vm1069, 1.0, %v3117
        %v4142 = vsel %vm1070, 1.0, %v3118
        %v4143 = vsel %vm1071, 1.0, %v3119
        %v4144 = vsel %vm1072, 1.0, %v3120
        %v4145 = vsel %vm1073, 1.0, %v3121
        %v4146 = vsel %vm1074, 1.0, %v3122
        %v4147 = vsel %vm1075, 1.0, %v3123
        %v4148 = vsel %vm1076, 1.0, %v3124
        %v4149 = vsel %vm1077, 1.0, %v3125
        %v4150 = vsel %vm1078, 1.0, %v3126
        %v4151 = vsel %vm1079, 1.0, %v3127
        %v4152 = vsel %vm1080, 1.0, %v3128
        %v4153 = vsel %vm1081, 1.0, %v3129
        %v4154 = vsel %vm1082, 1.0, %v3130
        %v4155 = vsel %vm1083, 1.0, %v3131
        %v4156 = vsel %vm1084, 1.0, %v3132
        %v4157 = vsel %vm1085, 1.0, %v3133
        %v4158 = vsel %vm1086, 1.0, %v3134
        %v4159 = vsel %vm1087, 1.0, %v3135
        %v4160 = vsel %vm1088, 1.0, %v3136
        %v4161 = vsel %vm1089, 1.0, %v3137
        %v4162 = vsel %vm1090, 1.0, %v3138
        %v4163 = vsel %vm1091, 1.0, %v3139
        %v4164 = vsel %vm1092, 1.0, %v3140
        %v4165 = vsel %vm1093, 1.0, %v3141
        %v4166 = vsel %vm1094, 1.0, %v3142
        %v4167 = vsel %vm1095, 1.0, %v3143
        %v4168 = vsel %vm1096, 1.0, %v3144
        %v4169 = vsel %vm1097, 1.0, %v3145
        %v4170 = vsel %vm1098, 1.0, %v3146
        %v4171 = vsel %vm1099, 1.0, %v3147
        %v4172 = vsel %vm1100, 1.0, %v3148
        %v4173 = vsel %vm1101, 1.0, %v3149
        %v4174 = vsel %vm1102, 1.0, %v3150
        %v4175 = vsel %vm1103, 1.0, %v3151
        %v4176 = vsel %vm1104, 1.0, %v3152
        %v4177 = vsel %vm1105, 1.0, %v3153
        %v4178 = vsel %vm1106, 1.0, %v3154
        %v4179 = vsel %vm1107, 1.0, %v3155
        %v4180 = vsel %vm1108, 1.0, %v3156
        %v4181 = vsel %vm1109, 1.0, %v3157
        %v4182 = vsel %vm1110, 1.0, %v3158
        %v4183 = vsel %vm1111, 1.0, %v3159
        %v4184 = vsel %vm1112, 1.0, %v3160
        %v4185 = vsel %vm1113, 1.0, %v3161
        %v4186 = vsel %vm1114, 1.0, %v3162
        %v4187 = vsel %vm1115, 1.0, %v3163
        %v4188 = vsel %vm1116, 1.0, %v3164
        %v4189 = vsel %vm1117, 1.0, %v3165
        %v4190 = vsel %vm1118, 1.0, %v3166
        %v4191 = vsel %vm1119, 1.0, %v3167
        %v4192 = vsel %vm1120, 1.0, %v3168
        %v4193 = vsel %vm1121, 1.0, %v3169
        %v4194 = vsel %vm1122, 1.0, %v3170
        %v4195 = vsel %vm1123, 1.0, %v3171
        %v4196 = vsel %vm1124, 1.0, %v3172
        %v4197 = vsel %vm1125, 1.0, %v3173
        %v4198 = vsel %vm1126, 1.0, %v3174
        %v4199 = vsel %vm1127, 1.0, %v3175
        %v4200 = vsel %vm1128, 1.0, %v3176
        %v4201 = vsel %vm1129, 1.0, %v3177
        %v4202 = vsel %vm1130, 1.0, %v3178
        %v4203 = vsel %vm1131, 1.0, %v3179
        %v4204 = vsel %vm1132, 1.0, %v3180
        %v4205 = vsel %vm1133, 1.0, %v3181
        %v4206 = vsel %vm1134, 1.0, %v3182
        %v4207 = vsel %vm1135, 1.0, %v3183
        %v4208 = vsel %vm1136, 1.0, %v3184
        %v4209 = vsel %vm1137, 1.0, %v3185
        %v4210 = vsel %vm1138, 1.0, %v3186
        %v4211 = vsel %vm1139, 1.0, %v3187
        %v4212 = vsel %vm1140, 1.0, %v3188
        %v4213 = vsel %vm1141, 1.0, %v3189
        %v4214 = vsel %vm1142, 1.0, %v3190
        %v4215 = vsel %vm1143, 1.0, %v3191
        %v4216 = vsel %vm1144, 1.0, %v3192
        %v4217 = vsel %vm1145, 1.0, %v3193
        %v4218 = vsel %vm1146, 1.0, %v3194
        %v4219 = vsel %vm1147, 1.0, %v3195
        %v4220 = vsel %vm1148, 1.0, %v3196
        %v4221 = vsel %vm1149, 1.0, %v3197
        %v4222 = vsel %vm1150, 1.0, %v3198
        %v4223 = vsel %vm1151, 1.0, %v3199
        %v4224 = vsel %vm1152, 1.0, %v3200
        %v4225 = vsel %vm1153, 1.0, %v3201
        %v4226 = vsel %vm1154, 1.0, %v3202
        %v4227 = vsel %vm1155, 1.0, %v3203
        %v4228 = vsel %vm1156, 1.0, %v3204
        %v4229 = vsel %vm1157, 1.0, %v3205
        %v4230 = vsel %vm1158, 1.0, %v3206
        %v4231 = vsel %vm1159, 1.0, %v3207
        %v4232 = vsel %vm1160, 1.0, %v3208
        %v4233 = vsel %vm1161, 1.0, %v3209
        %v4234 = vsel %vm1162, 1.0, %v3210
        %v4235 = vsel %vm1163, 1.0, %v3211
        %v4236 = vsel %vm1164, 1.0, %v3212
        %v4237 = vsel %vm1165, 1.0, %v3213
        %v4238 = vsel %vm1166, 1.0, %v3214
        %v4239 = vsel %vm1167, 1.0, %v3215
        %v4240 = vsel %vm1168, 1.0, %v3216
        %v4241 = vsel %vm1169, 1.0, %v3217
        %v4242 = vsel %vm1170, 1.0, %v3218
        %v4243 = vsel %vm1171, 1.0, %v3219
        %v4244 = vsel %vm1172, 1.0, %v3220
        %v4245 = vsel %vm1173, 1.0, %v3221
        %v4246 = vsel %vm1174, 1.0, %v3222
        %v4247 = vsel %vm1175, 1.0, %v3223
        %v4248 = vsel %vm1176, 1.0, %v3224
        %v4249 = vsel %vm1177, 1.0, %v3225
        %v4250 = vsel %vm1178, 1.0, %v3226
        %v4251 = vsel %vm1179, 1.0, %v3227
        %v4252 = vsel %vm1180, 1.0, %v3228
        %v4253 = vsel %vm1181, 1.0, %v3229
        %v4254 = vsel %vm1182, 1.0, %v3230
        %v4255 = vsel %vm1183, 1.0, %v3231
        %v4256 = vsel %vm1184, 1.0, %v3232
        %v4257 = vsel %vm1185, 1.0, %v3233
        %v4258 = vsel %vm1186, 1.0, %v3234
        %v4259 = vsel %vm1187, 1.0, %v3235
        %v4260 = vsel %vm1188, 1.0, %v3236
        %v4261 = vsel %vm1189, 1.0, %v3237
        %v4262 = vsel %vm1190, 1.0, %v3238
        %v4263 = vsel %vm1191, 1.0, %v3239
        %v4264 = vsel %vm1192, 1.0, %v3240
        %v4265 = vsel %vm1193, 1.0, %v3241
        %v4266 = vsel %vm1194, 1.0, %v3242
        %v4267 = vsel %vm1195, 1.0, %v3243
        %v4268 = vsel %vm1196, 1.0, %v3244
        %v4269 = vsel %vm1197, 1.0, %v3245
        %v4270 = vsel %vm1198, 1.0, %v3246
        %v4271 = vsel %vm1199, 1.0, %v3247
        %v4272 = vsel %vm1200, 1.0, %v3248
        %v4273 = vsel %vm1201, 1.0, %v3249
        %v4274 = vsel %vm1202, 1.0, %v3250
        %v4275 = vsel %vm1203, 1.0, %v3251
        %v4276 = vsel %vm1204, 1.0, %v3252
        %v4277 = vsel %vm1205, 1.0, %v3253
        %v4278 = vsel %vm1206, 1.0, %v3254
        %v4279 = vsel %vm1207, 1.0, %v3255
        %v4280 = vsel %vm1208, 1.0, %v3256
        %v4281 = vsel %vm1209, 1.0, %v3257
        %v4282 = vsel %vm1210, 1.0, %v3258
        %v4283 = vsel %vm1211, 1.0, %v3259
        %v4284 = vsel %vm1212, 1.0, %v3260
        %v4285 = vsel %vm1213, 1.0, %v3261
        %v4286 = vsel %vm1214, 1.0, %v3262
        %v4287 = vsel %vm1215, 1.0, %v3263
        %v4288 = vsel %vm1216, 1.0, %v3264
        %v4289 = vsel %vm1217, 1.0, %v3265
        %v4290 = vsel %vm1218, 1.0, %v3266
        %v4291 = vsel %vm1219, 1.0, %v3267
        %v4292 = vsel %vm1220, 1.0, %v3268
        %v4293 = vsel %vm1221, 1.0, %v3269
        %v4294 = vsel %vm1222, 1.0, %v3270
        %v4295 = vsel %vm1223, 1.0, %v3271
        %v4296 = vsel %vm1224, 1.0, %v3272
        %v4297 = vsel %vm1225, 1.0, %v3273
        %v4298 = vsel %vm1226, 1.0, %v3274
        %v4299 = vsel %vm1227, 1.0, %v3275
        %v4300 = vsel %vm1228, 1.0, %v3276
        %v4301 = vsel %vm1229, 1.0, %v3277
        %v4302 = vsel %vm1230, 1.0, %v3278
        %v4303 = vsel %vm1231, 1.0, %v3279
        %v4304 = vsel %vm1232, 1.0, %v3280
        %v4305 = vsel %vm1233, 1.0, %v3281
        %v4306 = vsel %vm1234, 1.0, %v3282
        %v4307 = vsel %vm1235, 1.0, %v3283
        %v4308 = vsel %vm1236, 1.0, %v3284
        %v4309 = vsel %vm1237, 1.0, %v3285
        %v4310 = vsel %vm1238, 1.0, %v3286
        %v4311 = vsel %vm1239, 1.0, %v3287
        %v4312 = vsel %vm1240, 1.0, %v3288
        %v4313 = vsel %vm1241, 1.0, %v3289
        %v4314 = vsel %vm1242, 1.0, %v3290
        %v4315 = vsel %vm1243, 1.0, %v3291
        %v4316 = vsel %vm1244, 1.0, %v3292
        %v4317 = vsel %vm1245, 1.0, %v3293
        %v4318 = vsel %vm1246, 1.0, %v3294
        %v4319 = vsel %vm1247, 1.0, %v3295
        %v4320 = vsel %vm1248, 1.0, %v3296
        %v4321 = vsel %vm1249, 1.0, %v3297
        %v4322 = vsel %vm1250, 1.0, %v3298
        %v4323 = vsel %vm1251, 1.0, %v3299
        %v4324 = vsel %vm1252, 1.0, %v3300
        %v4325 = vsel %vm1253, 1.0, %v3301
        %v4326 = vsel %vm1254, 1.0, %v3302
        %v4327 = vsel %vm1255, 1.0, %v3303
        %v4328 = vsel %vm1256, 1.0, %v3304
        %v4329 = vsel %vm1257, 1.0, %v3305
        %v4330 = vsel %vm1258, 1.0, %v3306
        %v4331 = vsel %vm1259, 1.0, %v3307
        %v4332 = vsel %vm1260, 1.0, %v3308
        %v4333 = vsel %vm1261, 1.0, %v3309
        %v4334 = vsel %vm1262, 1.0, %v3310
        %v4335 = vsel %vm1263, 1.0, %v3311
        %v4336 = vsel %vm1264, 1.0, %v3312
        %v4337 = vsel %vm1265, 1.0, %v3313
        %v4338 = vsel %vm1266, 1.0, %v3314
        %v4339 = vsel %vm1267, 1.0, %v3315
        %v4340 = vsel %vm1268, 1.0, %v3316
        %v4341 = vsel %vm1269, 1.0, %v3317
        %v4342 = vsel %vm1270, 1.0, %v3318
        %v4343 = vsel %vm1271, 1.0, %v3319
        %v4344 = vsel %vm1272, 1.0, %v3320
        %v4345 = vsel %vm1273, 1.0, %v3321
        %v4346 = vsel %vm1274, 1.0, %v3322
        %v4347 = vsel %vm1275, 1.0, %v3323
        %v4348 = vsel %vm1276, 1.0, %v3324
        %v4349 = vsel %vm1277, 1.0, %v3325
        %v4350 = vsel %vm1278, 1.0, %v3326
        %v4351 = vsel %vm1279, 1.0, %v3327
        %v4352 = vsel %vm1280, 1.0, %v3328
        %v4353 = vsel %vm1281, 1.0, %v3329
        %v4354 = vsel %vm1282, 1.0, %v3330
        %v4355 = vsel %vm1283, 1.0, %v3331
        %v4356 = vsel %vm1284, 1.0, %v3332
        %v4357 = vsel %vm1285, 1.0, %v3333
        %v4358 = vsel %vm1286, 1.0, %v3334
        %v4359 = vsel %vm1287, 1.0, %v3335
        %v4360 = vsel %vm1288, 1.0, %v3336
        %v4361 = vsel %vm1289, 1.0, %v3337
        %v4362 = vsel %vm1290, 1.0, %v3338
        %v4363 = vsel %vm1291, 1.0, %v3339
        %v4364 = vsel %vm1292, 1.0, %v3340
        %v4365 = vsel %vm1293, 1.0, %v3341
        %v4366 = vsel %vm1294, 1.0, %v3342
        %v4367 = vsel %vm1295, 1.0, %v3343
        %v4368 = vsel %vm1296, 1.0, %v3344
        %v4369 = vsel %vm1297, 1.0, %v3345
        %v4370 = vsel %vm1298, 1.0, %v3346
        %v4371 = vsel %vm1299, 1.0, %v3347
        %v4372 = vsel %vm1300, 1.0, %v3348
        %v4373 = vsel %vm1301, 1.0, %v3349
        %v4374 = vsel %vm1302, 1.0, %v3350
        %v4375 = vsel %vm1303, 1.0, %v3351
        %v4376 = vsel %vm1304, 1.0, %v3352
        %v4377 = vsel %vm1305, 1.0, %v3353
        %v4378 = vsel %vm1306, 1.0, %v3354
        %v4379 = vsel %vm1307, 1.0, %v3355
        %v4380 = vsel %vm1308, 1.0, %v3356
        %v4381 = vsel %vm1309, 1.0, %v3357
        %v4382 = vsel %vm1310, 1.0, %v3358
        %v4383 = vsel %vm1311, 1.0, %v3359
        %v4384 = vsel %vm1312, 1.0, %v3360
        %v4385 = vsel %vm1313, 1.0, %v3361
        %v4386 = vsel %vm1314, 1.0, %v3362
        %v4387 = vsel %vm1315, 1.0, %v3363
        %v4388 = vsel %vm1316, 1.0, %v3364
        %v4389 = vsel %vm1317, 1.0, %v3365
        %v4390 = vsel %vm1318, 1.0, %v3366
        %v4391 = vsel %vm1319, 1.0, %v3367
        %v4392 = vsel %vm1320, 1.0, %v3368
        %v4393 = vsel %vm1321, 1.0, %v3369
        %v4394 = vsel %vm1322, 1.0, %v3370
        %v4395 = vsel %vm1323, 1.0, %v3371
        %v4396 = vsel %vm1324, 1.0, %v3372
        %v4397 = vsel %vm1325, 1.0, %v3373
        %v4398 = vsel %vm1326, 1.0, %v3374
        %v4399 = vsel %vm1327, 1.0, %v3375
        %v4400 = vsel %vm1328, 1.0, %v3376
        %v4401 = vsel %vm1329, 1.0, %v3377
        %v4402 = vsel %vm1330, 1.0, %v3378
        %v4403 = vsel %vm1331, 1.0, %v3379
        %v4404 = vsel %vm1332, 1.0, %v3380
        %v4405 = vsel %vm1333, 1.0, %v3381
        %v4406 = vsel %vm1334, 1.0, %v3382
        %v4407 = vsel %vm1335, 1.0, %v3383
        %v4408 = vsel %vm1336, 1.0, %v3384
        %v4409 = vsel %vm1337, 1.0, %v3385
        %v4410 = vsel %vm1338, 1.0, %v3386
        %v4411 = vsel %vm1339, 1.0, %v3387
        %v4412 = vsel %vm1340, 1.0, %v3388
        %v4413 = vsel %vm1341, 1.0, %v3389
        %v4414 = vsel %vm1342, 1.0, %v3390
        %v4415 = vsel %vm1343, 1.0, %v3391
        %v4416 = vsel %vm1344, 1.0, %v3392
        %v4417 = vsel %vm1345, 1.0, %v3393
        %v4418 = vsel %vm1346, 1.0, %v3394
        %v4419 = vsel %vm1347, 1.0, %v3395
        %v4420 = vsel %vm1348, 1.0, %v3396
        %v4421 = vsel %vm1349, 1.0, %v3397
        %v4422 = vsel %vm1350, 1.0, %v3398
        %v4423 = vsel %vm1351, 1.0, %v3399
        %v4424 = vsel %vm1352, 1.0, %v3400
        %v4425 = vsel %vm1353, 1.0, %v3401
        %v4426 = vsel %vm1354, 1.0, %v3402
        %v4427 = vsel %vm1355, 1.0, %v3403
        %v4428 = vsel %vm1356, 1.0, %v3404
        %v4429 = vsel %vm1357, 1.0, %v3405
        %v4430 = vsel %vm1358, 1.0, %v3406
        %v4431 = vsel %vm1359, 1.0, %v3407
        %v4432 = vsel %vm1360, 1.0, %v3408
        %v4433 = vsel %vm1361, 1.0, %v3409
        %v4434 = vsel %vm1362, 1.0, %v3410
        %v4435 = vsel %vm1363, 1.0, %v3411
        %v4436 = vsel %vm1364, 1.0, %v3412
        %v4437 = vsel %vm1365, 1.0, %v3413
        %v4438 = vsel %vm1366, 1.0, %v3414
        %v4439 = vsel %vm1367, 1.0, %v3415
        %v4440 = vsel %vm1368, 1.0, %v3416
        %v4441 = vsel %vm1369, 1.0, %v3417
        %v4442 = vsel %vm1370, 1.0, %v3418
        %v4443 = vsel %vm1371, 1.0, %v3419
        %v4444 = vsel %vm1372, 1.0, %v3420
        %v4445 = vsel %vm1373, 1.0, %v3421
        %v4446 = vsel %vm1374, 1.0, %v3422
        %v4447 = vsel %vm1375, 1.0, %v3423
        %v4448 = vsel %vm1376, 1.0, %v3424
        %v4449 = vsel %vm1377, 1.0, %v3425
        %v4450 = vsel %vm1378, 1.0, %v3426
        %v4451 = vsel %vm1379, 1.0, %v3427
        %v4452 = vsel %vm1380, 1.0, %v3428
        %v4453 = vsel %vm1381, 1.0, %v3429
        %v4454 = vsel %vm1382, 1.0, %v3430
        %v4455 = vsel %vm1383, 1.0, %v3431
        %v4456 = vsel %vm1384, 1.0, %v3432
        %v4457 = vsel %vm1385, 1.0, %v3433
        %v4458 = vsel %vm1386, 1.0, %v3434
        %v4459 = vsel %vm1387, 1.0, %v3435
        %v4460 = vsel %vm1388, 1.0, %v3436
        %v4461 = vsel %vm1389, 1.0, %v3437
        %v4462 = vsel %vm1390, 1.0, %v3438
        %v4463 = vsel %vm1391, 1.0, %v3439
        %v4464 = vsel %vm1392, 1.0, %v3440
        %v4465 = vsel %vm1393, 1.0, %v3441
        %v4466 = vsel %vm1394, 1.0, %v3442
        %v4467 = vsel %vm1395, 1.0, %v3443
        %v4468 = vsel %vm1396, 1.0, %v3444
        %v4469 = vsel %vm1397, 1.0, %v3445
        %v4470 = vsel %vm1398, 1.0, %v3446
        %v4471 = vsel %vm1399, 1.0, %v3447
        %v4472 = vsel %vm1400, 1.0, %v3448
        %v4473 = vsel %vm1401, 1.0, %v3449
        %v4474 = vsel %vm1402, 1.0, %v3450
        %v4475 = vsel %vm1403, 1.0, %v3451
        %v4476 = vsel %vm1404, 1.0, %v3452
        %v4477 = vsel %vm1405, 1.0, %v3453
        %v4478 = vsel %vm1406, 1.0, %v3454
        %v4479 = vsel %vm1407, 1.0, %v3455
        %v4480 = vsel %vm1408, 1.0, %v3456
        %v4481 = vsel %vm1409, 1.0, %v3457
        %v4482 = vsel %vm1410, 1.0, %v3458
        %v4483 = vsel %vm1411, 1.0, %v3459
        %v4484 = vsel %vm1412, 1.0, %v3460
        %v4485 = vsel %vm1413, 1.0, %v3461
        %v4486 = vsel %vm1414, 1.0, %v3462
        %v4487 = vsel %vm1415, 1.0, %v3463
        %v4488 = vsel %vm1416, 1.0, %v3464
        %v4489 = vsel %vm1417, 1.0, %v3465
        %v4490 = vsel %vm1418, 1.0, %v3466
        %v4491 = vsel %vm1419, 1.0, %v3467
        %v4492 = vsel %vm1420, 1.0, %v3468
        %v4493 = vsel %vm1421, 1.0, %v3469
        %v4494 = vsel %vm1422, 1.0, %v3470
        %v4495 = vsel %vm1423, 1.0, %v3471
        %v4496 = vsel %vm1424, 1.0, %v3472
        %v4497 = vsel %vm1425, 1.0, %v3473
        %v4498 = vsel %vm1426, 1.0, %v3474
        %v4499 = vsel %vm1427, 1.0, %v3475
        %v4500 = vsel %vm1428, 1.0, %v3476
        %v4501 = vsel %vm1429, 1.0, %v3477
        %v4502 = vsel %vm1430, 1.0, %v3478
        %v4503 = vsel %vm1431, 1.0, %v3479
        %v4504 = vsel %vm1432, 1.0, %v3480
        %v4505 = vsel %vm1433, 1.0, %v3481
        %v4506 = vsel %vm1434, 1.0, %v3482
        %v4507 = vsel %vm1435, 1.0, %v3483
        %v4508 = vsel %vm1436, 1.0, %v3484
        %v4509 = vsel %vm1437, 1.0, %v3485
        %v4510 = vsel %vm1438, 1.0, %v3486
        %v4511 = vsel %vm1439, 1.0, %v3487
        %v4512 = vsel %vm1440, 1.0, %v3488
        %v4513 = vsel %vm1441, 1.0, %v3489
        %v4514 = vsel %vm1442, 1.0, %v3490
        %v4515 = vsel %vm1443, 1.0, %v3491
        %v4516 = vsel %vm1444, 1.0, %v3492
        %v4517 = vsel %vm1445, 1.0, %v3493
        %v4518 = vsel %vm1446, 1.0, %v3494
        %v4519 = vsel %vm1447, 1.0, %v3495
        %v4520 = vsel %vm1448, 1.0, %v3496
        %v4521 = vsel %vm1449, 1.0, %v3497
        %v4522 = vsel %vm1450, 1.0, %v3498
        %v4523 = vsel %vm1451, 1.0, %v3499
        %v4524 = vsel %vm1452, 1.0, %v3500
        %v4525 = vsel %vm1453, 1.0, %v3501
        %v4526 = vsel %vm1454, 1.0, %v3502
        %v4527 = vsel %vm1455, 1.0, %v3503
        %v4528 = vsel %vm1456, 1.0, %v3504
        %v4529 = vsel %vm1457, 1.0, %v3505
        %v4530 = vsel %vm1458, 1.0, %v3506
        %v4531 = vsel %vm1459, 1.0, %v3507
        %v4532 = vsel %vm1460, 1.0, %v3508
        %v4533 = vsel %vm1461, 1.0, %v3509
        %v4534 = vsel %vm1462, 1.0, %v3510
        %v4535 = vsel %vm1463, 1.0, %v3511
        %v4536 = vsel %vm1464, 1.0, %v3512
        %v4537 = vsel %vm1465, 1.0, %v3513
        %v4538 = vsel %vm1466, 1.0, %v3514
        %v4539 = vsel %vm1467, 1.0, %v3515
        %v4540 = vsel %vm1468, 1.0, %v3516
        %v4541 = vsel %vm1469, 1.0, %v3517
        %v4542 = vsel %vm1470, 1.0, %v3518
        %v4543 = vsel %vm1471, 1.0, %v3519
        %v4544 = vsel %vm1472, 1.0, %v3520
        %v4545 = vsel %vm1473, 1.0, %v3521
        %v4546 = vsel %vm1474, 1.0, %v3522
        %v4547 = vsel %vm1475, 1.0, %v3523
        %v4548 = vsel %vm1476, 1.0, %v3524
        %v4549 = vsel %vm1477, 1.0, %v3525
        %v4550 = vsel %vm1478, 1.0, %v3526
        %v4551 = vsel %vm1479, 1.0, %v3527
        %v4552 = vsel %vm1480, 1.0, %v3528
        %v4553 = vsel %vm1481, 1.0, %v3529
        %v4554 = vsel %vm1482, 1.0, %v3530
        %v4555 = vsel %vm1483, 1.0, %v3531
        %v4556 = vsel %vm1484, 1.0, %v3532
        %v4557 = vsel %vm1485, 1.0, %v3533
        %v4558 = vsel %vm1486, 1.0, %v3534
        %v4559 = vsel %vm1487, 1.0, %v3535
        %v4560 = vsel %vm1488, 1.0, %v3536
        %v4561 = vsel %vm1489, 1.0, %v3537
        %v4562 = vsel %vm1490, 1.0, %v3538
        %v4563 = vsel %vm1491, 1.0, %v3539
        %v4564 = vsel %vm1492, 1.0, %v3540
        %v4565 = vsel %vm1493, 1.0, %v3541
        %v4566 = vsel %vm1494, 1.0, %v3542
        %v4567 = vsel %vm1495, 1.0, %v3543
        %v4568 = vsel %vm1496, 1.0, %v3544
        %v4569 = vsel %vm1497, 1.0, %v3545
        %v4570 = vsel %vm1498, 1.0, %v3546
        %v4571 = vsel %vm1499, 1.0, %v3547
        %v4572 = vsel %vm1500, 1.0, %v3548
        %v4573 = vsel %vm1501, 1.0, %v3549
        %v4574 = vsel %vm1502, 1.0, %v3550
        %v4575 = vsel %vm1503, 1.0, %v3551
        %v4576 = vsel %vm1504, 1.0, %v3552
        %v4577 = vsel %vm1505, 1.0, %v3553
        %v4578 = vsel %vm1506, 1.0, %v3554
        %v4579 = vsel %vm1507, 1.0, %v3555
        %v4580 = vsel %vm1508, 1.0, %v3556
        %v4581 = vsel %vm1509, 1.0, %v3557
        %v4582 = vsel %vm1510, 1.0, %v3558
        %v4583 = vsel %vm1511, 1.0, %v3559
        %v4584 = vsel %vm1512, 1.0, %v3560
        %v4585 = vsel %vm1513, 1.0, %v3561
        %v4586 = vsel %vm1514, 1.0, %v3562
        %v4587 = vsel %vm1515, 1.0, %v3563
        %v4588 = vsel %vm1516, 1.0, %v3564
        %v4589 = vsel %vm1517, 1.0, %v3565
        %v4590 = vsel %vm1518, 1.0, %v3566
        %v4591 = vsel %vm1519, 1.0, %v3567
        %v4592 = vsel %vm1520, 1.0, %v3568
        %v4593 = vsel %vm1521, 1.0, %v3569
        %v4594 = vsel %vm1522, 1.0, %v3570
        %v4595 = vsel %vm1523, 1.0, %v3571
        %v4596 = vsel %vm1524, 1.0, %v3572
        %v4597 = vsel %vm1525, 1.0, %v3573
        %v4598 = vsel %vm1526, 1.0, %v3574
        %v4599 = vsel %vm1527, 1.0, %v3575
        %v4600 = vsel %vm1528, 1.0, %v3576
        %v4601 = vsel %vm1529, 1.0, %v3577
        %v4602 = vsel %vm1530, 1.0, %v3578
        %v4603 = vsel %vm1531, 1.0, %v3579
        %v4604 = vsel %vm1532, 1.0, %v3580
        %v4605 = vsel %vm1533, 1.0, %v3581
        %v4606 = vsel %vm1534, 1.0, %v3582
        %v4607 = vsel %vm1535, 1.0, %v3583
        %v4608 = vsel %vm1536, 1.0, %v3584
        %v4609 = vsel %vm1537, 1.0, %v3585
        %v4610 = vsel %vm1538, 1.0, %v3586
        %v4611 = vsel %vm1539, 1.0, %v3587
        %v4612 = vsel %vm1540, 1.0, %v3588
        %v4613 = vsel %vm1541, 1.0, %v3589
        %v4614 = vsel %vm1542, 1.0, %v3590
        %v4615 = vsel %vm1543, 1.0, %v3591
        %v4616 = vsel %vm1544, 1.0, %v3592
        %v4617 = vsel %vm1545, 1.0, %v3593
        %v4618 = vsel %vm1546, 1.0, %v3594
        %v4619 = vsel %vm1547, 1.0, %v3595
        %v4620 = vsel %vm1548, 1.0, %v3596
        %v4621 = vsel %vm1549, 1.0, %v3597
        %v4622 = vsel %vm1550, 1.0, %v3598
        %v4623 = vsel %vm1551, 1.0, %v3599
        %v4624 = vsel %vm1552, 1.0, %v3600
        %v4625 = vsel %vm1553, 1.0, %v3601
        %v4626 = vsel %vm1554, 1.0, %v3602
        %v4627 = vsel %vm1555, 1.0, %v3603
        %v4628 = vsel %vm1556, 1.0, %v3604
        %v4629 = vsel %vm1557, 1.0, %v3605
        %v4630 = vsel %vm1558, 1.0, %v3606
        %v4631 = vsel %vm1559, 1.0, %v3607
        %v4632 = vsel %vm1560, 1.0, %v3608
        %v4633 = vsel %vm1561, 1.0, %v3609
        %v4634 = vsel %vm1562, 1.0, %v3610
        %v4635 = vsel %vm1563, 1.0, %v3611
        %v4636 = vsel %vm1564, 1.0, %v3612
        %v4637 = vsel %vm1565, 1.0, %v3613
        %v4638 = vsel %vm1566, 1.0, %v3614
        %v4639 = vsel %vm1567, 1.0, %v3615
        %v4640 = vsel %vm1568, 1.0, %v3616
        %v4641 = vsel %vm1569, 1.0, %v3617
        %v4642 = vsel %vm1570, 1.0, %v3618
        %v4643 = vsel %vm1571, 1.0, %v3619
        %v4644 = vsel %vm1572, 1.0, %v3620
        %v4645 = vsel %vm1573, 1.0, %v3621
        %v4646 = vsel %vm1574, 1.0, %v3622
        %v4647 = vsel %vm1575, 1.0, %v3623
        %v4648 = vsel %vm1576, 1.0, %v3624
        %v4649 = vsel %vm1577, 1.0, %v3625
        %v4650 = vsel %vm1578, 1.0, %v3626
        %v4651 = vsel %vm1579, 1.0, %v3627
        %v4652 = vsel %vm1580, 1.0, %v3628
        %v4653 = vsel %vm1581, 1.0, %v3629
        %v4654 = vsel %vm1582, 1.0, %v3630
        %v4655 = vsel %vm1583, 1.0, %v3631
        %v4656 = vsel %vm1584, 1.0, %v3632
        %v4657 = vsel %vm1585, 1.0, %v3633
        %v4658 = vsel %vm1586, 1.0, %v3634
        %v4659 = vsel %vm1587, 1.0, %v3635
        %v4660 = vsel %vm1588, 1.0, %v3636
        %v4661 = vsel %vm1589, 1.0, %v3637
        %v4662 = vsel %vm1590, 1.0, %v3638
        %v4663 = vsel %vm1591, 1.0, %v3639
        %v4664 = vsel %vm1592, 1.0, %v3640
        %v4665 = vsel %vm1593, 1.0, %v3641
        %v4666 = vsel %vm1594, 1.0, %v3642
        %v4667 = vsel %vm1595, 1.0, %v3643
        %v4668 = vsel %vm1596, 1.0, %v3644
        %v4669 = vsel %vm1597, 1.0, %v3645
        %v4670 = vsel %vm1598, 1.0, %v3646
        %v4671 = vsel %vm1599, 1.0, %v3647
        %v4672 = vsel %vm1600, 1.0, %v3648
        %v4673 = vsel %vm1601, 1.0, %v3649
        %v4674 = vsel %vm1602, 1.0, %v3650
        %v4675 = vsel %vm1603, 1.0, %v3651
        %v4676 = vsel %vm1604, 1.0, %v3652
        %v4677 = vsel %vm1605, 1.0, %v3653
        %v4678 = vsel %vm1606, 1.0, %v3654
        %v4679 = vsel %vm1607, 1.0, %v3655
        %v4680 = vsel %vm1608, 1.0, %v3656
        %v4681 = vsel %vm1609, 1.0, %v3657
        %v4682 = vsel %vm1610, 1.0, %v3658
        %v4683 = vsel %vm1611, 1.0, %v3659
        %v4684 = vsel %vm1612, 1.0, %v3660
        %v4685 = vsel %vm1613, 1.0, %v3661
        %v4686 = vsel %vm1614, 1.0, %v3662
        %v4687 = vsel %vm1615, 1.0, %v3663
        %v4688 = vsel %vm1616, 1.0, %v3664
        %v4689 = vsel %vm1617, 1.0, %v3665
        %v4690 = vsel %vm1618, 1.0, %v3666
        %v4691 = vsel %vm1619, 1.0, %v3667
        %v4692 = vsel %vm1620, 1.0, %v3668
        %v4693 = vsel %vm1621, 1.0, %v3669
        %v4694 = vsel %vm1622, 1.0, %v3670
        %v4695 = vsel %vm1623, 1.0, %v3671
        %v4696 = vsel %vm1624, 1.0, %v3672
        %v4697 = vsel %vm1625, 1.0, %v3673
        %v4698 = vsel %vm1626, 1.0, %v3674
        %v4699 = vsel %vm1627, 1.0, %v3675
        %v4700 = vsel %vm1628, 1.0, %v3676
        %v4701 = vsel %vm1629, 1.0, %v3677
        %v4702 = vsel %vm1630, 1.0, %v3678
        %v4703 = vsel %vm1631, 1.0, %v3679
        %v4704 = vsel %vm1632, 1.0, %v3680
        %v4705 = vsel %vm1633, 1.0, %v3681
        %v4706 = vsel %vm1634, 1.0, %v3682
        %v4707 = vsel %vm1635, 1.0, %v3683
        %v4708 = vsel %vm1636, 1.0, %v3684
        %v4709 = vsel %vm1637, 1.0, %v3685
        %v4710 = vsel %vm1638, 1.0, %v3686
        %v4711 = vsel %vm1639, 1.0, %v3687
        %v4712 = vsel %vm1640, 1.0, %v3688
        %v4713 = vsel %vm1641, 1.0, %v3689
        %v4714 = vsel %vm1642, 1.0, %v3690
        %v4715 = vsel %vm1643, 1.0, %v3691
        %v4716 = vsel %vm1644, 1.0, %v3692
        %v4717 = vsel %vm1645, 1.0, %v3693
        %v4718 = vsel %vm1646, 1.0, %v3694
        %v4719 = vsel %vm1647, 1.0, %v3695
        %v4720 = vsel %vm1648, 1.0, %v3696
        %v4721 = vsel %vm1649, 1.0, %v3697
        %v4722 = vsel %vm1650, 1.0, %v3698
        %v4723 = vsel %vm1651, 1.0, %v3699
        %v4724 = vsel %vm1652, 1.0, %v3700
        %v4725 = vsel %vm1653, 1.0, %v3701
        %v4726 = vsel %vm1654, 1.0, %v3702
        %v4727 = vsel %vm1655, 1.0, %v3703
        %v4728 = vsel %vm1656, 1.0, %v3704
        %v4729 = vsel %vm1657, 1.0, %v3705
        %v4730 = vsel %vm1658, 1.0, %v3706
        %v4731 = vsel %vm1659, 1.0, %v3707
        %v4732 = vsel %vm1660, 1.0, %v3708
        %v4733 = vsel %vm1661, 1.0, %v3709
        %v4734 = vsel %vm1662, 1.0, %v3710
        %v4735 = vsel %vm1663, 1.0, %v3711
        %v4736 = vsel %vm1664, 1.0, %v3712
        %v4737 = vsel %vm1665, 1.0, %v3713
        %v4738 = vsel %vm1666, 1.0, %v3714
        %v4739 = vsel %vm1667, 1.0, %v3715
        %v4740 = vsel %vm1668, 1.0, %v3716
        %v4741 = vsel %vm1669, 1.0, %v3717
        %v4742 = vsel %vm1670, 1.0, %v3718
        %v4743 = vsel %vm1671, 1.0, %v3719
        %v4744 = vsel %vm1672, 1.0, %v3720
        %v4745 = vsel %vm1673, 1.0, %v3721
        %v4746 = vsel %vm1674, 1.0, %v3722
        %v4747 = vsel %vm1675, 1.0, %v3723
        %v4748 = vsel %vm1676, 1.0, %v3724
        %v4749 = vsel %vm1677, 1.0, %v3725
        %v4750 = vsel %vm1678, 1.0, %v3726
        %v4751 = vsel %vm1679, 1.0, %v3727
        %v4752 = vsel %vm1680, 1.0, %v3728
        %v4753 = vsel %vm1681, 1.0, %v3729
        %v4754 = vsel %vm1682, 1.0, %v3730
        %v4755 = vsel %vm1683, 1.0, %v3731
        %v4756 = vsel %vm1684, 1.0, %v3732
        %v4757 = vsel %vm1685, 1.0, %v3733
        %v4758 = vsel %vm1686, 1.0, %v3734
        %v4759 = vsel %vm1687, 1.0, %v3735
        %v4760 = vsel %vm1688, 1.0, %v3736
        %v4761 = vsel %vm1689, 1.0, %v3737
        %v4762 = vsel %vm1690, 1.0, %v3738
        %v4763 = vsel %vm1691, 1.0, %v3739
        %v4764 = vsel %vm1692, 1.0, %v3740
        %v4765 = vsel %vm1693, 1.0, %v3741
        %v4766 = vsel %vm1694, 1.0, %v3742
        %v4767 = vsel %vm1695, 1.0, %v3743
        %v4768 = vsel %vm1696, 1.0, %v3744
        %v4769 = vsel %vm1697, 1.0, %v3745
        %v4770 = vsel %vm1698, 1.0, %v3746
        %v4771 = vsel %vm1699, 1.0, %v3747
        %v4772 = vsel %vm1700, 1.0, %v3748
        %v4773 = vsel %vm1701, 1.0, %v3749
        %v4774 = vsel %vm1702, 1.0, %v3750
        %v4775 = vsel %vm1703, 1.0, %v3751
        %v4776 = vsel %vm1704, 1.0, %v3752
        %v4777 = vsel %vm1705, 1.0, %v3753
        %v4778 = vsel %vm1706, 1.0, %v3754
        %v4779 = vsel %vm1707, 1.0, %v3755
        %v4780 = vsel %vm1708, 1.0, %v3756
        %v4781 = vsel %vm1709, 1.0, %v3757
        %v4782 = vsel %vm1710, 1.0, %v3758
        %v4783 = vsel %vm1711, 1.0, %v3759
        %v4784 = vsel %vm1712, 1.0, %v3760
        %v4785 = vsel %vm1713, 1.0, %v3761
        %v4786 = vsel %vm1714, 1.0, %v3762
        %v4787 = vsel %vm1715, 1.0, %v3763
        %v4788 = vsel %vm1716, 1.0, %v3764
        %v4789 = vsel %vm1717, 1.0, %v3765
        %v4790 = vsel %vm1718, 1.0, %v3766
        %v4791 = vsel %vm1719, 1.0, %v3767
        %v4792 = vsel %vm1720, 1.0, %v3768
        %v4793 = vsel %vm1721, 1.0, %v3769
        %v4794 = vsel %vm1722, 1.0, %v3770
        %v4795 = vsel %vm1723, 1.0, %v3771
        %v4796 = vsel %vm1724, 1.0, %v3772
        %v4797 = vsel %vm1725, 1.0, %v3773
        %v4798 = vsel %vm1726, 1.0, %v3774
        %v4799 = vsel %vm1727, 1.0, %v3775
        %v4800 = vsel %vm1728, 1.0, %v3776
        %v4801 = vsel %vm1729, 1.0, %v3777
        %v4802 = vsel %vm1730, 1.0, %v3778
        %v4803 = vsel %vm1731, 1.0, %v3779
        %v4804 = vsel %vm1732, 1.0, %v3780
        %v4805 = vsel %vm1733, 1.0, %v3781
        %v4806 = vsel %vm1734, 1.0, %v3782
        %v4807 = vsel %vm1735, 1.0, %v3783
        %v4808 = vsel %vm1736, 1.0, %v3784
        %v4809 = vsel %vm1737, 1.0, %v3785
        %v4810 = vsel %vm1738, 1.0, %v3786
        %v4811 = vsel %vm1739, 1.0, %v3787
        %v4812 = vsel %vm1740, 1.0, %v3788
        %v4813 = vsel %vm1741, 1.0, %v3789
        %v4814 = vsel %vm1742, 1.0, %v3790
        %v4815 = vsel %vm1743, 1.0, %v3791
        %v4816 = vsel %vm1744, 1.0, %v3792
        %v4817 = vsel %vm1745, 1.0, %v3793
        %v4818 = vsel %vm1746, 1.0, %v3794
        %v4819 = vsel %vm1747, 1.0, %v3795
        %v4820 = vsel %vm1748, 1.0, %v3796
        %v4821 = vsel %vm1749, 1.0, %v3797
        %v4822 = vsel %vm1750, 1.0, %v3798
        %v4823 = vsel %vm1751, 1.0, %v3799
        %v4824 = vsel %vm1752, 1.0, %v3800
        %v4825 = vsel %vm1753, 1.0, %v3801
        %v4826 = vsel %vm1754, 1.0, %v3802
        %v4827 = vsel %vm1755, 1.0, %v3803
        %v4828 = vsel %vm1756, 1.0, %v3804
        %v4829 = vsel %vm1757, 1.0, %v3805
        %v4830 = vsel %vm1758, 1.0, %v3806
        %v4831 = vsel %vm1759, 1.0, %v3807
        %v4832 = vsel %vm1760, 1.0, %v3808
        %v4833 = vsel %vm1761, 1.0, %v3809
        %v4834 = vld [vmem:[#allocation2] sm:$0xff]
        %v4835 = vld [vmem:[#allocation2 + $0x8] sm:$0xff]
        %v4836 = vld [vmem:[#allocation2 + $0x10] sm:$0xff]
        %v4837 = vld [vmem:[#allocation2 + $0x18] sm:$0xff]
        %v4838 = vld [vmem:[#allocation2 + $0x20] sm:$0xff]
        %v4839 = vld [vmem:[#allocation2 + $0x28] sm:$0xff]
        %v4840 = vld [vmem:[#allocation2 + $0x30] sm:$0xff]
        %v4841 = vld [vmem:[#allocation2 + $0x38] sm:$0xff]
        %v4842 = vld [vmem:[#allocation2 + $0x40] sm:$0xff]
        %v4843 = vld [vmem:[#allocation2 + $0x48] sm:$0xff]
        %v4844 = vld [vmem:[#allocation2 + $0x50] sm:$0xff]
        %v4845 = vld [vmem:[#allocation2 + $0x58] sm:$0xff]
        %v4846 = vld [vmem:[#allocation2 + $0x60] sm:$0xff]
        %v4847 = vld [vmem:[#allocation2 + $0x68] sm:$0xff]
        %v4848 = vld [vmem:[#allocation2 + $0x70] sm:$0xff]
        %v4849 = vld [vmem:[#allocation2 + $0x78] sm:$0xff]
        %v4850 = vld [vmem:[#allocation2 + $0x80] sm:$0xff]
        %v4851 = vld [vmem:[#allocation2 + $0x88] sm:$0xff]
        %v4852 = vld [vmem:[#allocation2 + $0x90] sm:$0xff]
        %v4853 = vld [vmem:[#allocation2 + $0x98] sm:$0xff]
        %v4854 = vld [vmem:[#allocation2 + $0xa0] sm:$0xff]
        %v4855 = vld [vmem:[#allocation2 + $0xa8] sm:$0xff]
        %v4856 = vld [vmem:[#allocation2 + $0xb0] sm:$0xff]
        %v4857 = vld [vmem:[#allocation2 + $0xb8] sm:$0xff]
        %v4858 = vld [vmem:[#allocation2 + $0xc0] sm:$0xff]
        %v4859 = vld [vmem:[#allocation2 + $0xc8] sm:$0xff]
        %v4860 = vld [vmem:[#allocation2 + $0xd0] sm:$0xff]
        %v4861 = vld [vmem:[#allocation2 + $0xd8] sm:$0xff]
        %v4862 = vld [vmem:[#allocation2 + $0xe0] sm:$0xff]
        %v4863 = vld [vmem:[#allocation2 + $0xe8] sm:$0xff]
        %v4864 = vld [vmem:[#allocation2 + $0xf0] sm:$0xff]
        %v4865 = vld [vmem:[#allocation2 + $0xf8] sm:$0xff]
        %v4866 = vld [vmem:[#allocation2 + $0x100] sm:$0xff]
        %v4867 = vld [vmem:[#allocation2 + $0x108] sm:$0xff]
        %v4868 = vld [vmem:[#allocation2 + $0x110] sm:$0xff]
        %v4869 = vld [vmem:[#allocation2 + $0x118] sm:$0xff]
        %v4870 = vld [vmem:[#allocation2 + $0x120] sm:$0xff]
        %v4871 = vld [vmem:[#allocation2 + $0x128] sm:$0xff]
        %v4872 = vld [vmem:[#allocation2 + $0x130] sm:$0xff]
        %v4873 = vld [vmem:[#allocation2 + $0x138] sm:$0xff]
        %v4874 = vld [vmem:[#allocation2 + $0x140] sm:$0xff]
        %v4875 = vld [vmem:[#allocation2 + $0x148] sm:$0xff]
        %v4876 = vld [vmem:[#allocation2 + $0x150] sm:$0xff]
        %v4877 = vld [vmem:[#allocation2 + $0x158] sm:$0xff]
        %v4878 = vld [vmem:[#allocation2 + $0x160] sm:$0xff]
        %v4879 = vld [vmem:[#allocation2 + $0x168] sm:$0xff]
        %v4880 = vld [vmem:[#allocation2 + $0x170] sm:$0xff]
        %v4881 = vld [vmem:[#allocation2 + $0x178] sm:$0xff]
        %v4882 = vld [vmem:[#allocation2 + $0x180] sm:$0xff]
        %v4883 = vld [vmem:[#allocation2 + $0x188] sm:$0xff]
        %v4884 = vld [vmem:[#allocation2 + $0x190] sm:$0xff]
        %v4885 = vld [vmem:[#allocation2 + $0x198] sm:$0xff]
        %v4886 = vld [vmem:[#allocation2 + $0x1a0] sm:$0xff]
        %v4887 = vld [vmem:[#allocation2 + $0x1a8] sm:$0xff]
        %v4888 = vld [vmem:[#allocation2 + $0x1b0] sm:$0xff]
        %v4889 = vld [vmem:[#allocation2 + $0x1b8] sm:$0xff]
        %v4890 = vld [vmem:[#allocation2 + $0x1c0] sm:$0xff]
        %v4891 = vld [vmem:[#allocation2 + $0x1c8] sm:$0xff]
        %v4892 = vld [vmem:[#allocation2 + $0x1d0] sm:$0xff]
        %v4893 = vld [vmem:[#allocation2 + $0x1d8] sm:$0xff]
        %v4894 = vld [vmem:[#allocation2 + $0x1e0] sm:$0xff]
        %v4895 = vld [vmem:[#allocation2 + $0x1e8] sm:$0xff]
        %v4896 = vld [vmem:[#allocation2 + $0x1f0] sm:$0xff]
        %v4897 = vld [vmem:[#allocation2 + $0x1f8] sm:$0xff]
        %v4898 = vpack.c.bf16 %v3826, %v3810
        %v4899 = vpack.c.bf16 %v3827, %v3811
        %v4900 = vpack.c.bf16 %v3828, %v3812
        %v4901 = vpack.c.bf16 %v3829, %v3813
        %v4902 = vpack.c.bf16 %v3830, %v3814
        %v4903 = vpack.c.bf16 %v3831, %v3815
        %v4904 = vpack.c.bf16 %v3832, %v3816
        %v4905 = vpack.c.bf16 %v3833, %v3817
        %v4906 = vpack.c.bf16 %v3834, %v3818
        %v4907 = vpack.c.bf16 %v3835, %v3819
        %v4908 = vpack.c.bf16 %v3836, %v3820
        %v4909 = vpack.c.bf16 %v3837, %v3821
        %v4910 = vpack.c.bf16 %v3838, %v3822
        %v4911 = vpack.c.bf16 %v3839, %v3823
        %v4912 = vpack.c.bf16 %v3840, %v3824
        %v4913 = vpack.c.bf16 %v3841, %v3825
        %v4914 = vpack.c.bf16 %v3858, %v3842
        %v4915 = vpack.c.bf16 %v3859, %v3843
        %v4916 = vpack.c.bf16 %v3860, %v3844
        %v4917 = vpack.c.bf16 %v3861, %v3845
        %v4918 = vpack.c.bf16 %v3862, %v3846
        %v4919 = vpack.c.bf16 %v3863, %v3847
        %v4920 = vpack.c.bf16 %v3864, %v3848
        %v4921 = vpack.c.bf16 %v3865, %v3849
        %v4922 = vpack.c.bf16 %v3866, %v3850
        %v4923 = vpack.c.bf16 %v3867, %v3851
        %v4924 = vpack.c.bf16 %v3868, %v3852
        %v4925 = vpack.c.bf16 %v3869, %v3853
        %v4926 = vpack.c.bf16 %v3870, %v3854
        %v4927 = vpack.c.bf16 %v3871, %v3855
        %v4928 = vpack.c.bf16 %v3872, %v3856
        %v4929 = vpack.c.bf16 %v3873, %v3857
        %v4930 = vpack.c.bf16 %v3890, %v3874
        %v4931 = vpack.c.bf16 %v3891, %v3875
        %v4932 = vpack.c.bf16 %v3892, %v3876
        %v4933 = vpack.c.bf16 %v3893, %v3877
        %v4934 = vpack.c.bf16 %v3894, %v3878
        %v4935 = vpack.c.bf16 %v3895, %v3879
        %v4936 = vpack.c.bf16 %v3896, %v3880
        %v4937 = vpack.c.bf16 %v3897, %v3881
        %v4938 = vpack.c.bf16 %v3898, %v3882
        %v4939 = vpack.c.bf16 %v3899, %v3883
        %v4940 = vpack.c.bf16 %v3900, %v3884
        %v4941 = vpack.c.bf16 %v3901, %v3885
        %v4942 = vpack.c.bf16 %v3902, %v3886
        %v4943 = vpack.c.bf16 %v3903, %v3887
        %v4944 = vpack.c.bf16 %v3904, %v3888
        %v4945 = vpack.c.bf16 %v3905, %v3889
        %v4946 = vpack.c.bf16 %v3922, %v3906
        %v4947 = vpack.c.bf16 %v3923, %v3907
        %v4948 = vpack.c.bf16 %v3924, %v3908
        %v4949 = vpack.c.bf16 %v3925, %v3909
        %v4950 = vpack.c.bf16 %v3926, %v3910
        %v4951 = vpack.c.bf16 %v3927, %v3911
        %v4952 = vpack.c.bf16 %v3928, %v3912
        %v4953 = vpack.c.bf16 %v3929, %v3913
        %v4954 = vpack.c.bf16 %v3930, %v3914
        %v4955 = vpack.c.bf16 %v3931, %v3915
        %v4956 = vpack.c.bf16 %v3932, %v3916
        %v4957 = vpack.c.bf16 %v3933, %v3917
        %v4958 = vpack.c.bf16 %v3934, %v3918
        %v4959 = vpack.c.bf16 %v3935, %v3919
        %v4960 = vpack.c.bf16 %v3936, %v3920
        %v4961 = vpack.c.bf16 %v3937, %v3921
        %v4962 = vpack.c.bf16 %v3954, %v3938
        %v4963 = vpack.c.bf16 %v3955, %v3939
        %v4964 = vpack.c.bf16 %v3956, %v3940
        %v4965 = vpack.c.bf16 %v3957, %v3941
        %v4966 = vpack.c.bf16 %v3958, %v3942
        %v4967 = vpack.c.bf16 %v3959, %v3943
        %v4968 = vpack.c.bf16 %v3960, %v3944
        %v4969 = vpack.c.bf16 %v3961, %v3945
        %v4970 = vpack.c.bf16 %v3962, %v3946
        %v4971 = vpack.c.bf16 %v3963, %v3947
        %v4972 = vpack.c.bf16 %v3964, %v3948
        %v4973 = vpack.c.bf16 %v3965, %v3949
        %v4974 = vpack.c.bf16 %v3966, %v3950
        %v4975 = vpack.c.bf16 %v3967, %v3951
        %v4976 = vpack.c.bf16 %v3968, %v3952
        %v4977 = vpack.c.bf16 %v3969, %v3953
        %v4978 = vpack.c.bf16 %v3986, %v3970
        %v4979 = vpack.c.bf16 %v3987, %v3971
        %v4980 = vpack.c.bf16 %v3988, %v3972
        %v4981 = vpack.c.bf16 %v3989, %v3973
        %v4982 = vpack.c.bf16 %v3990, %v3974
        %v4983 = vpack.c.bf16 %v3991, %v3975
        %v4984 = vpack.c.bf16 %v3992, %v3976
        %v4985 = vpack.c.bf16 %v3993, %v3977
        %v4986 = vpack.c.bf16 %v3994, %v3978
        %v4987 = vpack.c.bf16 %v3995, %v3979
        %v4988 = vpack.c.bf16 %v3996, %v3980
        %v4989 = vpack.c.bf16 %v3997, %v3981
        %v4990 = vpack.c.bf16 %v3998, %v3982
        %v4991 = vpack.c.bf16 %v3999, %v3983
        %v4992 = vpack.c.bf16 %v4000, %v3984
        %v4993 = vpack.c.bf16 %v4001, %v3985
        %v4994 = vpack.c.bf16 %v4018, %v4002
        %v4995 = vpack.c.bf16 %v4019, %v4003
        %v4996 = vpack.c.bf16 %v4020, %v4004
        %v4997 = vpack.c.bf16 %v4021, %v4005
        %v4998 = vpack.c.bf16 %v4022, %v4006
        %v4999 = vpack.c.bf16 %v4023, %v4007
        %v5000 = vpack.c.bf16 %v4024, %v4008
        %v5001 = vpack.c.bf16 %v4025, %v4009
        %v5002 = vpack.c.bf16 %v4026, %v4010
        %v5003 = vpack.c.bf16 %v4027, %v4011
        %v5004 = vpack.c.bf16 %v4028, %v4012
        %v5005 = vpack.c.bf16 %v4029, %v4013
        %v5006 = vpack.c.bf16 %v4030, %v4014
        %v5007 = vpack.c.bf16 %v4031, %v4015
        %v5008 = vpack.c.bf16 %v4032, %v4016
        %v5009 = vpack.c.bf16 %v4033, %v4017
        %v5010 = vpack.c.bf16 %v4050, %v4034
        %v5011 = vpack.c.bf16 %v4051, %v4035
        %v5012 = vpack.c.bf16 %v4052, %v4036
        %v5013 = vpack.c.bf16 %v4053, %v4037
        %v5014 = vpack.c.bf16 %v4054, %v4038
        %v5015 = vpack.c.bf16 %v4055, %v4039
        %v5016 = vpack.c.bf16 %v4056, %v4040
        %v5017 = vpack.c.bf16 %v4057, %v4041
        %v5018 = vpack.c.bf16 %v4058, %v4042
        %v5019 = vpack.c.bf16 %v4059, %v4043
        %v5020 = vpack.c.bf16 %v4060, %v4044
        %v5021 = vpack.c.bf16 %v4061, %v4045
        %v5022 = vpack.c.bf16 %v4062, %v4046
        %v5023 = vpack.c.bf16 %v4063, %v4047
        %v5024 = vpack.c.bf16 %v4064, %v4048
        %v5025 = vpack.c.bf16 %v4065, %v4049
        %v5026 = vpack.c.bf16 %v4082, %v4066
        %v5027 = vpack.c.bf16 %v4083, %v4067
        %v5028 = vpack.c.bf16 %v4084, %v4068
        %v5029 = vpack.c.bf16 %v4085, %v4069
        %v5030 = vpack.c.bf16 %v4086, %v4070
        %v5031 = vpack.c.bf16 %v4087, %v4071
        %v5032 = vpack.c.bf16 %v4088, %v4072
        %v5033 = vpack.c.bf16 %v4089, %v4073
        %v5034 = vpack.c.bf16 %v4090, %v4074
        %v5035 = vpack.c.bf16 %v4091, %v4075
        %v5036 = vpack.c.bf16 %v4092, %v4076
        %v5037 = vpack.c.bf16 %v4093, %v4077
        %v5038 = vpack.c.bf16 %v4094, %v4078
        %v5039 = vpack.c.bf16 %v4095, %v4079
        %v5040 = vpack.c.bf16 %v4096, %v4080
        %v5041 = vpack.c.bf16 %v4097, %v4081
        %v5042 = vpack.c.bf16 %v4114, %v4098
        %v5043 = vpack.c.bf16 %v4115, %v4099
        %v5044 = vpack.c.bf16 %v4116, %v4100
        %v5045 = vpack.c.bf16 %v4117, %v4101
        %v5046 = vpack.c.bf16 %v4118, %v4102
        %v5047 = vpack.c.bf16 %v4119, %v4103
        %v5048 = vpack.c.bf16 %v4120, %v4104
        %v5049 = vpack.c.bf16 %v4121, %v4105
        %v5050 = vpack.c.bf16 %v4122, %v4106
        %v5051 = vpack.c.bf16 %v4123, %v4107
        %v5052 = vpack.c.bf16 %v4124, %v4108
        %v5053 = vpack.c.bf16 %v4125, %v4109
        %v5054 = vpack.c.bf16 %v4126, %v4110
        %v5055 = vpack.c.bf16 %v4127, %v4111
        %v5056 = vpack.c.bf16 %v4128, %v4112
        %v5057 = vpack.c.bf16 %v4129, %v4113
        %v5058 = vpack.c.bf16 %v4146, %v4130
        %v5059 = vpack.c.bf16 %v4147, %v4131
        %v5060 = vpack.c.bf16 %v4148, %v4132
        %v5061 = vpack.c.bf16 %v4149, %v4133
        %v5062 = vpack.c.bf16 %v4150, %v4134
        %v5063 = vpack.c.bf16 %v4151, %v4135
        %v5064 = vpack.c.bf16 %v4152, %v4136
        %v5065 = vpack.c.bf16 %v4153, %v4137
        %v5066 = vpack.c.bf16 %v4154, %v4138
        %v5067 = vpack.c.bf16 %v4155, %v4139
        %v5068 = vpack.c.bf16 %v4156, %v4140
        %v5069 = vpack.c.bf16 %v4157, %v4141
        %v5070 = vpack.c.bf16 %v4158, %v4142
        %v5071 = vpack.c.bf16 %v4159, %v4143
        %v5072 = vpack.c.bf16 %v4160, %v4144
        %v5073 = vpack.c.bf16 %v4161, %v4145
        %v5074 = vpack.c.bf16 %v4178, %v4162
        %v5075 = vpack.c.bf16 %v4179, %v4163
        %v5076 = vpack.c.bf16 %v4180, %v4164
        %v5077 = vpack.c.bf16 %v4181, %v4165
        %v5078 = vpack.c.bf16 %v4182, %v4166
        %v5079 = vpack.c.bf16 %v4183, %v4167
        %v5080 = vpack.c.bf16 %v4184, %v4168
        %v5081 = vpack.c.bf16 %v4185, %v4169
        %v5082 = vpack.c.bf16 %v4186, %v4170
        %v5083 = vpack.c.bf16 %v4187, %v4171
        %v5084 = vpack.c.bf16 %v4188, %v4172
        %v5085 = vpack.c.bf16 %v4189, %v4173
        %v5086 = vpack.c.bf16 %v4190, %v4174
        %v5087 = vpack.c.bf16 %v4191, %v4175
        %v5088 = vpack.c.bf16 %v4192, %v4176
        %v5089 = vpack.c.bf16 %v4193, %v4177
        %v5090 = vpack.c.bf16 %v4210, %v4194
        %v5091 = vpack.c.bf16 %v4211, %v4195
        %v5092 = vpack.c.bf16 %v4212, %v4196
        %v5093 = vpack.c.bf16 %v4213, %v4197
        %v5094 = vpack.c.bf16 %v4214, %v4198
        %v5095 = vpack.c.bf16 %v4215, %v4199
        %v5096 = vpack.c.bf16 %v4216, %v4200
        %v5097 = vpack.c.bf16 %v4217, %v4201
        %v5098 = vpack.c.bf16 %v4218, %v4202
        %v5099 = vpack.c.bf16 %v4219, %v4203
        %v5100 = vpack.c.bf16 %v4220, %v4204
        %v5101 = vpack.c.bf16 %v4221, %v4205
        %v5102 = vpack.c.bf16 %v4222, %v4206
        %v5103 = vpack.c.bf16 %v4223, %v4207
        %v5104 = vpack.c.bf16 %v4224, %v4208
        %v5105 = vpack.c.bf16 %v4225, %v4209
        %v5106 = vpack.c.bf16 %v4242, %v4226
        %v5107 = vpack.c.bf16 %v4243, %v4227
        %v5108 = vpack.c.bf16 %v4244, %v4228
        %v5109 = vpack.c.bf16 %v4245, %v4229
        %v5110 = vpack.c.bf16 %v4246, %v4230
        %v5111 = vpack.c.bf16 %v4247, %v4231
        %v5112 = vpack.c.bf16 %v4248, %v4232
        %v5113 = vpack.c.bf16 %v4249, %v4233
        %v5114 = vpack.c.bf16 %v4250, %v4234
        %v5115 = vpack.c.bf16 %v4251, %v4235
        %v5116 = vpack.c.bf16 %v4252, %v4236
        %v5117 = vpack.c.bf16 %v4253, %v4237
        %v5118 = vpack.c.bf16 %v4254, %v4238
        %v5119 = vpack.c.bf16 %v4255, %v4239
        %v5120 = vpack.c.bf16 %v4256, %v4240
        %v5121 = vpack.c.bf16 %v4257, %v4241
        %v5122 = vpack.c.bf16 %v4274, %v4258
        %v5123 = vpack.c.bf16 %v4275, %v4259
        %v5124 = vpack.c.bf16 %v4276, %v4260
        %v5125 = vpack.c.bf16 %v4277, %v4261
        %v5126 = vpack.c.bf16 %v4278, %v4262
        %v5127 = vpack.c.bf16 %v4279, %v4263
        %v5128 = vpack.c.bf16 %v4280, %v4264
        %v5129 = vpack.c.bf16 %v4281, %v4265
        %v5130 = vpack.c.bf16 %v4282, %v4266
        %v5131 = vpack.c.bf16 %v4283, %v4267
        %v5132 = vpack.c.bf16 %v4284, %v4268
        %v5133 = vpack.c.bf16 %v4285, %v4269
        %v5134 = vpack.c.bf16 %v4286, %v4270
        %v5135 = vpack.c.bf16 %v4287, %v4271
        %v5136 = vpack.c.bf16 %v4288, %v4272
        %v5137 = vpack.c.bf16 %v4289, %v4273
        %v5138 = vpack.c.bf16 %v4306, %v4290
        %v5139 = vpack.c.bf16 %v4307, %v4291
        %v5140 = vpack.c.bf16 %v4308, %v4292
        %v5141 = vpack.c.bf16 %v4309, %v4293
        %v5142 = vpack.c.bf16 %v4310, %v4294
        %v5143 = vpack.c.bf16 %v4311, %v4295
        %v5144 = vpack.c.bf16 %v4312, %v4296
        %v5145 = vpack.c.bf16 %v4313, %v4297
        %v5146 = vpack.c.bf16 %v4314, %v4298
        %v5147 = vpack.c.bf16 %v4315, %v4299
        %v5148 = vpack.c.bf16 %v4316, %v4300
        %v5149 = vpack.c.bf16 %v4317, %v4301
        %v5150 = vpack.c.bf16 %v4318, %v4302
        %v5151 = vpack.c.bf16 %v4319, %v4303
        %v5152 = vpack.c.bf16 %v4320, %v4304
        %v5153 = vpack.c.bf16 %v4321, %v4305
        %v5154 = vpack.c.bf16 %v4338, %v4322
        %v5155 = vpack.c.bf16 %v4339, %v4323
        %v5156 = vpack.c.bf16 %v4340, %v4324
        %v5157 = vpack.c.bf16 %v4341, %v4325
        %v5158 = vpack.c.bf16 %v4342, %v4326
        %v5159 = vpack.c.bf16 %v4343, %v4327
        %v5160 = vpack.c.bf16 %v4344, %v4328
        %v5161 = vpack.c.bf16 %v4345, %v4329
        %v5162 = vpack.c.bf16 %v4346, %v4330
        %v5163 = vpack.c.bf16 %v4347, %v4331
        %v5164 = vpack.c.bf16 %v4348, %v4332
        %v5165 = vpack.c.bf16 %v4349, %v4333
        %v5166 = vpack.c.bf16 %v4350, %v4334
        %v5167 = vpack.c.bf16 %v4351, %v4335
        %v5168 = vpack.c.bf16 %v4352, %v4336
        %v5169 = vpack.c.bf16 %v4353, %v4337
        %v5170 = vpack.c.bf16 %v4370, %v4354
        %v5171 = vpack.c.bf16 %v4371, %v4355
        %v5172 = vpack.c.bf16 %v4372, %v4356
        %v5173 = vpack.c.bf16 %v4373, %v4357
        %v5174 = vpack.c.bf16 %v4374, %v4358
        %v5175 = vpack.c.bf16 %v4375, %v4359
        %v5176 = vpack.c.bf16 %v4376, %v4360
        %v5177 = vpack.c.bf16 %v4377, %v4361
        %v5178 = vpack.c.bf16 %v4378, %v4362
        %v5179 = vpack.c.bf16 %v4379, %v4363
        %v5180 = vpack.c.bf16 %v4380, %v4364
        %v5181 = vpack.c.bf16 %v4381, %v4365
        %v5182 = vpack.c.bf16 %v4382, %v4366
        %v5183 = vpack.c.bf16 %v4383, %v4367
        %v5184 = vpack.c.bf16 %v4384, %v4368
        %v5185 = vpack.c.bf16 %v4385, %v4369
        %v5186 = vpack.c.bf16 %v4402, %v4386
        %v5187 = vpack.c.bf16 %v4403, %v4387
        %v5188 = vpack.c.bf16 %v4404, %v4388
        %v5189 = vpack.c.bf16 %v4405, %v4389
        %v5190 = vpack.c.bf16 %v4406, %v4390
        %v5191 = vpack.c.bf16 %v4407, %v4391
        %v5192 = vpack.c.bf16 %v4408, %v4392
        %v5193 = vpack.c.bf16 %v4409, %v4393
        %v5194 = vpack.c.bf16 %v4410, %v4394
        %v5195 = vpack.c.bf16 %v4411, %v4395
        %v5196 = vpack.c.bf16 %v4412, %v4396
        %v5197 = vpack.c.bf16 %v4413, %v4397
        %v5198 = vpack.c.bf16 %v4414, %v4398
        %v5199 = vpack.c.bf16 %v4415, %v4399
        %v5200 = vpack.c.bf16 %v4416, %v4400
        %v5201 = vpack.c.bf16 %v4417, %v4401
        %v5202 = vpack.c.bf16 %v4434, %v4418
        %v5203 = vpack.c.bf16 %v4435, %v4419
        %v5204 = vpack.c.bf16 %v4436, %v4420
        %v5205 = vpack.c.bf16 %v4437, %v4421
        %v5206 = vpack.c.bf16 %v4438, %v4422
        %v5207 = vpack.c.bf16 %v4439, %v4423
        %v5208 = vpack.c.bf16 %v4440, %v4424
        %v5209 = vpack.c.bf16 %v4441, %v4425
        %v5210 = vpack.c.bf16 %v4442, %v4426
        %v5211 = vpack.c.bf16 %v4443, %v4427
        %v5212 = vpack.c.bf16 %v4444, %v4428
        %v5213 = vpack.c.bf16 %v4445, %v4429
        %v5214 = vpack.c.bf16 %v4446, %v4430
        %v5215 = vpack.c.bf16 %v4447, %v4431
        %v5216 = vpack.c.bf16 %v4448, %v4432
        %v5217 = vpack.c.bf16 %v4449, %v4433
        %v5218 = vpack.c.bf16 %v4466, %v4450
        %v5219 = vpack.c.bf16 %v4467, %v4451
        %v5220 = vpack.c.bf16 %v4468, %v4452
        %v5221 = vpack.c.bf16 %v4469, %v4453
        %v5222 = vpack.c.bf16 %v4470, %v4454
        %v5223 = vpack.c.bf16 %v4471, %v4455
        %v5224 = vpack.c.bf16 %v4472, %v4456
        %v5225 = vpack.c.bf16 %v4473, %v4457
        %v5226 = vpack.c.bf16 %v4474, %v4458
        %v5227 = vpack.c.bf16 %v4475, %v4459
        %v5228 = vpack.c.bf16 %v4476, %v4460
        %v5229 = vpack.c.bf16 %v4477, %v4461
        %v5230 = vpack.c.bf16 %v4478, %v4462
        %v5231 = vpack.c.bf16 %v4479, %v4463
        %v5232 = vpack.c.bf16 %v4480, %v4464
        %v5233 = vpack.c.bf16 %v4481, %v4465
        %v5234 = vpack.c.bf16 %v4498, %v4482
        %v5235 = vpack.c.bf16 %v4499, %v4483
        %v5236 = vpack.c.bf16 %v4500, %v4484
        %v5237 = vpack.c.bf16 %v4501, %v4485
        %v5238 = vpack.c.bf16 %v4502, %v4486
        %v5239 = vpack.c.bf16 %v4503, %v4487
        %v5240 = vpack.c.bf16 %v4504, %v4488
        %v5241 = vpack.c.bf16 %v4505, %v4489
        %v5242 = vpack.c.bf16 %v4506, %v4490
        %v5243 = vpack.c.bf16 %v4507, %v4491
        %v5244 = vpack.c.bf16 %v4508, %v4492
        %v5245 = vpack.c.bf16 %v4509, %v4493
        %v5246 = vpack.c.bf16 %v4510, %v4494
        %v5247 = vpack.c.bf16 %v4511, %v4495
        %v5248 = vpack.c.bf16 %v4512, %v4496
        %v5249 = vpack.c.bf16 %v4513, %v4497
        %v5250 = vpack.c.bf16 %v4530, %v4514
        %v5251 = vpack.c.bf16 %v4531, %v4515
        %v5252 = vpack.c.bf16 %v4532, %v4516
        %v5253 = vpack.c.bf16 %v4533, %v4517
        %v5254 = vpack.c.bf16 %v4534, %v4518
        %v5255 = vpack.c.bf16 %v4535, %v4519
        %v5256 = vpack.c.bf16 %v4536, %v4520
        %v5257 = vpack.c.bf16 %v4537, %v4521
        %v5258 = vpack.c.bf16 %v4538, %v4522
        %v5259 = vpack.c.bf16 %v4539, %v4523
        %v5260 = vpack.c.bf16 %v4540, %v4524
        %v5261 = vpack.c.bf16 %v4541, %v4525
        %v5262 = vpack.c.bf16 %v4542, %v4526
        %v5263 = vpack.c.bf16 %v4543, %v4527
        %v5264 = vpack.c.bf16 %v4544, %v4528
        %v5265 = vpack.c.bf16 %v4545, %v4529
        %v5266 = vpack.c.bf16 %v4562, %v4546
        %v5267 = vpack.c.bf16 %v4563, %v4547
        %v5268 = vpack.c.bf16 %v4564, %v4548
        %v5269 = vpack.c.bf16 %v4565, %v4549
        %v5270 = vpack.c.bf16 %v4566, %v4550
        %v5271 = vpack.c.bf16 %v4567, %v4551
        %v5272 = vpack.c.bf16 %v4568, %v4552
        %v5273 = vpack.c.bf16 %v4569, %v4553
        %v5274 = vpack.c.bf16 %v4570, %v4554
        %v5275 = vpack.c.bf16 %v4571, %v4555
        %v5276 = vpack.c.bf16 %v4572, %v4556
        %v5277 = vpack.c.bf16 %v4573, %v4557
        %v5278 = vpack.c.bf16 %v4574, %v4558
        %v5279 = vpack.c.bf16 %v4575, %v4559
        %v5280 = vpack.c.bf16 %v4576, %v4560
        %v5281 = vpack.c.bf16 %v4577, %v4561
        %v5282 = vpack.c.bf16 %v4594, %v4578
        %v5283 = vpack.c.bf16 %v4595, %v4579
        %v5284 = vpack.c.bf16 %v4596, %v4580
        %v5285 = vpack.c.bf16 %v4597, %v4581
        %v5286 = vpack.c.bf16 %v4598, %v4582
        %v5287 = vpack.c.bf16 %v4599, %v4583
        %v5288 = vpack.c.bf16 %v4600, %v4584
        %v5289 = vpack.c.bf16 %v4601, %v4585
        %v5290 = vpack.c.bf16 %v4602, %v4586
        %v5291 = vpack.c.bf16 %v4603, %v4587
        %v5292 = vpack.c.bf16 %v4604, %v4588
        %v5293 = vpack.c.bf16 %v4605, %v4589
        %v5294 = vpack.c.bf16 %v4606, %v4590
        %v5295 = vpack.c.bf16 %v4607, %v4591
        %v5296 = vpack.c.bf16 %v4608, %v4592
        %v5297 = vpack.c.bf16 %v4609, %v4593
        %v5298 = vpack.c.bf16 %v4626, %v4610
        %v5299 = vpack.c.bf16 %v4627, %v4611
        %v5300 = vpack.c.bf16 %v4628, %v4612
        %v5301 = vpack.c.bf16 %v4629, %v4613
        %v5302 = vpack.c.bf16 %v4630, %v4614
        %v5303 = vpack.c.bf16 %v4631, %v4615
        %v5304 = vpack.c.bf16 %v4632, %v4616
        %v5305 = vpack.c.bf16 %v4633, %v4617
        %v5306 = vpack.c.bf16 %v4634, %v4618
        %v5307 = vpack.c.bf16 %v4635, %v4619
        %v5308 = vpack.c.bf16 %v4636, %v4620
        %v5309 = vpack.c.bf16 %v4637, %v4621
        %v5310 = vpack.c.bf16 %v4638, %v4622
        %v5311 = vpack.c.bf16 %v4639, %v4623
        %v5312 = vpack.c.bf16 %v4640, %v4624
        %v5313 = vpack.c.bf16 %v4641, %v4625
        %v5314 = vpack.c.bf16 %v4658, %v4642
        %v5315 = vpack.c.bf16 %v4659, %v4643
        %v5316 = vpack.c.bf16 %v4660, %v4644
        %v5317 = vpack.c.bf16 %v4661, %v4645
        %v5318 = vpack.c.bf16 %v4662, %v4646
        %v5319 = vpack.c.bf16 %v4663, %v4647
        %v5320 = vpack.c.bf16 %v4664, %v4648
        %v5321 = vpack.c.bf16 %v4665, %v4649
        %v5322 = vpack.c.bf16 %v4666, %v4650
        %v5323 = vpack.c.bf16 %v4667, %v4651
        %v5324 = vpack.c.bf16 %v4668, %v4652
        %v5325 = vpack.c.bf16 %v4669, %v4653
        %v5326 = vpack.c.bf16 %v4670, %v4654
        %v5327 = vpack.c.bf16 %v4671, %v4655
        %v5328 = vpack.c.bf16 %v4672, %v4656
        %v5329 = vpack.c.bf16 %v4673, %v4657
        %v5330 = vpack.c.bf16 %v4690, %v4674
        %v5331 = vpack.c.bf16 %v4691, %v4675
        %v5332 = vpack.c.bf16 %v4692, %v4676
        %v5333 = vpack.c.bf16 %v4693, %v4677
        %v5334 = vpack.c.bf16 %v4694, %v4678
        %v5335 = vpack.c.bf16 %v4695, %v4679
        %v5336 = vpack.c.bf16 %v4696, %v4680
        %v5337 = vpack.c.bf16 %v4697, %v4681
        %v5338 = vpack.c.bf16 %v4698, %v4682
        %v5339 = vpack.c.bf16 %v4699, %v4683
        %v5340 = vpack.c.bf16 %v4700, %v4684
        %v5341 = vpack.c.bf16 %v4701, %v4685
        %v5342 = vpack.c.bf16 %v4702, %v4686
        %v5343 = vpack.c.bf16 %v4703, %v4687
        %v5344 = vpack.c.bf16 %v4704, %v4688
        %v5345 = vpack.c.bf16 %v4705, %v4689
        %v5346 = vpack.c.bf16 %v4722, %v4706
        %v5347 = vpack.c.bf16 %v4723, %v4707
        %v5348 = vpack.c.bf16 %v4724, %v4708
        %v5349 = vpack.c.bf16 %v4725, %v4709
        %v5350 = vpack.c.bf16 %v4726, %v4710
        %v5351 = vpack.c.bf16 %v4727, %v4711
        %v5352 = vpack.c.bf16 %v4728, %v4712
        %v5353 = vpack.c.bf16 %v4729, %v4713
        %v5354 = vpack.c.bf16 %v4730, %v4714
        %v5355 = vpack.c.bf16 %v4731, %v4715
        %v5356 = vpack.c.bf16 %v4732, %v4716
        %v5357 = vpack.c.bf16 %v4733, %v4717
        %v5358 = vpack.c.bf16 %v4734, %v4718
        %v5359 = vpack.c.bf16 %v4735, %v4719
        %v5360 = vpack.c.bf16 %v4736, %v4720
        %v5361 = vpack.c.bf16 %v4737, %v4721
        %v5362 = vpack.c.bf16 %v4754, %v4738
        %v5363 = vpack.c.bf16 %v4755, %v4739
        %v5364 = vpack.c.bf16 %v4756, %v4740
        %v5365 = vpack.c.bf16 %v4757, %v4741
        %v5366 = vpack.c.bf16 %v4758, %v4742
        %v5367 = vpack.c.bf16 %v4759, %v4743
        %v5368 = vpack.c.bf16 %v4760, %v4744
        %v5369 = vpack.c.bf16 %v4761, %v4745
        %v5370 = vpack.c.bf16 %v4762, %v4746
        %v5371 = vpack.c.bf16 %v4763, %v4747
        %v5372 = vpack.c.bf16 %v4764, %v4748
        %v5373 = vpack.c.bf16 %v4765, %v4749
        %v5374 = vpack.c.bf16 %v4766, %v4750
        %v5375 = vpack.c.bf16 %v4767, %v4751
        %v5376 = vpack.c.bf16 %v4768, %v4752
        %v5377 = vpack.c.bf16 %v4769, %v4753
        %v5378 = vpack.c.bf16 %v4786, %v4770
        %v5379 = vpack.c.bf16 %v4787, %v4771
        %v5380 = vpack.c.bf16 %v4788, %v4772
        %v5381 = vpack.c.bf16 %v4789, %v4773
        %v5382 = vpack.c.bf16 %v4790, %v4774
        %v5383 = vpack.c.bf16 %v4791, %v4775
        %v5384 = vpack.c.bf16 %v4792, %v4776
        %v5385 = vpack.c.bf16 %v4793, %v4777
        %v5386 = vpack.c.bf16 %v4794, %v4778
        %v5387 = vpack.c.bf16 %v4795, %v4779
        %v5388 = vpack.c.bf16 %v4796, %v4780
        %v5389 = vpack.c.bf16 %v4797, %v4781
        %v5390 = vpack.c.bf16 %v4798, %v4782
        %v5391 = vpack.c.bf16 %v4799, %v4783
        %v5392 = vpack.c.bf16 %v4800, %v4784
        %v5393 = vpack.c.bf16 %v4801, %v4785
        %v5394 = vpack.c.bf16 %v4818, %v4802
        %v5395 = vpack.c.bf16 %v4819, %v4803
        %v5396 = vpack.c.bf16 %v4820, %v4804
        %v5397 = vpack.c.bf16 %v4821, %v4805
        %v5398 = vpack.c.bf16 %v4822, %v4806
        %v5399 = vpack.c.bf16 %v4823, %v4807
        %v5400 = vpack.c.bf16 %v4824, %v4808
        %v5401 = vpack.c.bf16 %v4825, %v4809
        %v5402 = vpack.c.bf16 %v4826, %v4810
        %v5403 = vpack.c.bf16 %v4827, %v4811
        %v5404 = vpack.c.bf16 %v4828, %v4812
        %v5405 = vpack.c.bf16 %v4829, %v4813
        %v5406 = vpack.c.bf16 %v4830, %v4814
        %v5407 = vpack.c.bf16 %v4831, %v4815
        %v5408 = vpack.c.bf16 %v4832, %v4816
        %v5409 = vpack.c.bf16 %v4833, %v4817
        %v5410 = vld [vmem:[%s2] sm:$0xf]
        %v5411 = vld [vmem:[%s2 + $0x4] sm:$0xf]
        %v5412 = vld [vmem:[%s2 + $0x8] sm:$0xf]
        %v5413 = vld [vmem:[%s2 + $0xc] sm:$0xf]
        %v5414 = vld [vmem:[%s2 + $0x10] sm:$0xf]
        %v5415 = vld [vmem:[%s2 + $0x14] sm:$0xf]
        %v5416 = vld [vmem:[%s2 + $0x18] sm:$0xf]
        %v5417 = vld [vmem:[%s2 + $0x1c] sm:$0xf]
        %v5418 = vld [vmem:[%s2 + $0x20] sm:$0xf]
        %v5419 = vld [vmem:[%s2 + $0x24] sm:$0xf]
        %v5420 = vld [vmem:[%s2 + $0x28] sm:$0xf]
        %v5421 = vld [vmem:[%s2 + $0x2c] sm:$0xf]
        %v5422 = vld [vmem:[%s2 + $0x30] sm:$0xf]
        %v5423 = vld [vmem:[%s2 + $0x34] sm:$0xf]
        %v5424 = vld [vmem:[%s2 + $0x38] sm:$0xf]
        %v5425 = vld [vmem:[%s2 + $0x3c] sm:$0xf]
        %v5426 = vld [vmem:[%s2 + $0x40] sm:$0xf]
        %v5427 = vld [vmem:[%s2 + $0x44] sm:$0xf]
        %v5428 = vld [vmem:[%s2 + $0x48] sm:$0xf]
        %v5429 = vld [vmem:[%s2 + $0x4c] sm:$0xf]
        %v5430 = vld [vmem:[%s2 + $0x50] sm:$0xf]
        %v5431 = vld [vmem:[%s2 + $0x54] sm:$0xf]
        %v5432 = vld [vmem:[%s2 + $0x58] sm:$0xf]
        %v5433 = vld [vmem:[%s2 + $0x5c] sm:$0xf]
        %v5434 = vld [vmem:[%s2 + $0x60] sm:$0xf]
        %v5435 = vld [vmem:[%s2 + $0x64] sm:$0xf]
        %v5436 = vld [vmem:[%s2 + $0x68] sm:$0xf]
        %v5437 = vld [vmem:[%s2 + $0x6c] sm:$0xf]
        %v5438 = vld [vmem:[%s2 + $0x70] sm:$0xf]
        %v5439 = vld [vmem:[%s2 + $0x74] sm:$0xf]
        %v5440 = vld [vmem:[%s2 + $0x78] sm:$0xf]
        %v5441 = vld [vmem:[%s2 + $0x7c] sm:$0xf]
        %v5442 = vld [vmem:[%s2 + $0x80] sm:$0xf]
        %v5443 = vld [vmem:[%s2 + $0x84] sm:$0xf]
        %v5444 = vld [vmem:[%s2 + $0x88] sm:$0xf]
        %v5445 = vld [vmem:[%s2 + $0x8c] sm:$0xf]
        %v5446 = vld [vmem:[%s2 + $0x90] sm:$0xf]
        %v5447 = vld [vmem:[%s2 + $0x94] sm:$0xf]
        %v5448 = vld [vmem:[%s2 + $0x98] sm:$0xf]
        %v5449 = vld [vmem:[%s2 + $0x9c] sm:$0xf]
        %v5450 = vld [vmem:[%s2 + $0xa0] sm:$0xf]
        %v5451 = vld [vmem:[%s2 + $0xa4] sm:$0xf]
        %v5452 = vld [vmem:[%s2 + $0xa8] sm:$0xf]
        %v5453 = vld [vmem:[%s2 + $0xac] sm:$0xf]
        %v5454 = vld [vmem:[%s2 + $0xb0] sm:$0xf]
        %v5455 = vld [vmem:[%s2 + $0xb4] sm:$0xf]
        %v5456 = vld [vmem:[%s2 + $0xb8] sm:$0xf]
        %v5457 = vld [vmem:[%s2 + $0xbc] sm:$0xf]
        %v5458 = vld [vmem:[%s2 + $0xc0] sm:$0xf]
        %v5459 = vld [vmem:[%s2 + $0xc4] sm:$0xf]
        %v5460 = vld [vmem:[%s2 + $0xc8] sm:$0xf]
        %v5461 = vld [vmem:[%s2 + $0xcc] sm:$0xf]
        %v5462 = vld [vmem:[%s2 + $0xd0] sm:$0xf]
        %v5463 = vld [vmem:[%s2 + $0xd4] sm:$0xf]
        %v5464 = vld [vmem:[%s2 + $0xd8] sm:$0xf]
        %v5465 = vld [vmem:[%s2 + $0xdc] sm:$0xf]
        %v5466 = vld [vmem:[%s2 + $0xe0] sm:$0xf]
        %v5467 = vld [vmem:[%s2 + $0xe4] sm:$0xf]
        %v5468 = vld [vmem:[%s2 + $0xe8] sm:$0xf]
        %v5469 = vld [vmem:[%s2 + $0xec] sm:$0xf]
        %v5470 = vld [vmem:[%s2 + $0xf0] sm:$0xf]
        %v5471 = vld [vmem:[%s2 + $0xf4] sm:$0xf]
        %v5472 = vld [vmem:[%s2 + $0xf8] sm:$0xf]
        %v5473 = vld [vmem:[%s2 + $0xfc] sm:$0xf]
        %v5474 = vld [vmem:[%s2 + $0x100] sm:$0xf]
        %v5475 = vld [vmem:[%s2 + $0x104] sm:$0xf]
        %v5476 = vld [vmem:[%s2 + $0x108] sm:$0xf]
        %v5477 = vld [vmem:[%s2 + $0x10c] sm:$0xf]
        %v5478 = vld [vmem:[%s2 + $0x110] sm:$0xf]
        %v5479 = vld [vmem:[%s2 + $0x114] sm:$0xf]
        %v5480 = vld [vmem:[%s2 + $0x118] sm:$0xf]
        %v5481 = vld [vmem:[%s2 + $0x11c] sm:$0xf]
        %v5482 = vld [vmem:[%s2 + $0x120] sm:$0xf]
        %v5483 = vld [vmem:[%s2 + $0x124] sm:$0xf]
        %v5484 = vld [vmem:[%s2 + $0x128] sm:$0xf]
        %v5485 = vld [vmem:[%s2 + $0x12c] sm:$0xf]
        %v5486 = vld [vmem:[%s2 + $0x130] sm:$0xf]
        %v5487 = vld [vmem:[%s2 + $0x134] sm:$0xf]
        %v5488 = vld [vmem:[%s2 + $0x138] sm:$0xf]
        %v5489 = vld [vmem:[%s2 + $0x13c] sm:$0xf]
        %v5490 = vld [vmem:[%s2 + $0x140] sm:$0xf]
        %v5491 = vld [vmem:[%s2 + $0x144] sm:$0xf]
        %v5492 = vld [vmem:[%s2 + $0x148] sm:$0xf]
        %v5493 = vld [vmem:[%s2 + $0x14c] sm:$0xf]
        %v5494 = vld [vmem:[%s2 + $0x150] sm:$0xf]
        %v5495 = vld [vmem:[%s2 + $0x154] sm:$0xf]
        %v5496 = vld [vmem:[%s2 + $0x158] sm:$0xf]
        %v5497 = vld [vmem:[%s2 + $0x15c] sm:$0xf]
        %v5498 = vld [vmem:[%s2 + $0x160] sm:$0xf]
        %v5499 = vld [vmem:[%s2 + $0x164] sm:$0xf]
        %v5500 = vld [vmem:[%s2 + $0x168] sm:$0xf]
        %v5501 = vld [vmem:[%s2 + $0x16c] sm:$0xf]
        %v5502 = vld [vmem:[%s2 + $0x170] sm:$0xf]
        %v5503 = vld [vmem:[%s2 + $0x174] sm:$0xf]
        %v5504 = vld [vmem:[%s2 + $0x178] sm:$0xf]
        %v5505 = vld [vmem:[%s2 + $0x17c] sm:$0xf]
        %v5506 = vld [vmem:[%s2 + $0x180] sm:$0xf]
        %v5507 = vld [vmem:[%s2 + $0x184] sm:$0xf]
        %v5508 = vld [vmem:[%s2 + $0x188] sm:$0xf]
        %v5509 = vld [vmem:[%s2 + $0x18c] sm:$0xf]
        %v5510 = vld [vmem:[%s2 + $0x190] sm:$0xf]
        %v5511 = vld [vmem:[%s2 + $0x194] sm:$0xf]
        %v5512 = vld [vmem:[%s2 + $0x198] sm:$0xf]
        %v5513 = vld [vmem:[%s2 + $0x19c] sm:$0xf]
        %v5514 = vld [vmem:[%s2 + $0x1a0] sm:$0xf]
        %v5515 = vld [vmem:[%s2 + $0x1a4] sm:$0xf]
        %v5516 = vld [vmem:[%s2 + $0x1a8] sm:$0xf]
        %v5517 = vld [vmem:[%s2 + $0x1ac] sm:$0xf]
        %v5518 = vld [vmem:[%s2 + $0x1b0] sm:$0xf]
        %v5519 = vld [vmem:[%s2 + $0x1b4] sm:$0xf]
        %v5520 = vld [vmem:[%s2 + $0x1b8] sm:$0xf]
        %v5521 = vld [vmem:[%s2 + $0x1bc] sm:$0xf]
        %v5522 = vld [vmem:[%s2 + $0x1c0] sm:$0xf]
        %v5523 = vld [vmem:[%s2 + $0x1c4] sm:$0xf]
        %v5524 = vld [vmem:[%s2 + $0x1c8] sm:$0xf]
        %v5525 = vld [vmem:[%s2 + $0x1cc] sm:$0xf]
        %v5526 = vld [vmem:[%s2 + $0x1d0] sm:$0xf]
        %v5527 = vld [vmem:[%s2 + $0x1d4] sm:$0xf]
        %v5528 = vld [vmem:[%s2 + $0x1d8] sm:$0xf]
        %v5529 = vld [vmem:[%s2 + $0x1dc] sm:$0xf]
        %v5530 = vld [vmem:[%s2 + $0x1e0] sm:$0xf]
        %v5531 = vld [vmem:[%s2 + $0x1e4] sm:$0xf]
        %v5532 = vld [vmem:[%s2 + $0x1e8] sm:$0xf]
        %v5533 = vld [vmem:[%s2 + $0x1ec] sm:$0xf]
        %v5534 = vld [vmem:[%s2 + $0x1f0] sm:$0xf]
        %v5535 = vld [vmem:[%s2 + $0x1f4] sm:$0xf]
        %v5536 = vld [vmem:[%s2 + $0x1f8] sm:$0xf]
        %v5537 = vld [vmem:[%s2 + $0x1fc] sm:$0xf]
        %v5538 = vld [vmem:[%s2 + $0x200] sm:$0xf]
        %v5539 = vld [vmem:[%s2 + $0x204] sm:$0xf]
        %v5540 = vld [vmem:[%s2 + $0x208] sm:$0xf]
        %v5541 = vld [vmem:[%s2 + $0x20c] sm:$0xf]
        %v5542 = vld [vmem:[%s2 + $0x210] sm:$0xf]
        %v5543 = vld [vmem:[%s2 + $0x214] sm:$0xf]
        %v5544 = vld [vmem:[%s2 + $0x218] sm:$0xf]
        %v5545 = vld [vmem:[%s2 + $0x21c] sm:$0xf]
        %v5546 = vld [vmem:[%s2 + $0x220] sm:$0xf]
        %v5547 = vld [vmem:[%s2 + $0x224] sm:$0xf]
        %v5548 = vld [vmem:[%s2 + $0x228] sm:$0xf]
        %v5549 = vld [vmem:[%s2 + $0x22c] sm:$0xf]
        %v5550 = vld [vmem:[%s2 + $0x230] sm:$0xf]
        %v5551 = vld [vmem:[%s2 + $0x234] sm:$0xf]
        %v5552 = vld [vmem:[%s2 + $0x238] sm:$0xf]
        %v5553 = vld [vmem:[%s2 + $0x23c] sm:$0xf]
        %v5554 = vld [vmem:[%s2 + $0x240] sm:$0xf]
        %v5555 = vld [vmem:[%s2 + $0x244] sm:$0xf]
        %v5556 = vld [vmem:[%s2 + $0x248] sm:$0xf]
        %v5557 = vld [vmem:[%s2 + $0x24c] sm:$0xf]
        %v5558 = vld [vmem:[%s2 + $0x250] sm:$0xf]
        %v5559 = vld [vmem:[%s2 + $0x254] sm:$0xf]
        %v5560 = vld [vmem:[%s2 + $0x258] sm:$0xf]
        %v5561 = vld [vmem:[%s2 + $0x25c] sm:$0xf]
        %v5562 = vld [vmem:[%s2 + $0x260] sm:$0xf]
        %v5563 = vld [vmem:[%s2 + $0x264] sm:$0xf]
        %v5564 = vld [vmem:[%s2 + $0x268] sm:$0xf]
        %v5565 = vld [vmem:[%s2 + $0x26c] sm:$0xf]
        %v5566 = vld [vmem:[%s2 + $0x270] sm:$0xf]
        %v5567 = vld [vmem:[%s2 + $0x274] sm:$0xf]
        %v5568 = vld [vmem:[%s2 + $0x278] sm:$0xf]
        %v5569 = vld [vmem:[%s2 + $0x27c] sm:$0xf]
        %v5570 = vld [vmem:[%s2 + $0x280] sm:$0xf]
        %v5571 = vld [vmem:[%s2 + $0x284] sm:$0xf]
        %v5572 = vld [vmem:[%s2 + $0x288] sm:$0xf]
        %v5573 = vld [vmem:[%s2 + $0x28c] sm:$0xf]
        %v5574 = vld [vmem:[%s2 + $0x290] sm:$0xf]
        %v5575 = vld [vmem:[%s2 + $0x294] sm:$0xf]
        %v5576 = vld [vmem:[%s2 + $0x298] sm:$0xf]
        %v5577 = vld [vmem:[%s2 + $0x29c] sm:$0xf]
        %v5578 = vld [vmem:[%s2 + $0x2a0] sm:$0xf]
        %v5579 = vld [vmem:[%s2 + $0x2a4] sm:$0xf]
        %v5580 = vld [vmem:[%s2 + $0x2a8] sm:$0xf]
        %v5581 = vld [vmem:[%s2 + $0x2ac] sm:$0xf]
        %v5582 = vld [vmem:[%s2 + $0x2b0] sm:$0xf]
        %v5583 = vld [vmem:[%s2 + $0x2b4] sm:$0xf]
        %v5584 = vld [vmem:[%s2 + $0x2b8] sm:$0xf]
        %v5585 = vld [vmem:[%s2 + $0x2bc] sm:$0xf]
        %v5586 = vld [vmem:[%s2 + $0x2c0] sm:$0xf]
        %v5587 = vld [vmem:[%s2 + $0x2c4] sm:$0xf]
        %v5588 = vld [vmem:[%s2 + $0x2c8] sm:$0xf]
        %v5589 = vld [vmem:[%s2 + $0x2cc] sm:$0xf]
        %v5590 = vld [vmem:[%s2 + $0x2d0] sm:$0xf]
        %v5591 = vld [vmem:[%s2 + $0x2d4] sm:$0xf]
        %v5592 = vld [vmem:[%s2 + $0x2d8] sm:$0xf]
        %v5593 = vld [vmem:[%s2 + $0x2dc] sm:$0xf]
        %v5594 = vld [vmem:[%s2 + $0x2e0] sm:$0xf]
        %v5595 = vld [vmem:[%s2 + $0x2e4] sm:$0xf]
        %v5596 = vld [vmem:[%s2 + $0x2e8] sm:$0xf]
        %v5597 = vld [vmem:[%s2 + $0x2ec] sm:$0xf]
        %v5598 = vld [vmem:[%s2 + $0x2f0] sm:$0xf]
        %v5599 = vld [vmem:[%s2 + $0x2f4] sm:$0xf]
        %v5600 = vld [vmem:[%s2 + $0x2f8] sm:$0xf]
        %v5601 = vld [vmem:[%s2 + $0x2fc] sm:$0xf]
        %v5602 = vld [vmem:[%s2 + $0x300] sm:$0xf]
        %v5603 = vld [vmem:[%s2 + $0x304] sm:$0xf]
        %v5604 = vld [vmem:[%s2 + $0x308] sm:$0xf]
        %v5605 = vld [vmem:[%s2 + $0x30c] sm:$0xf]
        %v5606 = vld [vmem:[%s2 + $0x310] sm:$0xf]
        %v5607 = vld [vmem:[%s2 + $0x314] sm:$0xf]
        %v5608 = vld [vmem:[%s2 + $0x318] sm:$0xf]
        %v5609 = vld [vmem:[%s2 + $0x31c] sm:$0xf]
        %v5610 = vld [vmem:[%s2 + $0x320] sm:$0xf]
        %v5611 = vld [vmem:[%s2 + $0x324] sm:$0xf]
        %v5612 = vld [vmem:[%s2 + $0x328] sm:$0xf]
        %v5613 = vld [vmem:[%s2 + $0x32c] sm:$0xf]
        %v5614 = vld [vmem:[%s2 + $0x330] sm:$0xf]
        %v5615 = vld [vmem:[%s2 + $0x334] sm:$0xf]
        %v5616 = vld [vmem:[%s2 + $0x338] sm:$0xf]
        %v5617 = vld [vmem:[%s2 + $0x33c] sm:$0xf]
        %v5618 = vld [vmem:[%s2 + $0x340] sm:$0xf]
        %v5619 = vld [vmem:[%s2 + $0x344] sm:$0xf]
        %v5620 = vld [vmem:[%s2 + $0x348] sm:$0xf]
        %v5621 = vld [vmem:[%s2 + $0x34c] sm:$0xf]
        %v5622 = vld [vmem:[%s2 + $0x350] sm:$0xf]
        %v5623 = vld [vmem:[%s2 + $0x354] sm:$0xf]
        %v5624 = vld [vmem:[%s2 + $0x358] sm:$0xf]
        %v5625 = vld [vmem:[%s2 + $0x35c] sm:$0xf]
        %v5626 = vld [vmem:[%s2 + $0x360] sm:$0xf]
        %v5627 = vld [vmem:[%s2 + $0x364] sm:$0xf]
        %v5628 = vld [vmem:[%s2 + $0x368] sm:$0xf]
        %v5629 = vld [vmem:[%s2 + $0x36c] sm:$0xf]
        %v5630 = vld [vmem:[%s2 + $0x370] sm:$0xf]
        %v5631 = vld [vmem:[%s2 + $0x374] sm:$0xf]
        %v5632 = vld [vmem:[%s2 + $0x378] sm:$0xf]
        %v5633 = vld [vmem:[%s2 + $0x37c] sm:$0xf]
        %v5634 = vld [vmem:[%s2 + $0x380] sm:$0xf]
        %v5635 = vld [vmem:[%s2 + $0x384] sm:$0xf]
        %v5636 = vld [vmem:[%s2 + $0x388] sm:$0xf]
        %v5637 = vld [vmem:[%s2 + $0x38c] sm:$0xf]
        %v5638 = vld [vmem:[%s2 + $0x390] sm:$0xf]
        %v5639 = vld [vmem:[%s2 + $0x394] sm:$0xf]
        %v5640 = vld [vmem:[%s2 + $0x398] sm:$0xf]
        %v5641 = vld [vmem:[%s2 + $0x39c] sm:$0xf]
        %v5642 = vld [vmem:[%s2 + $0x3a0] sm:$0xf]
        %v5643 = vld [vmem:[%s2 + $0x3a4] sm:$0xf]
        %v5644 = vld [vmem:[%s2 + $0x3a8] sm:$0xf]
        %v5645 = vld [vmem:[%s2 + $0x3ac] sm:$0xf]
        %v5646 = vld [vmem:[%s2 + $0x3b0] sm:$0xf]
        %v5647 = vld [vmem:[%s2 + $0x3b4] sm:$0xf]
        %v5648 = vld [vmem:[%s2 + $0x3b8] sm:$0xf]
        %v5649 = vld [vmem:[%s2 + $0x3bc] sm:$0xf]
        %v5650 = vld [vmem:[%s2 + $0x3c0] sm:$0xf]
        %v5651 = vld [vmem:[%s2 + $0x3c4] sm:$0xf]
        %v5652 = vld [vmem:[%s2 + $0x3c8] sm:$0xf]
        %v5653 = vld [vmem:[%s2 + $0x3cc] sm:$0xf]
        %v5654 = vld [vmem:[%s2 + $0x3d0] sm:$0xf]
        %v5655 = vld [vmem:[%s2 + $0x3d4] sm:$0xf]
        %v5656 = vld [vmem:[%s2 + $0x3d8] sm:$0xf]
        %v5657 = vld [vmem:[%s2 + $0x3dc] sm:$0xf]
        %v5658 = vld [vmem:[%s2 + $0x3e0] sm:$0xf]
        %v5659 = vld [vmem:[%s2 + $0x3e4] sm:$0xf]
        %v5660 = vld [vmem:[%s2 + $0x3e8] sm:$0xf]
        %v5661 = vld [vmem:[%s2 + $0x3ec] sm:$0xf]
        %v5662 = vld [vmem:[%s2 + $0x3f0] sm:$0xf]
        %v5663 = vld [vmem:[%s2 + $0x3f4] sm:$0xf]
        %v5664 = vld [vmem:[%s2 + $0x3f8] sm:$0xf]
        %v5665 = vld [vmem:[%s2 + $0x3fc] sm:$0xf]
        %v5922 = vunpack.c.l.b16 %v5410
        %v5923 = vunpack.c.l.b16 %v5411
        %v5924 = vunpack.c.l.b16 %v5412
        %v5925 = vunpack.c.l.b16 %v5413
        %v5926 = vunpack.c.l.b16 %v5414
        %v5927 = vunpack.c.l.b16 %v5415
        %v5928 = vunpack.c.l.b16 %v5416
        %v5929 = vunpack.c.l.b16 %v5417
        %v5930 = vunpack.c.l.b16 %v5418
        %v5931 = vunpack.c.l.b16 %v5419
        %v5932 = vunpack.c.l.b16 %v5420
        %v5933 = vunpack.c.l.b16 %v5421
        %v5934 = vunpack.c.l.b16 %v5422
        %v5935 = vunpack.c.l.b16 %v5423
        %v5936 = vunpack.c.l.b16 %v5424
        %v5937 = vunpack.c.l.b16 %v5425
        %v5938 = vunpack.c.l.b16 %v5426
        %v5939 = vunpack.c.l.b16 %v5427
        %v5940 = vunpack.c.l.b16 %v5428
        %v5941 = vunpack.c.l.b16 %v5429
        %v5942 = vunpack.c.l.b16 %v5430
        %v5943 = vunpack.c.l.b16 %v5431
        %v5944 = vunpack.c.l.b16 %v5432
        %v5945 = vunpack.c.l.b16 %v5433
        %v5946 = vunpack.c.l.b16 %v5434
        %v5947 = vunpack.c.l.b16 %v5435
        %v5948 = vunpack.c.l.b16 %v5436
        %v5949 = vunpack.c.l.b16 %v5437
        %v5950 = vunpack.c.l.b16 %v5438
        %v5951 = vunpack.c.l.b16 %v5439
        %v5952 = vunpack.c.l.b16 %v5440
        %v5953 = vunpack.c.l.b16 %v5441
        %v5954 = vunpack.c.l.b16 %v5442
        %v5955 = vunpack.c.l.b16 %v5443
        %v5956 = vunpack.c.l.b16 %v5444
        %v5957 = vunpack.c.l.b16 %v5445
        %v5958 = vunpack.c.l.b16 %v5446
        %v5959 = vunpack.c.l.b16 %v5447
        %v5960 = vunpack.c.l.b16 %v5448
        %v5961 = vunpack.c.l.b16 %v5449
        %v5962 = vunpack.c.l.b16 %v5450
        %v5963 = vunpack.c.l.b16 %v5451
        %v5964 = vunpack.c.l.b16 %v5452
        %v5965 = vunpack.c.l.b16 %v5453
        %v5966 = vunpack.c.l.b16 %v5454
        %v5967 = vunpack.c.l.b16 %v5455
        %v5968 = vunpack.c.l.b16 %v5456
        %v5969 = vunpack.c.l.b16 %v5457
        %v5970 = vunpack.c.l.b16 %v5458
        %v5971 = vunpack.c.l.b16 %v5459
        %v5972 = vunpack.c.l.b16 %v5460
        %v5973 = vunpack.c.l.b16 %v5461
        %v5974 = vunpack.c.l.b16 %v5462
        %v5975 = vunpack.c.l.b16 %v5463
        %v5976 = vunpack.c.l.b16 %v5464
        %v5977 = vunpack.c.l.b16 %v5465
        %v5978 = vunpack.c.l.b16 %v5466
        %v5979 = vunpack.c.l.b16 %v5467
        %v5980 = vunpack.c.l.b16 %v5468
        %v5981 = vunpack.c.l.b16 %v5469
        %v5982 = vunpack.c.l.b16 %v5470
        %v5983 = vunpack.c.l.b16 %v5471
        %v5984 = vunpack.c.l.b16 %v5472
        %v5985 = vunpack.c.l.b16 %v5473
        %v5986 = vunpack.c.l.b16 %v5474
        %v5987 = vunpack.c.l.b16 %v5475
        %v5988 = vunpack.c.l.b16 %v5476
        %v5989 = vunpack.c.l.b16 %v5477
        %v5990 = vunpack.c.l.b16 %v5478
        %v5991 = vunpack.c.l.b16 %v5479
        %v5992 = vunpack.c.l.b16 %v5480
        %v5993 = vunpack.c.l.b16 %v5481
        %v5994 = vunpack.c.l.b16 %v5482
        %v5995 = vunpack.c.l.b16 %v5483
        %v5996 = vunpack.c.l.b16 %v5484
        %v5997 = vunpack.c.l.b16 %v5485
        %v5998 = vunpack.c.l.b16 %v5486
        %v5999 = vunpack.c.l.b16 %v5487
        %v6000 = vunpack.c.l.b16 %v5488
        %v6001 = vunpack.c.l.b16 %v5489
        %v6002 = vunpack.c.l.b16 %v5490
        %v6003 = vunpack.c.l.b16 %v5491
        %v6004 = vunpack.c.l.b16 %v5492
        %v6005 = vunpack.c.l.b16 %v5493
        %v6006 = vunpack.c.l.b16 %v5494
        %v6007 = vunpack.c.l.b16 %v5495
        %v6008 = vunpack.c.l.b16 %v5496
        %v6009 = vunpack.c.l.b16 %v5497
        %v6010 = vunpack.c.l.b16 %v5498
        %v6011 = vunpack.c.l.b16 %v5499
        %v6012 = vunpack.c.l.b16 %v5500
        %v6013 = vunpack.c.l.b16 %v5501
        %v6014 = vunpack.c.l.b16 %v5502
        %v6015 = vunpack.c.l.b16 %v5503
        %v6016 = vunpack.c.l.b16 %v5504
        %v6017 = vunpack.c.l.b16 %v5505
        %v6018 = vunpack.c.l.b16 %v5506
        %v6019 = vunpack.c.l.b16 %v5507
        %v6020 = vunpack.c.l.b16 %v5508
        %v6021 = vunpack.c.l.b16 %v5509
        %v6022 = vunpack.c.l.b16 %v5510
        %v6023 = vunpack.c.l.b16 %v5511
        %v6024 = vunpack.c.l.b16 %v5512
        %v6025 = vunpack.c.l.b16 %v5513
        %v6026 = vunpack.c.l.b16 %v5514
        %v6027 = vunpack.c.l.b16 %v5515
        %v6028 = vunpack.c.l.b16 %v5516
        %v6029 = vunpack.c.l.b16 %v5517
        %v6030 = vunpack.c.l.b16 %v5518
        %v6031 = vunpack.c.l.b16 %v5519
        %v6032 = vunpack.c.l.b16 %v5520
        %v6033 = vunpack.c.l.b16 %v5521
        %v6034 = vunpack.c.l.b16 %v5522
        %v6035 = vunpack.c.l.b16 %v5523
        %v6036 = vunpack.c.l.b16 %v5524
        %v6037 = vunpack.c.l.b16 %v5525
        %v6038 = vunpack.c.l.b16 %v5526
        %v6039 = vunpack.c.l.b16 %v5527
        %v6040 = vunpack.c.l.b16 %v5528
        %v6041 = vunpack.c.l.b16 %v5529
        %v6042 = vunpack.c.l.b16 %v5530
        %v6043 = vunpack.c.l.b16 %v5531
        %v6044 = vunpack.c.l.b16 %v5532
        %v6045 = vunpack.c.l.b16 %v5533
        %v6046 = vunpack.c.l.b16 %v5534
        %v6047 = vunpack.c.l.b16 %v5535
        %v6048 = vunpack.c.l.b16 %v5536
        %v6049 = vunpack.c.l.b16 %v5537
        %v6050 = vunpack.c.l.b16 %v5538
        %v6051 = vunpack.c.l.b16 %v5539
        %v6052 = vunpack.c.l.b16 %v5540
        %v6053 = vunpack.c.l.b16 %v5541
        %v6054 = vunpack.c.l.b16 %v5542
        %v6055 = vunpack.c.l.b16 %v5543
        %v6056 = vunpack.c.l.b16 %v5544
        %v6057 = vunpack.c.l.b16 %v5545
        %v6058 = vunpack.c.l.b16 %v5546
        %v6059 = vunpack.c.l.b16 %v5547
        %v6060 = vunpack.c.l.b16 %v5548
        %v6061 = vunpack.c.l.b16 %v5549
        %v6062 = vunpack.c.l.b16 %v5550
        %v6063 = vunpack.c.l.b16 %v5551
        %v6064 = vunpack.c.l.b16 %v5552
        %v6065 = vunpack.c.l.b16 %v5553
        %v6066 = vunpack.c.l.b16 %v5554
        %v6067 = vunpack.c.l.b16 %v5555
        %v6068 = vunpack.c.l.b16 %v5556
        %v6069 = vunpack.c.l.b16 %v5557
        %v6070 = vunpack.c.l.b16 %v5558
        %v6071 = vunpack.c.l.b16 %v5559
        %v6072 = vunpack.c.l.b16 %v5560
        %v6073 = vunpack.c.l.b16 %v5561
        %v6074 = vunpack.c.l.b16 %v5562
        %v6075 = vunpack.c.l.b16 %v5563
        %v6076 = vunpack.c.l.b16 %v5564
        %v6077 = vunpack.c.l.b16 %v5565
        %v6078 = vunpack.c.l.b16 %v5566
        %v6079 = vunpack.c.l.b16 %v5567
        %v6080 = vunpack.c.l.b16 %v5568
        %v6081 = vunpack.c.l.b16 %v5569
        %v6082 = vunpack.c.l.b16 %v5570
        %v6083 = vunpack.c.l.b16 %v5571
        %v6084 = vunpack.c.l.b16 %v5572
        %v6085 = vunpack.c.l.b16 %v5573
        %v6086 = vunpack.c.l.b16 %v5574
        %v6087 = vunpack.c.l.b16 %v5575
        %v6088 = vunpack.c.l.b16 %v5576
        %v6089 = vunpack.c.l.b16 %v5577
        %v6090 = vunpack.c.l.b16 %v5578
        %v6091 = vunpack.c.l.b16 %v5579
        %v6092 = vunpack.c.l.b16 %v5580
        %v6093 = vunpack.c.l.b16 %v5581
        %v6094 = vunpack.c.l.b16 %v5582
        %v6095 = vunpack.c.l.b16 %v5583
        %v6096 = vunpack.c.l.b16 %v5584
        %v6097 = vunpack.c.l.b16 %v5585
        %v6098 = vunpack.c.l.b16 %v5586
        %v6099 = vunpack.c.l.b16 %v5587
        %v6100 = vunpack.c.l.b16 %v5588
        %v6101 = vunpack.c.l.b16 %v5589
        %v6102 = vunpack.c.l.b16 %v5590
        %v6103 = vunpack.c.l.b16 %v5591
        %v6104 = vunpack.c.l.b16 %v5592
        %v6105 = vunpack.c.l.b16 %v5593
        %v6106 = vunpack.c.l.b16 %v5594
        %v6107 = vunpack.c.l.b16 %v5595
        %v6108 = vunpack.c.l.b16 %v5596
        %v6109 = vunpack.c.l.b16 %v5597
        %v6110 = vunpack.c.l.b16 %v5598
        %v6111 = vunpack.c.l.b16 %v5599
        %v6112 = vunpack.c.l.b16 %v5600
        %v6113 = vunpack.c.l.b16 %v5601
        %v6114 = vunpack.c.l.b16 %v5602
        %v6115 = vunpack.c.l.b16 %v5603
        %v6116 = vunpack.c.l.b16 %v5604
        %v6117 = vunpack.c.l.b16 %v5605
        %v6118 = vunpack.c.l.b16 %v5606
        %v6119 = vunpack.c.l.b16 %v5607
        %v6120 = vunpack.c.l.b16 %v5608
        %v6121 = vunpack.c.l.b16 %v5609
        %v6122 = vunpack.c.l.b16 %v5610
        %v6123 = vunpack.c.l.b16 %v5611
        %v6124 = vunpack.c.l.b16 %v5612
        %v6125 = vunpack.c.l.b16 %v5613
        %v6126 = vunpack.c.l.b16 %v5614
        %v6127 = vunpack.c.l.b16 %v5615
        %v6128 = vunpack.c.l.b16 %v5616
        %v6129 = vunpack.c.l.b16 %v5617
        %v6130 = vunpack.c.l.b16 %v5618
        %v6131 = vunpack.c.l.b16 %v5619
        %v6132 = vunpack.c.l.b16 %v5620
        %v6133 = vunpack.c.l.b16 %v5621
        %v6134 = vunpack.c.l.b16 %v5622
        %v6135 = vunpack.c.l.b16 %v5623
        %v6136 = vunpack.c.l.b16 %v5624
        %v6137 = vunpack.c.l.b16 %v5625
        %v6138 = vunpack.c.l.b16 %v5626
        %v6139 = vunpack.c.l.b16 %v5627
        %v6140 = vunpack.c.l.b16 %v5628
        %v6141 = vunpack.c.l.b16 %v5629
        %v6142 = vunpack.c.l.b16 %v5630
        %v6143 = vunpack.c.l.b16 %v5631
        %v6144 = vunpack.c.l.b16 %v5632
        %v6145 = vunpack.c.l.b16 %v5633
        %v6146 = vunpack.c.l.b16 %v5634
        %v6147 = vunpack.c.l.b16 %v5635
        %v6148 = vunpack.c.l.b16 %v5636
        %v6149 = vunpack.c.l.b16 %v5637
        %v6150 = vunpack.c.l.b16 %v5638
        %v6151 = vunpack.c.l.b16 %v5639
        %v6152 = vunpack.c.l.b16 %v5640
        %v6153 = vunpack.c.l.b16 %v5641
        %v6154 = vunpack.c.l.b16 %v5642
        %v6155 = vunpack.c.l.b16 %v5643
        %v6156 = vunpack.c.l.b16 %v5644
        %v6157 = vunpack.c.l.b16 %v5645
        %v6158 = vunpack.c.l.b16 %v5646
        %v6159 = vunpack.c.l.b16 %v5647
        %v6160 = vunpack.c.l.b16 %v5648
        %v6161 = vunpack.c.l.b16 %v5649
        %v6162 = vunpack.c.l.b16 %v5650
        %v6163 = vunpack.c.l.b16 %v5651
        %v6164 = vunpack.c.l.b16 %v5652
        %v6165 = vunpack.c.l.b16 %v5653
        %v6166 = vunpack.c.l.b16 %v5654
        %v6167 = vunpack.c.l.b16 %v5655
        %v6168 = vunpack.c.l.b16 %v5656
        %v6169 = vunpack.c.l.b16 %v5657
        %v6170 = vunpack.c.l.b16 %v5658
        %v6171 = vunpack.c.l.b16 %v5659
        %v6172 = vunpack.c.l.b16 %v5660
        %v6173 = vunpack.c.l.b16 %v5661
        %v6174 = vunpack.c.l.b16 %v5662
        %v6175 = vunpack.c.l.b16 %v5663
        %v6176 = vunpack.c.l.b16 %v5664
        %v6177 = vunpack.c.l.b16 %v5665
        %v6178 = vpack.c.b16 %v5923, %v5922
        %v6179 = vpack.c.b16 %v5925, %v5924
        %v6180 = vpack.c.b16 %v5927, %v5926
        %v6181 = vpack.c.b16 %v5929, %v5928
        %v6182 = vpack.c.b16 %v5931, %v5930
        %v6183 = vpack.c.b16 %v5933, %v5932
        %v6184 = vpack.c.b16 %v5935, %v5934
        %v6185 = vpack.c.b16 %v5937, %v5936
        %v6186 = vpack.c.b16 %v5939, %v5938
        %v6187 = vpack.c.b16 %v5941, %v5940
        %v6188 = vpack.c.b16 %v5943, %v5942
        %v6189 = vpack.c.b16 %v5945, %v5944
        %v6190 = vpack.c.b16 %v5947, %v5946
        %v6191 = vpack.c.b16 %v5949, %v5948
        %v6192 = vpack.c.b16 %v5951, %v5950
        %v6193 = vpack.c.b16 %v5953, %v5952
        %v6194 = vpack.c.b16 %v5955, %v5954
        %v6195 = vpack.c.b16 %v5957, %v5956
        %v6196 = vpack.c.b16 %v5959, %v5958
        %v6197 = vpack.c.b16 %v5961, %v5960
        %v6198 = vpack.c.b16 %v5963, %v5962
        %v6199 = vpack.c.b16 %v5965, %v5964
        %v6200 = vpack.c.b16 %v5967, %v5966
        %v6201 = vpack.c.b16 %v5969, %v5968
        %v6202 = vpack.c.b16 %v5971, %v5970
        %v6203 = vpack.c.b16 %v5973, %v5972
        %v6204 = vpack.c.b16 %v5975, %v5974
        %v6205 = vpack.c.b16 %v5977, %v5976
        %v6206 = vpack.c.b16 %v5979, %v5978
        %v6207 = vpack.c.b16 %v5981, %v5980
        %v6208 = vpack.c.b16 %v5983, %v5982
        %v6209 = vpack.c.b16 %v5985, %v5984
        %v6210 = vpack.c.b16 %v5987, %v5986
        %v6211 = vpack.c.b16 %v5989, %v5988
        %v6212 = vpack.c.b16 %v5991, %v5990
        %v6213 = vpack.c.b16 %v5993, %v5992
        %v6214 = vpack.c.b16 %v5995, %v5994
        %v6215 = vpack.c.b16 %v5997, %v5996
        %v6216 = vpack.c.b16 %v5999, %v5998
        %v6217 = vpack.c.b16 %v6001, %v6000
        %v6218 = vpack.c.b16 %v6003, %v6002
        %v6219 = vpack.c.b16 %v6005, %v6004
        %v6220 = vpack.c.b16 %v6007, %v6006
        %v6221 = vpack.c.b16 %v6009, %v6008
        %v6222 = vpack.c.b16 %v6011, %v6010
        %v6223 = vpack.c.b16 %v6013, %v6012
        %v6224 = vpack.c.b16 %v6015, %v6014
        %v6225 = vpack.c.b16 %v6017, %v6016
        %v6226 = vpack.c.b16 %v6019, %v6018
        %v6227 = vpack.c.b16 %v6021, %v6020
        %v6228 = vpack.c.b16 %v6023, %v6022
        %v6229 = vpack.c.b16 %v6025, %v6024
        %v6230 = vpack.c.b16 %v6027, %v6026
        %v6231 = vpack.c.b16 %v6029, %v6028
        %v6232 = vpack.c.b16 %v6031, %v6030
        %v6233 = vpack.c.b16 %v6033, %v6032
        %v6234 = vpack.c.b16 %v6035, %v6034
        %v6235 = vpack.c.b16 %v6037, %v6036
        %v6236 = vpack.c.b16 %v6039, %v6038
        %v6237 = vpack.c.b16 %v6041, %v6040
        %v6238 = vpack.c.b16 %v6043, %v6042
        %v6239 = vpack.c.b16 %v6045, %v6044
        %v6240 = vpack.c.b16 %v6047, %v6046
        %v6241 = vpack.c.b16 %v6049, %v6048
        %v6242 = vpack.c.b16 %v6051, %v6050
        %v6243 = vpack.c.b16 %v6053, %v6052
        %v6244 = vpack.c.b16 %v6055, %v6054
        %v6245 = vpack.c.b16 %v6057, %v6056
        %v6246 = vpack.c.b16 %v6059, %v6058
        %v6247 = vpack.c.b16 %v6061, %v6060
        %v6248 = vpack.c.b16 %v6063, %v6062
        %v6249 = vpack.c.b16 %v6065, %v6064
        %v6250 = vpack.c.b16 %v6067, %v6066
        %v6251 = vpack.c.b16 %v6069, %v6068
        %v6252 = vpack.c.b16 %v6071, %v6070
        %v6253 = vpack.c.b16 %v6073, %v6072
        %v6254 = vpack.c.b16 %v6075, %v6074
        %v6255 = vpack.c.b16 %v6077, %v6076
        %v6256 = vpack.c.b16 %v6079, %v6078
        %v6257 = vpack.c.b16 %v6081, %v6080
        %v6258 = vpack.c.b16 %v6083, %v6082
        %v6259 = vpack.c.b16 %v6085, %v6084
        %v6260 = vpack.c.b16 %v6087, %v6086
        %v6261 = vpack.c.b16 %v6089, %v6088
        %v6262 = vpack.c.b16 %v6091, %v6090
        %v6263 = vpack.c.b16 %v6093, %v6092
        %v6264 = vpack.c.b16 %v6095, %v6094
        %v6265 = vpack.c.b16 %v6097, %v6096
        %v6266 = vpack.c.b16 %v6099, %v6098
        %v6267 = vpack.c.b16 %v6101, %v6100
        %v6268 = vpack.c.b16 %v6103, %v6102
        %v6269 = vpack.c.b16 %v6105, %v6104
        %v6270 = vpack.c.b16 %v6107, %v6106
        %v6271 = vpack.c.b16 %v6109, %v6108
        %v6272 = vpack.c.b16 %v6111, %v6110
        %v6273 = vpack.c.b16 %v6113, %v6112
        %v6274 = vpack.c.b16 %v6115, %v6114
        %v6275 = vpack.c.b16 %v6117, %v6116
        %v6276 = vpack.c.b16 %v6119, %v6118
        %v6277 = vpack.c.b16 %v6121, %v6120
        %v6278 = vpack.c.b16 %v6123, %v6122
        %v6279 = vpack.c.b16 %v6125, %v6124
        %v6280 = vpack.c.b16 %v6127, %v6126
        %v6281 = vpack.c.b16 %v6129, %v6128
        %v6282 = vpack.c.b16 %v6131, %v6130
        %v6283 = vpack.c.b16 %v6133, %v6132
        %v6284 = vpack.c.b16 %v6135, %v6134
        %v6285 = vpack.c.b16 %v6137, %v6136
        %v6286 = vpack.c.b16 %v6139, %v6138
        %v6287 = vpack.c.b16 %v6141, %v6140
        %v6288 = vpack.c.b16 %v6143, %v6142
        %v6289 = vpack.c.b16 %v6145, %v6144
        %v6290 = vpack.c.b16 %v6147, %v6146
        %v6291 = vpack.c.b16 %v6149, %v6148
        %v6292 = vpack.c.b16 %v6151, %v6150
        %v6293 = vpack.c.b16 %v6153, %v6152
        %v6294 = vpack.c.b16 %v6155, %v6154
        %v6295 = vpack.c.b16 %v6157, %v6156
        %v6296 = vpack.c.b16 %v6159, %v6158
        %v6297 = vpack.c.b16 %v6161, %v6160
        %v6298 = vpack.c.b16 %v6163, %v6162
        %v6299 = vpack.c.b16 %v6165, %v6164
        %v6300 = vpack.c.b16 %v6167, %v6166
        %v6301 = vpack.c.b16 %v6169, %v6168
        %v6302 = vpack.c.b16 %v6171, %v6170
        %v6303 = vpack.c.b16 %v6173, %v6172
        %v6304 = vpack.c.b16 %v6175, %v6174
        %v6305 = vpack.c.b16 %v6177, %v6176
        %6434 = vmatprep.subr.bf16.mxu0 0
        %6435 = vmatpush1.bf16.msra.mxu0 %v6185
        %6436 = vmatprep.subr.bf16.mxu0 0
        %6437 = vmatpush1.bf16.msra.mxu0 %v6184
        %6438 = vmatprep.subr.bf16.mxu0 0
        %6439 = vmatpush1.bf16.msra.mxu0 %v6183
        %6440 = vmatprep.subr.bf16.mxu0 0
        %6441 = vmatpush1.bf16.msra.mxu0 %v6182
        %6442 = vmatprep.subr.bf16.mxu0 0
        %6443 = vmatpush1.bf16.msra.mxu0 %v6181
        %6444 = vmatprep.subr.bf16.mxu0 0
        %6445 = vmatpush1.bf16.msra.mxu0 %v6180
        %6446 = vmatprep.subr.bf16.mxu0 0
        %6447 = vmatpush1.bf16.msra.mxu0 %v6179
        %6448 = vmatprep.subr.bf16.mxu0 0
        %6449 = vmatpush1.bf16.msra.mxu0 %v6178
        %6450 = vmatprep.subr.bf16.mxu0 0
        %6451 = vmatpush2.bf16.msra.mxu0 %v6193
        %6452 = vmatprep.subr.bf16.mxu0 0
        %6453 = vmatpush2.bf16.msra.mxu0 %v6192
        %6454 = vmatprep.subr.bf16.mxu0 0
        %6455 = vmatpush2.bf16.msra.mxu0 %v6191
        %6456 = vmatprep.subr.bf16.mxu0 0
        %6457 = vmatpush2.bf16.msra.mxu0 %v6190
        %6458 = vmatprep.subr.bf16.mxu0 0
        %6459 = vmatpush2.bf16.msra.mxu0 %v6189
        %6460 = vmatprep.subr.bf16.mxu0 0
        %6461 = vmatpush2.bf16.msra.mxu0 %v6188
        %6462 = vmatprep.subr.bf16.mxu0 0
        %6463 = vmatpush2.bf16.msra.mxu0 %v6187
        %6464 = vmatprep.subr.bf16.mxu0 0
        %6465 = vmatpush2.bf16.msra.mxu0 %v6186
        %6466 = vmatprep.mubr.bf16.mxu0 %v4899
        %6467 = vmatmul.mubr.bf16.gmra.mxu0 %v4898
        %v6468 = vpop.f32.mrf.mxu0
        %v6469 = vadd.f32 0.0, %v6468
        %v6470 = vpop.f32.mrf.mxu0
        %v6471 = vpop.f32.mrf.mxu0
        %v6472 = vadd.f32 0.0, %v6471
        %v6473 = vpop.f32.mrf.mxu0
        %6474 = vmatprep.mubr.bf16.mxu0 %v4915
        %6475 = vmatmul.mubr.bf16.gmra.mxu0 %v4914
        %v6476 = vpop.f32.mrf.mxu0
        %v6477 = vadd.f32 0.0, %v6476
        %v6478 = vpop.f32.mrf.mxu0
        %v6479 = vpop.f32.mrf.mxu0
        %v6480 = vadd.f32 0.0, %v6479
        %v6481 = vpop.f32.mrf.mxu0
        %6482 = vmatprep.mubr.bf16.mxu0 %v4931
        %6483 = vmatmul.mubr.bf16.gmra.mxu0 %v4930
        %v6484 = vpop.f32.mrf.mxu0
        %v6485 = vadd.f32 0.0, %v6484
        %v6486 = vpop.f32.mrf.mxu0
        %v6487 = vpop.f32.mrf.mxu0
        %v6488 = vadd.f32 0.0, %v6487
        %v6489 = vpop.f32.mrf.mxu0
        %6490 = vmatprep.mubr.bf16.mxu0 %v4947
        %6491 = vmatmul.mubr.bf16.gmra.mxu0 %v4946
        %v6492 = vpop.f32.mrf.mxu0
        %v6493 = vadd.f32 0.0, %v6492
        %v6494 = vpop.f32.mrf.mxu0
        %v6495 = vpop.f32.mrf.mxu0
        %v6496 = vadd.f32 0.0, %v6495
        %v6497 = vpop.f32.mrf.mxu0
        %6498 = vmatprep.mubr.bf16.mxu0 %v4963
        %6499 = vmatmul.mubr.bf16.gmra.mxu0 %v4962
        %v6500 = vpop.f32.mrf.mxu0
        %v6501 = vadd.f32 0.0, %v6500
        %v6502 = vpop.f32.mrf.mxu0
        %v6503 = vpop.f32.mrf.mxu0
        %v6504 = vadd.f32 0.0, %v6503
        %v6505 = vpop.f32.mrf.mxu0
        %6506 = vmatprep.mubr.bf16.mxu0 %v4979
        %6507 = vmatmul.mubr.bf16.gmra.mxu0 %v4978
        %v6508 = vpop.f32.mrf.mxu0
        %v6509 = vadd.f32 0.0, %v6508
        %v6510 = vpop.f32.mrf.mxu0
        %v6511 = vpop.f32.mrf.mxu0
        %v6512 = vadd.f32 0.0, %v6511
        %v6513 = vpop.f32.mrf.mxu0
        %6514 = vmatprep.mubr.bf16.mxu0 %v4995
        %6515 = vmatmul.mubr.bf16.gmra.mxu0 %v4994
        %v6516 = vpop.f32.mrf.mxu0
        %v6517 = vadd.f32 0.0, %v6516
        %v6518 = vpop.f32.mrf.mxu0
        %v6519 = vpop.f32.mrf.mxu0
        %v6520 = vadd.f32 0.0, %v6519
        %v6521 = vpop.f32.mrf.mxu0
        %6522 = vmatprep.mubr.bf16.mxu0 %v5011
        %6523 = vmatmul.mubr.bf16.gmra.mxu0 %v5010
        %v6524 = vpop.f32.mrf.mxu0
        %v6525 = vadd.f32 0.0, %v6524
        %v6526 = vpop.f32.mrf.mxu0
        %v6527 = vpop.f32.mrf.mxu0
        %v6528 = vadd.f32 0.0, %v6527
        %v6529 = vpop.f32.mrf.mxu0
        %6530 = vmatprep.mubr.bf16.mxu0 %v5027
        %6531 = vmatmul.mubr.bf16.gmra.mxu0 %v5026
        %v6532 = vpop.f32.mrf.mxu0
        %v6533 = vadd.f32 0.0, %v6532
        %v6534 = vpop.f32.mrf.mxu0
        %v6535 = vpop.f32.mrf.mxu0
        %v6536 = vadd.f32 0.0, %v6535
        %v6537 = vpop.f32.mrf.mxu0
        %6538 = vmatprep.mubr.bf16.mxu0 %v5043
        %6539 = vmatmul.mubr.bf16.gmra.mxu0 %v5042
        %v6540 = vpop.f32.mrf.mxu0
        %v6541 = vadd.f32 0.0, %v6540
        %v6542 = vpop.f32.mrf.mxu0
        %v6543 = vpop.f32.mrf.mxu0
        %v6544 = vadd.f32 0.0, %v6543
        %v6545 = vpop.f32.mrf.mxu0
        %6546 = vmatprep.mubr.bf16.mxu0 %v5059
        %6547 = vmatmul.mubr.bf16.gmra.mxu0 %v5058
        %v6548 = vpop.f32.mrf.mxu0
        %v6549 = vadd.f32 0.0, %v6548
        %v6550 = vpop.f32.mrf.mxu0
        %v6551 = vpop.f32.mrf.mxu0
        %v6552 = vadd.f32 0.0, %v6551
        %v6553 = vpop.f32.mrf.mxu0
        %6554 = vmatprep.mubr.bf16.mxu0 %v5075
        %6555 = vmatmul.mubr.bf16.gmra.mxu0 %v5074
        %v6556 = vpop.f32.mrf.mxu0
        %v6557 = vadd.f32 0.0, %v6556
        %v6558 = vpop.f32.mrf.mxu0
        %v6559 = vpop.f32.mrf.mxu0
        %v6560 = vadd.f32 0.0, %v6559
        %v6561 = vpop.f32.mrf.mxu0
        %6562 = vmatprep.mubr.bf16.mxu0 %v5091
        %6563 = vmatmul.mubr.bf16.gmra.mxu0 %v5090
        %v6564 = vpop.f32.mrf.mxu0
        %v6565 = vadd.f32 0.0, %v6564
        %v6566 = vpop.f32.mrf.mxu0
        %v6567 = vpop.f32.mrf.mxu0
        %v6568 = vadd.f32 0.0, %v6567
        %v6569 = vpop.f32.mrf.mxu0
        %6570 = vmatprep.mubr.bf16.mxu0 %v5107
        %6571 = vmatmul.mubr.bf16.gmra.mxu0 %v5106
        %v6572 = vpop.f32.mrf.mxu0
        %v6573 = vadd.f32 0.0, %v6572
        %v6574 = vpop.f32.mrf.mxu0
        %v6575 = vpop.f32.mrf.mxu0
        %v6576 = vadd.f32 0.0, %v6575
        %v6577 = vpop.f32.mrf.mxu0
        %6578 = vmatprep.mubr.bf16.mxu0 %v5123
        %6579 = vmatmul.mubr.bf16.gmra.mxu0 %v5122
        %v6580 = vpop.f32.mrf.mxu0
        %v6581 = vadd.f32 0.0, %v6580
        %v6582 = vpop.f32.mrf.mxu0
        %v6583 = vpop.f32.mrf.mxu0
        %v6584 = vadd.f32 0.0, %v6583
        %v6585 = vpop.f32.mrf.mxu0
        %6586 = vmatprep.mubr.bf16.mxu0 %v5139
        %6587 = vmatmul.mubr.bf16.gmra.mxu0 %v5138
        %v6588 = vpop.f32.mrf.mxu0
        %v6589 = vadd.f32 0.0, %v6588
        %v6590 = vpop.f32.mrf.mxu0
        %v6591 = vpop.f32.mrf.mxu0
        %v6592 = vadd.f32 0.0, %v6591
        %v6593 = vpop.f32.mrf.mxu0
        %6594 = vmatprep.mubr.bf16.mxu0 %v5155
        %6595 = vmatmul.mubr.bf16.gmra.mxu0 %v5154
        %v6596 = vpop.f32.mrf.mxu0
        %v6597 = vadd.f32 0.0, %v6596
        %v6598 = vpop.f32.mrf.mxu0
        %v6599 = vpop.f32.mrf.mxu0
        %v6600 = vadd.f32 0.0, %v6599
        %v6601 = vpop.f32.mrf.mxu0
        %6602 = vmatprep.mubr.bf16.mxu0 %v5171
        %6603 = vmatmul.mubr.bf16.gmra.mxu0 %v5170
        %v6604 = vpop.f32.mrf.mxu0
        %v6605 = vadd.f32 0.0, %v6604
        %v6606 = vpop.f32.mrf.mxu0
        %v6607 = vpop.f32.mrf.mxu0
        %v6608 = vadd.f32 0.0, %v6607
        %v6609 = vpop.f32.mrf.mxu0
        %6610 = vmatprep.mubr.bf16.mxu0 %v5187
        %6611 = vmatmul.mubr.bf16.gmra.mxu0 %v5186
        %v6612 = vpop.f32.mrf.mxu0
        %v6613 = vadd.f32 0.0, %v6612
        %v6614 = vpop.f32.mrf.mxu0
        %v6615 = vpop.f32.mrf.mxu0
        %v6616 = vadd.f32 0.0, %v6615
        %v6617 = vpop.f32.mrf.mxu0
        %6618 = vmatprep.mubr.bf16.mxu0 %v5203
        %6619 = vmatmul.mubr.bf16.gmra.mxu0 %v5202
        %v6620 = vpop.f32.mrf.mxu0
        %v6621 = vadd.f32 0.0, %v6620
        %v6622 = vpop.f32.mrf.mxu0
        %v6623 = vpop.f32.mrf.mxu0
        %v6624 = vadd.f32 0.0, %v6623
        %v6625 = vpop.f32.mrf.mxu0
        %6626 = vmatprep.mubr.bf16.mxu0 %v5219
        %6627 = vmatmul.mubr.bf16.gmra.mxu0 %v5218
        %v6628 = vpop.f32.mrf.mxu0
        %v6629 = vadd.f32 0.0, %v6628
        %v6630 = vpop.f32.mrf.mxu0
        %v6631 = vpop.f32.mrf.mxu0
        %v6632 = vadd.f32 0.0, %v6631
        %v6633 = vpop.f32.mrf.mxu0
        %6634 = vmatprep.mubr.bf16.mxu0 %v5235
        %6635 = vmatmul.mubr.bf16.gmra.mxu0 %v5234
        %v6636 = vpop.f32.mrf.mxu0
        %v6637 = vadd.f32 0.0, %v6636
        %v6638 = vpop.f32.mrf.mxu0
        %v6639 = vpop.f32.mrf.mxu0
        %v6640 = vadd.f32 0.0, %v6639
        %v6641 = vpop.f32.mrf.mxu0
        %6642 = vmatprep.mubr.bf16.mxu0 %v5251
        %6643 = vmatmul.mubr.bf16.gmra.mxu0 %v5250
        %v6644 = vpop.f32.mrf.mxu0
        %v6645 = vadd.f32 0.0, %v6644
        %v6646 = vpop.f32.mrf.mxu0
        %v6647 = vpop.f32.mrf.mxu0
        %v6648 = vadd.f32 0.0, %v6647
        %v6649 = vpop.f32.mrf.mxu0
        %6650 = vmatprep.mubr.bf16.mxu0 %v5267
        %6651 = vmatmul.mubr.bf16.gmra.mxu0 %v5266
        %v6652 = vpop.f32.mrf.mxu0
        %v6653 = vadd.f32 0.0, %v6652
        %v6654 = vpop.f32.mrf.mxu0
        %v6655 = vpop.f32.mrf.mxu0
        %v6656 = vadd.f32 0.0, %v6655
        %v6657 = vpop.f32.mrf.mxu0
        %6658 = vmatprep.mubr.bf16.mxu0 %v5283
        %6659 = vmatmul.mubr.bf16.gmra.mxu0 %v5282
        %v6660 = vpop.f32.mrf.mxu0
        %v6661 = vadd.f32 0.0, %v6660
        %v6662 = vpop.f32.mrf.mxu0
        %v6663 = vpop.f32.mrf.mxu0
        %v6664 = vadd.f32 0.0, %v6663
        %v6665 = vpop.f32.mrf.mxu0
        %6666 = vmatprep.mubr.bf16.mxu0 %v5299
        %6667 = vmatmul.mubr.bf16.gmra.mxu0 %v5298
        %v6668 = vpop.f32.mrf.mxu0
        %v6669 = vadd.f32 0.0, %v6668
        %v6670 = vpop.f32.mrf.mxu0
        %v6671 = vpop.f32.mrf.mxu0
        %v6672 = vadd.f32 0.0, %v6671
        %v6673 = vpop.f32.mrf.mxu0
        %6674 = vmatprep.mubr.bf16.mxu0 %v5315
        %6675 = vmatmul.mubr.bf16.gmra.mxu0 %v5314
        %v6676 = vpop.f32.mrf.mxu0
        %v6677 = vadd.f32 0.0, %v6676
        %v6678 = vpop.f32.mrf.mxu0
        %v6679 = vpop.f32.mrf.mxu0
        %v6680 = vadd.f32 0.0, %v6679
        %v6681 = vpop.f32.mrf.mxu0
        %6682 = vmatprep.mubr.bf16.mxu0 %v5331
        %6683 = vmatmul.mubr.bf16.gmra.mxu0 %v5330
        %v6684 = vpop.f32.mrf.mxu0
        %v6685 = vadd.f32 0.0, %v6684
        %v6686 = vpop.f32.mrf.mxu0
        %v6687 = vpop.f32.mrf.mxu0
        %v6688 = vadd.f32 0.0, %v6687
        %v6689 = vpop.f32.mrf.mxu0
        %6690 = vmatprep.mubr.bf16.mxu0 %v5347
        %6691 = vmatmul.mubr.bf16.gmra.mxu0 %v5346
        %v6692 = vpop.f32.mrf.mxu0
        %v6693 = vadd.f32 0.0, %v6692
        %v6694 = vpop.f32.mrf.mxu0
        %v6695 = vpop.f32.mrf.mxu0
        %v6696 = vadd.f32 0.0, %v6695
        %v6697 = vpop.f32.mrf.mxu0
        %6698 = vmatprep.mubr.bf16.mxu0 %v5363
        %6699 = vmatmul.mubr.bf16.gmra.mxu0 %v5362
        %v6700 = vpop.f32.mrf.mxu0
        %v6701 = vadd.f32 0.0, %v6700
        %v6702 = vpop.f32.mrf.mxu0
        %v6703 = vpop.f32.mrf.mxu0
        %v6704 = vadd.f32 0.0, %v6703
        %v6705 = vpop.f32.mrf.mxu0
        %6706 = vmatprep.mubr.bf16.mxu0 %v5379
        %6707 = vmatmul.mubr.bf16.gmra.mxu0 %v5378
        %v6708 = vpop.f32.mrf.mxu0
        %v6709 = vadd.f32 0.0, %v6708
        %v6710 = vpop.f32.mrf.mxu0
        %v6711 = vpop.f32.mrf.mxu0
        %v6712 = vadd.f32 0.0, %v6711
        %v6713 = vpop.f32.mrf.mxu0
        %6714 = vmatprep.mubr.bf16.mxu0 %v5395
        %6715 = vmatmul.mubr.bf16.gmra.mxu0 %v5394
        %v6716 = vpop.f32.mrf.mxu0
        %v6717 = vadd.f32 0.0, %v6716
        %v6718 = vpop.f32.mrf.mxu0
        %v6719 = vpop.f32.mrf.mxu0
        %v6720 = vadd.f32 0.0, %v6719
        %v6721 = vpop.f32.mrf.mxu0
        %6722 = vdwg.mxu0
        %6723 = vmatprep.subr.bf16.mxu0 0
        %6724 = vmatpush1.bf16.msra.mxu0 %v6201
        %6725 = vmatprep.subr.bf16.mxu0 0
        %6726 = vmatpush1.bf16.msra.mxu0 %v6200
        %6727 = vmatprep.subr.bf16.mxu0 0
        %6728 = vmatpush1.bf16.msra.mxu0 %v6199
        %6729 = vmatprep.subr.bf16.mxu0 0
        %6730 = vmatpush1.bf16.msra.mxu0 %v6198
        %6731 = vmatprep.subr.bf16.mxu0 0
        %6732 = vmatpush1.bf16.msra.mxu0 %v6197
        %6733 = vmatprep.subr.bf16.mxu0 0
        %6734 = vmatpush1.bf16.msra.mxu0 %v6196
        %6735 = vmatprep.subr.bf16.mxu0 0
        %6736 = vmatpush1.bf16.msra.mxu0 %v6195
        %6737 = vmatprep.subr.bf16.mxu0 0
        %6738 = vmatpush1.bf16.msra.mxu0 %v6194
        %6739 = vmatprep.subr.bf16.mxu0 0
        %6740 = vmatpush2.bf16.msra.mxu0 %v6209
        %6741 = vmatprep.subr.bf16.mxu0 0
        %6742 = vmatpush2.bf16.msra.mxu0 %v6208
        %6743 = vmatprep.subr.bf16.mxu0 0
        %6744 = vmatpush2.bf16.msra.mxu0 %v6207
        %6745 = vmatprep.subr.bf16.mxu0 0
        %6746 = vmatpush2.bf16.msra.mxu0 %v6206
        %6747 = vmatprep.subr.bf16.mxu0 0
        %6748 = vmatpush2.bf16.msra.mxu0 %v6205
        %6749 = vmatprep.subr.bf16.mxu0 0
        %6750 = vmatpush2.bf16.msra.mxu0 %v6204
        %6751 = vmatprep.subr.bf16.mxu0 0
        %6752 = vmatpush2.bf16.msra.mxu0 %v6203
        %6753 = vmatprep.subr.bf16.mxu0 0
        %6754 = vmatpush2.bf16.msra.mxu0 %v6202
        %6755 = vmatprep.mubr.bf16.mxu0 %v4901
        %6756 = vmatmul.mubr.bf16.gmra.mxu0 %v4900
        %v6757 = vpop.f32.mrf.mxu0
        %v6758 = vadd.f32 %v6469, %v6757
        %v6759 = vpop.f32.mrf.mxu0
        %v6760 = vpop.f32.mrf.mxu0
        %v6761 = vadd.f32 %v6472, %v6760
        %v6762 = vpop.f32.mrf.mxu0
        %6763 = vmatprep.mubr.bf16.mxu0 %v4917
        %6764 = vmatmul.mubr.bf16.gmra.mxu0 %v4916
        %v6765 = vpop.f32.mrf.mxu0
        %v6766 = vadd.f32 %v6477, %v6765
        %v6767 = vpop.f32.mrf.mxu0
        %v6768 = vpop.f32.mrf.mxu0
        %v6769 = vadd.f32 %v6480, %v6768
        %v6770 = vpop.f32.mrf.mxu0
        %6771 = vmatprep.mubr.bf16.mxu0 %v4933
        %6772 = vmatmul.mubr.bf16.gmra.mxu0 %v4932
        %v6773 = vpop.f32.mrf.mxu0
        %v6774 = vadd.f32 %v6485, %v6773
        %v6775 = vpop.f32.mrf.mxu0
        %v6776 = vpop.f32.mrf.mxu0
        %v6777 = vadd.f32 %v6488, %v6776
        %v6778 = vpop.f32.mrf.mxu0
        %6779 = vmatprep.mubr.bf16.mxu0 %v4949
        %6780 = vmatmul.mubr.bf16.gmra.mxu0 %v4948
        %v6781 = vpop.f32.mrf.mxu0
        %v6782 = vadd.f32 %v6493, %v6781
        %v6783 = vpop.f32.mrf.mxu0
        %v6784 = vpop.f32.mrf.mxu0
        %v6785 = vadd.f32 %v6496, %v6784
        %v6786 = vpop.f32.mrf.mxu0
        %6787 = vmatprep.mubr.bf16.mxu0 %v4965
        %6788 = vmatmul.mubr.bf16.gmra.mxu0 %v4964
        %v6789 = vpop.f32.mrf.mxu0
        %v6790 = vadd.f32 %v6501, %v6789
        %v6791 = vpop.f32.mrf.mxu0
        %v6792 = vpop.f32.mrf.mxu0
        %v6793 = vadd.f32 %v6504, %v6792
        %v6794 = vpop.f32.mrf.mxu0
        %6795 = vmatprep.mubr.bf16.mxu0 %v4981
        %6796 = vmatmul.mubr.bf16.gmra.mxu0 %v4980
        %v6797 = vpop.f32.mrf.mxu0
        %v6798 = vadd.f32 %v6509, %v6797
        %v6799 = vpop.f32.mrf.mxu0
        %v6800 = vpop.f32.mrf.mxu0
        %v6801 = vadd.f32 %v6512, %v6800
        %v6802 = vpop.f32.mrf.mxu0
        %6803 = vmatprep.mubr.bf16.mxu0 %v4997
        %6804 = vmatmul.mubr.bf16.gmra.mxu0 %v4996
        %v6805 = vpop.f32.mrf.mxu0
        %v6806 = vadd.f32 %v6517, %v6805
        %v6807 = vpop.f32.mrf.mxu0
        %v6808 = vpop.f32.mrf.mxu0
        %v6809 = vadd.f32 %v6520, %v6808
        %v6810 = vpop.f32.mrf.mxu0
        %6811 = vmatprep.mubr.bf16.mxu0 %v5013
        %6812 = vmatmul.mubr.bf16.gmra.mxu0 %v5012
        %v6813 = vpop.f32.mrf.mxu0
        %v6814 = vadd.f32 %v6525, %v6813
        %v6815 = vpop.f32.mrf.mxu0
        %v6816 = vpop.f32.mrf.mxu0
        %v6817 = vadd.f32 %v6528, %v6816
        %v6818 = vpop.f32.mrf.mxu0
        %6819 = vmatprep.mubr.bf16.mxu0 %v5029
        %6820 = vmatmul.mubr.bf16.gmra.mxu0 %v5028
        %v6821 = vpop.f32.mrf.mxu0
        %v6822 = vadd.f32 %v6533, %v6821
        %v6823 = vpop.f32.mrf.mxu0
        %v6824 = vpop.f32.mrf.mxu0
        %v6825 = vadd.f32 %v6536, %v6824
        %v6826 = vpop.f32.mrf.mxu0
        %6827 = vmatprep.mubr.bf16.mxu0 %v5045
        %6828 = vmatmul.mubr.bf16.gmra.mxu0 %v5044
        %v6829 = vpop.f32.mrf.mxu0
        %v6830 = vadd.f32 %v6541, %v6829
        %v6831 = vpop.f32.mrf.mxu0
        %v6832 = vpop.f32.mrf.mxu0
        %v6833 = vadd.f32 %v6544, %v6832
        %v6834 = vpop.f32.mrf.mxu0
        %6835 = vmatprep.mubr.bf16.mxu0 %v5061
        %6836 = vmatmul.mubr.bf16.gmra.mxu0 %v5060
        %v6837 = vpop.f32.mrf.mxu0
        %v6838 = vadd.f32 %v6549, %v6837
        %v6839 = vpop.f32.mrf.mxu0
        %v6840 = vpop.f32.mrf.mxu0
        %v6841 = vadd.f32 %v6552, %v6840
        %v6842 = vpop.f32.mrf.mxu0
        %6843 = vmatprep.mubr.bf16.mxu0 %v5077
        %6844 = vmatmul.mubr.bf16.gmra.mxu0 %v5076
        %v6845 = vpop.f32.mrf.mxu0
        %v6846 = vadd.f32 %v6557, %v6845
        %v6847 = vpop.f32.mrf.mxu0
        %v6848 = vpop.f32.mrf.mxu0
        %v6849 = vadd.f32 %v6560, %v6848
        %v6850 = vpop.f32.mrf.mxu0
        %6851 = vmatprep.mubr.bf16.mxu0 %v5093
        %6852 = vmatmul.mubr.bf16.gmra.mxu0 %v5092
        %v6853 = vpop.f32.mrf.mxu0
        %v6854 = vadd.f32 %v6565, %v6853
        %v6855 = vpop.f32.mrf.mxu0
        %v6856 = vpop.f32.mrf.mxu0
        %v6857 = vadd.f32 %v6568, %v6856
        %v6858 = vpop.f32.mrf.mxu0
        %6859 = vmatprep.mubr.bf16.mxu0 %v5109
        %6860 = vmatmul.mubr.bf16.gmra.mxu0 %v5108
        %v6861 = vpop.f32.mrf.mxu0
        %v6862 = vadd.f32 %v6573, %v6861
        %v6863 = vpop.f32.mrf.mxu0
        %v6864 = vpop.f32.mrf.mxu0
        %v6865 = vadd.f32 %v6576, %v6864
        %v6866 = vpop.f32.mrf.mxu0
        %6867 = vmatprep.mubr.bf16.mxu0 %v5125
        %6868 = vmatmul.mubr.bf16.gmra.mxu0 %v5124
        %v6869 = vpop.f32.mrf.mxu0
        %v6870 = vadd.f32 %v6581, %v6869
        %v6871 = vpop.f32.mrf.mxu0
        %v6872 = vpop.f32.mrf.mxu0
        %v6873 = vadd.f32 %v6584, %v6872
        %v6874 = vpop.f32.mrf.mxu0
        %6875 = vmatprep.mubr.bf16.mxu0 %v5141
        %6876 = vmatmul.mubr.bf16.gmra.mxu0 %v5140
        %v6877 = vpop.f32.mrf.mxu0
        %v6878 = vadd.f32 %v6589, %v6877
        %v6879 = vpop.f32.mrf.mxu0
        %v6880 = vpop.f32.mrf.mxu0
        %v6881 = vadd.f32 %v6592, %v6880
        %v6882 = vpop.f32.mrf.mxu0
        %6883 = vmatprep.mubr.bf16.mxu0 %v5157
        %6884 = vmatmul.mubr.bf16.gmra.mxu0 %v5156
        %v6885 = vpop.f32.mrf.mxu0
        %v6886 = vadd.f32 %v6597, %v6885
        %v6887 = vpop.f32.mrf.mxu0
        %v6888 = vpop.f32.mrf.mxu0
        %v6889 = vadd.f32 %v6600, %v6888
        %v6890 = vpop.f32.mrf.mxu0
        %6891 = vmatprep.mubr.bf16.mxu0 %v5173
        %6892 = vmatmul.mubr.bf16.gmra.mxu0 %v5172
        %v6893 = vpop.f32.mrf.mxu0
        %v6894 = vadd.f32 %v6605, %v6893
        %v6895 = vpop.f32.mrf.mxu0
        %v6896 = vpop.f32.mrf.mxu0
        %v6897 = vadd.f32 %v6608, %v6896
        %v6898 = vpop.f32.mrf.mxu0
        %6899 = vmatprep.mubr.bf16.mxu0 %v5189
        %6900 = vmatmul.mubr.bf16.gmra.mxu0 %v5188
        %v6901 = vpop.f32.mrf.mxu0
        %v6902 = vadd.f32 %v6613, %v6901
        %v6903 = vpop.f32.mrf.mxu0
        %v6904 = vpop.f32.mrf.mxu0
        %v6905 = vadd.f32 %v6616, %v6904
        %v6906 = vpop.f32.mrf.mxu0
        %6907 = vmatprep.mubr.bf16.mxu0 %v5205
        %6908 = vmatmul.mubr.bf16.gmra.mxu0 %v5204
        %v6909 = vpop.f32.mrf.mxu0
        %v6910 = vadd.f32 %v6621, %v6909
        %v6911 = vpop.f32.mrf.mxu0
        %v6912 = vpop.f32.mrf.mxu0
        %v6913 = vadd.f32 %v6624, %v6912
        %v6914 = vpop.f32.mrf.mxu0
        %6915 = vmatprep.mubr.bf16.mxu0 %v5221
        %6916 = vmatmul.mubr.bf16.gmra.mxu0 %v5220
        %v6917 = vpop.f32.mrf.mxu0
        %v6918 = vadd.f32 %v6629, %v6917
        %v6919 = vpop.f32.mrf.mxu0
        %v6920 = vpop.f32.mrf.mxu0
        %v6921 = vadd.f32 %v6632, %v6920
        %v6922 = vpop.f32.mrf.mxu0
        %6923 = vmatprep.mubr.bf16.mxu0 %v5237
        %6924 = vmatmul.mubr.bf16.gmra.mxu0 %v5236
        %v6925 = vpop.f32.mrf.mxu0
        %v6926 = vadd.f32 %v6637, %v6925
        %v6927 = vpop.f32.mrf.mxu0
        %v6928 = vpop.f32.mrf.mxu0
        %v6929 = vadd.f32 %v6640, %v6928
        %v6930 = vpop.f32.mrf.mxu0
        %6931 = vmatprep.mubr.bf16.mxu0 %v5253
        %6932 = vmatmul.mubr.bf16.gmra.mxu0 %v5252
        %v6933 = vpop.f32.mrf.mxu0
        %v6934 = vadd.f32 %v6645, %v6933
        %v6935 = vpop.f32.mrf.mxu0
        %v6936 = vpop.f32.mrf.mxu0
        %v6937 = vadd.f32 %v6648, %v6936
        %v6938 = vpop.f32.mrf.mxu0
        %6939 = vmatprep.mubr.bf16.mxu0 %v5269
        %6940 = vmatmul.mubr.bf16.gmra.mxu0 %v5268
        %v6941 = vpop.f32.mrf.mxu0
        %v6942 = vadd.f32 %v6653, %v6941
        %v6943 = vpop.f32.mrf.mxu0
        %v6944 = vpop.f32.mrf.mxu0
        %v6945 = vadd.f32 %v6656, %v6944
        %v6946 = vpop.f32.mrf.mxu0
        %6947 = vmatprep.mubr.bf16.mxu0 %v5285
        %6948 = vmatmul.mubr.bf16.gmra.mxu0 %v5284
        %v6949 = vpop.f32.mrf.mxu0
        %v6950 = vadd.f32 %v6661, %v6949
        %v6951 = vpop.f32.mrf.mxu0
        %v6952 = vpop.f32.mrf.mxu0
        %v6953 = vadd.f32 %v6664, %v6952
        %v6954 = vpop.f32.mrf.mxu0
        %6955 = vmatprep.mubr.bf16.mxu0 %v5301
        %6956 = vmatmul.mubr.bf16.gmra.mxu0 %v5300
        %v6957 = vpop.f32.mrf.mxu0
        %v6958 = vadd.f32 %v6669, %v6957
        %v6959 = vpop.f32.mrf.mxu0
        %v6960 = vpop.f32.mrf.mxu0
        %v6961 = vadd.f32 %v6672, %v6960
        %v6962 = vpop.f32.mrf.mxu0
        %6963 = vmatprep.mubr.bf16.mxu0 %v5317
        %6964 = vmatmul.mubr.bf16.gmra.mxu0 %v5316
        %v6965 = vpop.f32.mrf.mxu0
        %v6966 = vadd.f32 %v6677, %v6965
        %v6967 = vpop.f32.mrf.mxu0
        %v6968 = vpop.f32.mrf.mxu0
        %v6969 = vadd.f32 %v6680, %v6968
        %v6970 = vpop.f32.mrf.mxu0
        %6971 = vmatprep.mubr.bf16.mxu0 %v5333
        %6972 = vmatmul.mubr.bf16.gmra.mxu0 %v5332
        %v6973 = vpop.f32.mrf.mxu0
        %v6974 = vadd.f32 %v6685, %v6973
        %v6975 = vpop.f32.mrf.mxu0
        %v6976 = vpop.f32.mrf.mxu0
        %v6977 = vadd.f32 %v6688, %v6976
        %v6978 = vpop.f32.mrf.mxu0
        %6979 = vmatprep.mubr.bf16.mxu0 %v5349
        %6980 = vmatmul.mubr.bf16.gmra.mxu0 %v5348
        %v6981 = vpop.f32.mrf.mxu0
        %v6982 = vadd.f32 %v6693, %v6981
        %v6983 = vpop.f32.mrf.mxu0
        %v6984 = vpop.f32.mrf.mxu0
        %v6985 = vadd.f32 %v6696, %v6984
        %v6986 = vpop.f32.mrf.mxu0
        %6987 = vmatprep.mubr.bf16.mxu0 %v5365
        %6988 = vmatmul.mubr.bf16.gmra.mxu0 %v5364
        %v6989 = vpop.f32.mrf.mxu0
        %v6990 = vadd.f32 %v6701, %v6989
        %v6991 = vpop.f32.mrf.mxu0
        %v6992 = vpop.f32.mrf.mxu0
        %v6993 = vadd.f32 %v6704, %v6992
        %v6994 = vpop.f32.mrf.mxu0
        %6995 = vmatprep.mubr.bf16.mxu0 %v5381
        %6996 = vmatmul.mubr.bf16.gmra.mxu0 %v5380
        %v6997 = vpop.f32.mrf.mxu0
        %v6998 = vadd.f32 %v6709, %v6997
        %v6999 = vpop.f32.mrf.mxu0
        %v7000 = vpop.f32.mrf.mxu0
        %v7001 = vadd.f32 %v6712, %v7000
        %v7002 = vpop.f32.mrf.mxu0
        %7003 = vmatprep.mubr.bf16.mxu0 %v5397
        %7004 = vmatmul.mubr.bf16.gmra.mxu0 %v5396
        %v7005 = vpop.f32.mrf.mxu0
        %v7006 = vadd.f32 %v6717, %v7005
        %v7007 = vpop.f32.mrf.mxu0
        %v7008 = vpop.f32.mrf.mxu0
        %v7009 = vadd.f32 %v6720, %v7008
        %v7010 = vpop.f32.mrf.mxu0
        %7011 = vdwg.mxu0
        %7012 = vmatprep.subr.bf16.mxu0 0
        %7013 = vmatpush1.bf16.msra.mxu0 %v6217
        %7014 = vmatprep.subr.bf16.mxu0 0
        %7015 = vmatpush1.bf16.msra.mxu0 %v6216
        %7016 = vmatprep.subr.bf16.mxu0 0
        %7017 = vmatpush1.bf16.msra.mxu0 %v6215
        %7018 = vmatprep.subr.bf16.mxu0 0
        %7019 = vmatpush1.bf16.msra.mxu0 %v6214
        %7020 = vmatprep.subr.bf16.mxu0 0
        %7021 = vmatpush1.bf16.msra.mxu0 %v6213
        %7022 = vmatprep.subr.bf16.mxu0 0
        %7023 = vmatpush1.bf16.msra.mxu0 %v6212
        %7024 = vmatprep.subr.bf16.mxu0 0
        %7025 = vmatpush1.bf16.msra.mxu0 %v6211
        %7026 = vmatprep.subr.bf16.mxu0 0
        %7027 = vmatpush1.bf16.msra.mxu0 %v6210
        %7028 = vmatprep.subr.bf16.mxu0 0
        %7029 = vmatpush2.bf16.msra.mxu0 %v6225
        %7030 = vmatprep.subr.bf16.mxu0 0
        %7031 = vmatpush2.bf16.msra.mxu0 %v6224
        %7032 = vmatprep.subr.bf16.mxu0 0
        %7033 = vmatpush2.bf16.msra.mxu0 %v6223
        %7034 = vmatprep.subr.bf16.mxu0 0
        %7035 = vmatpush2.bf16.msra.mxu0 %v6222
        %7036 = vmatprep.subr.bf16.mxu0 0
        %7037 = vmatpush2.bf16.msra.mxu0 %v6221
        %7038 = vmatprep.subr.bf16.mxu0 0
        %7039 = vmatpush2.bf16.msra.mxu0 %v6220
        %7040 = vmatprep.subr.bf16.mxu0 0
        %7041 = vmatpush2.bf16.msra.mxu0 %v6219
        %7042 = vmatprep.subr.bf16.mxu0 0
        %7043 = vmatpush2.bf16.msra.mxu0 %v6218
        %7044 = vmatprep.mubr.bf16.mxu0 %v4903
        %7045 = vmatmul.mubr.bf16.gmra.mxu0 %v4902
        %v7046 = vpop.f32.mrf.mxu0
        %v7047 = vadd.f32 %v6758, %v7046
        %v7048 = vpop.f32.mrf.mxu0
        %v7049 = vpop.f32.mrf.mxu0
        %v7050 = vadd.f32 %v6761, %v7049
        %v7051 = vpop.f32.mrf.mxu0
        %7052 = vmatprep.mubr.bf16.mxu0 %v4919
        %7053 = vmatmul.mubr.bf16.gmra.mxu0 %v4918
        %v7054 = vpop.f32.mrf.mxu0
        %v7055 = vadd.f32 %v6766, %v7054
        %v7056 = vpop.f32.mrf.mxu0
        %v7057 = vpop.f32.mrf.mxu0
        %v7058 = vadd.f32 %v6769, %v7057
        %v7059 = vpop.f32.mrf.mxu0
        %7060 = vmatprep.mubr.bf16.mxu0 %v4935
        %7061 = vmatmul.mubr.bf16.gmra.mxu0 %v4934
        %v7062 = vpop.f32.mrf.mxu0
        %v7063 = vadd.f32 %v6774, %v7062
        %v7064 = vpop.f32.mrf.mxu0
        %v7065 = vpop.f32.mrf.mxu0
        %v7066 = vadd.f32 %v6777, %v7065
        %v7067 = vpop.f32.mrf.mxu0
        %7068 = vmatprep.mubr.bf16.mxu0 %v4951
        %7069 = vmatmul.mubr.bf16.gmra.mxu0 %v4950
        %v7070 = vpop.f32.mrf.mxu0
        %v7071 = vadd.f32 %v6782, %v7070
        %v7072 = vpop.f32.mrf.mxu0
        %v7073 = vpop.f32.mrf.mxu0
        %v7074 = vadd.f32 %v6785, %v7073
        %v7075 = vpop.f32.mrf.mxu0
        %7076 = vmatprep.mubr.bf16.mxu0 %v4967
        %7077 = vmatmul.mubr.bf16.gmra.mxu0 %v4966
        %v7078 = vpop.f32.mrf.mxu0
        %v7079 = vadd.f32 %v6790, %v7078
        %v7080 = vpop.f32.mrf.mxu0
        %v7081 = vpop.f32.mrf.mxu0
        %v7082 = vadd.f32 %v6793, %v7081
        %v7083 = vpop.f32.mrf.mxu0
        %7084 = vmatprep.mubr.bf16.mxu0 %v4983
        %7085 = vmatmul.mubr.bf16.gmra.mxu0 %v4982
        %v7086 = vpop.f32.mrf.mxu0
        %v7087 = vadd.f32 %v6798, %v7086
        %v7088 = vpop.f32.mrf.mxu0
        %v7089 = vpop.f32.mrf.mxu0
        %v7090 = vadd.f32 %v6801, %v7089
        %v7091 = vpop.f32.mrf.mxu0
        %7092 = vmatprep.mubr.bf16.mxu0 %v4999
        %7093 = vmatmul.mubr.bf16.gmra.mxu0 %v4998
        %v7094 = vpop.f32.mrf.mxu0
        %v7095 = vadd.f32 %v6806, %v7094
        %v7096 = vpop.f32.mrf.mxu0
        %v7097 = vpop.f32.mrf.mxu0
        %v7098 = vadd.f32 %v6809, %v7097
        %v7099 = vpop.f32.mrf.mxu0
        %7100 = vmatprep.mubr.bf16.mxu0 %v5015
        %7101 = vmatmul.mubr.bf16.gmra.mxu0 %v5014
        %v7102 = vpop.f32.mrf.mxu0
        %v7103 = vadd.f32 %v6814, %v7102
        %v7104 = vpop.f32.mrf.mxu0
        %v7105 = vpop.f32.mrf.mxu0
        %v7106 = vadd.f32 %v6817, %v7105
        %v7107 = vpop.f32.mrf.mxu0
        %7108 = vmatprep.mubr.bf16.mxu0 %v5031
        %7109 = vmatmul.mubr.bf16.gmra.mxu0 %v5030
        %v7110 = vpop.f32.mrf.mxu0
        %v7111 = vadd.f32 %v6822, %v7110
        %v7112 = vpop.f32.mrf.mxu0
        %v7113 = vpop.f32.mrf.mxu0
        %v7114 = vadd.f32 %v6825, %v7113
        %v7115 = vpop.f32.mrf.mxu0
        %7116 = vmatprep.mubr.bf16.mxu0 %v5047
        %7117 = vmatmul.mubr.bf16.gmra.mxu0 %v5046
        %v7118 = vpop.f32.mrf.mxu0
        %v7119 = vadd.f32 %v6830, %v7118
        %v7120 = vpop.f32.mrf.mxu0
        %v7121 = vpop.f32.mrf.mxu0
        %v7122 = vadd.f32 %v6833, %v7121
        %v7123 = vpop.f32.mrf.mxu0
        %7124 = vmatprep.mubr.bf16.mxu0 %v5063
        %7125 = vmatmul.mubr.bf16.gmra.mxu0 %v5062
        %v7126 = vpop.f32.mrf.mxu0
        %v7127 = vadd.f32 %v6838, %v7126
        %v7128 = vpop.f32.mrf.mxu0
        %v7129 = vpop.f32.mrf.mxu0
        %v7130 = vadd.f32 %v6841, %v7129
        %v7131 = vpop.f32.mrf.mxu0
        %7132 = vmatprep.mubr.bf16.mxu0 %v5079
        %7133 = vmatmul.mubr.bf16.gmra.mxu0 %v5078
        %v7134 = vpop.f32.mrf.mxu0
        %v7135 = vadd.f32 %v6846, %v7134
        %v7136 = vpop.f32.mrf.mxu0
        %v7137 = vpop.f32.mrf.mxu0
        %v7138 = vadd.f32 %v6849, %v7137
        %v7139 = vpop.f32.mrf.mxu0
        %7140 = vmatprep.mubr.bf16.mxu0 %v5095
        %7141 = vmatmul.mubr.bf16.gmra.mxu0 %v5094
        %v7142 = vpop.f32.mrf.mxu0
        %v7143 = vadd.f32 %v6854, %v7142
        %v7144 = vpop.f32.mrf.mxu0
        %v7145 = vpop.f32.mrf.mxu0
        %v7146 = vadd.f32 %v6857, %v7145
        %v7147 = vpop.f32.mrf.mxu0
        %7148 = vmatprep.mubr.bf16.mxu0 %v5111
        %7149 = vmatmul.mubr.bf16.gmra.mxu0 %v5110
        %v7150 = vpop.f32.mrf.mxu0
        %v7151 = vadd.f32 %v6862, %v7150
        %v7152 = vpop.f32.mrf.mxu0
        %v7153 = vpop.f32.mrf.mxu0
        %v7154 = vadd.f32 %v6865, %v7153
        %v7155 = vpop.f32.mrf.mxu0
        %7156 = vmatprep.mubr.bf16.mxu0 %v5127
        %7157 = vmatmul.mubr.bf16.gmra.mxu0 %v5126
        %v7158 = vpop.f32.mrf.mxu0
        %v7159 = vadd.f32 %v6870, %v7158
        %v7160 = vpop.f32.mrf.mxu0
        %v7161 = vpop.f32.mrf.mxu0
        %v7162 = vadd.f32 %v6873, %v7161
        %v7163 = vpop.f32.mrf.mxu0
        %7164 = vmatprep.mubr.bf16.mxu0 %v5143
        %7165 = vmatmul.mubr.bf16.gmra.mxu0 %v5142
        %v7166 = vpop.f32.mrf.mxu0
        %v7167 = vadd.f32 %v6878, %v7166
        %v7168 = vpop.f32.mrf.mxu0
        %v7169 = vpop.f32.mrf.mxu0
        %v7170 = vadd.f32 %v6881, %v7169
        %v7171 = vpop.f32.mrf.mxu0
        %7172 = vmatprep.mubr.bf16.mxu0 %v5159
        %7173 = vmatmul.mubr.bf16.gmra.mxu0 %v5158
        %v7174 = vpop.f32.mrf.mxu0
        %v7175 = vadd.f32 %v6886, %v7174
        %v7176 = vpop.f32.mrf.mxu0
        %v7177 = vpop.f32.mrf.mxu0
        %v7178 = vadd.f32 %v6889, %v7177
        %v7179 = vpop.f32.mrf.mxu0
        %7180 = vmatprep.mubr.bf16.mxu0 %v5175
        %7181 = vmatmul.mubr.bf16.gmra.mxu0 %v5174
        %v7182 = vpop.f32.mrf.mxu0
        %v7183 = vadd.f32 %v6894, %v7182
        %v7184 = vpop.f32.mrf.mxu0
        %v7185 = vpop.f32.mrf.mxu0
        %v7186 = vadd.f32 %v6897, %v7185
        %v7187 = vpop.f32.mrf.mxu0
        %7188 = vmatprep.mubr.bf16.mxu0 %v5191
        %7189 = vmatmul.mubr.bf16.gmra.mxu0 %v5190
        %v7190 = vpop.f32.mrf.mxu0
        %v7191 = vadd.f32 %v6902, %v7190
        %v7192 = vpop.f32.mrf.mxu0
        %v7193 = vpop.f32.mrf.mxu0
        %v7194 = vadd.f32 %v6905, %v7193
        %v7195 = vpop.f32.mrf.mxu0
        %7196 = vmatprep.mubr.bf16.mxu0 %v5207
        %7197 = vmatmul.mubr.bf16.gmra.mxu0 %v5206
        %v7198 = vpop.f32.mrf.mxu0
        %v7199 = vadd.f32 %v6910, %v7198
        %v7200 = vpop.f32.mrf.mxu0
        %v7201 = vpop.f32.mrf.mxu0
        %v7202 = vadd.f32 %v6913, %v7201
        %v7203 = vpop.f32.mrf.mxu0
        %7204 = vmatprep.mubr.bf16.mxu0 %v5223
        %7205 = vmatmul.mubr.bf16.gmra.mxu0 %v5222
        %v7206 = vpop.f32.mrf.mxu0
        %v7207 = vadd.f32 %v6918, %v7206
        %v7208 = vpop.f32.mrf.mxu0
        %v7209 = vpop.f32.mrf.mxu0
        %v7210 = vadd.f32 %v6921, %v7209
        %v7211 = vpop.f32.mrf.mxu0
        %7212 = vmatprep.mubr.bf16.mxu0 %v5239
        %7213 = vmatmul.mubr.bf16.gmra.mxu0 %v5238
        %v7214 = vpop.f32.mrf.mxu0
        %v7215 = vadd.f32 %v6926, %v7214
        %v7216 = vpop.f32.mrf.mxu0
        %v7217 = vpop.f32.mrf.mxu0
        %v7218 = vadd.f32 %v6929, %v7217
        %v7219 = vpop.f32.mrf.mxu0
        %7220 = vmatprep.mubr.bf16.mxu0 %v5255
        %7221 = vmatmul.mubr.bf16.gmra.mxu0 %v5254
        %v7222 = vpop.f32.mrf.mxu0
        %v7223 = vadd.f32 %v6934, %v7222
        %v7224 = vpop.f32.mrf.mxu0
        %v7225 = vpop.f32.mrf.mxu0
        %v7226 = vadd.f32 %v6937, %v7225
        %v7227 = vpop.f32.mrf.mxu0
        %7228 = vmatprep.mubr.bf16.mxu0 %v5271
        %7229 = vmatmul.mubr.bf16.gmra.mxu0 %v5270
        %v7230 = vpop.f32.mrf.mxu0
        %v7231 = vadd.f32 %v6942, %v7230
        %v7232 = vpop.f32.mrf.mxu0
        %v7233 = vpop.f32.mrf.mxu0
        %v7234 = vadd.f32 %v6945, %v7233
        %v7235 = vpop.f32.mrf.mxu0
        %7236 = vmatprep.mubr.bf16.mxu0 %v5287
        %7237 = vmatmul.mubr.bf16.gmra.mxu0 %v5286
        %v7238 = vpop.f32.mrf.mxu0
        %v7239 = vadd.f32 %v6950, %v7238
        %v7240 = vpop.f32.mrf.mxu0
        %v7241 = vpop.f32.mrf.mxu0
        %v7242 = vadd.f32 %v6953, %v7241
        %v7243 = vpop.f32.mrf.mxu0
        %7244 = vmatprep.mubr.bf16.mxu0 %v5303
        %7245 = vmatmul.mubr.bf16.gmra.mxu0 %v5302
        %v7246 = vpop.f32.mrf.mxu0
        %v7247 = vadd.f32 %v6958, %v7246
        %v7248 = vpop.f32.mrf.mxu0
        %v7249 = vpop.f32.mrf.mxu0
        %v7250 = vadd.f32 %v6961, %v7249
        %v7251 = vpop.f32.mrf.mxu0
        %7252 = vmatprep.mubr.bf16.mxu0 %v5319
        %7253 = vmatmul.mubr.bf16.gmra.mxu0 %v5318
        %v7254 = vpop.f32.mrf.mxu0
        %v7255 = vadd.f32 %v6966, %v7254
        %v7256 = vpop.f32.mrf.mxu0
        %v7257 = vpop.f32.mrf.mxu0
        %v7258 = vadd.f32 %v6969, %v7257
        %v7259 = vpop.f32.mrf.mxu0
        %7260 = vmatprep.mubr.bf16.mxu0 %v5335
        %7261 = vmatmul.mubr.bf16.gmra.mxu0 %v5334
        %v7262 = vpop.f32.mrf.mxu0
        %v7263 = vadd.f32 %v6974, %v7262
        %v7264 = vpop.f32.mrf.mxu0
        %v7265 = vpop.f32.mrf.mxu0
        %v7266 = vadd.f32 %v6977, %v7265
        %v7267 = vpop.f32.mrf.mxu0
        %7268 = vmatprep.mubr.bf16.mxu0 %v5351
        %7269 = vmatmul.mubr.bf16.gmra.mxu0 %v5350
        %v7270 = vpop.f32.mrf.mxu0
        %v7271 = vadd.f32 %v6982, %v7270
        %v7272 = vpop.f32.mrf.mxu0
        %v7273 = vpop.f32.mrf.mxu0
        %v7274 = vadd.f32 %v6985, %v7273
        %v7275 = vpop.f32.mrf.mxu0
        %7276 = vmatprep.mubr.bf16.mxu0 %v5367
        %7277 = vmatmul.mubr.bf16.gmra.mxu0 %v5366
        %v7278 = vpop.f32.mrf.mxu0
        %v7279 = vadd.f32 %v6990, %v7278
        %v7280 = vpop.f32.mrf.mxu0
        %v7281 = vpop.f32.mrf.mxu0
        %v7282 = vadd.f32 %v6993, %v7281
        %v7283 = vpop.f32.mrf.mxu0
        %7284 = vmatprep.mubr.bf16.mxu0 %v5383
        %7285 = vmatmul.mubr.bf16.gmra.mxu0 %v5382
        %v7286 = vpop.f32.mrf.mxu0
        %v7287 = vadd.f32 %v6998, %v7286
        %v7288 = vpop.f32.mrf.mxu0
        %v7289 = vpop.f32.mrf.mxu0
        %v7290 = vadd.f32 %v7001, %v7289
        %v7291 = vpop.f32.mrf.mxu0
        %7292 = vmatprep.mubr.bf16.mxu0 %v5399
        %7293 = vmatmul.mubr.bf16.gmra.mxu0 %v5398
        %v7294 = vpop.f32.mrf.mxu0
        %v7295 = vadd.f32 %v7006, %v7294
        %v7296 = vpop.f32.mrf.mxu0
        %v7297 = vpop.f32.mrf.mxu0
        %v7298 = vadd.f32 %v7009, %v7297
        %v7299 = vpop.f32.mrf.mxu0
        %7300 = vdwg.mxu0
        %7301 = vmatprep.subr.bf16.mxu0 0
        %7302 = vmatpush1.bf16.msra.mxu0 %v6233
        %7303 = vmatprep.subr.bf16.mxu0 0
        %7304 = vmatpush1.bf16.msra.mxu0 %v6232
        %7305 = vmatprep.subr.bf16.mxu0 0
        %7306 = vmatpush1.bf16.msra.mxu0 %v6231
        %7307 = vmatprep.subr.bf16.mxu0 0
        %7308 = vmatpush1.bf16.msra.mxu0 %v6230
        %7309 = vmatprep.subr.bf16.mxu0 0
        %7310 = vmatpush1.bf16.msra.mxu0 %v6229
        %7311 = vmatprep.subr.bf16.mxu0 0
        %7312 = vmatpush1.bf16.msra.mxu0 %v6228
        %7313 = vmatprep.subr.bf16.mxu0 0
        %7314 = vmatpush1.bf16.msra.mxu0 %v6227
        %7315 = vmatprep.subr.bf16.mxu0 0
        %7316 = vmatpush1.bf16.msra.mxu0 %v6226
        %7317 = vmatprep.subr.bf16.mxu0 0
        %7318 = vmatpush2.bf16.msra.mxu0 %v6241
        %7319 = vmatprep.subr.bf16.mxu0 0
        %7320 = vmatpush2.bf16.msra.mxu0 %v6240
        %7321 = vmatprep.subr.bf16.mxu0 0
        %7322 = vmatpush2.bf16.msra.mxu0 %v6239
        %7323 = vmatprep.subr.bf16.mxu0 0
        %7324 = vmatpush2.bf16.msra.mxu0 %v6238
        %7325 = vmatprep.subr.bf16.mxu0 0
        %7326 = vmatpush2.bf16.msra.mxu0 %v6237
        %7327 = vmatprep.subr.bf16.mxu0 0
        %7328 = vmatpush2.bf16.msra.mxu0 %v6236
        %7329 = vmatprep.subr.bf16.mxu0 0
        %7330 = vmatpush2.bf16.msra.mxu0 %v6235
        %7331 = vmatprep.subr.bf16.mxu0 0
        %7332 = vmatpush2.bf16.msra.mxu0 %v6234
        %7333 = vmatprep.mubr.bf16.mxu0 %v4905
        %7334 = vmatmul.mubr.bf16.gmra.mxu0 %v4904
        %v7335 = vpop.f32.mrf.mxu0
        %v7336 = vadd.f32 %v7047, %v7335
        %v7337 = vpop.f32.mrf.mxu0
        %v7338 = vpop.f32.mrf.mxu0
        %v7339 = vadd.f32 %v7050, %v7338
        %v7340 = vpop.f32.mrf.mxu0
        %7341 = vmatprep.mubr.bf16.mxu0 %v4921
        %7342 = vmatmul.mubr.bf16.gmra.mxu0 %v4920
        %v7343 = vpop.f32.mrf.mxu0
        %v7344 = vadd.f32 %v7055, %v7343
        %v7345 = vpop.f32.mrf.mxu0
        %v7346 = vpop.f32.mrf.mxu0
        %v7347 = vadd.f32 %v7058, %v7346
        %v7348 = vpop.f32.mrf.mxu0
        %7349 = vmatprep.mubr.bf16.mxu0 %v4937
        %7350 = vmatmul.mubr.bf16.gmra.mxu0 %v4936
        %v7351 = vpop.f32.mrf.mxu0
        %v7352 = vadd.f32 %v7063, %v7351
        %v7353 = vpop.f32.mrf.mxu0
        %v7354 = vpop.f32.mrf.mxu0
        %v7355 = vadd.f32 %v7066, %v7354
        %v7356 = vpop.f32.mrf.mxu0
        %7357 = vmatprep.mubr.bf16.mxu0 %v4953
        %7358 = vmatmul.mubr.bf16.gmra.mxu0 %v4952
        %v7359 = vpop.f32.mrf.mxu0
        %v7360 = vadd.f32 %v7071, %v7359
        %v7361 = vpop.f32.mrf.mxu0
        %v7362 = vpop.f32.mrf.mxu0
        %v7363 = vadd.f32 %v7074, %v7362
        %v7364 = vpop.f32.mrf.mxu0
        %7365 = vmatprep.mubr.bf16.mxu0 %v4969
        %7366 = vmatmul.mubr.bf16.gmra.mxu0 %v4968
        %v7367 = vpop.f32.mrf.mxu0
        %v7368 = vadd.f32 %v7079, %v7367
        %v7369 = vpop.f32.mrf.mxu0
        %v7370 = vpop.f32.mrf.mxu0
        %v7371 = vadd.f32 %v7082, %v7370
        %v7372 = vpop.f32.mrf.mxu0
        %7373 = vmatprep.mubr.bf16.mxu0 %v4985
        %7374 = vmatmul.mubr.bf16.gmra.mxu0 %v4984
        %v7375 = vpop.f32.mrf.mxu0
        %v7376 = vadd.f32 %v7087, %v7375
        %v7377 = vpop.f32.mrf.mxu0
        %v7378 = vpop.f32.mrf.mxu0
        %v7379 = vadd.f32 %v7090, %v7378
        %v7380 = vpop.f32.mrf.mxu0
        %7381 = vmatprep.mubr.bf16.mxu0 %v5001
        %7382 = vmatmul.mubr.bf16.gmra.mxu0 %v5000
        %v7383 = vpop.f32.mrf.mxu0
        %v7384 = vadd.f32 %v7095, %v7383
        %v7385 = vpop.f32.mrf.mxu0
        %v7386 = vpop.f32.mrf.mxu0
        %v7387 = vadd.f32 %v7098, %v7386
        %v7388 = vpop.f32.mrf.mxu0
        %7389 = vmatprep.mubr.bf16.mxu0 %v5017
        %7390 = vmatmul.mubr.bf16.gmra.mxu0 %v5016
        %v7391 = vpop.f32.mrf.mxu0
        %v7392 = vadd.f32 %v7103, %v7391
        %v7393 = vpop.f32.mrf.mxu0
        %v7394 = vpop.f32.mrf.mxu0
        %v7395 = vadd.f32 %v7106, %v7394
        %v7396 = vpop.f32.mrf.mxu0
        %7397 = vmatprep.mubr.bf16.mxu0 %v5033
        %7398 = vmatmul.mubr.bf16.gmra.mxu0 %v5032
        %v7399 = vpop.f32.mrf.mxu0
        %v7400 = vadd.f32 %v7111, %v7399
        %v7401 = vpop.f32.mrf.mxu0
        %v7402 = vpop.f32.mrf.mxu0
        %v7403 = vadd.f32 %v7114, %v7402
        %v7404 = vpop.f32.mrf.mxu0
        %7405 = vmatprep.mubr.bf16.mxu0 %v5049
        %7406 = vmatmul.mubr.bf16.gmra.mxu0 %v5048
        %v7407 = vpop.f32.mrf.mxu0
        %v7408 = vadd.f32 %v7119, %v7407
        %v7409 = vpop.f32.mrf.mxu0
        %v7410 = vpop.f32.mrf.mxu0
        %v7411 = vadd.f32 %v7122, %v7410
        %v7412 = vpop.f32.mrf.mxu0
        %7413 = vmatprep.mubr.bf16.mxu0 %v5065
        %7414 = vmatmul.mubr.bf16.gmra.mxu0 %v5064
        %v7415 = vpop.f32.mrf.mxu0
        %v7416 = vadd.f32 %v7127, %v7415
        %v7417 = vpop.f32.mrf.mxu0
        %v7418 = vpop.f32.mrf.mxu0
        %v7419 = vadd.f32 %v7130, %v7418
        %v7420 = vpop.f32.mrf.mxu0
        %7421 = vmatprep.mubr.bf16.mxu0 %v5081
        %7422 = vmatmul.mubr.bf16.gmra.mxu0 %v5080
        %v7423 = vpop.f32.mrf.mxu0
        %v7424 = vadd.f32 %v7135, %v7423
        %v7425 = vpop.f32.mrf.mxu0
        %v7426 = vpop.f32.mrf.mxu0
        %v7427 = vadd.f32 %v7138, %v7426
        %v7428 = vpop.f32.mrf.mxu0
        %7429 = vmatprep.mubr.bf16.mxu0 %v5097
        %7430 = vmatmul.mubr.bf16.gmra.mxu0 %v5096
        %v7431 = vpop.f32.mrf.mxu0
        %v7432 = vadd.f32 %v7143, %v7431
        %v7433 = vpop.f32.mrf.mxu0
        %v7434 = vpop.f32.mrf.mxu0
        %v7435 = vadd.f32 %v7146, %v7434
        %v7436 = vpop.f32.mrf.mxu0
        %7437 = vmatprep.mubr.bf16.mxu0 %v5113
        %7438 = vmatmul.mubr.bf16.gmra.mxu0 %v5112
        %v7439 = vpop.f32.mrf.mxu0
        %v7440 = vadd.f32 %v7151, %v7439
        %v7441 = vpop.f32.mrf.mxu0
        %v7442 = vpop.f32.mrf.mxu0
        %v7443 = vadd.f32 %v7154, %v7442
        %v7444 = vpop.f32.mrf.mxu0
        %7445 = vmatprep.mubr.bf16.mxu0 %v5129
        %7446 = vmatmul.mubr.bf16.gmra.mxu0 %v5128
        %v7447 = vpop.f32.mrf.mxu0
        %v7448 = vadd.f32 %v7159, %v7447
        %v7449 = vpop.f32.mrf.mxu0
        %v7450 = vpop.f32.mrf.mxu0
        %v7451 = vadd.f32 %v7162, %v7450
        %v7452 = vpop.f32.mrf.mxu0
        %7453 = vmatprep.mubr.bf16.mxu0 %v5145
        %7454 = vmatmul.mubr.bf16.gmra.mxu0 %v5144
        %v7455 = vpop.f32.mrf.mxu0
        %v7456 = vadd.f32 %v7167, %v7455
        %v7457 = vpop.f32.mrf.mxu0
        %v7458 = vpop.f32.mrf.mxu0
        %v7459 = vadd.f32 %v7170, %v7458
        %v7460 = vpop.f32.mrf.mxu0
        %7461 = vmatprep.mubr.bf16.mxu0 %v5161
        %7462 = vmatmul.mubr.bf16.gmra.mxu0 %v5160
        %v7463 = vpop.f32.mrf.mxu0
        %v7464 = vadd.f32 %v7175, %v7463
        %v7465 = vpop.f32.mrf.mxu0
        %v7466 = vpop.f32.mrf.mxu0
        %v7467 = vadd.f32 %v7178, %v7466
        %v7468 = vpop.f32.mrf.mxu0
        %7469 = vmatprep.mubr.bf16.mxu0 %v5177
        %7470 = vmatmul.mubr.bf16.gmra.mxu0 %v5176
        %v7471 = vpop.f32.mrf.mxu0
        %v7472 = vadd.f32 %v7183, %v7471
        %v7473 = vpop.f32.mrf.mxu0
        %v7474 = vpop.f32.mrf.mxu0
        %v7475 = vadd.f32 %v7186, %v7474
        %v7476 = vpop.f32.mrf.mxu0
        %7477 = vmatprep.mubr.bf16.mxu0 %v5193
        %7478 = vmatmul.mubr.bf16.gmra.mxu0 %v5192
        %v7479 = vpop.f32.mrf.mxu0
        %v7480 = vadd.f32 %v7191, %v7479
        %v7481 = vpop.f32.mrf.mxu0
        %v7482 = vpop.f32.mrf.mxu0
        %v7483 = vadd.f32 %v7194, %v7482
        %v7484 = vpop.f32.mrf.mxu0
        %7485 = vmatprep.mubr.bf16.mxu0 %v5209
        %7486 = vmatmul.mubr.bf16.gmra.mxu0 %v5208
        %v7487 = vpop.f32.mrf.mxu0
        %v7488 = vadd.f32 %v7199, %v7487
        %v7489 = vpop.f32.mrf.mxu0
        %v7490 = vpop.f32.mrf.mxu0
        %v7491 = vadd.f32 %v7202, %v7490
        %v7492 = vpop.f32.mrf.mxu0
        %7493 = vmatprep.mubr.bf16.mxu0 %v5225
        %7494 = vmatmul.mubr.bf16.gmra.mxu0 %v5224
        %v7495 = vpop.f32.mrf.mxu0
        %v7496 = vadd.f32 %v7207, %v7495
        %v7497 = vpop.f32.mrf.mxu0
        %v7498 = vpop.f32.mrf.mxu0
        %v7499 = vadd.f32 %v7210, %v7498
        %v7500 = vpop.f32.mrf.mxu0
        %7501 = vmatprep.mubr.bf16.mxu0 %v5241
        %7502 = vmatmul.mubr.bf16.gmra.mxu0 %v5240
        %v7503 = vpop.f32.mrf.mxu0
        %v7504 = vadd.f32 %v7215, %v7503
        %v7505 = vpop.f32.mrf.mxu0
        %v7506 = vpop.f32.mrf.mxu0
        %v7507 = vadd.f32 %v7218, %v7506
        %v7508 = vpop.f32.mrf.mxu0
        %7509 = vmatprep.mubr.bf16.mxu0 %v5257
        %7510 = vmatmul.mubr.bf16.gmra.mxu0 %v5256
        %v7511 = vpop.f32.mrf.mxu0
        %v7512 = vadd.f32 %v7223, %v7511
        %v7513 = vpop.f32.mrf.mxu0
        %v7514 = vpop.f32.mrf.mxu0
        %v7515 = vadd.f32 %v7226, %v7514
        %v7516 = vpop.f32.mrf.mxu0
        %7517 = vmatprep.mubr.bf16.mxu0 %v5273
        %7518 = vmatmul.mubr.bf16.gmra.mxu0 %v5272
        %v7519 = vpop.f32.mrf.mxu0
        %v7520 = vadd.f32 %v7231, %v7519
        %v7521 = vpop.f32.mrf.mxu0
        %v7522 = vpop.f32.mrf.mxu0
        %v7523 = vadd.f32 %v7234, %v7522
        %v7524 = vpop.f32.mrf.mxu0
        %7525 = vmatprep.mubr.bf16.mxu0 %v5289
        %7526 = vmatmul.mubr.bf16.gmra.mxu0 %v5288
        %v7527 = vpop.f32.mrf.mxu0
        %v7528 = vadd.f32 %v7239, %v7527
        %v7529 = vpop.f32.mrf.mxu0
        %v7530 = vpop.f32.mrf.mxu0
        %v7531 = vadd.f32 %v7242, %v7530
        %v7532 = vpop.f32.mrf.mxu0
        %7533 = vmatprep.mubr.bf16.mxu0 %v5305
        %7534 = vmatmul.mubr.bf16.gmra.mxu0 %v5304
        %v7535 = vpop.f32.mrf.mxu0
        %v7536 = vadd.f32 %v7247, %v7535
        %v7537 = vpop.f32.mrf.mxu0
        %v7538 = vpop.f32.mrf.mxu0
        %v7539 = vadd.f32 %v7250, %v7538
        %v7540 = vpop.f32.mrf.mxu0
        %7541 = vmatprep.mubr.bf16.mxu0 %v5321
        %7542 = vmatmul.mubr.bf16.gmra.mxu0 %v5320
        %v7543 = vpop.f32.mrf.mxu0
        %v7544 = vadd.f32 %v7255, %v7543
        %v7545 = vpop.f32.mrf.mxu0
        %v7546 = vpop.f32.mrf.mxu0
        %v7547 = vadd.f32 %v7258, %v7546
        %v7548 = vpop.f32.mrf.mxu0
        %7549 = vmatprep.mubr.bf16.mxu0 %v5337
        %7550 = vmatmul.mubr.bf16.gmra.mxu0 %v5336
        %v7551 = vpop.f32.mrf.mxu0
        %v7552 = vadd.f32 %v7263, %v7551
        %v7553 = vpop.f32.mrf.mxu0
        %v7554 = vpop.f32.mrf.mxu0
        %v7555 = vadd.f32 %v7266, %v7554
        %v7556 = vpop.f32.mrf.mxu0
        %7557 = vmatprep.mubr.bf16.mxu0 %v5353
        %7558 = vmatmul.mubr.bf16.gmra.mxu0 %v5352
        %v7559 = vpop.f32.mrf.mxu0
        %v7560 = vadd.f32 %v7271, %v7559
        %v7561 = vpop.f32.mrf.mxu0
        %v7562 = vpop.f32.mrf.mxu0
        %v7563 = vadd.f32 %v7274, %v7562
        %v7564 = vpop.f32.mrf.mxu0
        %7565 = vmatprep.mubr.bf16.mxu0 %v5369
        %7566 = vmatmul.mubr.bf16.gmra.mxu0 %v5368
        %v7567 = vpop.f32.mrf.mxu0
        %v7568 = vadd.f32 %v7279, %v7567
        %v7569 = vpop.f32.mrf.mxu0
        %v7570 = vpop.f32.mrf.mxu0
        %v7571 = vadd.f32 %v7282, %v7570
        %v7572 = vpop.f32.mrf.mxu0
        %7573 = vmatprep.mubr.bf16.mxu0 %v5385
        %7574 = vmatmul.mubr.bf16.gmra.mxu0 %v5384
        %v7575 = vpop.f32.mrf.mxu0
        %v7576 = vadd.f32 %v7287, %v7575
        %v7577 = vpop.f32.mrf.mxu0
        %v7578 = vpop.f32.mrf.mxu0
        %v7579 = vadd.f32 %v7290, %v7578
        %v7580 = vpop.f32.mrf.mxu0
        %7581 = vmatprep.mubr.bf16.mxu0 %v5401
        %7582 = vmatmul.mubr.bf16.gmra.mxu0 %v5400
        %v7583 = vpop.f32.mrf.mxu0
        %v7584 = vadd.f32 %v7295, %v7583
        %v7585 = vpop.f32.mrf.mxu0
        %v7586 = vpop.f32.mrf.mxu0
        %v7587 = vadd.f32 %v7298, %v7586
        %v7588 = vpop.f32.mrf.mxu0
        %7589 = vdwg.mxu0
        %7590 = vmatprep.subr.bf16.mxu0 0
        %7591 = vmatpush1.bf16.msra.mxu0 %v6249
        %7592 = vmatprep.subr.bf16.mxu0 0
        %7593 = vmatpush1.bf16.msra.mxu0 %v6248
        %7594 = vmatprep.subr.bf16.mxu0 0
        %7595 = vmatpush1.bf16.msra.mxu0 %v6247
        %7596 = vmatprep.subr.bf16.mxu0 0
        %7597 = vmatpush1.bf16.msra.mxu0 %v6246
        %7598 = vmatprep.subr.bf16.mxu0 0
        %7599 = vmatpush1.bf16.msra.mxu0 %v6245
        %7600 = vmatprep.subr.bf16.mxu0 0
        %7601 = vmatpush1.bf16.msra.mxu0 %v6244
        %7602 = vmatprep.subr.bf16.mxu0 0
        %7603 = vmatpush1.bf16.msra.mxu0 %v6243
        %7604 = vmatprep.subr.bf16.mxu0 0
        %7605 = vmatpush1.bf16.msra.mxu0 %v6242
        %7606 = vmatprep.subr.bf16.mxu0 0
        %7607 = vmatpush2.bf16.msra.mxu0 %v6257
        %7608 = vmatprep.subr.bf16.mxu0 0
        %7609 = vmatpush2.bf16.msra.mxu0 %v6256
        %7610 = vmatprep.subr.bf16.mxu0 0
        %7611 = vmatpush2.bf16.msra.mxu0 %v6255
        %7612 = vmatprep.subr.bf16.mxu0 0
        %7613 = vmatpush2.bf16.msra.mxu0 %v6254
        %7614 = vmatprep.subr.bf16.mxu0 0
        %7615 = vmatpush2.bf16.msra.mxu0 %v6253
        %7616 = vmatprep.subr.bf16.mxu0 0
        %7617 = vmatpush2.bf16.msra.mxu0 %v6252
        %7618 = vmatprep.subr.bf16.mxu0 0
        %7619 = vmatpush2.bf16.msra.mxu0 %v6251
        %7620 = vmatprep.subr.bf16.mxu0 0
        %7621 = vmatpush2.bf16.msra.mxu0 %v6250
        %7622 = vmatprep.mubr.bf16.mxu0 %v4907
        %7623 = vmatmul.mubr.bf16.gmra.mxu0 %v4906
        %v7624 = vpop.f32.mrf.mxu0
        %v7625 = vadd.f32 %v7336, %v7624
        %v7626 = vpop.f32.mrf.mxu0
        %v7627 = vpop.f32.mrf.mxu0
        %v7628 = vadd.f32 %v7339, %v7627
        %v7629 = vpop.f32.mrf.mxu0
        %7630 = vmatprep.mubr.bf16.mxu0 %v4923
        %7631 = vmatmul.mubr.bf16.gmra.mxu0 %v4922
        %v7632 = vpop.f32.mrf.mxu0
        %v7633 = vadd.f32 %v7344, %v7632
        %v7634 = vpop.f32.mrf.mxu0
        %v7635 = vpop.f32.mrf.mxu0
        %v7636 = vadd.f32 %v7347, %v7635
        %v7637 = vpop.f32.mrf.mxu0
        %7638 = vmatprep.mubr.bf16.mxu0 %v4939
        %7639 = vmatmul.mubr.bf16.gmra.mxu0 %v4938
        %v7640 = vpop.f32.mrf.mxu0
        %v7641 = vadd.f32 %v7352, %v7640
        %v7642 = vpop.f32.mrf.mxu0
        %v7643 = vpop.f32.mrf.mxu0
        %v7644 = vadd.f32 %v7355, %v7643
        %v7645 = vpop.f32.mrf.mxu0
        %7646 = vmatprep.mubr.bf16.mxu0 %v4955
        %7647 = vmatmul.mubr.bf16.gmra.mxu0 %v4954
        %v7648 = vpop.f32.mrf.mxu0
        %v7649 = vadd.f32 %v7360, %v7648
        %v7650 = vpop.f32.mrf.mxu0
        %v7651 = vpop.f32.mrf.mxu0
        %v7652 = vadd.f32 %v7363, %v7651
        %v7653 = vpop.f32.mrf.mxu0
        %7654 = vmatprep.mubr.bf16.mxu0 %v4971
        %7655 = vmatmul.mubr.bf16.gmra.mxu0 %v4970
        %v7656 = vpop.f32.mrf.mxu0
        %v7657 = vadd.f32 %v7368, %v7656
        %v7658 = vpop.f32.mrf.mxu0
        %v7659 = vpop.f32.mrf.mxu0
        %v7660 = vadd.f32 %v7371, %v7659
        %v7661 = vpop.f32.mrf.mxu0
        %7662 = vmatprep.mubr.bf16.mxu0 %v4987
        %7663 = vmatmul.mubr.bf16.gmra.mxu0 %v4986
        %v7664 = vpop.f32.mrf.mxu0
        %v7665 = vadd.f32 %v7376, %v7664
        %v7666 = vpop.f32.mrf.mxu0
        %v7667 = vpop.f32.mrf.mxu0
        %v7668 = vadd.f32 %v7379, %v7667
        %v7669 = vpop.f32.mrf.mxu0
        %7670 = vmatprep.mubr.bf16.mxu0 %v5003
        %7671 = vmatmul.mubr.bf16.gmra.mxu0 %v5002
        %v7672 = vpop.f32.mrf.mxu0
        %v7673 = vadd.f32 %v7384, %v7672
        %v7674 = vpop.f32.mrf.mxu0
        %v7675 = vpop.f32.mrf.mxu0
        %v7676 = vadd.f32 %v7387, %v7675
        %v7677 = vpop.f32.mrf.mxu0
        %7678 = vmatprep.mubr.bf16.mxu0 %v5019
        %7679 = vmatmul.mubr.bf16.gmra.mxu0 %v5018
        %v7680 = vpop.f32.mrf.mxu0
        %v7681 = vadd.f32 %v7392, %v7680
        %v7682 = vpop.f32.mrf.mxu0
        %v7683 = vpop.f32.mrf.mxu0
        %v7684 = vadd.f32 %v7395, %v7683
        %v7685 = vpop.f32.mrf.mxu0
        %7686 = vmatprep.mubr.bf16.mxu0 %v5035
        %7687 = vmatmul.mubr.bf16.gmra.mxu0 %v5034
        %v7688 = vpop.f32.mrf.mxu0
        %v7689 = vadd.f32 %v7400, %v7688
        %v7690 = vpop.f32.mrf.mxu0
        %v7691 = vpop.f32.mrf.mxu0
        %v7692 = vadd.f32 %v7403, %v7691
        %v7693 = vpop.f32.mrf.mxu0
        %7694 = vmatprep.mubr.bf16.mxu0 %v5051
        %7695 = vmatmul.mubr.bf16.gmra.mxu0 %v5050
        %v7696 = vpop.f32.mrf.mxu0
        %v7697 = vadd.f32 %v7408, %v7696
        %v7698 = vpop.f32.mrf.mxu0
        %v7699 = vpop.f32.mrf.mxu0
        %v7700 = vadd.f32 %v7411, %v7699
        %v7701 = vpop.f32.mrf.mxu0
        %7702 = vmatprep.mubr.bf16.mxu0 %v5067
        %7703 = vmatmul.mubr.bf16.gmra.mxu0 %v5066
        %v7704 = vpop.f32.mrf.mxu0
        %v7705 = vadd.f32 %v7416, %v7704
        %v7706 = vpop.f32.mrf.mxu0
        %v7707 = vpop.f32.mrf.mxu0
        %v7708 = vadd.f32 %v7419, %v7707
        %v7709 = vpop.f32.mrf.mxu0
        %7710 = vmatprep.mubr.bf16.mxu0 %v5083
        %7711 = vmatmul.mubr.bf16.gmra.mxu0 %v5082
        %v7712 = vpop.f32.mrf.mxu0
        %v7713 = vadd.f32 %v7424, %v7712
        %v7714 = vpop.f32.mrf.mxu0
        %v7715 = vpop.f32.mrf.mxu0
        %v7716 = vadd.f32 %v7427, %v7715
        %v7717 = vpop.f32.mrf.mxu0
        %7718 = vmatprep.mubr.bf16.mxu0 %v5099
        %7719 = vmatmul.mubr.bf16.gmra.mxu0 %v5098
        %v7720 = vpop.f32.mrf.mxu0
        %v7721 = vadd.f32 %v7432, %v7720
        %v7722 = vpop.f32.mrf.mxu0
        %v7723 = vpop.f32.mrf.mxu0
        %v7724 = vadd.f32 %v7435, %v7723
        %v7725 = vpop.f32.mrf.mxu0
        %7726 = vmatprep.mubr.bf16.mxu0 %v5115
        %7727 = vmatmul.mubr.bf16.gmra.mxu0 %v5114
        %v7728 = vpop.f32.mrf.mxu0
        %v7729 = vadd.f32 %v7440, %v7728
        %v7730 = vpop.f32.mrf.mxu0
        %v7731 = vpop.f32.mrf.mxu0
        %v7732 = vadd.f32 %v7443, %v7731
        %v7733 = vpop.f32.mrf.mxu0
        %7734 = vmatprep.mubr.bf16.mxu0 %v5131
        %7735 = vmatmul.mubr.bf16.gmra.mxu0 %v5130
        %v7736 = vpop.f32.mrf.mxu0
        %v7737 = vadd.f32 %v7448, %v7736
        %v7738 = vpop.f32.mrf.mxu0
        %v7739 = vpop.f32.mrf.mxu0
        %v7740 = vadd.f32 %v7451, %v7739
        %v7741 = vpop.f32.mrf.mxu0
        %7742 = vmatprep.mubr.bf16.mxu0 %v5147
        %7743 = vmatmul.mubr.bf16.gmra.mxu0 %v5146
        %v7744 = vpop.f32.mrf.mxu0
        %v7745 = vadd.f32 %v7456, %v7744
        %v7746 = vpop.f32.mrf.mxu0
        %v7747 = vpop.f32.mrf.mxu0
        %v7748 = vadd.f32 %v7459, %v7747
        %v7749 = vpop.f32.mrf.mxu0
        %7750 = vmatprep.mubr.bf16.mxu0 %v5163
        %7751 = vmatmul.mubr.bf16.gmra.mxu0 %v5162
        %v7752 = vpop.f32.mrf.mxu0
        %v7753 = vadd.f32 %v7464, %v7752
        %v7754 = vpop.f32.mrf.mxu0
        %v7755 = vpop.f32.mrf.mxu0
        %v7756 = vadd.f32 %v7467, %v7755
        %v7757 = vpop.f32.mrf.mxu0
        %7758 = vmatprep.mubr.bf16.mxu0 %v5179
        %7759 = vmatmul.mubr.bf16.gmra.mxu0 %v5178
        %v7760 = vpop.f32.mrf.mxu0
        %v7761 = vadd.f32 %v7472, %v7760
        %v7762 = vpop.f32.mrf.mxu0
        %v7763 = vpop.f32.mrf.mxu0
        %v7764 = vadd.f32 %v7475, %v7763
        %v7765 = vpop.f32.mrf.mxu0
        %7766 = vmatprep.mubr.bf16.mxu0 %v5195
        %7767 = vmatmul.mubr.bf16.gmra.mxu0 %v5194
        %v7768 = vpop.f32.mrf.mxu0
        %v7769 = vadd.f32 %v7480, %v7768
        %v7770 = vpop.f32.mrf.mxu0
        %v7771 = vpop.f32.mrf.mxu0
        %v7772 = vadd.f32 %v7483, %v7771
        %v7773 = vpop.f32.mrf.mxu0
        %7774 = vmatprep.mubr.bf16.mxu0 %v5211
        %7775 = vmatmul.mubr.bf16.gmra.mxu0 %v5210
        %v7776 = vpop.f32.mrf.mxu0
        %v7777 = vadd.f32 %v7488, %v7776
        %v7778 = vpop.f32.mrf.mxu0
        %v7779 = vpop.f32.mrf.mxu0
        %v7780 = vadd.f32 %v7491, %v7779
        %v7781 = vpop.f32.mrf.mxu0
        %7782 = vmatprep.mubr.bf16.mxu0 %v5227
        %7783 = vmatmul.mubr.bf16.gmra.mxu0 %v5226
        %v7784 = vpop.f32.mrf.mxu0
        %v7785 = vadd.f32 %v7496, %v7784
        %v7786 = vpop.f32.mrf.mxu0
        %v7787 = vpop.f32.mrf.mxu0
        %v7788 = vadd.f32 %v7499, %v7787
        %v7789 = vpop.f32.mrf.mxu0
        %7790 = vmatprep.mubr.bf16.mxu0 %v5243
        %7791 = vmatmul.mubr.bf16.gmra.mxu0 %v5242
        %v7792 = vpop.f32.mrf.mxu0
        %v7793 = vadd.f32 %v7504, %v7792
        %v7794 = vpop.f32.mrf.mxu0
        %v7795 = vpop.f32.mrf.mxu0
        %v7796 = vadd.f32 %v7507, %v7795
        %v7797 = vpop.f32.mrf.mxu0
        %7798 = vmatprep.mubr.bf16.mxu0 %v5259
        %7799 = vmatmul.mubr.bf16.gmra.mxu0 %v5258
        %v7800 = vpop.f32.mrf.mxu0
        %v7801 = vadd.f32 %v7512, %v7800
        %v7802 = vpop.f32.mrf.mxu0
        %v7803 = vpop.f32.mrf.mxu0
        %v7804 = vadd.f32 %v7515, %v7803
        %v7805 = vpop.f32.mrf.mxu0
        %7806 = vmatprep.mubr.bf16.mxu0 %v5275
        %7807 = vmatmul.mubr.bf16.gmra.mxu0 %v5274
        %v7808 = vpop.f32.mrf.mxu0
        %v7809 = vadd.f32 %v7520, %v7808
        %v7810 = vpop.f32.mrf.mxu0
        %v7811 = vpop.f32.mrf.mxu0
        %v7812 = vadd.f32 %v7523, %v7811
        %v7813 = vpop.f32.mrf.mxu0
        %7814 = vmatprep.mubr.bf16.mxu0 %v5291
        %7815 = vmatmul.mubr.bf16.gmra.mxu0 %v5290
        %v7816 = vpop.f32.mrf.mxu0
        %v7817 = vadd.f32 %v7528, %v7816
        %v7818 = vpop.f32.mrf.mxu0
        %v7819 = vpop.f32.mrf.mxu0
        %v7820 = vadd.f32 %v7531, %v7819
        %v7821 = vpop.f32.mrf.mxu0
        %7822 = vmatprep.mubr.bf16.mxu0 %v5307
        %7823 = vmatmul.mubr.bf16.gmra.mxu0 %v5306
        %v7824 = vpop.f32.mrf.mxu0
        %v7825 = vadd.f32 %v7536, %v7824
        %v7826 = vpop.f32.mrf.mxu0
        %v7827 = vpop.f32.mrf.mxu0
        %v7828 = vadd.f32 %v7539, %v7827
        %v7829 = vpop.f32.mrf.mxu0
        %7830 = vmatprep.mubr.bf16.mxu0 %v5323
        %7831 = vmatmul.mubr.bf16.gmra.mxu0 %v5322
        %v7832 = vpop.f32.mrf.mxu0
        %v7833 = vadd.f32 %v7544, %v7832
        %v7834 = vpop.f32.mrf.mxu0
        %v7835 = vpop.f32.mrf.mxu0
        %v7836 = vadd.f32 %v7547, %v7835
        %v7837 = vpop.f32.mrf.mxu0
        %7838 = vmatprep.mubr.bf16.mxu0 %v5339
        %7839 = vmatmul.mubr.bf16.gmra.mxu0 %v5338
        %v7840 = vpop.f32.mrf.mxu0
        %v7841 = vadd.f32 %v7552, %v7840
        %v7842 = vpop.f32.mrf.mxu0
        %v7843 = vpop.f32.mrf.mxu0
        %v7844 = vadd.f32 %v7555, %v7843
        %v7845 = vpop.f32.mrf.mxu0
        %7846 = vmatprep.mubr.bf16.mxu0 %v5355
        %7847 = vmatmul.mubr.bf16.gmra.mxu0 %v5354
        %v7848 = vpop.f32.mrf.mxu0
        %v7849 = vadd.f32 %v7560, %v7848
        %v7850 = vpop.f32.mrf.mxu0
        %v7851 = vpop.f32.mrf.mxu0
        %v7852 = vadd.f32 %v7563, %v7851
        %v7853 = vpop.f32.mrf.mxu0
        %7854 = vmatprep.mubr.bf16.mxu0 %v5371
        %7855 = vmatmul.mubr.bf16.gmra.mxu0 %v5370
        %v7856 = vpop.f32.mrf.mxu0
        %v7857 = vadd.f32 %v7568, %v7856
        %v7858 = vpop.f32.mrf.mxu0
        %v7859 = vpop.f32.mrf.mxu0
        %v7860 = vadd.f32 %v7571, %v7859
        %v7861 = vpop.f32.mrf.mxu0
        %7862 = vmatprep.mubr.bf16.mxu0 %v5387
        %7863 = vmatmul.mubr.bf16.gmra.mxu0 %v5386
        %v7864 = vpop.f32.mrf.mxu0
        %v7865 = vadd.f32 %v7576, %v7864
        %v7866 = vpop.f32.mrf.mxu0
        %v7867 = vpop.f32.mrf.mxu0
        %v7868 = vadd.f32 %v7579, %v7867
        %v7869 = vpop.f32.mrf.mxu0
        %7870 = vmatprep.mubr.bf16.mxu0 %v5403
        %7871 = vmatmul.mubr.bf16.gmra.mxu0 %v5402
        %v7872 = vpop.f32.mrf.mxu0
        %v7873 = vadd.f32 %v7584, %v7872
        %v7874 = vpop.f32.mrf.mxu0
        %v7875 = vpop.f32.mrf.mxu0
        %v7876 = vadd.f32 %v7587, %v7875
        %v7877 = vpop.f32.mrf.mxu0
        %7878 = vdwg.mxu0
        %7879 = vmatprep.subr.bf16.mxu0 0
        %7880 = vmatpush1.bf16.msra.mxu0 %v6265
        %7881 = vmatprep.subr.bf16.mxu0 0
        %7882 = vmatpush1.bf16.msra.mxu0 %v6264
        %7883 = vmatprep.subr.bf16.mxu0 0
        %7884 = vmatpush1.bf16.msra.mxu0 %v6263
        %7885 = vmatprep.subr.bf16.mxu0 0
        %7886 = vmatpush1.bf16.msra.mxu0 %v6262
        %7887 = vmatprep.subr.bf16.mxu0 0
        %7888 = vmatpush1.bf16.msra.mxu0 %v6261
        %7889 = vmatprep.subr.bf16.mxu0 0
        %7890 = vmatpush1.bf16.msra.mxu0 %v6260
        %7891 = vmatprep.subr.bf16.mxu0 0
        %7892 = vmatpush1.bf16.msra.mxu0 %v6259
        %7893 = vmatprep.subr.bf16.mxu0 0
        %7894 = vmatpush1.bf16.msra.mxu0 %v6258
        %7895 = vmatprep.subr.bf16.mxu0 0
        %7896 = vmatpush2.bf16.msra.mxu0 %v6273
        %7897 = vmatprep.subr.bf16.mxu0 0
        %7898 = vmatpush2.bf16.msra.mxu0 %v6272
        %7899 = vmatprep.subr.bf16.mxu0 0
        %7900 = vmatpush2.bf16.msra.mxu0 %v6271
        %7901 = vmatprep.subr.bf16.mxu0 0
        %7902 = vmatpush2.bf16.msra.mxu0 %v6270
        %7903 = vmatprep.subr.bf16.mxu0 0
        %7904 = vmatpush2.bf16.msra.mxu0 %v6269
        %7905 = vmatprep.subr.bf16.mxu0 0
        %7906 = vmatpush2.bf16.msra.mxu0 %v6268
        %7907 = vmatprep.subr.bf16.mxu0 0
        %7908 = vmatpush2.bf16.msra.mxu0 %v6267
        %7909 = vmatprep.subr.bf16.mxu0 0
        %7910 = vmatpush2.bf16.msra.mxu0 %v6266
        %7911 = vmatprep.mubr.bf16.mxu0 %v4909
        %7912 = vmatmul.mubr.bf16.gmra.mxu0 %v4908
        %v7913 = vpop.f32.mrf.mxu0
        %v7914 = vadd.f32 %v7625, %v7913
        %v7915 = vpop.f32.mrf.mxu0
        %v7916 = vpop.f32.mrf.mxu0
        %v7917 = vadd.f32 %v7628, %v7916
        %v7918 = vpop.f32.mrf.mxu0
        %7919 = vmatprep.mubr.bf16.mxu0 %v4925
        %7920 = vmatmul.mubr.bf16.gmra.mxu0 %v4924
        %v7921 = vpop.f32.mrf.mxu0
        %v7922 = vadd.f32 %v7633, %v7921
        %v7923 = vpop.f32.mrf.mxu0
        %v7924 = vpop.f32.mrf.mxu0
        %v7925 = vadd.f32 %v7636, %v7924
        %v7926 = vpop.f32.mrf.mxu0
        %7927 = vmatprep.mubr.bf16.mxu0 %v4941
        %7928 = vmatmul.mubr.bf16.gmra.mxu0 %v4940
        %v7929 = vpop.f32.mrf.mxu0
        %v7930 = vadd.f32 %v7641, %v7929
        %v7931 = vpop.f32.mrf.mxu0
        %v7932 = vpop.f32.mrf.mxu0
        %v7933 = vadd.f32 %v7644, %v7932
        %v7934 = vpop.f32.mrf.mxu0
        %7935 = vmatprep.mubr.bf16.mxu0 %v4957
        %7936 = vmatmul.mubr.bf16.gmra.mxu0 %v4956
        %v7937 = vpop.f32.mrf.mxu0
        %v7938 = vadd.f32 %v7649, %v7937
        %v7939 = vpop.f32.mrf.mxu0
        %v7940 = vpop.f32.mrf.mxu0
        %v7941 = vadd.f32 %v7652, %v7940
        %v7942 = vpop.f32.mrf.mxu0
        %7943 = vmatprep.mubr.bf16.mxu0 %v4973
        %7944 = vmatmul.mubr.bf16.gmra.mxu0 %v4972
        %v7945 = vpop.f32.mrf.mxu0
        %v7946 = vadd.f32 %v7657, %v7945
        %v7947 = vpop.f32.mrf.mxu0
        %v7948 = vpop.f32.mrf.mxu0
        %v7949 = vadd.f32 %v7660, %v7948
        %v7950 = vpop.f32.mrf.mxu0
        %7951 = vmatprep.mubr.bf16.mxu0 %v4989
        %7952 = vmatmul.mubr.bf16.gmra.mxu0 %v4988
        %v7953 = vpop.f32.mrf.mxu0
        %v7954 = vadd.f32 %v7665, %v7953
        %v7955 = vpop.f32.mrf.mxu0
        %v7956 = vpop.f32.mrf.mxu0
        %v7957 = vadd.f32 %v7668, %v7956
        %v7958 = vpop.f32.mrf.mxu0
        %7959 = vmatprep.mubr.bf16.mxu0 %v5005
        %7960 = vmatmul.mubr.bf16.gmra.mxu0 %v5004
        %v7961 = vpop.f32.mrf.mxu0
        %v7962 = vadd.f32 %v7673, %v7961
        %v7963 = vpop.f32.mrf.mxu0
        %v7964 = vpop.f32.mrf.mxu0
        %v7965 = vadd.f32 %v7676, %v7964
        %v7966 = vpop.f32.mrf.mxu0
        %7967 = vmatprep.mubr.bf16.mxu0 %v5021
        %7968 = vmatmul.mubr.bf16.gmra.mxu0 %v5020
        %v7969 = vpop.f32.mrf.mxu0
        %v7970 = vadd.f32 %v7681, %v7969
        %v7971 = vpop.f32.mrf.mxu0
        %v7972 = vpop.f32.mrf.mxu0
        %v7973 = vadd.f32 %v7684, %v7972
        %v7974 = vpop.f32.mrf.mxu0
        %7975 = vmatprep.mubr.bf16.mxu0 %v5037
        %7976 = vmatmul.mubr.bf16.gmra.mxu0 %v5036
        %v7977 = vpop.f32.mrf.mxu0
        %v7978 = vadd.f32 %v7689, %v7977
        %v7979 = vpop.f32.mrf.mxu0
        %v7980 = vpop.f32.mrf.mxu0
        %v7981 = vadd.f32 %v7692, %v7980
        %v7982 = vpop.f32.mrf.mxu0
        %7983 = vmatprep.mubr.bf16.mxu0 %v5053
        %7984 = vmatmul.mubr.bf16.gmra.mxu0 %v5052
        %v7985 = vpop.f32.mrf.mxu0
        %v7986 = vadd.f32 %v7697, %v7985
        %v7987 = vpop.f32.mrf.mxu0
        %v7988 = vpop.f32.mrf.mxu0
        %v7989 = vadd.f32 %v7700, %v7988
        %v7990 = vpop.f32.mrf.mxu0
        %7991 = vmatprep.mubr.bf16.mxu0 %v5069
        %7992 = vmatmul.mubr.bf16.gmra.mxu0 %v5068
        %v7993 = vpop.f32.mrf.mxu0
        %v7994 = vadd.f32 %v7705, %v7993
        %v7995 = vpop.f32.mrf.mxu0
        %v7996 = vpop.f32.mrf.mxu0
        %v7997 = vadd.f32 %v7708, %v7996
        %v7998 = vpop.f32.mrf.mxu0
        %7999 = vmatprep.mubr.bf16.mxu0 %v5085
        %8000 = vmatmul.mubr.bf16.gmra.mxu0 %v5084
        %v8001 = vpop.f32.mrf.mxu0
        %v8002 = vadd.f32 %v7713, %v8001
        %v8003 = vpop.f32.mrf.mxu0
        %v8004 = vpop.f32.mrf.mxu0
        %v8005 = vadd.f32 %v7716, %v8004
        %v8006 = vpop.f32.mrf.mxu0
        %8007 = vmatprep.mubr.bf16.mxu0 %v5101
        %8008 = vmatmul.mubr.bf16.gmra.mxu0 %v5100
        %v8009 = vpop.f32.mrf.mxu0
        %v8010 = vadd.f32 %v7721, %v8009
        %v8011 = vpop.f32.mrf.mxu0
        %v8012 = vpop.f32.mrf.mxu0
        %v8013 = vadd.f32 %v7724, %v8012
        %v8014 = vpop.f32.mrf.mxu0
        %8015 = vmatprep.mubr.bf16.mxu0 %v5117
        %8016 = vmatmul.mubr.bf16.gmra.mxu0 %v5116
        %v8017 = vpop.f32.mrf.mxu0
        %v8018 = vadd.f32 %v7729, %v8017
        %v8019 = vpop.f32.mrf.mxu0
        %v8020 = vpop.f32.mrf.mxu0
        %v8021 = vadd.f32 %v7732, %v8020
        %v8022 = vpop.f32.mrf.mxu0
        %8023 = vmatprep.mubr.bf16.mxu0 %v5133
        %8024 = vmatmul.mubr.bf16.gmra.mxu0 %v5132
        %v8025 = vpop.f32.mrf.mxu0
        %v8026 = vadd.f32 %v7737, %v8025
        %v8027 = vpop.f32.mrf.mxu0
        %v8028 = vpop.f32.mrf.mxu0
        %v8029 = vadd.f32 %v7740, %v8028
        %v8030 = vpop.f32.mrf.mxu0
        %8031 = vmatprep.mubr.bf16.mxu0 %v5149
        %8032 = vmatmul.mubr.bf16.gmra.mxu0 %v5148
        %v8033 = vpop.f32.mrf.mxu0
        %v8034 = vadd.f32 %v7745, %v8033
        %v8035 = vpop.f32.mrf.mxu0
        %v8036 = vpop.f32.mrf.mxu0
        %v8037 = vadd.f32 %v7748, %v8036
        %v8038 = vpop.f32.mrf.mxu0
        %8039 = vmatprep.mubr.bf16.mxu0 %v5165
        %8040 = vmatmul.mubr.bf16.gmra.mxu0 %v5164
        %v8041 = vpop.f32.mrf.mxu0
        %v8042 = vadd.f32 %v7753, %v8041
        %v8043 = vpop.f32.mrf.mxu0
        %v8044 = vpop.f32.mrf.mxu0
        %v8045 = vadd.f32 %v7756, %v8044
        %v8046 = vpop.f32.mrf.mxu0
        %8047 = vmatprep.mubr.bf16.mxu0 %v5181
        %8048 = vmatmul.mubr.bf16.gmra.mxu0 %v5180
        %v8049 = vpop.f32.mrf.mxu0
        %v8050 = vadd.f32 %v7761, %v8049
        %v8051 = vpop.f32.mrf.mxu0
        %v8052 = vpop.f32.mrf.mxu0
        %v8053 = vadd.f32 %v7764, %v8052
        %v8054 = vpop.f32.mrf.mxu0
        %8055 = vmatprep.mubr.bf16.mxu0 %v5197
        %8056 = vmatmul.mubr.bf16.gmra.mxu0 %v5196
        %v8057 = vpop.f32.mrf.mxu0
        %v8058 = vadd.f32 %v7769, %v8057
        %v8059 = vpop.f32.mrf.mxu0
        %v8060 = vpop.f32.mrf.mxu0
        %v8061 = vadd.f32 %v7772, %v8060
        %v8062 = vpop.f32.mrf.mxu0
        %8063 = vmatprep.mubr.bf16.mxu0 %v5213
        %8064 = vmatmul.mubr.bf16.gmra.mxu0 %v5212
        %v8065 = vpop.f32.mrf.mxu0
        %v8066 = vadd.f32 %v7777, %v8065
        %v8067 = vpop.f32.mrf.mxu0
        %v8068 = vpop.f32.mrf.mxu0
        %v8069 = vadd.f32 %v7780, %v8068
        %v8070 = vpop.f32.mrf.mxu0
        %8071 = vmatprep.mubr.bf16.mxu0 %v5229
        %8072 = vmatmul.mubr.bf16.gmra.mxu0 %v5228
        %v8073 = vpop.f32.mrf.mxu0
        %v8074 = vadd.f32 %v7785, %v8073
        %v8075 = vpop.f32.mrf.mxu0
        %v8076 = vpop.f32.mrf.mxu0
        %v8077 = vadd.f32 %v7788, %v8076
        %v8078 = vpop.f32.mrf.mxu0
        %8079 = vmatprep.mubr.bf16.mxu0 %v5245
        %8080 = vmatmul.mubr.bf16.gmra.mxu0 %v5244
        %v8081 = vpop.f32.mrf.mxu0
        %v8082 = vadd.f32 %v7793, %v8081
        %v8083 = vpop.f32.mrf.mxu0
        %v8084 = vpop.f32.mrf.mxu0
        %v8085 = vadd.f32 %v7796, %v8084
        %v8086 = vpop.f32.mrf.mxu0
        %8087 = vmatprep.mubr.bf16.mxu0 %v5261
        %8088 = vmatmul.mubr.bf16.gmra.mxu0 %v5260
        %v8089 = vpop.f32.mrf.mxu0
        %v8090 = vadd.f32 %v7801, %v8089
        %v8091 = vpop.f32.mrf.mxu0
        %v8092 = vpop.f32.mrf.mxu0
        %v8093 = vadd.f32 %v7804, %v8092
        %v8094 = vpop.f32.mrf.mxu0
        %8095 = vmatprep.mubr.bf16.mxu0 %v5277
        %8096 = vmatmul.mubr.bf16.gmra.mxu0 %v5276
        %v8097 = vpop.f32.mrf.mxu0
        %v8098 = vadd.f32 %v7809, %v8097
        %v8099 = vpop.f32.mrf.mxu0
        %v8100 = vpop.f32.mrf.mxu0
        %v8101 = vadd.f32 %v7812, %v8100
        %v8102 = vpop.f32.mrf.mxu0
        %8103 = vmatprep.mubr.bf16.mxu0 %v5293
        %8104 = vmatmul.mubr.bf16.gmra.mxu0 %v5292
        %v8105 = vpop.f32.mrf.mxu0
        %v8106 = vadd.f32 %v7817, %v8105
        %v8107 = vpop.f32.mrf.mxu0
        %v8108 = vpop.f32.mrf.mxu0
        %v8109 = vadd.f32 %v7820, %v8108
        %v8110 = vpop.f32.mrf.mxu0
        %8111 = vmatprep.mubr.bf16.mxu0 %v5309
        %8112 = vmatmul.mubr.bf16.gmra.mxu0 %v5308
        %v8113 = vpop.f32.mrf.mxu0
        %v8114 = vadd.f32 %v7825, %v8113
        %v8115 = vpop.f32.mrf.mxu0
        %v8116 = vpop.f32.mrf.mxu0
        %v8117 = vadd.f32 %v7828, %v8116
        %v8118 = vpop.f32.mrf.mxu0
        %8119 = vmatprep.mubr.bf16.mxu0 %v5325
        %8120 = vmatmul.mubr.bf16.gmra.mxu0 %v5324
        %v8121 = vpop.f32.mrf.mxu0
        %v8122 = vadd.f32 %v7833, %v8121
        %v8123 = vpop.f32.mrf.mxu0
        %v8124 = vpop.f32.mrf.mxu0
        %v8125 = vadd.f32 %v7836, %v8124
        %v8126 = vpop.f32.mrf.mxu0
        %8127 = vmatprep.mubr.bf16.mxu0 %v5341
        %8128 = vmatmul.mubr.bf16.gmra.mxu0 %v5340
        %v8129 = vpop.f32.mrf.mxu0
        %v8130 = vadd.f32 %v7841, %v8129
        %v8131 = vpop.f32.mrf.mxu0
        %v8132 = vpop.f32.mrf.mxu0
        %v8133 = vadd.f32 %v7844, %v8132
        %v8134 = vpop.f32.mrf.mxu0
        %8135 = vmatprep.mubr.bf16.mxu0 %v5357
        %8136 = vmatmul.mubr.bf16.gmra.mxu0 %v5356
        %v8137 = vpop.f32.mrf.mxu0
        %v8138 = vadd.f32 %v7849, %v8137
        %v8139 = vpop.f32.mrf.mxu0
        %v8140 = vpop.f32.mrf.mxu0
        %v8141 = vadd.f32 %v7852, %v8140
        %v8142 = vpop.f32.mrf.mxu0
        %8143 = vmatprep.mubr.bf16.mxu0 %v5373
        %8144 = vmatmul.mubr.bf16.gmra.mxu0 %v5372
        %v8145 = vpop.f32.mrf.mxu0
        %v8146 = vadd.f32 %v7857, %v8145
        %v8147 = vpop.f32.mrf.mxu0
        %v8148 = vpop.f32.mrf.mxu0
        %v8149 = vadd.f32 %v7860, %v8148
        %v8150 = vpop.f32.mrf.mxu0
        %8151 = vmatprep.mubr.bf16.mxu0 %v5389
        %8152 = vmatmul.mubr.bf16.gmra.mxu0 %v5388
        %v8153 = vpop.f32.mrf.mxu0
        %v8154 = vadd.f32 %v7865, %v8153
        %v8155 = vpop.f32.mrf.mxu0
        %v8156 = vpop.f32.mrf.mxu0
        %v8157 = vadd.f32 %v7868, %v8156
        %v8158 = vpop.f32.mrf.mxu0
        %8159 = vmatprep.mubr.bf16.mxu0 %v5405
        %8160 = vmatmul.mubr.bf16.gmra.mxu0 %v5404
        %v8161 = vpop.f32.mrf.mxu0
        %v8162 = vadd.f32 %v7873, %v8161
        %v8163 = vpop.f32.mrf.mxu0
        %v8164 = vpop.f32.mrf.mxu0
        %v8165 = vadd.f32 %v7876, %v8164
        %v8166 = vpop.f32.mrf.mxu0
        %8167 = vdwg.mxu0
        %8168 = vmatprep.subr.bf16.mxu0 0
        %8169 = vmatpush1.bf16.msra.mxu0 %v6281
        %8170 = vmatprep.subr.bf16.mxu0 0
        %8171 = vmatpush1.bf16.msra.mxu0 %v6280
        %8172 = vmatprep.subr.bf16.mxu0 0
        %8173 = vmatpush1.bf16.msra.mxu0 %v6279
        %8174 = vmatprep.subr.bf16.mxu0 0
        %8175 = vmatpush1.bf16.msra.mxu0 %v6278
        %8176 = vmatprep.subr.bf16.mxu0 0
        %8177 = vmatpush1.bf16.msra.mxu0 %v6277
        %8178 = vmatprep.subr.bf16.mxu0 0
        %8179 = vmatpush1.bf16.msra.mxu0 %v6276
        %8180 = vmatprep.subr.bf16.mxu0 0
        %8181 = vmatpush1.bf16.msra.mxu0 %v6275
        %8182 = vmatprep.subr.bf16.mxu0 0
        %8183 = vmatpush1.bf16.msra.mxu0 %v6274
        %8184 = vmatprep.subr.bf16.mxu0 0
        %8185 = vmatpush2.bf16.msra.mxu0 %v6289
        %8186 = vmatprep.subr.bf16.mxu0 0
        %8187 = vmatpush2.bf16.msra.mxu0 %v6288
        %8188 = vmatprep.subr.bf16.mxu0 0
        %8189 = vmatpush2.bf16.msra.mxu0 %v6287
        %8190 = vmatprep.subr.bf16.mxu0 0
        %8191 = vmatpush2.bf16.msra.mxu0 %v6286
        %8192 = vmatprep.subr.bf16.mxu0 0
        %8193 = vmatpush2.bf16.msra.mxu0 %v6285
        %8194 = vmatprep.subr.bf16.mxu0 0
        %8195 = vmatpush2.bf16.msra.mxu0 %v6284
        %8196 = vmatprep.subr.bf16.mxu0 0
        %8197 = vmatpush2.bf16.msra.mxu0 %v6283
        %8198 = vmatprep.subr.bf16.mxu0 0
        %8199 = vmatpush2.bf16.msra.mxu0 %v6282
        %8200 = vmatprep.mubr.bf16.mxu0 %v4911
        %8201 = vmatmul.mubr.bf16.gmra.mxu0 %v4910
        %v8202 = vpop.f32.mrf.mxu0
        %v8203 = vadd.f32 %v7914, %v8202
        %v8204 = vpop.f32.mrf.mxu0
        %v8205 = vpop.f32.mrf.mxu0
        %v8206 = vadd.f32 %v7917, %v8205
        %v8207 = vpop.f32.mrf.mxu0
        %8208 = vmatprep.mubr.bf16.mxu0 %v4927
        %8209 = vmatmul.mubr.bf16.gmra.mxu0 %v4926
        %v8210 = vpop.f32.mrf.mxu0
        %v8211 = vadd.f32 %v7922, %v8210
        %v8212 = vpop.f32.mrf.mxu0
        %v8213 = vpop.f32.mrf.mxu0
        %v8214 = vadd.f32 %v7925, %v8213
        %v8215 = vpop.f32.mrf.mxu0
        %8216 = vmatprep.mubr.bf16.mxu0 %v4943
        %8217 = vmatmul.mubr.bf16.gmra.mxu0 %v4942
        %v8218 = vpop.f32.mrf.mxu0
        %v8219 = vadd.f32 %v7930, %v8218
        %v8220 = vpop.f32.mrf.mxu0
        %v8221 = vpop.f32.mrf.mxu0
        %v8222 = vadd.f32 %v7933, %v8221
        %v8223 = vpop.f32.mrf.mxu0
        %8224 = vmatprep.mubr.bf16.mxu0 %v4959
        %8225 = vmatmul.mubr.bf16.gmra.mxu0 %v4958
        %v8226 = vpop.f32.mrf.mxu0
        %v8227 = vadd.f32 %v7938, %v8226
        %v8228 = vpop.f32.mrf.mxu0
        %v8229 = vpop.f32.mrf.mxu0
        %v8230 = vadd.f32 %v7941, %v8229
        %v8231 = vpop.f32.mrf.mxu0
        %8232 = vmatprep.mubr.bf16.mxu0 %v4975
        %8233 = vmatmul.mubr.bf16.gmra.mxu0 %v4974
        %v8234 = vpop.f32.mrf.mxu0
        %v8235 = vadd.f32 %v7946, %v8234
        %v8236 = vpop.f32.mrf.mxu0
        %v8237 = vpop.f32.mrf.mxu0
        %v8238 = vadd.f32 %v7949, %v8237
        %v8239 = vpop.f32.mrf.mxu0
        %8240 = vmatprep.mubr.bf16.mxu0 %v4991
        %8241 = vmatmul.mubr.bf16.gmra.mxu0 %v4990
        %v8242 = vpop.f32.mrf.mxu0
        %v8243 = vadd.f32 %v7954, %v8242
        %v8244 = vpop.f32.mrf.mxu0
        %v8245 = vpop.f32.mrf.mxu0
        %v8246 = vadd.f32 %v7957, %v8245
        %v8247 = vpop.f32.mrf.mxu0
        %8248 = vmatprep.mubr.bf16.mxu0 %v5007
        %8249 = vmatmul.mubr.bf16.gmra.mxu0 %v5006
        %v8250 = vpop.f32.mrf.mxu0
        %v8251 = vadd.f32 %v7962, %v8250
        %v8252 = vpop.f32.mrf.mxu0
        %v8253 = vpop.f32.mrf.mxu0
        %v8254 = vadd.f32 %v7965, %v8253
        %v8255 = vpop.f32.mrf.mxu0
        %8256 = vmatprep.mubr.bf16.mxu0 %v5023
        %8257 = vmatmul.mubr.bf16.gmra.mxu0 %v5022
        %v8258 = vpop.f32.mrf.mxu0
        %v8259 = vadd.f32 %v7970, %v8258
        %v8260 = vpop.f32.mrf.mxu0
        %v8261 = vpop.f32.mrf.mxu0
        %v8262 = vadd.f32 %v7973, %v8261
        %v8263 = vpop.f32.mrf.mxu0
        %8264 = vmatprep.mubr.bf16.mxu0 %v5039
        %8265 = vmatmul.mubr.bf16.gmra.mxu0 %v5038
        %v8266 = vpop.f32.mrf.mxu0
        %v8267 = vadd.f32 %v7978, %v8266
        %v8268 = vpop.f32.mrf.mxu0
        %v8269 = vpop.f32.mrf.mxu0
        %v8270 = vadd.f32 %v7981, %v8269
        %v8271 = vpop.f32.mrf.mxu0
        %8272 = vmatprep.mubr.bf16.mxu0 %v5055
        %8273 = vmatmul.mubr.bf16.gmra.mxu0 %v5054
        %v8274 = vpop.f32.mrf.mxu0
        %v8275 = vadd.f32 %v7986, %v8274
        %v8276 = vpop.f32.mrf.mxu0
        %v8277 = vpop.f32.mrf.mxu0
        %v8278 = vadd.f32 %v7989, %v8277
        %v8279 = vpop.f32.mrf.mxu0
        %8280 = vmatprep.mubr.bf16.mxu0 %v5071
        %8281 = vmatmul.mubr.bf16.gmra.mxu0 %v5070
        %v8282 = vpop.f32.mrf.mxu0
        %v8283 = vadd.f32 %v7994, %v8282
        %v8284 = vpop.f32.mrf.mxu0
        %v8285 = vpop.f32.mrf.mxu0
        %v8286 = vadd.f32 %v7997, %v8285
        %v8287 = vpop.f32.mrf.mxu0
        %8288 = vmatprep.mubr.bf16.mxu0 %v5087
        %8289 = vmatmul.mubr.bf16.gmra.mxu0 %v5086
        %v8290 = vpop.f32.mrf.mxu0
        %v8291 = vadd.f32 %v8002, %v8290
        %v8292 = vpop.f32.mrf.mxu0
        %v8293 = vpop.f32.mrf.mxu0
        %v8294 = vadd.f32 %v8005, %v8293
        %v8295 = vpop.f32.mrf.mxu0
        %8296 = vmatprep.mubr.bf16.mxu0 %v5103
        %8297 = vmatmul.mubr.bf16.gmra.mxu0 %v5102
        %v8298 = vpop.f32.mrf.mxu0
        %v8299 = vadd.f32 %v8010, %v8298
        %v8300 = vpop.f32.mrf.mxu0
        %v8301 = vpop.f32.mrf.mxu0
        %v8302 = vadd.f32 %v8013, %v8301
        %v8303 = vpop.f32.mrf.mxu0
        %8304 = vmatprep.mubr.bf16.mxu0 %v5119
        %8305 = vmatmul.mubr.bf16.gmra.mxu0 %v5118
        %v8306 = vpop.f32.mrf.mxu0
        %v8307 = vadd.f32 %v8018, %v8306
        %v8308 = vpop.f32.mrf.mxu0
        %v8309 = vpop.f32.mrf.mxu0
        %v8310 = vadd.f32 %v8021, %v8309
        %v8311 = vpop.f32.mrf.mxu0
        %8312 = vmatprep.mubr.bf16.mxu0 %v5135
        %8313 = vmatmul.mubr.bf16.gmra.mxu0 %v5134
        %v8314 = vpop.f32.mrf.mxu0
        %v8315 = vadd.f32 %v8026, %v8314
        %v8316 = vpop.f32.mrf.mxu0
        %v8317 = vpop.f32.mrf.mxu0
        %v8318 = vadd.f32 %v8029, %v8317
        %v8319 = vpop.f32.mrf.mxu0
        %8320 = vmatprep.mubr.bf16.mxu0 %v5151
        %8321 = vmatmul.mubr.bf16.gmra.mxu0 %v5150
        %v8322 = vpop.f32.mrf.mxu0
        %v8323 = vadd.f32 %v8034, %v8322
        %v8324 = vpop.f32.mrf.mxu0
        %v8325 = vpop.f32.mrf.mxu0
        %v8326 = vadd.f32 %v8037, %v8325
        %v8327 = vpop.f32.mrf.mxu0
        %8328 = vmatprep.mubr.bf16.mxu0 %v5167
        %8329 = vmatmul.mubr.bf16.gmra.mxu0 %v5166
        %v8330 = vpop.f32.mrf.mxu0
        %v8331 = vadd.f32 %v8042, %v8330
        %v8332 = vpop.f32.mrf.mxu0
        %v8333 = vpop.f32.mrf.mxu0
        %v8334 = vadd.f32 %v8045, %v8333
        %v8335 = vpop.f32.mrf.mxu0
        %8336 = vmatprep.mubr.bf16.mxu0 %v5183
        %8337 = vmatmul.mubr.bf16.gmra.mxu0 %v5182
        %v8338 = vpop.f32.mrf.mxu0
        %v8339 = vadd.f32 %v8050, %v8338
        %v8340 = vpop.f32.mrf.mxu0
        %v8341 = vpop.f32.mrf.mxu0
        %v8342 = vadd.f32 %v8053, %v8341
        %v8343 = vpop.f32.mrf.mxu0
        %8344 = vmatprep.mubr.bf16.mxu0 %v5199
        %8345 = vmatmul.mubr.bf16.gmra.mxu0 %v5198
        %v8346 = vpop.f32.mrf.mxu0
        %v8347 = vadd.f32 %v8058, %v8346
        %v8348 = vpop.f32.mrf.mxu0
        %v8349 = vpop.f32.mrf.mxu0
        %v8350 = vadd.f32 %v8061, %v8349
        %v8351 = vpop.f32.mrf.mxu0
        %8352 = vmatprep.mubr.bf16.mxu0 %v5215
        %8353 = vmatmul.mubr.bf16.gmra.mxu0 %v5214
        %v8354 = vpop.f32.mrf.mxu0
        %v8355 = vadd.f32 %v8066, %v8354
        %v8356 = vpop.f32.mrf.mxu0
        %v8357 = vpop.f32.mrf.mxu0
        %v8358 = vadd.f32 %v8069, %v8357
        %v8359 = vpop.f32.mrf.mxu0
        %8360 = vmatprep.mubr.bf16.mxu0 %v5231
        %8361 = vmatmul.mubr.bf16.gmra.mxu0 %v5230
        %v8362 = vpop.f32.mrf.mxu0
        %v8363 = vadd.f32 %v8074, %v8362
        %v8364 = vpop.f32.mrf.mxu0
        %v8365 = vpop.f32.mrf.mxu0
        %v8366 = vadd.f32 %v8077, %v8365
        %v8367 = vpop.f32.mrf.mxu0
        %8368 = vmatprep.mubr.bf16.mxu0 %v5247
        %8369 = vmatmul.mubr.bf16.gmra.mxu0 %v5246
        %v8370 = vpop.f32.mrf.mxu0
        %v8371 = vadd.f32 %v8082, %v8370
        %v8372 = vpop.f32.mrf.mxu0
        %v8373 = vpop.f32.mrf.mxu0
        %v8374 = vadd.f32 %v8085, %v8373
        %v8375 = vpop.f32.mrf.mxu0
        %8376 = vmatprep.mubr.bf16.mxu0 %v5263
        %8377 = vmatmul.mubr.bf16.gmra.mxu0 %v5262
        %v8378 = vpop.f32.mrf.mxu0
        %v8379 = vadd.f32 %v8090, %v8378
        %v8380 = vpop.f32.mrf.mxu0
        %v8381 = vpop.f32.mrf.mxu0
        %v8382 = vadd.f32 %v8093, %v8381
        %v8383 = vpop.f32.mrf.mxu0
        %8384 = vmatprep.mubr.bf16.mxu0 %v5279
        %8385 = vmatmul.mubr.bf16.gmra.mxu0 %v5278
        %v8386 = vpop.f32.mrf.mxu0
        %v8387 = vadd.f32 %v8098, %v8386
        %v8388 = vpop.f32.mrf.mxu0
        %v8389 = vpop.f32.mrf.mxu0
        %v8390 = vadd.f32 %v8101, %v8389
        %v8391 = vpop.f32.mrf.mxu0
        %8392 = vmatprep.mubr.bf16.mxu0 %v5295
        %8393 = vmatmul.mubr.bf16.gmra.mxu0 %v5294
        %v8394 = vpop.f32.mrf.mxu0
        %v8395 = vadd.f32 %v8106, %v8394
        %v8396 = vpop.f32.mrf.mxu0
        %v8397 = vpop.f32.mrf.mxu0
        %v8398 = vadd.f32 %v8109, %v8397
        %v8399 = vpop.f32.mrf.mxu0
        %8400 = vmatprep.mubr.bf16.mxu0 %v5311
        %8401 = vmatmul.mubr.bf16.gmra.mxu0 %v5310
        %v8402 = vpop.f32.mrf.mxu0
        %v8403 = vadd.f32 %v8114, %v8402
        %v8404 = vpop.f32.mrf.mxu0
        %v8405 = vpop.f32.mrf.mxu0
        %v8406 = vadd.f32 %v8117, %v8405
        %v8407 = vpop.f32.mrf.mxu0
        %8408 = vmatprep.mubr.bf16.mxu0 %v5327
        %8409 = vmatmul.mubr.bf16.gmra.mxu0 %v5326
        %v8410 = vpop.f32.mrf.mxu0
        %v8411 = vadd.f32 %v8122, %v8410
        %v8412 = vpop.f32.mrf.mxu0
        %v8413 = vpop.f32.mrf.mxu0
        %v8414 = vadd.f32 %v8125, %v8413
        %v8415 = vpop.f32.mrf.mxu0
        %8416 = vmatprep.mubr.bf16.mxu0 %v5343
        %8417 = vmatmul.mubr.bf16.gmra.mxu0 %v5342
        %v8418 = vpop.f32.mrf.mxu0
        %v8419 = vadd.f32 %v8130, %v8418
        %v8420 = vpop.f32.mrf.mxu0
        %v8421 = vpop.f32.mrf.mxu0
        %v8422 = vadd.f32 %v8133, %v8421
        %v8423 = vpop.f32.mrf.mxu0
        %8424 = vmatprep.mubr.bf16.mxu0 %v5359
        %8425 = vmatmul.mubr.bf16.gmra.mxu0 %v5358
        %v8426 = vpop.f32.mrf.mxu0
        %v8427 = vadd.f32 %v8138, %v8426
        %v8428 = vpop.f32.mrf.mxu0
        %v8429 = vpop.f32.mrf.mxu0
        %v8430 = vadd.f32 %v8141, %v8429
        %v8431 = vpop.f32.mrf.mxu0
        %8432 = vmatprep.mubr.bf16.mxu0 %v5375
        %8433 = vmatmul.mubr.bf16.gmra.mxu0 %v5374
        %v8434 = vpop.f32.mrf.mxu0
        %v8435 = vadd.f32 %v8146, %v8434
        %v8436 = vpop.f32.mrf.mxu0
        %v8437 = vpop.f32.mrf.mxu0
        %v8438 = vadd.f32 %v8149, %v8437
        %v8439 = vpop.f32.mrf.mxu0
        %8440 = vmatprep.mubr.bf16.mxu0 %v5391
        %8441 = vmatmul.mubr.bf16.gmra.mxu0 %v5390
        %v8442 = vpop.f32.mrf.mxu0
        %v8443 = vadd.f32 %v8154, %v8442
        %v8444 = vpop.f32.mrf.mxu0
        %v8445 = vpop.f32.mrf.mxu0
        %v8446 = vadd.f32 %v8157, %v8445
        %v8447 = vpop.f32.mrf.mxu0
        %8448 = vmatprep.mubr.bf16.mxu0 %v5407
        %8449 = vmatmul.mubr.bf16.gmra.mxu0 %v5406
        %v8450 = vpop.f32.mrf.mxu0
        %v8451 = vadd.f32 %v8162, %v8450
        %v8452 = vpop.f32.mrf.mxu0
        %v8453 = vpop.f32.mrf.mxu0
        %v8454 = vadd.f32 %v8165, %v8453
        %v8455 = vpop.f32.mrf.mxu0
        %8456 = vdwg.mxu0
        %8457 = vmatprep.subr.bf16.mxu0 0
        %8458 = vmatpush1.bf16.msra.mxu0 %v6297
        %8459 = vmatprep.subr.bf16.mxu0 0
        %8460 = vmatpush1.bf16.msra.mxu0 %v6296
        %8461 = vmatprep.subr.bf16.mxu0 0
        %8462 = vmatpush1.bf16.msra.mxu0 %v6295
        %8463 = vmatprep.subr.bf16.mxu0 0
        %8464 = vmatpush1.bf16.msra.mxu0 %v6294
        %8465 = vmatprep.subr.bf16.mxu0 0
        %8466 = vmatpush1.bf16.msra.mxu0 %v6293
        %8467 = vmatprep.subr.bf16.mxu0 0
        %8468 = vmatpush1.bf16.msra.mxu0 %v6292
        %8469 = vmatprep.subr.bf16.mxu0 0
        %8470 = vmatpush1.bf16.msra.mxu0 %v6291
        %8471 = vmatprep.subr.bf16.mxu0 0
        %8472 = vmatpush1.bf16.msra.mxu0 %v6290
        %8473 = vmatprep.subr.bf16.mxu0 0
        %8474 = vmatpush2.bf16.msra.mxu0 %v6305
        %8475 = vmatprep.subr.bf16.mxu0 0
        %8476 = vmatpush2.bf16.msra.mxu0 %v6304
        %8477 = vmatprep.subr.bf16.mxu0 0
        %8478 = vmatpush2.bf16.msra.mxu0 %v6303
        %8479 = vmatprep.subr.bf16.mxu0 0
        %8480 = vmatpush2.bf16.msra.mxu0 %v6302
        %8481 = vmatprep.subr.bf16.mxu0 0
        %8482 = vmatpush2.bf16.msra.mxu0 %v6301
        %8483 = vmatprep.subr.bf16.mxu0 0
        %8484 = vmatpush2.bf16.msra.mxu0 %v6300
        %8485 = vmatprep.subr.bf16.mxu0 0
        %8486 = vmatpush2.bf16.msra.mxu0 %v6299
        %8487 = vmatprep.subr.bf16.mxu0 0
        %8488 = vmatpush2.bf16.msra.mxu0 %v6298
        %8489 = vmatprep.mubr.bf16.mxu0 %v4913
        %8490 = vmatmul.mubr.bf16.gmra.mxu0 %v4912
        %v8491 = vpop.f32.mrf.mxu0
        %v8492 = vadd.f32 %v8203, %v8491
        %v8493 = vpop.f32.mrf.mxu0
        %v8494 = vpop.f32.mrf.mxu0
        %v8495 = vadd.f32 %v8206, %v8494
        %v8496 = vpop.f32.mrf.mxu0
        %8497 = vmatprep.mubr.bf16.mxu0 %v4929
        %8498 = vmatmul.mubr.bf16.gmra.mxu0 %v4928
        %v8499 = vpop.f32.mrf.mxu0
        %v8500 = vadd.f32 %v8211, %v8499
        %v8501 = vpop.f32.mrf.mxu0
        %v8502 = vpop.f32.mrf.mxu0
        %v8503 = vadd.f32 %v8214, %v8502
        %v8504 = vpop.f32.mrf.mxu0
        %8505 = vmatprep.mubr.bf16.mxu0 %v4945
        %8506 = vmatmul.mubr.bf16.gmra.mxu0 %v4944
        %v8507 = vpop.f32.mrf.mxu0
        %v8508 = vadd.f32 %v8219, %v8507
        %v8509 = vpop.f32.mrf.mxu0
        %v8510 = vpop.f32.mrf.mxu0
        %v8511 = vadd.f32 %v8222, %v8510
        %v8512 = vpop.f32.mrf.mxu0
        %8513 = vmatprep.mubr.bf16.mxu0 %v4961
        %8514 = vmatmul.mubr.bf16.gmra.mxu0 %v4960
        %v8515 = vpop.f32.mrf.mxu0
        %v8516 = vadd.f32 %v8227, %v8515
        %v8517 = vpop.f32.mrf.mxu0
        %v8518 = vpop.f32.mrf.mxu0
        %v8519 = vadd.f32 %v8230, %v8518
        %v8520 = vpop.f32.mrf.mxu0
        %8521 = vmatprep.mubr.bf16.mxu0 %v4977
        %8522 = vmatmul.mubr.bf16.gmra.mxu0 %v4976
        %v8523 = vpop.f32.mrf.mxu0
        %v8524 = vadd.f32 %v8235, %v8523
        %v8525 = vpop.f32.mrf.mxu0
        %v8526 = vpop.f32.mrf.mxu0
        %v8527 = vadd.f32 %v8238, %v8526
        %v8528 = vpop.f32.mrf.mxu0
        %8529 = vmatprep.mubr.bf16.mxu0 %v4993
        %8530 = vmatmul.mubr.bf16.gmra.mxu0 %v4992
        %v8531 = vpop.f32.mrf.mxu0
        %v8532 = vadd.f32 %v8243, %v8531
        %v8533 = vpop.f32.mrf.mxu0
        %v8534 = vpop.f32.mrf.mxu0
        %v8535 = vadd.f32 %v8246, %v8534
        %v8536 = vpop.f32.mrf.mxu0
        %8537 = vmatprep.mubr.bf16.mxu0 %v5009
        %8538 = vmatmul.mubr.bf16.gmra.mxu0 %v5008
        %v8539 = vpop.f32.mrf.mxu0
        %v8540 = vadd.f32 %v8251, %v8539
        %v8541 = vpop.f32.mrf.mxu0
        %v8542 = vpop.f32.mrf.mxu0
        %v8543 = vadd.f32 %v8254, %v8542
        %v8544 = vpop.f32.mrf.mxu0
        %8545 = vmatprep.mubr.bf16.mxu0 %v5025
        %8546 = vmatmul.mubr.bf16.gmra.mxu0 %v5024
        %v8547 = vpop.f32.mrf.mxu0
        %v8548 = vadd.f32 %v8259, %v8547
        %v8549 = vpop.f32.mrf.mxu0
        %v8550 = vpop.f32.mrf.mxu0
        %v8551 = vadd.f32 %v8262, %v8550
        %v8552 = vpop.f32.mrf.mxu0
        %8553 = vmatprep.mubr.bf16.mxu0 %v5041
        %8554 = vmatmul.mubr.bf16.gmra.mxu0 %v5040
        %v8555 = vpop.f32.mrf.mxu0
        %v8556 = vadd.f32 %v8267, %v8555
        %v8557 = vpop.f32.mrf.mxu0
        %v8558 = vpop.f32.mrf.mxu0
        %v8559 = vadd.f32 %v8270, %v8558
        %v8560 = vpop.f32.mrf.mxu0
        %8561 = vmatprep.mubr.bf16.mxu0 %v5057
        %8562 = vmatmul.mubr.bf16.gmra.mxu0 %v5056
        %v8563 = vpop.f32.mrf.mxu0
        %v8564 = vadd.f32 %v8275, %v8563
        %v8565 = vpop.f32.mrf.mxu0
        %v8566 = vpop.f32.mrf.mxu0
        %v8567 = vadd.f32 %v8278, %v8566
        %v8568 = vpop.f32.mrf.mxu0
        %8569 = vmatprep.mubr.bf16.mxu0 %v5073
        %8570 = vmatmul.mubr.bf16.gmra.mxu0 %v5072
        %v8571 = vpop.f32.mrf.mxu0
        %v8572 = vadd.f32 %v8283, %v8571
        %v8573 = vpop.f32.mrf.mxu0
        %v8574 = vpop.f32.mrf.mxu0
        %v8575 = vadd.f32 %v8286, %v8574
        %v8576 = vpop.f32.mrf.mxu0
        %8577 = vmatprep.mubr.bf16.mxu0 %v5089
        %8578 = vmatmul.mubr.bf16.gmra.mxu0 %v5088
        %v8579 = vpop.f32.mrf.mxu0
        %v8580 = vadd.f32 %v8291, %v8579
        %v8581 = vpop.f32.mrf.mxu0
        %v8582 = vpop.f32.mrf.mxu0
        %v8583 = vadd.f32 %v8294, %v8582
        %v8584 = vpop.f32.mrf.mxu0
        %8585 = vmatprep.mubr.bf16.mxu0 %v5105
        %8586 = vmatmul.mubr.bf16.gmra.mxu0 %v5104
        %v8587 = vpop.f32.mrf.mxu0
        %v8588 = vadd.f32 %v8299, %v8587
        %v8589 = vpop.f32.mrf.mxu0
        %v8590 = vpop.f32.mrf.mxu0
        %v8591 = vadd.f32 %v8302, %v8590
        %v8592 = vpop.f32.mrf.mxu0
        %8593 = vmatprep.mubr.bf16.mxu0 %v5121
        %8594 = vmatmul.mubr.bf16.gmra.mxu0 %v5120
        %v8595 = vpop.f32.mrf.mxu0
        %v8596 = vadd.f32 %v8307, %v8595
        %v8597 = vpop.f32.mrf.mxu0
        %v8598 = vpop.f32.mrf.mxu0
        %v8599 = vadd.f32 %v8310, %v8598
        %v8600 = vpop.f32.mrf.mxu0
        %8601 = vmatprep.mubr.bf16.mxu0 %v5137
        %8602 = vmatmul.mubr.bf16.gmra.mxu0 %v5136
        %v8603 = vpop.f32.mrf.mxu0
        %v8604 = vadd.f32 %v8315, %v8603
        %v8605 = vpop.f32.mrf.mxu0
        %v8606 = vpop.f32.mrf.mxu0
        %v8607 = vadd.f32 %v8318, %v8606
        %v8608 = vpop.f32.mrf.mxu0
        %8609 = vmatprep.mubr.bf16.mxu0 %v5153
        %8610 = vmatmul.mubr.bf16.gmra.mxu0 %v5152
        %v8611 = vpop.f32.mrf.mxu0
        %v8612 = vadd.f32 %v8323, %v8611
        %v8613 = vpop.f32.mrf.mxu0
        %v8614 = vpop.f32.mrf.mxu0
        %v8615 = vadd.f32 %v8326, %v8614
        %v8616 = vpop.f32.mrf.mxu0
        %8617 = vmatprep.mubr.bf16.mxu0 %v5169
        %8618 = vmatmul.mubr.bf16.gmra.mxu0 %v5168
        %v8619 = vpop.f32.mrf.mxu0
        %v8620 = vadd.f32 %v8331, %v8619
        %v8621 = vpop.f32.mrf.mxu0
        %v8622 = vpop.f32.mrf.mxu0
        %v8623 = vadd.f32 %v8334, %v8622
        %v8624 = vpop.f32.mrf.mxu0
        %8625 = vmatprep.mubr.bf16.mxu0 %v5185
        %8626 = vmatmul.mubr.bf16.gmra.mxu0 %v5184
        %v8627 = vpop.f32.mrf.mxu0
        %v8628 = vadd.f32 %v8339, %v8627
        %v8629 = vpop.f32.mrf.mxu0
        %v8630 = vpop.f32.mrf.mxu0
        %v8631 = vadd.f32 %v8342, %v8630
        %v8632 = vpop.f32.mrf.mxu0
        %8633 = vmatprep.mubr.bf16.mxu0 %v5201
        %8634 = vmatmul.mubr.bf16.gmra.mxu0 %v5200
        %v8635 = vpop.f32.mrf.mxu0
        %v8636 = vadd.f32 %v8347, %v8635
        %v8637 = vpop.f32.mrf.mxu0
        %v8638 = vpop.f32.mrf.mxu0
        %v8639 = vadd.f32 %v8350, %v8638
        %v8640 = vpop.f32.mrf.mxu0
        %8641 = vmatprep.mubr.bf16.mxu0 %v5217
        %8642 = vmatmul.mubr.bf16.gmra.mxu0 %v5216
        %v8643 = vpop.f32.mrf.mxu0
        %v8644 = vadd.f32 %v8355, %v8643
        %v8645 = vpop.f32.mrf.mxu0
        %v8646 = vpop.f32.mrf.mxu0
        %v8647 = vadd.f32 %v8358, %v8646
        %v8648 = vpop.f32.mrf.mxu0
        %8649 = vmatprep.mubr.bf16.mxu0 %v5233
        %8650 = vmatmul.mubr.bf16.gmra.mxu0 %v5232
        %v8651 = vpop.f32.mrf.mxu0
        %v8652 = vadd.f32 %v8363, %v8651
        %v8653 = vpop.f32.mrf.mxu0
        %v8654 = vpop.f32.mrf.mxu0
        %v8655 = vadd.f32 %v8366, %v8654
        %v8656 = vpop.f32.mrf.mxu0
        %8657 = vmatprep.mubr.bf16.mxu0 %v5249
        %8658 = vmatmul.mubr.bf16.gmra.mxu0 %v5248
        %v8659 = vpop.f32.mrf.mxu0
        %v8660 = vadd.f32 %v8371, %v8659
        %v8661 = vpop.f32.mrf.mxu0
        %v8662 = vpop.f32.mrf.mxu0
        %v8663 = vadd.f32 %v8374, %v8662
        %v8664 = vpop.f32.mrf.mxu0
        %8665 = vmatprep.mubr.bf16.mxu0 %v5265
        %8666 = vmatmul.mubr.bf16.gmra.mxu0 %v5264
        %v8667 = vpop.f32.mrf.mxu0
        %v8668 = vadd.f32 %v8379, %v8667
        %v8669 = vpop.f32.mrf.mxu0
        %v8670 = vpop.f32.mrf.mxu0
        %v8671 = vadd.f32 %v8382, %v8670
        %v8672 = vpop.f32.mrf.mxu0
        %8673 = vmatprep.mubr.bf16.mxu0 %v5281
        %8674 = vmatmul.mubr.bf16.gmra.mxu0 %v5280
        %v8675 = vpop.f32.mrf.mxu0
        %v8676 = vadd.f32 %v8387, %v8675
        %v8677 = vpop.f32.mrf.mxu0
        %v8678 = vpop.f32.mrf.mxu0
        %v8679 = vadd.f32 %v8390, %v8678
        %v8680 = vpop.f32.mrf.mxu0
        %8681 = vmatprep.mubr.bf16.mxu0 %v5297
        %8682 = vmatmul.mubr.bf16.gmra.mxu0 %v5296
        %v8683 = vpop.f32.mrf.mxu0
        %v8684 = vadd.f32 %v8395, %v8683
        %v8685 = vpop.f32.mrf.mxu0
        %v8686 = vpop.f32.mrf.mxu0
        %v8687 = vadd.f32 %v8398, %v8686
        %v8688 = vpop.f32.mrf.mxu0
        %8689 = vmatprep.mubr.bf16.mxu0 %v5313
        %8690 = vmatmul.mubr.bf16.gmra.mxu0 %v5312
        %v8691 = vpop.f32.mrf.mxu0
        %v8692 = vadd.f32 %v8403, %v8691
        %v8693 = vpop.f32.mrf.mxu0
        %v8694 = vpop.f32.mrf.mxu0
        %v8695 = vadd.f32 %v8406, %v8694
        %v8696 = vpop.f32.mrf.mxu0
        %8697 = vmatprep.mubr.bf16.mxu0 %v5329
        %8698 = vmatmul.mubr.bf16.gmra.mxu0 %v5328
        %v8699 = vpop.f32.mrf.mxu0
        %v8700 = vadd.f32 %v8411, %v8699
        %v8701 = vpop.f32.mrf.mxu0
        %v8702 = vpop.f32.mrf.mxu0
        %v8703 = vadd.f32 %v8414, %v8702
        %v8704 = vpop.f32.mrf.mxu0
        %8705 = vmatprep.mubr.bf16.mxu0 %v5345
        %8706 = vmatmul.mubr.bf16.gmra.mxu0 %v5344
        %v8707 = vpop.f32.mrf.mxu0
        %v8708 = vadd.f32 %v8419, %v8707
        %v8709 = vpop.f32.mrf.mxu0
        %v8710 = vpop.f32.mrf.mxu0
        %v8711 = vadd.f32 %v8422, %v8710
        %v8712 = vpop.f32.mrf.mxu0
        %8713 = vmatprep.mubr.bf16.mxu0 %v5361
        %8714 = vmatmul.mubr.bf16.gmra.mxu0 %v5360
        %v8715 = vpop.f32.mrf.mxu0
        %v8716 = vadd.f32 %v8427, %v8715
        %v8717 = vpop.f32.mrf.mxu0
        %v8718 = vpop.f32.mrf.mxu0
        %v8719 = vadd.f32 %v8430, %v8718
        %v8720 = vpop.f32.mrf.mxu0
        %8721 = vmatprep.mubr.bf16.mxu0 %v5377
        %8722 = vmatmul.mubr.bf16.gmra.mxu0 %v5376
        %v8723 = vpop.f32.mrf.mxu0
        %v8724 = vadd.f32 %v8435, %v8723
        %v8725 = vpop.f32.mrf.mxu0
        %v8726 = vpop.f32.mrf.mxu0
        %v8727 = vadd.f32 %v8438, %v8726
        %v8728 = vpop.f32.mrf.mxu0
        %8729 = vmatprep.mubr.bf16.mxu0 %v5393
        %8730 = vmatmul.mubr.bf16.gmra.mxu0 %v5392
        %v8731 = vpop.f32.mrf.mxu0
        %v8732 = vadd.f32 %v8443, %v8731
        %v8733 = vpop.f32.mrf.mxu0
        %v8734 = vpop.f32.mrf.mxu0
        %v8735 = vadd.f32 %v8446, %v8734
        %v8736 = vpop.f32.mrf.mxu0
        %8737 = vmatprep.mubr.bf16.mxu0 %v5409
        %8738 = vmatmul.mubr.bf16.gmra.mxu0 %v5408
        %v8739 = vpop.f32.mrf.mxu0
        %v8740 = vadd.f32 %v8451, %v8739
        %v8741 = vpop.f32.mrf.mxu0
        %v8742 = vpop.f32.mrf.mxu0
        %v8743 = vadd.f32 %v8454, %v8742
        %v8744 = vpop.f32.mrf.mxu0
        %8745 = vdwg.mxu0
        %v8746 = vadd.f32 %v4834, %v8492
        %v8747 = vadd.f32 %v4835, %v8495
        %v8748 = vadd.f32 %v4836, %v8500
        %v8749 = vadd.f32 %v4837, %v8503
        %v8750 = vadd.f32 %v4838, %v8508
        %v8751 = vadd.f32 %v4839, %v8511
        %v8752 = vadd.f32 %v4840, %v8516
        %v8753 = vadd.f32 %v4841, %v8519
        %v8754 = vadd.f32 %v4842, %v8524
        %v8755 = vadd.f32 %v4843, %v8527
        %v8756 = vadd.f32 %v4844, %v8532
        %v8757 = vadd.f32 %v4845, %v8535
        %v8758 = vadd.f32 %v4846, %v8540
        %v8759 = vadd.f32 %v4847, %v8543
        %v8760 = vadd.f32 %v4848, %v8548
        %v8761 = vadd.f32 %v4849, %v8551
        %v8762 = vadd.f32 %v4850, %v8556
        %v8763 = vadd.f32 %v4851, %v8559
        %v8764 = vadd.f32 %v4852, %v8564
        %v8765 = vadd.f32 %v4853, %v8567
        %v8766 = vadd.f32 %v4854, %v8572
        %v8767 = vadd.f32 %v4855, %v8575
        %v8768 = vadd.f32 %v4856, %v8580
        %v8769 = vadd.f32 %v4857, %v8583
        %v8770 = vadd.f32 %v4858, %v8588
        %v8771 = vadd.f32 %v4859, %v8591
        %v8772 = vadd.f32 %v4860, %v8596
        %v8773 = vadd.f32 %v4861, %v8599
        %v8774 = vadd.f32 %v4862, %v8604
        %v8775 = vadd.f32 %v4863, %v8607
        %v8776 = vadd.f32 %v4864, %v8612
        %v8777 = vadd.f32 %v4865, %v8615
        %v8778 = vadd.f32 %v4866, %v8620
        %v8779 = vadd.f32 %v4867, %v8623
        %v8780 = vadd.f32 %v4868, %v8628
        %v8781 = vadd.f32 %v4869, %v8631
        %v8782 = vadd.f32 %v4870, %v8636
        %v8783 = vadd.f32 %v4871, %v8639
        %v8784 = vadd.f32 %v4872, %v8644
        %v8785 = vadd.f32 %v4873, %v8647
        %v8786 = vadd.f32 %v4874, %v8652
        %v8787 = vadd.f32 %v4875, %v8655
        %v8788 = vadd.f32 %v4876, %v8660
        %v8789 = vadd.f32 %v4877, %v8663
        %v8790 = vadd.f32 %v4878, %v8668
        %v8791 = vadd.f32 %v4879, %v8671
        %v8792 = vadd.f32 %v4880, %v8676
        %v8793 = vadd.f32 %v4881, %v8679
        %v8794 = vadd.f32 %v4882, %v8684
        %v8795 = vadd.f32 %v4883, %v8687
        %v8796 = vadd.f32 %v4884, %v8692
        %v8797 = vadd.f32 %v4885, %v8695
        %v8798 = vadd.f32 %v4886, %v8700
        %v8799 = vadd.f32 %v4887, %v8703
        %v8800 = vadd.f32 %v4888, %v8708
        %v8801 = vadd.f32 %v4889, %v8711
        %v8802 = vadd.f32 %v4890, %v8716
        %v8803 = vadd.f32 %v4891, %v8719
        %v8804 = vadd.f32 %v4892, %v8724
        %v8805 = vadd.f32 %v4893, %v8727
        %v8806 = vadd.f32 %v4894, %v8732
        %v8807 = vadd.f32 %v4895, %v8735
        %v8808 = vadd.f32 %v4896, %v8740
        %v8809 = vadd.f32 %v4897, %v8743
        %8810 = vst [vmem:[#allocation2] sm:$0xff] %v8746
        %8811 = vst [vmem:[#allocation2 + $0x8] sm:$0xff] %v8747
        %8812 = vst [vmem:[#allocation2 + $0x10] sm:$0xff] %v8748
        %8813 = vst [vmem:[#allocation2 + $0x18] sm:$0xff] %v8749
        %8814 = vst [vmem:[#allocation2 + $0x20] sm:$0xff] %v8750
        %8815 = vst [vmem:[#allocation2 + $0x28] sm:$0xff] %v8751
        %8816 = vst [vmem:[#allocation2 + $0x30] sm:$0xff] %v8752
        %8817 = vst [vmem:[#allocation2 + $0x38] sm:$0xff] %v8753
        %8818 = vst [vmem:[#allocation2 + $0x40] sm:$0xff] %v8754
        %8819 = vst [vmem:[#allocation2 + $0x48] sm:$0xff] %v8755
        %8820 = vst [vmem:[#allocation2 + $0x50] sm:$0xff] %v8756
        %8821 = vst [vmem:[#allocation2 + $0x58] sm:$0xff] %v8757
        %8822 = vst [vmem:[#allocation2 + $0x60] sm:$0xff] %v8758
        %8823 = vst [vmem:[#allocation2 + $0x68] sm:$0xff] %v8759
        %8824 = vst [vmem:[#allocation2 + $0x70] sm:$0xff] %v8760
        %8825 = vst [vmem:[#allocation2 + $0x78] sm:$0xff] %v8761
        %8826 = vst [vmem:[#allocation2 + $0x80] sm:$0xff] %v8762
        %8827 = vst [vmem:[#allocation2 + $0x88] sm:$0xff] %v8763
        %8828 = vst [vmem:[#allocation2 + $0x90] sm:$0xff] %v8764
        %8829 = vst [vmem:[#allocation2 + $0x98] sm:$0xff] %v8765
        %8830 = vst [vmem:[#allocation2 + $0xa0] sm:$0xff] %v8766
        %8831 = vst [vmem:[#allocation2 + $0xa8] sm:$0xff] %v8767
        %8832 = vst [vmem:[#allocation2 + $0xb0] sm:$0xff] %v8768
        %8833 = vst [vmem:[#allocation2 + $0xb8] sm:$0xff] %v8769
        %8834 = vst [vmem:[#allocation2 + $0xc0] sm:$0xff] %v8770
        %8835 = vst [vmem:[#allocation2 + $0xc8] sm:$0xff] %v8771
        %8836 = vst [vmem:[#allocation2 + $0xd0] sm:$0xff] %v8772
        %8837 = vst [vmem:[#allocation2 + $0xd8] sm:$0xff] %v8773
        %8838 = vst [vmem:[#allocation2 + $0xe0] sm:$0xff] %v8774
        %8839 = vst [vmem:[#allocation2 + $0xe8] sm:$0xff] %v8775
        %8840 = vst [vmem:[#allocation2 + $0xf0] sm:$0xff] %v8776
        %8841 = vst [vmem:[#allocation2 + $0xf8] sm:$0xff] %v8777
        %8842 = vst [vmem:[#allocation2 + $0x100] sm:$0xff] %v8778
        %8843 = vst [vmem:[#allocation2 + $0x108] sm:$0xff] %v8779
        %8844 = vst [vmem:[#allocation2 + $0x110] sm:$0xff] %v8780
        %8845 = vst [vmem:[#allocation2 + $0x118] sm:$0xff] %v8781
        %8846 = vst [vmem:[#allocation2 + $0x120] sm:$0xff] %v8782
        %8847 = vst [vmem:[#allocation2 + $0x128] sm:$0xff] %v8783
        %8848 = vst [vmem:[#allocation2 + $0x130] sm:$0xff] %v8784
        %8849 = vst [vmem:[#allocation2 + $0x138] sm:$0xff] %v8785
        %8850 = vst [vmem:[#allocation2 + $0x140] sm:$0xff] %v8786
        %8851 = vst [vmem:[#allocation2 + $0x148] sm:$0xff] %v8787
        %8852 = vst [vmem:[#allocation2 + $0x150] sm:$0xff] %v8788
        %8853 = vst [vmem:[#allocation2 + $0x158] sm:$0xff] %v8789
        %8854 = vst [vmem:[#allocation2 + $0x160] sm:$0xff] %v8790
        %8855 = vst [vmem:[#allocation2 + $0x168] sm:$0xff] %v8791
        %8856 = vst [vmem:[#allocation2 + $0x170] sm:$0xff] %v8792
        %8857 = vst [vmem:[#allocation2 + $0x178] sm:$0xff] %v8793
        %8858 = vst [vmem:[#allocation2 + $0x180] sm:$0xff] %v8794
        %8859 = vst [vmem:[#allocation2 + $0x188] sm:$0xff] %v8795
        %8860 = vst [vmem:[#allocation2 + $0x190] sm:$0xff] %v8796
        %8861 = vst [vmem:[#allocation2 + $0x198] sm:$0xff] %v8797
        %8862 = vst [vmem:[#allocation2 + $0x1a0] sm:$0xff] %v8798
        %8863 = vst [vmem:[#allocation2 + $0x1a8] sm:$0xff] %v8799
        %8864 = vst [vmem:[#allocation2 + $0x1b0] sm:$0xff] %v8800
        %8865 = vst [vmem:[#allocation2 + $0x1b8] sm:$0xff] %v8801
        %8866 = vst [vmem:[#allocation2 + $0x1c0] sm:$0xff] %v8802
        %8867 = vst [vmem:[#allocation2 + $0x1c8] sm:$0xff] %v8803
        %8868 = vst [vmem:[#allocation2 + $0x1d0] sm:$0xff] %v8804
        %8869 = vst [vmem:[#allocation2 + $0x1d8] sm:$0xff] %v8805
        %8870 = vst [vmem:[#allocation2 + $0x1e0] sm:$0xff] %v8806
        %8871 = vst [vmem:[#allocation2 + $0x1e8] sm:$0xff] %v8807
        %8872 = vst [vmem:[#allocation2 + $0x1f0] sm:$0xff] %v8808
        %8873 = vst [vmem:[#allocation2 + $0x1f8] sm:$0xff] %v8809
        // Predicated region
        $region37: #{tpu_custom_call.1} parent=31 // pred_check
          %p8874 = pneg %p202
        $region38: #{tpu_custom_call.1} parent=31 // pred_check_branch
          %8876 = sbr.rel (%p8874) target = $region40
        $region39: #{tpu_custom_call.1} parent=31 // pred_region
          %v8877 = vld [vmem:[#allocation2] sm:$0xff]
          %v8878 = vld [vmem:[#allocation2 + $0x8] sm:$0xff]
          %v8879 = vld [vmem:[#allocation2 + $0x10] sm:$0xff]
          %v8880 = vld [vmem:[#allocation2 + $0x18] sm:$0xff]
          %v8881 = vld [vmem:[#allocation2 + $0x20] sm:$0xff]
          %v8882 = vld [vmem:[#allocation2 + $0x28] sm:$0xff]
          %v8883 = vld [vmem:[#allocation2 + $0x30] sm:$0xff]
          %v8884 = vld [vmem:[#allocation2 + $0x38] sm:$0xff]
          %v8885 = vld [vmem:[#allocation2 + $0x40] sm:$0xff]
          %v8886 = vld [vmem:[#allocation2 + $0x48] sm:$0xff]
          %v8887 = vld [vmem:[#allocation2 + $0x50] sm:$0xff]
          %v8888 = vld [vmem:[#allocation2 + $0x58] sm:$0xff]
          %v8889 = vld [vmem:[#allocation2 + $0x60] sm:$0xff]
          %v8890 = vld [vmem:[#allocation2 + $0x68] sm:$0xff]
          %v8891 = vld [vmem:[#allocation2 + $0x70] sm:$0xff]
          %v8892 = vld [vmem:[#allocation2 + $0x78] sm:$0xff]
          %v8893 = vld [vmem:[#allocation2 + $0x80] sm:$0xff]
          %v8894 = vld [vmem:[#allocation2 + $0x88] sm:$0xff]
          %v8895 = vld [vmem:[#allocation2 + $0x90] sm:$0xff]
          %v8896 = vld [vmem:[#allocation2 + $0x98] sm:$0xff]
          %v8897 = vld [vmem:[#allocation2 + $0xa0] sm:$0xff]
          %v8898 = vld [vmem:[#allocation2 + $0xa8] sm:$0xff]
          %v8899 = vld [vmem:[#allocation2 + $0xb0] sm:$0xff]
          %v8900 = vld [vmem:[#allocation2 + $0xb8] sm:$0xff]
          %v8901 = vld [vmem:[#allocation2 + $0xc0] sm:$0xff]
          %v8902 = vld [vmem:[#allocation2 + $0xc8] sm:$0xff]
          %v8903 = vld [vmem:[#allocation2 + $0xd0] sm:$0xff]
          %v8904 = vld [vmem:[#allocation2 + $0xd8] sm:$0xff]
          %v8905 = vld [vmem:[#allocation2 + $0xe0] sm:$0xff]
          %v8906 = vld [vmem:[#allocation2 + $0xe8] sm:$0xff]
          %v8907 = vld [vmem:[#allocation2 + $0xf0] sm:$0xff]
          %v8908 = vld [vmem:[#allocation2 + $0xf8] sm:$0xff]
          %v8909 = vld [vmem:[#allocation2 + $0x100] sm:$0xff]
          %v8910 = vld [vmem:[#allocation2 + $0x108] sm:$0xff]
          %v8911 = vld [vmem:[#allocation2 + $0x110] sm:$0xff]
          %v8912 = vld [vmem:[#allocation2 + $0x118] sm:$0xff]
          %v8913 = vld [vmem:[#allocation2 + $0x120] sm:$0xff]
          %v8914 = vld [vmem:[#allocation2 + $0x128] sm:$0xff]
          %v8915 = vld [vmem:[#allocation2 + $0x130] sm:$0xff]
          %v8916 = vld [vmem:[#allocation2 + $0x138] sm:$0xff]
          %v8917 = vld [vmem:[#allocation2 + $0x140] sm:$0xff]
          %v8918 = vld [vmem:[#allocation2 + $0x148] sm:$0xff]
          %v8919 = vld [vmem:[#allocation2 + $0x150] sm:$0xff]
          %v8920 = vld [vmem:[#allocation2 + $0x158] sm:$0xff]
          %v8921 = vld [vmem:[#allocation2 + $0x160] sm:$0xff]
          %v8922 = vld [vmem:[#allocation2 + $0x168] sm:$0xff]
          %v8923 = vld [vmem:[#allocation2 + $0x170] sm:$0xff]
          %v8924 = vld [vmem:[#allocation2 + $0x178] sm:$0xff]
          %v8925 = vld [vmem:[#allocation2 + $0x180] sm:$0xff]
          %v8926 = vld [vmem:[#allocation2 + $0x188] sm:$0xff]
          %v8927 = vld [vmem:[#allocation2 + $0x190] sm:$0xff]
          %v8928 = vld [vmem:[#allocation2 + $0x198] sm:$0xff]
          %v8929 = vld [vmem:[#allocation2 + $0x1a0] sm:$0xff]
          %v8930 = vld [vmem:[#allocation2 + $0x1a8] sm:$0xff]
          %v8931 = vld [vmem:[#allocation2 + $0x1b0] sm:$0xff]
          %v8932 = vld [vmem:[#allocation2 + $0x1b8] sm:$0xff]
          %v8933 = vld [vmem:[#allocation2 + $0x1c0] sm:$0xff]
          %v8934 = vld [vmem:[#allocation2 + $0x1c8] sm:$0xff]
          %v8935 = vld [vmem:[#allocation2 + $0x1d0] sm:$0xff]
          %v8936 = vld [vmem:[#allocation2 + $0x1d8] sm:$0xff]
          %v8937 = vld [vmem:[#allocation2 + $0x1e0] sm:$0xff]
          %v8938 = vld [vmem:[#allocation2 + $0x1e8] sm:$0xff]
          %v8939 = vld [vmem:[#allocation2 + $0x1f0] sm:$0xff]
          %v8940 = vld [vmem:[#allocation2 + $0x1f8] sm:$0xff]
          %v8941 = vadd.f32 %v8877, %v8878
          %v8942 = vadd.f32 %v8941, %v8879
          %v8943 = vadd.f32 %v8942, %v8880
          %v8944 = vadd.f32 %v8943, %v8881
          %v8945 = vadd.f32 %v8944, %v8882
          %v8946 = vadd.f32 %v8945, %v8883
          %v8947 = vadd.f32 %v8946, %v8884
          %v8948 = vadd.f32 %v8947, %v8885
          %v8949 = vadd.f32 %v8948, %v8886
          %v8950 = vadd.f32 %v8949, %v8887
          %v8951 = vadd.f32 %v8950, %v8888
          %v8952 = vadd.f32 %v8951, %v8889
          %v8953 = vadd.f32 %v8952, %v8890
          %v8954 = vadd.f32 %v8953, %v8891
          %v8955 = vadd.f32 %v8954, %v8892
          %v8956 = vadd.f32 %v8955, %v8893
          %v8957 = vadd.f32 %v8956, %v8894
          %v8958 = vadd.f32 %v8957, %v8895
          %v8959 = vadd.f32 %v8958, %v8896
          %v8960 = vadd.f32 %v8959, %v8897
          %v8961 = vadd.f32 %v8960, %v8898
          %v8962 = vadd.f32 %v8961, %v8899
          %v8963 = vadd.f32 %v8962, %v8900
          %v8964 = vadd.f32 %v8963, %v8901
          %v8965 = vadd.f32 %v8964, %v8902
          %v8966 = vadd.f32 %v8965, %v8903
          %v8967 = vadd.f32 %v8966, %v8904
          %v8968 = vadd.f32 %v8967, %v8905
          %v8969 = vadd.f32 %v8968, %v8906
          %v8970 = vadd.f32 %v8969, %v8907
          %v8971 = vadd.f32 %v8970, %v8908
          %v8972 = vadd.f32 %v8971, %v8909
          %v8973 = vadd.f32 %v8972, %v8910
          %v8974 = vadd.f32 %v8973, %v8911
          %v8975 = vadd.f32 %v8974, %v8912
          %v8976 = vadd.f32 %v8975, %v8913
          %v8977 = vadd.f32 %v8976, %v8914
          %v8978 = vadd.f32 %v8977, %v8915
          %v8979 = vadd.f32 %v8978, %v8916
          %v8980 = vadd.f32 %v8979, %v8917
          %v8981 = vadd.f32 %v8980, %v8918
          %v8982 = vadd.f32 %v8981, %v8919
          %v8983 = vadd.f32 %v8982, %v8920
          %v8984 = vadd.f32 %v8983, %v8921
          %v8985 = vadd.f32 %v8984, %v8922
          %v8986 = vadd.f32 %v8985, %v8923
          %v8987 = vadd.f32 %v8986, %v8924
          %v8988 = vadd.f32 %v8987, %v8925
          %v8989 = vadd.f32 %v8988, %v8926
          %v8990 = vadd.f32 %v8989, %v8927
          %v8991 = vadd.f32 %v8990, %v8928
          %v8992 = vadd.f32 %v8991, %v8929
          %v8993 = vadd.f32 %v8992, %v8930
          %v8994 = vadd.f32 %v8993, %v8931
          %v8995 = vadd.f32 %v8994, %v8932
          %v8996 = vadd.f32 %v8995, %v8933
          %v8997 = vadd.f32 %v8996, %v8934
          %v8998 = vadd.f32 %v8997, %v8935
          %v8999 = vadd.f32 %v8998, %v8936
          %v9000 = vadd.f32 %v8999, %v8937
          %v9001 = vadd.f32 %v9000, %v8938
          %v9002 = vadd.f32 %v9001, %v8939
          %v9003 = vadd.f32 %v9002, %v8940
          %9004 = vadd.xlane.f32.xlu0 %v9003
          %v9005 = vpop.xlane.xlu0 %9004
          %v9006 = vrot.slane %v9005, 4
          %v9007 = vadd.f32 %v9005, %v9006
          %v9008 = vrot.slane %v9007, 2
          %v9009 = vadd.f32 %v9007, %v9008
          %v9010 = vrot.slane %v9009, 1
          %v9011 = vadd.f32 %v9009, %v9010
          %s9012 = vtos %v9011
          %v9013 = vstv %s9012
          %9014 = vst [vmem:[%s189] sm:$0x1] %v9013
        $region40: #{tpu_custom_call.1} parent=31 // pred_fallthru
          _
        %s9015 = sand.u32 %s110, 1
        %s9016 = scalar_lea.sflag [#allocation4], %s9015
        %s9017 = sand.u32 %s110, 1
        %s9018 = scalar_lea.vmem [#allocation3], %s9017
        // Predicated region
        $region41: #{tpu_custom_call.1} parent=31 // pred_check
          %p9019 = pneg %p120
        $region42: #{tpu_custom_call.1} parent=31 // pred_check_branch
          %9021 = sbr.rel (%p9019) target = $region44
        $region43: #{tpu_custom_call.1} parent=31 // pred_region
          %s9023 = ssub.s32 16, 16
          %9024 = vsyncadd %s9016, %s9023
          %s9025 = smul.addr %s21, 16
          %s9026 = scalar_lea.hbm %s3, %s9025
          %s9028 = sshll.u32 %s9018, 4
          %s9029 = int_to_ptr.vmem [resolvable:$true] %s9028
          %9031 = dma.vmem_to_hbm [thread:$0]  %s9029, 16, %s9026, %s9016
        $region44: #{tpu_custom_call.1} parent=31 // pred_fallthru
          _
      $region32: #{tpu_custom_call.1} parent=5 // pred_fallthru
        _
      %p9032 = scmp.le.s32.totalorder 2, %s12
      // Predicated region
      $region45: #{tpu_custom_call.1} parent=5 // pred_check
        %p9033 = pneg %p9032
      $region46: #{tpu_custom_call.1} parent=5 // pred_check_branch
        %9035 = sbr.rel (%p9033) target = $region48
      $region47: #{tpu_custom_call.1} parent=5 // pred_region
        %s9036 = ssub.s32 %s12, 2
        // Predicated region
        $region49: #{tpu_custom_call.1} parent=47 // pred_check
          %p9037 = pneg %p126
        $region50: #{tpu_custom_call.1} parent=47 // pred_check_branch
          %9039 = sbr.rel (%p9037) target = $region52
        $region51: #{tpu_custom_call.1} parent=47 // pred_region
          %s9040 = sand.u32 %s111, 1
          %s9041 = scalar_lea.sflag [#allocation4], %s9040
          %s9042 = sand.u32 %s111, 1
          %s9043 = scalar_lea.vmem [#allocation3], %s9042
          %9044 = dma.done %s9041, 16
        $region52: #{tpu_custom_call.1} parent=47 // pred_fallthru
          _
      $region48: #{tpu_custom_call.1} parent=5 // pred_fallthru
        _
    $region6: #{tpu_custom_call.1} parent=1 // loop_footer
      %s16 = sadd.s32 1, %s12
    $region7: #{tpu_custom_call.1} parent=1 // loop_footer_branch
      %11 = sbr.rel target = $region3
    $region8: #{tpu_custom_call.1} parent=1 // loop_exit
      _
    %9045 = vsyncpa [#allocation4], 1
    %s9046 = scalar_lea.sflag [#allocation4], 1
    %9047 = vsyncpa %s9046, 1

</llo_original>
